<compile_context>
chip_gen: v6e
topology: v6e:2x2x1
jax: 0.10.0
libtpu: 0.0.40
codegen_flags: <defaults>
</compile_context>

<pallas_src>
import functools
import numpy as np
import jax
import jax.numpy as jnp
from jax import lax
from jax.experimental import pallas as pl
from jax.experimental.pallas import tpu as pltpu


# ---------------- static (numpy) helper matrices / index vectors ----------------

def _round_up(x, m):
    return ((x + m - 1) // m) * m


def _band_np(L, r):
    idx = np.arange(L)
    return (np.abs(idx[:, None] - idx[None, :]) <= r).astype(np.float32)


def _pool_mat_np(L):
    # One axis of avg_pool3d(kernel=3, stride=2, padding=1, count_include_pad=False).
    Lout = (L - 1) // 2 + 1
    A = np.zeros((Lout, L), np.float32)
    for i in range(Lout):
        lo, hi = max(0, 2 * i - 1), min(L, 2 * i + 2)
        A[i, lo:hi] = 1.0 / (hi - lo)
    return A


def _level_constants(d, h, w, lp, r, do_pool):
    hw = h * w
    hpos = np.full((1, lp), -1.0e6, np.float32)   # sentinel on zero-padded lanes
    wpos = np.full((1, lp), -1.0e6, np.float32)
    lane = np.arange(hw)
    hpos[0, :hw] = (lane // w).astype(np.float32)
    wpos[0, :hw] = (lane % w).astype(np.float32)

    consts = {
        "bd": jnp.asarray(_band_np(d, r)),        # (d, d) f32 band matrix (D-axis box)
        "hpos": jnp.asarray(hpos),
        "wpos": jnp.asarray(wpos),
        # lane-rotation amounts: +/-1..r (W axis) and +/-w..r*w (H axis)
        "w_shifts": [j for j in range(1, r + 1)] + [lp - j for j in range(1, r + 1)],
        "h_shifts": [j * w for j in range(1, r + 1)] + [lp - j * w for j in range(1, r + 1)],
    }
    if do_pool:
        cnt_h = np.minimum(np.arange(h) + 2, h) - np.maximum(np.arange(h) - 1, 0)
        cnt_w = np.minimum(np.arange(w) + 2, w) - np.maximum(np.arange(w) - 1, 0)
        invc = np.zeros((1, lp), np.float32)
        invc[0, :hw] = 1.0 / (np.repeat(cnt_h, w) * np.tile(cnt_w, h))
        consts["ad"] = jnp.asarray(_pool_mat_np(d))               # (d2, d) f32
        consts["invc"] = jnp.asarray(invc)                        # (1, lp) f32
    return consts


# ---------------- Pallas level kernel: NCC cc-sum (+ fused 3x3x3 avg-pool) ----------------

def _level_kernel(i_ref, j_ref, bd_ref, hpos_ref, wpos_ref, *rest,
                  w_shifts, h_shifts, r, ws, eps, do_pool):
    if do_pool:
        ad_ref, invc_ref, cc_ref, pi_ref, pj_ref = rest
    else:
        (cc_ref,) = rest

    I = i_ref[0]            # (D, LP) f32, lanes = H*W (zero padded)
    J = j_ref[0]
    hp = hpos_ref[...]      # (1, LP) f32 h-index per lane (sentinel on pad lanes)
    wp = wpos_ref[...]      # (1, LP) f32 w-index per lane

    # 0/1 masks per rotation amount, built from the rotated index vectors, so they are
    # correct independent of the rotation direction convention and of the lane padding.
    def masks_for(shifts, max_dh, max_dw):
        out = []
        for s in shifts:
            ph = pltpu.roll(hp, s, axis=1)
            pw = pltpu.roll(wp, s, axis=1)
            m = (jnp.abs(ph - hp) <= max_dh) & (jnp.abs(pw - wp) <= max_dw)
            out.append(m.astype(jnp.float32))
        return out

    w_masks = masks_for(w_shifts, 0.0, float(r))   # same h-row, |dw| <= r
    h_masks = masks_for(h_shifts, float(r), 0.0)   # same w-col, |dh| <= r

    def lane_box(x, shifts, masks):                # masked shift-and-add along lanes
        acc = x
        for s, m in zip(shifts, masks):
            acc = acc + m * pltpu.roll(x, s, axis=1)
        return acc

    bd = bd_ref[...]                               # (D, D) f32 band matrix

    def box3(x):                                   # k^3 box sum with zero padding
        y = lane_box(x, w_shifts, w_masks)         # along W  (lanes, stride 1)
        y = lane_box(y, h_shifts, h_masks)         # along H  (lanes, stride W)
        return jnp.dot(bd, y, preferred_element_type=jnp.float32)   # along D (MXU)

    I_sum, J_sum = box3(I), box3(J)
    I2_sum, J2_sum, IJ_sum = box3(I * I), box3(J * J), box3(I * J)

    inv_ws = 1.0 / ws
    u_I = I_sum * inv_ws
    u_J = J_sum * inv_ws
    cross = IJ_sum - u_J * I_sum - u_I * J_sum + u_I * u_J * ws
    I_var = I2_sum - 2.0 * u_I * I_sum + u_I * u_I * ws
    J_var = J2_sum - 2.0 * u_J * J_sum + u_J * u_J * ws
    cc = cross * cross * pl.reciprocal(I_var * J_var + eps, approx=True)
    # Zero-padded lanes have all statistics == 0 -> cc == 0 there, so the full sum is exact.
    cc_ref[...] = jnp.zeros_like(cc_ref) + jnp.sum(cc)     # per-batch partial sum

    if do_pool:
        ad = ad_ref[...]                           # (D2, D) f32 pool matrix (D axis, incl. 1/count_d)
        invc = invc_ref[...]                       # (1, LP) 1/(count_h * count_w), 0 on pad lanes
        # 3-tap (kernel=3) sums along W and H reuse the +/-1-lane and +/-W-lane masks above.
        pw_s, pw_m = [w_shifts[0], w_shifts[r]], [w_masks[0], w_masks[r]]
        ph_s, ph_m = [h_shifts[0], h_shifts[r]], [h_masks[0], h_masks[r]]

        def pool_hw(x):
            y = lane_box(x, pw_s, pw_m)
            y = lane_box(y, ph_s, ph_m)
            return y * invc

        pi_ref[0] = jnp.dot(ad, pool_hw(I), preferred_element_type=jnp.float32)
        pj_ref[0] = jnp.dot(ad, pool_hw(J), preferred_element_type=jnp.float32)


def _ncc_level_call(Icur, Jcur, consts, *, d, lp, r, k, eps, do_pool):
    N = Icur.shape[0]
    d2 = (d - 1) // 2 + 1
    kern = functools.partial(
        _level_kernel,
        w_shifts=consts["w_shifts"], h_shifts=consts["h_shifts"],
        r=r, ws=float(k) ** 3, eps=eps, do_pool=do_pool)

    in_specs = [
        pl.BlockSpec((1, d, lp), lambda n: (n, 0, 0)),
        pl.BlockSpec((1, d, lp), lambda n: (n, 0, 0)),
        pl.BlockSpec((d, d), lambda n: (0, 0)),
        pl.BlockSpec((1, lp), lambda n: (0, 0)),
        pl.BlockSpec((1, lp), lambda n: (0, 0)),
    ]
    args = [Icur, Jcur, consts["bd"], consts["hpos"], consts["wpos"]]
    out_shape = [jax.ShapeDtypeStruct((N, 1, 1), jnp.float32)]
    out_specs = [pl.BlockSpec((1, 1, 1), lambda n: (n, 0, 0))]
    if do_pool:
        in_specs += [pl.BlockSpec((d2, d), lambda n: (0, 0)),
                     pl.BlockSpec((1, lp), lambda n: (0, 0))]
        args += [consts["ad"], consts["invc"]]
        out_shape += [jax.ShapeDtypeStruct((N, d2, lp), jnp.float32)] * 2
        out_specs += [pl.BlockSpec((1, d2, lp), lambda n: (n, 0, 0))] * 2

    return pl.pallas_call(
        kern,
        out_shape=tuple(out_shape),
        grid_spec=pltpu.PrefetchScalarGridSpec(
            num_scalar_prefetch=0,
            grid=(N,),
            in_specs=in_specs,
            out_specs=tuple(out_specs),
        ),
        compiler_params=pltpu.CompilerParams(dimension_semantics=("parallel",)),
    )(*args)


# ---------------- multi_resolution_NCC forward (wrapper / glue) ----------------

def _pad_lanes(x, lp):
    pad = lp - x.shape[-1]
    return jnp.pad(x, ((0, 0), (0, 0), (0, pad))) if pad > 0 else x


@functools.partial(jax.jit, static_argnames=("win", "eps", "scale"))
def multi_resolution_ncc(I, J, win=7, eps=1e-5, scale=3):
    """I, J: (N, 1, D, H, W) float32 (NCDHW, like PyTorch).  Returns the scalar loss."""
    N, C, D, H, W = I.shape
    assert C == 1, "NCC conv weight has a single channel"
    d, h, w = D, H, W
    lp = _round_up(h * w, 128)
    Icur = _pad_lanes(I.reshape(N, d, h * w).astype(jnp.float32), lp)
    Jcur = _pad_lanes(J.reshape(N, d, h * w).astype(jnp.float32), lp)

    total = jnp.float32(0.0)
    for i in range(scale):
        k = win - 2 * i
        r = k // 2
        assert k >= 1 and h > 2 * r and w > 2 * r, "volume too small for this window"
        do_pool = i < scale - 1
        consts = _level_constants(d, h, w, lp, r, do_pool)
        outs = _ncc_level_call(Icur, Jcur, consts, d=d, lp=lp, r=r, k=k,
                               eps=eps, do_pool=do_pool)
        cc_sum = jnp.sum(outs[0])
        total = total + (-(cc_sum / float(N * d * h * w))) / (2.0 ** i)

        if do_pool:
            d2 = (d - 1) // 2 + 1
            h2 = (h - 1) // 2 + 1
            w2 = (w - 1) // 2 + 1
            lp2 = _round_up(h2 * w2, 128)

            # TODO(synk): the stride-2 (h, w) subsample of the already pooled volumes is plain
            # JAX slicing between the level kernels; it could be moved in-kernel with strided
            # lane gathers if it ever matters.
            def subsample(p, hw=h * w, d2_=d2, h_=h, w_=w, h2_=h2, w2_=w2, lp2_=lp2):
                p = p[:, :, :hw].reshape(N, d2_, h_, w_)[:, :, ::2, ::2]
                return _pad_lanes(p.reshape(N, d2_, h2_ * w2_), lp2_)

            Icur, Jcur = subsample(outs[1]), subsample(outs[2])
            d, h, w, lp = d2, h2, w2, lp2
    return total


# ---------------- pure-JAX reference (correctness check) ----------------

def _ncc_ref(I, J, win, eps):
    r = win // 2
    wgt = jnp.ones((1, 1, win, win, win), jnp.float32)
    conv = lambda x: lax.conv_general_dilated(
        x, wgt, (1, 1, 1), [(r, r)] * 3,
        dimension_numbers=("NCDHW", "OIDHW", "NCDHW"))
    I_sum, J_sum = conv(I), conv(J)
    I2_sum, J2_sum, IJ_sum = conv(I * I), conv(J * J), conv(I * J)
    ws = float(win) ** 3
    u_I, u_J = I_sum / ws, J_sum / ws
    cross = IJ_sum - u_J * I_sum - u_I * J_sum + u_I * u_J * ws
    I_var = I2_sum - 2.0 * u_I * I_sum + u_I * u_I * ws
    J_var = J2_sum - 2.0 * u_J * J_sum + u_J * u_J * ws
    cc = cross * cross / (I_var * J_var + eps)
    return -jnp.mean(cc)


def _avg_pool3d_ref(x):
    pads = [(0, 0), (0, 0), (1, 1), (1, 1), (1, 1)]
    s = lax.reduce_window(x, 0.0, lax.add, (1, 1, 3, 3, 3), (1, 1, 2, 2, 2), pads)
    c = lax.reduce_window(jnp.ones_like(x), 0.0, lax.add,
                          (1, 1, 3, 3, 3), (1, 1, 2, 2, 2), pads)
    return s / c


def _multi_ref(I, J, win=7, eps=1e-5, scale=3):
    total = 0.0
    for i in range(scale):
        total = total + _ncc_ref(I, J, win - 2 * i, eps) / (2.0 ** i)
        if i < scale - 1:
            I, J = _avg_pool3d_ref(I), _avg_pool3d_ref(J)
    return total


if __name__ == "__main__":
    key = jax.random.PRNGKey(0)
    k1, k2 = jax.random.split(key)
    N, C, D, H, W = 2, 1, 16, 16, 16
    I = jax.random.normal(k1, (N, C, D, H, W), jnp.float32)
    J = 0.7 * I + 0.3 * jax.random.normal(k2, (N, C, D, H, W), jnp.float32)

    out = multi_resolution_ncc(I, J, win=7, eps=1e-5, scale=3)
    out = jax.block_until_ready(out)

    ref = jax.block_until_ready(_multi_ref(I, J, win=7, eps=1e-5, scale=3))
    assert np.allclose(np.asarray(out), np.asarray(ref), rtol=1e-2, atol=5e-3), (out, ref)

    print("KERNEL_OK")
</pallas_src>

<mosaic_0001>
module attributes {stable_mosaic.version = 11 : i64} {
  func.func @_level_kernel(%arg0: i32, %arg1: memref<1x16x256xf32, #tpu.memory_space<vmem>>, %arg2: memref<1x16x256xf32, #tpu.memory_space<vmem>>, %arg3: memref<16x16xf32, #tpu.memory_space<vmem>>, %arg4: memref<1x256xf32, #tpu.memory_space<vmem>>, %arg5: memref<1x256xf32, #tpu.memory_space<vmem>>, %arg6: memref<8x16xf32, #tpu.memory_space<vmem>>, %arg7: memref<1x256xf32, #tpu.memory_space<vmem>>, %arg8: memref<1x1x1xf32, #tpu.memory_space<vmem>>, %arg9: memref<1x8x256xf32, #tpu.memory_space<vmem>>, %arg10: memref<1x8x256xf32, #tpu.memory_space<vmem>>) attributes {dimension_semantics = [#tpu.dimension_semantics<parallel>], iteration_bounds = array<i64: 2>, scalar_prefetch = 0 : i64, scratch_operands = 0 : i64, tpu.core_type = #tpu.core_type<tc>, window_params = [{transform_indices = @transform_0, window_bounds = array<i64: 1, 16, 256>}, {transform_indices = @transform_1, window_bounds = array<i64: 1, 16, 256>}, {pipeline_mode = #tpu.pipeline_mode<synchronous>, transform_indices = @transform_2, window_bounds = array<i64: 16, 16>}, {pipeline_mode = #tpu.pipeline_mode<synchronous>, transform_indices = @transform_3, window_bounds = array<i64: 1, 256>}, {pipeline_mode = #tpu.pipeline_mode<synchronous>, transform_indices = @transform_4, window_bounds = array<i64: 1, 256>}, {pipeline_mode = #tpu.pipeline_mode<synchronous>, transform_indices = @transform_5, window_bounds = array<i64: 8, 16>}, {pipeline_mode = #tpu.pipeline_mode<synchronous>, transform_indices = @transform_6, window_bounds = array<i64: 1, 256>}, {transform_indices = @transform_7, window_bounds = array<i64: 1, 1, 1>}, {transform_indices = @transform_8, window_bounds = array<i64: 1, 8, 256>}, {transform_indices = @transform_9, window_bounds = array<i64: 1, 8, 256>}]} {
    %c0 = arith.constant 0 : index
    %c0_0 = arith.constant 0 : index
    %c0_1 = arith.constant 0 : index
    %0 = vector.load %arg1[%c0, %c0_0, %c0_1] : memref<1x16x256xf32, #tpu.memory_space<vmem>>, vector<1x16x256xf32>
    %1 = vector.shape_cast %0 : vector<1x16x256xf32> to vector<16x256xf32>
    %c0_2 = arith.constant 0 : index
    %c0_3 = arith.constant 0 : index
    %c0_4 = arith.constant 0 : index
    %2 = vector.load %arg2[%c0_2, %c0_3, %c0_4] : memref<1x16x256xf32, #tpu.memory_space<vmem>>, vector<1x16x256xf32>
    %3 = vector.shape_cast %2 : vector<1x16x256xf32> to vector<16x256xf32>
    %c0_5 = arith.constant 0 : index
    %c0_6 = arith.constant 0 : index
    %4 = vector.load %arg4[%c0_5, %c0_6] : memref<1x256xf32, #tpu.memory_space<vmem>>, vector<1x256xf32>
    %c0_7 = arith.constant 0 : index
    %c0_8 = arith.constant 0 : index
    %5 = vector.load %arg5[%c0_7, %c0_8] : memref<1x256xf32, #tpu.memory_space<vmem>>, vector<1x256xf32>
    %c1_i32 = arith.constant 1 : i32
    %6 = tpu.dynamic_rotate %4 by %c1_i32 dim 1 : vector<1x256xf32>, i32 -> vector<1x256xf32>
    %c1_i32_9 = arith.constant 1 : i32
    %7 = tpu.dynamic_rotate %5 by %c1_i32_9 dim 1 : vector<1x256xf32>, i32 -> vector<1x256xf32>
    %8 = arith.subf %6, %4 : vector<1x256xf32>
    %9 = math.absf %8 : vector<1x256xf32>
    %cst = arith.constant 0.000000e+00 : f32
    %10 = vector.broadcast %cst : f32 to vector<1x256xf32>
    %11 = arith.cmpf ole, %9, %10 : vector<1x256xf32>
    %12 = arith.subf %7, %5 : vector<1x256xf32>
    %13 = math.absf %12 : vector<1x256xf32>
    %cst_10 = arith.constant 3.000000e+00 : f32
    %14 = vector.broadcast %cst_10 : f32 to vector<1x256xf32>
    %15 = arith.cmpf ole, %13, %14 : vector<1x256xf32>
    %16 = arith.andi %11, %15 : vector<1x256xi1>
    %17 = arith.extui %16 : vector<1x256xi1> to vector<1x256xi32>
    %18 = arith.sitofp %17 : vector<1x256xi32> to vector<1x256xf32>
    %c2_i32 = arith.constant 2 : i32
    %19 = tpu.dynamic_rotate %4 by %c2_i32 dim 1 : vector<1x256xf32>, i32 -> vector<1x256xf32>
    %c2_i32_11 = arith.constant 2 : i32
    %20 = tpu.dynamic_rotate %5 by %c2_i32_11 dim 1 : vector<1x256xf32>, i32 -> vector<1x256xf32>
    %21 = arith.subf %19, %4 : vector<1x256xf32>
    %22 = math.absf %21 : vector<1x256xf32>
    %cst_12 = arith.constant 0.000000e+00 : f32
    %23 = vector.broadcast %cst_12 : f32 to vector<1x256xf32>
    %24 = arith.cmpf ole, %22, %23 : vector<1x256xf32>
    %25 = arith.subf %20, %5 : vector<1x256xf32>
    %26 = math.absf %25 : vector<1x256xf32>
    %cst_13 = arith.constant 3.000000e+00 : f32
    %27 = vector.broadcast %cst_13 : f32 to vector<1x256xf32>
    %28 = arith.cmpf ole, %26, %27 : vector<1x256xf32>
    %29 = arith.andi %24, %28 : vector<1x256xi1>
    %30 = arith.extui %29 : vector<1x256xi1> to vector<1x256xi32>
    %31 = arith.sitofp %30 : vector<1x256xi32> to vector<1x256xf32>
    %c3_i32 = arith.constant 3 : i32
    %32 = tpu.dynamic_rotate %4 by %c3_i32 dim 1 : vector<1x256xf32>, i32 -> vector<1x256xf32>
    %c3_i32_14 = arith.constant 3 : i32
    %33 = tpu.dynamic_rotate %5 by %c3_i32_14 dim 1 : vector<1x256xf32>, i32 -> vector<1x256xf32>
    %34 = arith.subf %32, %4 : vector<1x256xf32>
    %35 = math.absf %34 : vector<1x256xf32>
    %cst_15 = arith.constant 0.000000e+00 : f32
    %36 = vector.broadcast %cst_15 : f32 to vector<1x256xf32>
    %37 = arith.cmpf ole, %35, %36 : vector<1x256xf32>
    %38 = arith.subf %33, %5 : vector<1x256xf32>
    %39 = math.absf %38 : vector<1x256xf32>
    %cst_16 = arith.constant 3.000000e+00 : f32
    %40 = vector.broadcast %cst_16 : f32 to vector<1x256xf32>
    %41 = arith.cmpf ole, %39, %40 : vector<1x256xf32>
    %42 = arith.andi %37, %41 : vector<1x256xi1>
    %43 = arith.extui %42 : vector<1x256xi1> to vector<1x256xi32>
    %44 = arith.sitofp %43 : vector<1x256xi32> to vector<1x256xf32>
    %c255_i32 = arith.constant 255 : i32
    %45 = tpu.dynamic_rotate %4 by %c255_i32 dim 1 : vector<1x256xf32>, i32 -> vector<1x256xf32>
    %c255_i32_17 = arith.constant 255 : i32
    %46 = tpu.dynamic_rotate %5 by %c255_i32_17 dim 1 : vector<1x256xf32>, i32 -> vector<1x256xf32>
    %47 = arith.subf %45, %4 : vector<1x256xf32>
    %48 = math.absf %47 : vector<1x256xf32>
    %cst_18 = arith.constant 0.000000e+00 : f32
    %49 = vector.broadcast %cst_18 : f32 to vector<1x256xf32>
    %50 = arith.cmpf ole, %48, %49 : vector<1x256xf32>
    %51 = arith.subf %46, %5 : vector<1x256xf32>
    %52 = math.absf %51 : vector<1x256xf32>
    %cst_19 = arith.constant 3.000000e+00 : f32
    %53 = vector.broadcast %cst_19 : f32 to vector<1x256xf32>
    %54 = arith.cmpf ole, %52, %53 : vector<1x256xf32>
    %55 = arith.andi %50, %54 : vector<1x256xi1>
    %56 = arith.extui %55 : vector<1x256xi1> to vector<1x256xi32>
    %57 = arith.sitofp %56 : vector<1x256xi32> to vector<1x256xf32>
    %c254_i32 = arith.constant 254 : i32
    %58 = tpu.dynamic_rotate %4 by %c254_i32 dim 1 : vector<1x256xf32>, i32 -> vector<1x256xf32>
    %c254_i32_20 = arith.constant 254 : i32
    %59 = tpu.dynamic_rotate %5 by %c254_i32_20 dim 1 : vector<1x256xf32>, i32 -> vector<1x256xf32>
    %60 = arith.subf %58, %4 : vector<1x256xf32>
    %61 = math.absf %60 : vector<1x256xf32>
    %cst_21 = arith.constant 0.000000e+00 : f32
    %62 = vector.broadcast %cst_21 : f32 to vector<1x256xf32>
    %63 = arith.cmpf ole, %61, %62 : vector<1x256xf32>
    %64 = arith.subf %59, %5 : vector<1x256xf32>
    %65 = math.absf %64 : vector<1x256xf32>
    %cst_22 = arith.constant 3.000000e+00 : f32
    %66 = vector.broadcast %cst_22 : f32 to vector<1x256xf32>
    %67 = arith.cmpf ole, %65, %66 : vector<1x256xf32>
    %68 = arith.andi %63, %67 : vector<1x256xi1>
    %69 = arith.extui %68 : vector<1x256xi1> to vector<1x256xi32>
    %70 = arith.sitofp %69 : vector<1x256xi32> to vector<1x256xf32>
    %c253_i32 = arith.constant 253 : i32
    %71 = tpu.dynamic_rotate %4 by %c253_i32 dim 1 : vector<1x256xf32>, i32 -> vector<1x256xf32>
    %c253_i32_23 = arith.constant 253 : i32
    %72 = tpu.dynamic_rotate %5 by %c253_i32_23 dim 1 : vector<1x256xf32>, i32 -> vector<1x256xf32>
    %73 = arith.subf %71, %4 : vector<1x256xf32>
    %74 = math.absf %73 : vector<1x256xf32>
    %cst_24 = arith.constant 0.000000e+00 : f32
    %75 = vector.broadcast %cst_24 : f32 to vector<1x256xf32>
    %76 = arith.cmpf ole, %74, %75 : vector<1x256xf32>
    %77 = arith.subf %72, %5 : vector<1x256xf32>
    %78 = math.absf %77 : vector<1x256xf32>
    %cst_25 = arith.constant 3.000000e+00 : f32
    %79 = vector.broadcast %cst_25 : f32 to vector<1x256xf32>
    %80 = arith.cmpf ole, %78, %79 : vector<1x256xf32>
    %81 = arith.andi %76, %80 : vector<1x256xi1>
    %82 = arith.extui %81 : vector<1x256xi1> to vector<1x256xi32>
    %83 = arith.sitofp %82 : vector<1x256xi32> to vector<1x256xf32>
    %c16_i32 = arith.constant 16 : i32
    %84 = tpu.dynamic_rotate %4 by %c16_i32 dim 1 : vector<1x256xf32>, i32 -> vector<1x256xf32>
    %c16_i32_26 = arith.constant 16 : i32
    %85 = tpu.dynamic_rotate %5 by %c16_i32_26 dim 1 : vector<1x256xf32>, i32 -> vector<1x256xf32>
    %86 = arith.subf %84, %4 : vector<1x256xf32>
    %87 = math.absf %86 : vector<1x256xf32>
    %cst_27 = arith.constant 3.000000e+00 : f32
    %88 = vector.broadcast %cst_27 : f32 to vector<1x256xf32>
    %89 = arith.cmpf ole, %87, %88 : vector<1x256xf32>
    %90 = arith.subf %85, %5 : vector<1x256xf32>
    %91 = math.absf %90 : vector<1x256xf32>
    %cst_28 = arith.constant 0.000000e+00 : f32
    %92 = vector.broadcast %cst_28 : f32 to vector<1x256xf32>
    %93 = arith.cmpf ole, %91, %92 : vector<1x256xf32>
    %94 = arith.andi %89, %93 : vector<1x256xi1>
    %95 = arith.extui %94 : vector<1x256xi1> to vector<1x256xi32>
    %96 = arith.sitofp %95 : vector<1x256xi32> to vector<1x256xf32>
    %c32_i32 = arith.constant 32 : i32
    %97 = tpu.dynamic_rotate %4 by %c32_i32 dim 1 : vector<1x256xf32>, i32 -> vector<1x256xf32>
    %c32_i32_29 = arith.constant 32 : i32
    %98 = tpu.dynamic_rotate %5 by %c32_i32_29 dim 1 : vector<1x256xf32>, i32 -> vector<1x256xf32>
    %99 = arith.subf %97, %4 : vector<1x256xf32>
    %100 = math.absf %99 : vector<1x256xf32>
    %cst_30 = arith.constant 3.000000e+00 : f32
    %101 = vector.broadcast %cst_30 : f32 to vector<1x256xf32>
    %102 = arith.cmpf ole, %100, %101 : vector<1x256xf32>
    %103 = arith.subf %98, %5 : vector<1x256xf32>
    %104 = math.absf %103 : vector<1x256xf32>
    %cst_31 = arith.constant 0.000000e+00 : f32
    %105 = vector.broadcast %cst_31 : f32 to vector<1x256xf32>
    %106 = arith.cmpf ole, %104, %105 : vector<1x256xf32>
    %107 = arith.andi %102, %106 : vector<1x256xi1>
    %108 = arith.extui %107 : vector<1x256xi1> to vector<1x256xi32>
    %109 = arith.sitofp %108 : vector<1x256xi32> to vector<1x256xf32>
    %c48_i32 = arith.constant 48 : i32
    %110 = tpu.dynamic_rotate %4 by %c48_i32 dim 1 : vector<1x256xf32>, i32 -> vector<1x256xf32>
    %c48_i32_32 = arith.constant 48 : i32
    %111 = tpu.dynamic_rotate %5 by %c48_i32_32 dim 1 : vector<1x256xf32>, i32 -> vector<1x256xf32>
    %112 = arith.subf %110, %4 : vector<1x256xf32>
    %113 = math.absf %112 : vector<1x256xf32>
    %cst_33 = arith.constant 3.000000e+00 : f32
    %114 = vector.broadcast %cst_33 : f32 to vector<1x256xf32>
    %115 = arith.cmpf ole, %113, %114 : vector<1x256xf32>
    %116 = arith.subf %111, %5 : vector<1x256xf32>
    %117 = math.absf %116 : vector<1x256xf32>
    %cst_34 = arith.constant 0.000000e+00 : f32
    %118 = vector.broadcast %cst_34 : f32 to vector<1x256xf32>
    %119 = arith.cmpf ole, %117, %118 : vector<1x256xf32>
    %120 = arith.andi %115, %119 : vector<1x256xi1>
    %121 = arith.extui %120 : vector<1x256xi1> to vector<1x256xi32>
    %122 = arith.sitofp %121 : vector<1x256xi32> to vector<1x256xf32>
    %c240_i32 = arith.constant 240 : i32
    %123 = tpu.dynamic_rotate %4 by %c240_i32 dim 1 : vector<1x256xf32>, i32 -> vector<1x256xf32>
    %c240_i32_35 = arith.constant 240 : i32
    %124 = tpu.dynamic_rotate %5 by %c240_i32_35 dim 1 : vector<1x256xf32>, i32 -> vector<1x256xf32>
    %125 = arith.subf %123, %4 : vector<1x256xf32>
    %126 = math.absf %125 : vector<1x256xf32>
    %cst_36 = arith.constant 3.000000e+00 : f32
    %127 = vector.broadcast %cst_36 : f32 to vector<1x256xf32>
    %128 = arith.cmpf ole, %126, %127 : vector<1x256xf32>
    %129 = arith.subf %124, %5 : vector<1x256xf32>
    %130 = math.absf %129 : vector<1x256xf32>
    %cst_37 = arith.constant 0.000000e+00 : f32
    %131 = vector.broadcast %cst_37 : f32 to vector<1x256xf32>
    %132 = arith.cmpf ole, %130, %131 : vector<1x256xf32>
    %133 = arith.andi %128, %132 : vector<1x256xi1>
    %134 = arith.extui %133 : vector<1x256xi1> to vector<1x256xi32>
    %135 = arith.sitofp %134 : vector<1x256xi32> to vector<1x256xf32>
    %c224_i32 = arith.constant 224 : i32
    %136 = tpu.dynamic_rotate %4 by %c224_i32 dim 1 : vector<1x256xf32>, i32 -> vector<1x256xf32>
    %c224_i32_38 = arith.constant 224 : i32
    %137 = tpu.dynamic_rotate %5 by %c224_i32_38 dim 1 : vector<1x256xf32>, i32 -> vector<1x256xf32>
    %138 = arith.subf %136, %4 : vector<1x256xf32>
    %139 = math.absf %138 : vector<1x256xf32>
    %cst_39 = arith.constant 3.000000e+00 : f32
    %140 = vector.broadcast %cst_39 : f32 to vector<1x256xf32>
    %141 = arith.cmpf ole, %139, %140 : vector<1x256xf32>
    %142 = arith.subf %137, %5 : vector<1x256xf32>
    %143 = math.absf %142 : vector<1x256xf32>
    %cst_40 = arith.constant 0.000000e+00 : f32
    %144 = vector.broadcast %cst_40 : f32 to vector<1x256xf32>
    %145 = arith.cmpf ole, %143, %144 : vector<1x256xf32>
    %146 = arith.andi %141, %145 : vector<1x256xi1>
    %147 = arith.extui %146 : vector<1x256xi1> to vector<1x256xi32>
    %148 = arith.sitofp %147 : vector<1x256xi32> to vector<1x256xf32>
    %c208_i32 = arith.constant 208 : i32
    %149 = tpu.dynamic_rotate %4 by %c208_i32 dim 1 : vector<1x256xf32>, i32 -> vector<1x256xf32>
    %c208_i32_41 = arith.constant 208 : i32
    %150 = tpu.dynamic_rotate %5 by %c208_i32_41 dim 1 : vector<1x256xf32>, i32 -> vector<1x256xf32>
    %151 = arith.subf %149, %4 : vector<1x256xf32>
    %152 = math.absf %151 : vector<1x256xf32>
    %cst_42 = arith.constant 3.000000e+00 : f32
    %153 = vector.broadcast %cst_42 : f32 to vector<1x256xf32>
    %154 = arith.cmpf ole, %152, %153 : vector<1x256xf32>
    %155 = arith.subf %150, %5 : vector<1x256xf32>
    %156 = math.absf %155 : vector<1x256xf32>
    %cst_43 = arith.constant 0.000000e+00 : f32
    %157 = vector.broadcast %cst_43 : f32 to vector<1x256xf32>
    %158 = arith.cmpf ole, %156, %157 : vector<1x256xf32>
    %159 = arith.andi %154, %158 : vector<1x256xi1>
    %160 = arith.extui %159 : vector<1x256xi1> to vector<1x256xi32>
    %161 = arith.sitofp %160 : vector<1x256xi32> to vector<1x256xf32>
    %c0_44 = arith.constant 0 : index
    %c0_45 = arith.constant 0 : index
    %162 = vector.load %arg3[%c0_44, %c0_45] : memref<16x16xf32, #tpu.memory_space<vmem>>, vector<16x16xf32>
    %c1_i32_46 = arith.constant 1 : i32
    %163 = tpu.dynamic_rotate %1 by %c1_i32_46 dim 1 : vector<16x256xf32>, i32 -> vector<16x256xf32>
    %164 = vector.broadcast %18 : vector<1x256xf32> to vector<16x256xf32>
    %165 = arith.mulf %164, %163 : vector<16x256xf32>
    %166 = arith.addf %1, %165 : vector<16x256xf32>
    %c2_i32_47 = arith.constant 2 : i32
    %167 = tpu.dynamic_rotate %1 by %c2_i32_47 dim 1 : vector<16x256xf32>, i32 -> vector<16x256xf32>
    %168 = vector.broadcast %31 : vector<1x256xf32> to vector<16x256xf32>
    %169 = arith.mulf %168, %167 : vector<16x256xf32>
    %170 = arith.addf %166, %169 : vector<16x256xf32>
    %c3_i32_48 = arith.constant 3 : i32
    %171 = tpu.dynamic_rotate %1 by %c3_i32_48 dim 1 : vector<16x256xf32>, i32 -> vector<16x256xf32>
    %172 = vector.broadcast %44 : vector<1x256xf32> to vector<16x256xf32>
    %173 = arith.mulf %172, %171 : vector<16x256xf32>
    %174 = arith.addf %170, %173 : vector<16x256xf32>
    %c255_i32_49 = arith.constant 255 : i32
    %175 = tpu.dynamic_rotate %1 by %c255_i32_49 dim 1 : vector<16x256xf32>, i32 -> vector<16x256xf32>
    %176 = vector.broadcast %57 : vector<1x256xf32> to vector<16x256xf32>
    %177 = arith.mulf %176, %175 : vector<16x256xf32>
    %178 = arith.addf %174, %177 : vector<16x256xf32>
    %c254_i32_50 = arith.constant 254 : i32
    %179 = tpu.dynamic_rotate %1 by %c254_i32_50 dim 1 : vector<16x256xf32>, i32 -> vector<16x256xf32>
    %180 = vector.broadcast %70 : vector<1x256xf32> to vector<16x256xf32>
    %181 = arith.mulf %180, %179 : vector<16x256xf32>
    %182 = arith.addf %178, %181 : vector<16x256xf32>
    %c253_i32_51 = arith.constant 253 : i32
    %183 = tpu.dynamic_rotate %1 by %c253_i32_51 dim 1 : vector<16x256xf32>, i32 -> vector<16x256xf32>
    %184 = vector.broadcast %83 : vector<1x256xf32> to vector<16x256xf32>
    %185 = arith.mulf %184, %183 : vector<16x256xf32>
    %186 = arith.addf %182, %185 : vector<16x256xf32>
    %c16_i32_52 = arith.constant 16 : i32
    %187 = tpu.dynamic_rotate %186 by %c16_i32_52 dim 1 : vector<16x256xf32>, i32 -> vector<16x256xf32>
    %188 = vector.broadcast %96 : vector<1x256xf32> to vector<16x256xf32>
    %189 = arith.mulf %188, %187 : vector<16x256xf32>
    %190 = arith.addf %186, %189 : vector<16x256xf32>
    %c32_i32_53 = arith.constant 32 : i32
    %191 = tpu.dynamic_rotate %186 by %c32_i32_53 dim 1 : vector<16x256xf32>, i32 -> vector<16x256xf32>
    %192 = vector.broadcast %109 : vector<1x256xf32> to vector<16x256xf32>
    %193 = arith.mulf %192, %191 : vector<16x256xf32>
    %194 = arith.addf %190, %193 : vector<16x256xf32>
    %c48_i32_54 = arith.constant 48 : i32
    %195 = tpu.dynamic_rotate %186 by %c48_i32_54 dim 1 : vector<16x256xf32>, i32 -> vector<16x256xf32>
    %196 = vector.broadcast %122 : vector<1x256xf32> to vector<16x256xf32>
    %197 = arith.mulf %196, %195 : vector<16x256xf32>
    %198 = arith.addf %194, %197 : vector<16x256xf32>
    %c240_i32_55 = arith.constant 240 : i32
    %199 = tpu.dynamic_rotate %186 by %c240_i32_55 dim 1 : vector<16x256xf32>, i32 -> vector<16x256xf32>
    %200 = vector.broadcast %135 : vector<1x256xf32> to vector<16x256xf32>
    %201 = arith.mulf %200, %199 : vector<16x256xf32>
    %202 = arith.addf %198, %201 : vector<16x256xf32>
    %c224_i32_56 = arith.constant 224 : i32
    %203 = tpu.dynamic_rotate %186 by %c224_i32_56 dim 1 : vector<16x256xf32>, i32 -> vector<16x256xf32>
    %204 = vector.broadcast %148 : vector<1x256xf32> to vector<16x256xf32>
    %205 = arith.mulf %204, %203 : vector<16x256xf32>
    %206 = arith.addf %202, %205 : vector<16x256xf32>
    %c208_i32_57 = arith.constant 208 : i32
    %207 = tpu.dynamic_rotate %186 by %c208_i32_57 dim 1 : vector<16x256xf32>, i32 -> vector<16x256xf32>
    %208 = vector.broadcast %161 : vector<1x256xf32> to vector<16x256xf32>
    %209 = arith.mulf %208, %207 : vector<16x256xf32>
    %210 = arith.addf %206, %209 : vector<16x256xf32>
    %cst_58 = arith.constant dense<0.000000e+00> : vector<16x256xf32>
    %211 = tpu.matmul %162, %210, %cst_58 {dimension_numbers = #tpu.dot_dimension_numbers<[1], [0], [0], [1], [0, 0, 1, 1], [], []>} : vector<16x16xf32>, vector<16x256xf32>, vector<16x256xf32> -> vector<16x256xf32>
    %c1_i32_59 = arith.constant 1 : i32
    %212 = tpu.dynamic_rotate %3 by %c1_i32_59 dim 1 : vector<16x256xf32>, i32 -> vector<16x256xf32>
    %213 = vector.broadcast %18 : vector<1x256xf32> to vector<16x256xf32>
    %214 = arith.mulf %213, %212 : vector<16x256xf32>
    %215 = arith.addf %3, %214 : vector<16x256xf32>
    %c2_i32_60 = arith.constant 2 : i32
    %216 = tpu.dynamic_rotate %3 by %c2_i32_60 dim 1 : vector<16x256xf32>, i32 -> vector<16x256xf32>
    %217 = vector.broadcast %31 : vector<1x256xf32> to vector<16x256xf32>
    %218 = arith.mulf %217, %216 : vector<16x256xf32>
    %219 = arith.addf %215, %218 : vector<16x256xf32>
    %c3_i32_61 = arith.constant 3 : i32
    %220 = tpu.dynamic_rotate %3 by %c3_i32_61 dim 1 : vector<16x256xf32>, i32 -> vector<16x256xf32>
    %221 = vector.broadcast %44 : vector<1x256xf32> to vector<16x256xf32>
    %222 = arith.mulf %221, %220 : vector<16x256xf32>
    %223 = arith.addf %219, %222 : vector<16x256xf32>
    %c255_i32_62 = arith.constant 255 : i32
    %224 = tpu.dynamic_rotate %3 by %c255_i32_62 dim 1 : vector<16x256xf32>, i32 -> vector<16x256xf32>
    %225 = vector.broadcast %57 : vector<1x256xf32> to vector<16x256xf32>
    %226 = arith.mulf %225, %224 : vector<16x256xf32>
    %227 = arith.addf %223, %226 : vector<16x256xf32>
    %c254_i32_63 = arith.constant 254 : i32
    %228 = tpu.dynamic_rotate %3 by %c254_i32_63 dim 1 : vector<16x256xf32>, i32 -> vector<16x256xf32>
    %229 = vector.broadcast %70 : vector<1x256xf32> to vector<16x256xf32>
    %230 = arith.mulf %229, %228 : vector<16x256xf32>
    %231 = arith.addf %227, %230 : vector<16x256xf32>
    %c253_i32_64 = arith.constant 253 : i32
    %232 = tpu.dynamic_rotate %3 by %c253_i32_64 dim 1 : vector<16x256xf32>, i32 -> vector<16x256xf32>
    %233 = vector.broadcast %83 : vector<1x256xf32> to vector<16x256xf32>
    %234 = arith.mulf %233, %232 : vector<16x256xf32>
    %235 = arith.addf %231, %234 : vector<16x256xf32>
    %c16_i32_65 = arith.constant 16 : i32
    %236 = tpu.dynamic_rotate %235 by %c16_i32_65 dim 1 : vector<16x256xf32>, i32 -> vector<16x256xf32>
    %237 = vector.broadcast %96 : vector<1x256xf32> to vector<16x256xf32>
    %238 = arith.mulf %237, %236 : vector<16x256xf32>
    %239 = arith.addf %235, %238 : vector<16x256xf32>
    %c32_i32_66 = arith.constant 32 : i32
    %240 = tpu.dynamic_rotate %235 by %c32_i32_66 dim 1 : vector<16x256xf32>, i32 -> vector<16x256xf32>
    %241 = vector.broadcast %109 : vector<1x256xf32> to vector<16x256xf32>
    %242 = arith.mulf %241, %240 : vector<16x256xf32>
    %243 = arith.addf %239, %242 : vector<16x256xf32>
    %c48_i32_67 = arith.constant 48 : i32
    %244 = tpu.dynamic_rotate %235 by %c48_i32_67 dim 1 : vector<16x256xf32>, i32 -> vector<16x256xf32>
    %245 = vector.broadcast %122 : vector<1x256xf32> to vector<16x256xf32>
    %246 = arith.mulf %245, %244 : vector<16x256xf32>
    %247 = arith.addf %243, %246 : vector<16x256xf32>
    %c240_i32_68 = arith.constant 240 : i32
    %248 = tpu.dynamic_rotate %235 by %c240_i32_68 dim 1 : vector<16x256xf32>, i32 -> vector<16x256xf32>
    %249 = vector.broadcast %135 : vector<1x256xf32> to vector<16x256xf32>
    %250 = arith.mulf %249, %248 : vector<16x256xf32>
    %251 = arith.addf %247, %250 : vector<16x256xf32>
    %c224_i32_69 = arith.constant 224 : i32
    %252 = tpu.dynamic_rotate %235 by %c224_i32_69 dim 1 : vector<16x256xf32>, i32 -> vector<16x256xf32>
    %253 = vector.broadcast %148 : vector<1x256xf32> to vector<16x256xf32>
    %254 = arith.mulf %253, %252 : vector<16x256xf32>
    %255 = arith.addf %251, %254 : vector<16x256xf32>
    %c208_i32_70 = arith.constant 208 : i32
    %256 = tpu.dynamic_rotate %235 by %c208_i32_70 dim 1 : vector<16x256xf32>, i32 -> vector<16x256xf32>
    %257 = vector.broadcast %161 : vector<1x256xf32> to vector<16x256xf32>
    %258 = arith.mulf %257, %256 : vector<16x256xf32>
    %259 = arith.addf %255, %258 : vector<16x256xf32>
    %cst_71 = arith.constant dense<0.000000e+00> : vector<16x256xf32>
    %260 = tpu.matmul %162, %259, %cst_71 {dimension_numbers = #tpu.dot_dimension_numbers<[1], [0], [0], [1], [0, 0, 1, 1], [], []>} : vector<16x16xf32>, vector<16x256xf32>, vector<16x256xf32> -> vector<16x256xf32>
    %261 = arith.mulf %1, %1 : vector<16x256xf32>
    %c1_i32_72 = arith.constant 1 : i32
    %262 = tpu.dynamic_rotate %261 by %c1_i32_72 dim 1 : vector<16x256xf32>, i32 -> vector<16x256xf32>
    %263 = vector.broadcast %18 : vector<1x256xf32> to vector<16x256xf32>
    %264 = arith.mulf %263, %262 : vector<16x256xf32>
    %265 = arith.addf %261, %264 : vector<16x256xf32>
    %c2_i32_73 = arith.constant 2 : i32
    %266 = tpu.dynamic_rotate %261 by %c2_i32_73 dim 1 : vector<16x256xf32>, i32 -> vector<16x256xf32>
    %267 = vector.broadcast %31 : vector<1x256xf32> to vector<16x256xf32>
    %268 = arith.mulf %267, %266 : vector<16x256xf32>
    %269 = arith.addf %265, %268 : vector<16x256xf32>
    %c3_i32_74 = arith.constant 3 : i32
    %270 = tpu.dynamic_rotate %261 by %c3_i32_74 dim 1 : vector<16x256xf32>, i32 -> vector<16x256xf32>
    %271 = vector.broadcast %44 : vector<1x256xf32> to vector<16x256xf32>
    %272 = arith.mulf %271, %270 : vector<16x256xf32>
    %273 = arith.addf %269, %272 : vector<16x256xf32>
    %c255_i32_75 = arith.constant 255 : i32
    %274 = tpu.dynamic_rotate %261 by %c255_i32_75 dim 1 : vector<16x256xf32>, i32 -> vector<16x256xf32>
    %275 = vector.broadcast %57 : vector<1x256xf32> to vector<16x256xf32>
    %276 = arith.mulf %275, %274 : vector<16x256xf32>
    %277 = arith.addf %273, %276 : vector<16x256xf32>
    %c254_i32_76 = arith.constant 254 : i32
    %278 = tpu.dynamic_rotate %261 by %c254_i32_76 dim 1 : vector<16x256xf32>, i32 -> vector<16x256xf32>
    %279 = vector.broadcast %70 : vector<1x256xf32> to vector<16x256xf32>
    %280 = arith.mulf %279, %278 : vector<16x256xf32>
    %281 = arith.addf %277, %280 : vector<16x256xf32>
    %c253_i32_77 = arith.constant 253 : i32
    %282 = tpu.dynamic_rotate %261 by %c253_i32_77 dim 1 : vector<16x256xf32>, i32 -> vector<16x256xf32>
    %283 = vector.broadcast %83 : vector<1x256xf32> to vector<16x256xf32>
    %284 = arith.mulf %283, %282 : vector<16x256xf32>
    %285 = arith.addf %281, %284 : vector<16x256xf32>
    %c16_i32_78 = arith.constant 16 : i32
    %286 = tpu.dynamic_rotate %285 by %c16_i32_78 dim 1 : vector<16x256xf32>, i32 -> vector<16x256xf32>
    %287 = vector.broadcast %96 : vector<1x256xf32> to vector<16x256xf32>
    %288 = arith.mulf %287, %286 : vector<16x256xf32>
    %289 = arith.addf %285, %288 : vector<16x256xf32>
    %c32_i32_79 = arith.constant 32 : i32
    %290 = tpu.dynamic_rotate %285 by %c32_i32_79 dim 1 : vector<16x256xf32>, i32 -> vector<16x256xf32>
    %291 = vector.broadcast %109 : vector<1x256xf32> to vector<16x256xf32>
    %292 = arith.mulf %291, %290 : vector<16x256xf32>
    %293 = arith.addf %289, %292 : vector<16x256xf32>
    %c48_i32_80 = arith.constant 48 : i32
    %294 = tpu.dynamic_rotate %285 by %c48_i32_80 dim 1 : vector<16x256xf32>, i32 -> vector<16x256xf32>
    %295 = vector.broadcast %122 : vector<1x256xf32> to vector<16x256xf32>
    %296 = arith.mulf %295, %294 : vector<16x256xf32>
    %297 = arith.addf %293, %296 : vector<16x256xf32>
    %c240_i32_81 = arith.constant 240 : i32
    %298 = tpu.dynamic_rotate %285 by %c240_i32_81 dim 1 : vector<16x256xf32>, i32 -> vector<16x256xf32>
    %299 = vector.broadcast %135 : vector<1x256xf32> to vector<16x256xf32>
    %300 = arith.mulf %299, %298 : vector<16x256xf32>
    %301 = arith.addf %297, %300 : vector<16x256xf32>
    %c224_i32_82 = arith.constant 224 : i32
    %302 = tpu.dynamic_rotate %285 by %c224_i32_82 dim 1 : vector<16x256xf32>, i32 -> vector<16x256xf32>
    %303 = vector.broadcast %148 : vector<1x256xf32> to vector<16x256xf32>
    %304 = arith.mulf %303, %302 : vector<16x256xf32>
    %305 = arith.addf %301, %304 : vector<16x256xf32>
    %c208_i32_83 = arith.constant 208 : i32
    %306 = tpu.dynamic_rotate %285 by %c208_i32_83 dim 1 : vector<16x256xf32>, i32 -> vector<16x256xf32>
    %307 = vector.broadcast %161 : vector<1x256xf32> to vector<16x256xf32>
    %308 = arith.mulf %307, %306 : vector<16x256xf32>
    %309 = arith.addf %305, %308 : vector<16x256xf32>
    %cst_84 = arith.constant dense<0.000000e+00> : vector<16x256xf32>
    %310 = tpu.matmul %162, %309, %cst_84 {dimension_numbers = #tpu.dot_dimension_numbers<[1], [0], [0], [1], [0, 0, 1, 1], [], []>} : vector<16x16xf32>, vector<16x256xf32>, vector<16x256xf32> -> vector<16x256xf32>
    %311 = arith.mulf %3, %3 : vector<16x256xf32>
    %c1_i32_85 = arith.constant 1 : i32
    %312 = tpu.dynamic_rotate %311 by %c1_i32_85 dim 1 : vector<16x256xf32>, i32 -> vector<16x256xf32>
    %313 = vector.broadcast %18 : vector<1x256xf32> to vector<16x256xf32>
    %314 = arith.mulf %313, %312 : vector<16x256xf32>
    %315 = arith.addf %311, %314 : vector<16x256xf32>
    %c2_i32_86 = arith.constant 2 : i32
    %316 = tpu.dynamic_rotate %311 by %c2_i32_86 dim 1 : vector<16x256xf32>, i32 -> vector<16x256xf32>
    %317 = vector.broadcast %31 : vector<1x256xf32> to vector<16x256xf32>
    %318 = arith.mulf %317, %316 : vector<16x256xf32>
    %319 = arith.addf %315, %318 : vector<16x256xf32>
    %c3_i32_87 = arith.constant 3 : i32
    %320 = tpu.dynamic_rotate %311 by %c3_i32_87 dim 1 : vector<16x256xf32>, i32 -> vector<16x256xf32>
    %321 = vector.broadcast %44 : vector<1x256xf32> to vector<16x256xf32>
    %322 = arith.mulf %321, %320 : vector<16x256xf32>
    %323 = arith.addf %319, %322 : vector<16x256xf32>
    %c255_i32_88 = arith.constant 255 : i32
    %324 = tpu.dynamic_rotate %311 by %c255_i32_88 dim 1 : vector<16x256xf32>, i32 -> vector<16x256xf32>
    %325 = vector.broadcast %57 : vector<1x256xf32> to vector<16x256xf32>
    %326 = arith.mulf %325, %324 : vector<16x256xf32>
    %327 = arith.addf %323, %326 : vector<16x256xf32>
    %c254_i32_89 = arith.constant 254 : i32
    %328 = tpu.dynamic_rotate %311 by %c254_i32_89 dim 1 : vector<16x256xf32>, i32 -> vector<16x256xf32>
    %329 = vector.broadcast %70 : vector<1x256xf32> to vector<16x256xf32>
    %330 = arith.mulf %329, %328 : vector<16x256xf32>
    %331 = arith.addf %327, %330 : vector<16x256xf32>
    %c253_i32_90 = arith.constant 253 : i32
    %332 = tpu.dynamic_rotate %311 by %c253_i32_90 dim 1 : vector<16x256xf32>, i32 -> vector<16x256xf32>
    %333 = vector.broadcast %83 : vector<1x256xf32> to vector<16x256xf32>
    %334 = arith.mulf %333, %332 : vector<16x256xf32>
    %335 = arith.addf %331, %334 : vector<16x256xf32>
    %c16_i32_91 = arith.constant 16 : i32
    %336 = tpu.dynamic_rotate %335 by %c16_i32_91 dim 1 : vector<16x256xf32>, i32 -> vector<16x256xf32>
    %337 = vector.broadcast %96 : vector<1x256xf32> to vector<16x256xf32>
    %338 = arith.mulf %337, %336 : vector<16x256xf32>
    %339 = arith.addf %335, %338 : vector<16x256xf32>
    %c32_i32_92 = arith.constant 32 : i32
    %340 = tpu.dynamic_rotate %335 by %c32_i32_92 dim 1 : vector<16x256xf32>, i32 -> vector<16x256xf32>
    %341 = vector.broadcast %109 : vector<1x256xf32> to vector<16x256xf32>
    %342 = arith.mulf %341, %340 : vector<16x256xf32>
    %343 = arith.addf %339, %342 : vector<16x256xf32>
    %c48_i32_93 = arith.constant 48 : i32
    %344 = tpu.dynamic_rotate %335 by %c48_i32_93 dim 1 : vector<16x256xf32>, i32 -> vector<16x256xf32>
    %345 = vector.broadcast %122 : vector<1x256xf32> to vector<16x256xf32>
    %346 = arith.mulf %345, %344 : vector<16x256xf32>
    %347 = arith.addf %343, %346 : vector<16x256xf32>
    %c240_i32_94 = arith.constant 240 : i32
    %348 = tpu.dynamic_rotate %335 by %c240_i32_94 dim 1 : vector<16x256xf32>, i32 -> vector<16x256xf32>
    %349 = vector.broadcast %135 : vector<1x256xf32> to vector<16x256xf32>
    %350 = arith.mulf %349, %348 : vector<16x256xf32>
    %351 = arith.addf %347, %350 : vector<16x256xf32>
    %c224_i32_95 = arith.constant 224 : i32
    %352 = tpu.dynamic_rotate %335 by %c224_i32_95 dim 1 : vector<16x256xf32>, i32 -> vector<16x256xf32>
    %353 = vector.broadcast %148 : vector<1x256xf32> to vector<16x256xf32>
    %354 = arith.mulf %353, %352 : vector<16x256xf32>
    %355 = arith.addf %351, %354 : vector<16x256xf32>
    %c208_i32_96 = arith.constant 208 : i32
    %356 = tpu.dynamic_rotate %335 by %c208_i32_96 dim 1 : vector<16x256xf32>, i32 -> vector<16x256xf32>
    %357 = vector.broadcast %161 : vector<1x256xf32> to vector<16x256xf32>
    %358 = arith.mulf %357, %356 : vector<16x256xf32>
    %359 = arith.addf %355, %358 : vector<16x256xf32>
    %cst_97 = arith.constant dense<0.000000e+00> : vector<16x256xf32>
    %360 = tpu.matmul %162, %359, %cst_97 {dimension_numbers = #tpu.dot_dimension_numbers<[1], [0], [0], [1], [0, 0, 1, 1], [], []>} : vector<16x16xf32>, vector<16x256xf32>, vector<16x256xf32> -> vector<16x256xf32>
    %361 = arith.mulf %1, %3 : vector<16x256xf32>
    %c1_i32_98 = arith.constant 1 : i32
    %362 = tpu.dynamic_rotate %361 by %c1_i32_98 dim 1 : vector<16x256xf32>, i32 -> vector<16x256xf32>
    %363 = vector.broadcast %18 : vector<1x256xf32> to vector<16x256xf32>
    %364 = arith.mulf %363, %362 : vector<16x256xf32>
    %365 = arith.addf %361, %364 : vector<16x256xf32>
    %c2_i32_99 = arith.constant 2 : i32
    %366 = tpu.dynamic_rotate %361 by %c2_i32_99 dim 1 : vector<16x256xf32>, i32 -> vector<16x256xf32>
    %367 = vector.broadcast %31 : vector<1x256xf32> to vector<16x256xf32>
    %368 = arith.mulf %367, %366 : vector<16x256xf32>
    %369 = arith.addf %365, %368 : vector<16x256xf32>
    %c3_i32_100 = arith.constant 3 : i32
    %370 = tpu.dynamic_rotate %361 by %c3_i32_100 dim 1 : vector<16x256xf32>, i32 -> vector<16x256xf32>
    %371 = vector.broadcast %44 : vector<1x256xf32> to vector<16x256xf32>
    %372 = arith.mulf %371, %370 : vector<16x256xf32>
    %373 = arith.addf %369, %372 : vector<16x256xf32>
    %c255_i32_101 = arith.constant 255 : i32
    %374 = tpu.dynamic_rotate %361 by %c255_i32_101 dim 1 : vector<16x256xf32>, i32 -> vector<16x256xf32>
    %375 = vector.broadcast %57 : vector<1x256xf32> to vector<16x256xf32>
    %376 = arith.mulf %375, %374 : vector<16x256xf32>
    %377 = arith.addf %373, %376 : vector<16x256xf32>
    %c254_i32_102 = arith.constant 254 : i32
    %378 = tpu.dynamic_rotate %361 by %c254_i32_102 dim 1 : vector<16x256xf32>, i32 -> vector<16x256xf32>
    %379 = vector.broadcast %70 : vector<1x256xf32> to vector<16x256xf32>
    %380 = arith.mulf %379, %378 : vector<16x256xf32>
    %381 = arith.addf %377, %380 : vector<16x256xf32>
    %c253_i32_103 = arith.constant 253 : i32
    %382 = tpu.dynamic_rotate %361 by %c253_i32_103 dim 1 : vector<16x256xf32>, i32 -> vector<16x256xf32>
    %383 = vector.broadcast %83 : vector<1x256xf32> to vector<16x256xf32>
    %384 = arith.mulf %383, %382 : vector<16x256xf32>
    %385 = arith.addf %381, %384 : vector<16x256xf32>
    %c16_i32_104 = arith.constant 16 : i32
    %386 = tpu.dynamic_rotate %385 by %c16_i32_104 dim 1 : vector<16x256xf32>, i32 -> vector<16x256xf32>
    %387 = vector.broadcast %96 : vector<1x256xf32> to vector<16x256xf32>
    %388 = arith.mulf %387, %386 : vector<16x256xf32>
    %389 = arith.addf %385, %388 : vector<16x256xf32>
    %c32_i32_105 = arith.constant 32 : i32
    %390 = tpu.dynamic_rotate %385 by %c32_i32_105 dim 1 : vector<16x256xf32>, i32 -> vector<16x256xf32>
    %391 = vector.broadcast %109 : vector<1x256xf32> to vector<16x256xf32>
    %392 = arith.mulf %391, %390 : vector<16x256xf32>
    %393 = arith.addf %389, %392 : vector<16x256xf32>
    %c48_i32_106 = arith.constant 48 : i32
    %394 = tpu.dynamic_rotate %385 by %c48_i32_106 dim 1 : vector<16x256xf32>, i32 -> vector<16x256xf32>
    %395 = vector.broadcast %122 : vector<1x256xf32> to vector<16x256xf32>
    %396 = arith.mulf %395, %394 : vector<16x256xf32>
    %397 = arith.addf %393, %396 : vector<16x256xf32>
    %c240_i32_107 = arith.constant 240 : i32
    %398 = tpu.dynamic_rotate %385 by %c240_i32_107 dim 1 : vector<16x256xf32>, i32 -> vector<16x256xf32>
    %399 = vector.broadcast %135 : vector<1x256xf32> to vector<16x256xf32>
    %400 = arith.mulf %399, %398 : vector<16x256xf32>
    %401 = arith.addf %397, %400 : vector<16x256xf32>
    %c224_i32_108 = arith.constant 224 : i32
    %402 = tpu.dynamic_rotate %385 by %c224_i32_108 dim 1 : vector<16x256xf32>, i32 -> vector<16x256xf32>
    %403 = vector.broadcast %148 : vector<1x256xf32> to vector<16x256xf32>
    %404 = arith.mulf %403, %402 : vector<16x256xf32>
    %405 = arith.addf %401, %404 : vector<16x256xf32>
    %c208_i32_109 = arith.constant 208 : i32
    %406 = tpu.dynamic_rotate %385 by %c208_i32_109 dim 1 : vector<16x256xf32>, i32 -> vector<16x256xf32>
    %407 = vector.broadcast %161 : vector<1x256xf32> to vector<16x256xf32>
    %408 = arith.mulf %407, %406 : vector<16x256xf32>
    %409 = arith.addf %405, %408 : vector<16x256xf32>
    %cst_110 = arith.constant dense<0.000000e+00> : vector<16x256xf32>
    %410 = tpu.matmul %162, %409, %cst_110 {dimension_numbers = #tpu.dot_dimension_numbers<[1], [0], [0], [1], [0, 0, 1, 1], [], []>} : vector<16x16xf32>, vector<16x256xf32>, vector<16x256xf32> -> vector<16x256xf32>
    %cst_111 = arith.constant 0.002915452 : f32
    %411 = vector.broadcast %cst_111 : f32 to vector<16x256xf32>
    %412 = arith.mulf %211, %411 : vector<16x256xf32>
    %cst_112 = arith.constant 0.002915452 : f32
    %413 = vector.broadcast %cst_112 : f32 to vector<16x256xf32>
    %414 = arith.mulf %260, %413 : vector<16x256xf32>
    %415 = arith.mulf %414, %211 : vector<16x256xf32>
    %416 = arith.subf %410, %415 : vector<16x256xf32>
    %417 = arith.mulf %412, %260 : vector<16x256xf32>
    %418 = arith.subf %416, %417 : vector<16x256xf32>
    %419 = arith.mulf %412, %414 : vector<16x256xf32>
    %cst_113 = arith.constant 3.430000e+02 : f32
    %420 = vector.broadcast %cst_113 : f32 to vector<16x256xf32>
    %421 = arith.mulf %419, %420 : vector<16x256xf32>
    %422 = arith.addf %418, %421 : vector<16x256xf32>
    %cst_114 = arith.constant 2.000000e+00 : f32
    %423 = vector.broadcast %cst_114 : f32 to vector<16x256xf32>
    %424 = arith.mulf %423, %412 : vector<16x256xf32>
    %425 = arith.mulf %424, %211 : vector<16x256xf32>
    %426 = arith.subf %310, %425 : vector<16x256xf32>
    %427 = arith.mulf %412, %412 : vector<16x256xf32>
    %cst_115 = arith.constant 3.430000e+02 : f32
    %428 = vector.broadcast %cst_115 : f32 to vector<16x256xf32>
    %429 = arith.mulf %427, %428 : vector<16x256xf32>
    %430 = arith.addf %426, %429 : vector<16x256xf32>
    %cst_116 = arith.constant 2.000000e+00 : f32
    %431 = vector.broadcast %cst_116 : f32 to vector<16x256xf32>
    %432 = arith.mulf %431, %414 : vector<16x256xf32>
    %433 = arith.mulf %432, %260 : vector<16x256xf32>
    %434 = arith.subf %360, %433 : vector<16x256xf32>
    %435 = arith.mulf %414, %414 : vector<16x256xf32>
    %cst_117 = arith.constant 3.430000e+02 : f32
    %436 = vector.broadcast %cst_117 : f32 to vector<16x256xf32>
    %437 = arith.mulf %435, %436 : vector<16x256xf32>
    %438 = arith.addf %434, %437 : vector<16x256xf32>
    %439 = arith.mulf %422, %422 : vector<16x256xf32>
    %440 = arith.mulf %430, %438 : vector<16x256xf32>
    %cst_118 = arith.constant 9.99999974E-6 : f32
    %441 = vector.broadcast %cst_118 : f32 to vector<16x256xf32>
    %442 = arith.addf %440, %441 : vector<16x256xf32>
    %443 = tpu.reciprocal %442 {approx = true} : vector<16x256xf32> -> vector<16x256xf32>
    %444 = arith.mulf %439, %443 : vector<16x256xf32>
    %cst_119 = arith.constant 0.000000e+00 : f32
    %445 = vector.broadcast %cst_119 : f32 to vector<1x1x1xf32>
    %446 = vector.shape_cast %444 : vector<16x256xf32> to vector<1x16x256xf32>
    %cst_120 = arith.constant dense<0.000000e+00> : vector<1xf32>
    %447 = vector.multi_reduction <add>, %446, %cst_120 [1, 2] : vector<1x16x256xf32> to vector<1xf32>
    %448 = vector.shape_cast %447 : vector<1xf32> to vector<1x1x1xf32>
    %449 = vector.extract %448[0, 0, 0] : f32 from vector<1x1x1xf32>
    %450 = vector.broadcast %449 : f32 to vector<1x1x1xf32>
    %451 = arith.addf %445, %450 : vector<1x1x1xf32>
    %c0_121 = arith.constant 0 : index
    %c0_122 = arith.constant 0 : index
    %c0_123 = arith.constant 0 : index
    %452 = vector.load %arg8[%c0_121, %c0_122, %c0_123] : memref<1x1x1xf32, #tpu.memory_space<vmem>>, vector<1x1x1xf32>
    tpu.vector_store %arg8[%c0_121, %c0_122, %c0_123], %451 {strides = array<i32>} : memref<1x1x1xf32, #tpu.memory_space<vmem>>, vector<1x1x1xf32>,
    %c0_124 = arith.constant 0 : index
    %c0_125 = arith.constant 0 : index
    %453 = vector.load %arg6[%c0_124, %c0_125] : memref<8x16xf32, #tpu.memory_space<vmem>>, vector<8x16xf32>
    %c0_126 = arith.constant 0 : index
    %c0_127 = arith.constant 0 : index
    %454 = vector.load %arg7[%c0_126, %c0_127] : memref<1x256xf32, #tpu.memory_space<vmem>>, vector<1x256xf32>
    %c1_i32_128 = arith.constant 1 : i32
    %455 = tpu.dynamic_rotate %1 by %c1_i32_128 dim 1 : vector<16x256xf32>, i32 -> vector<16x256xf32>
    %456 = vector.broadcast %18 : vector<1x256xf32> to vector<16x256xf32>
    %457 = arith.mulf %456, %455 : vector<16x256xf32>
    %458 = arith.addf %1, %457 : vector<16x256xf32>
    %c255_i32_129 = arith.constant 255 : i32
    %459 = tpu.dynamic_rotate %1 by %c255_i32_129 dim 1 : vector<16x256xf32>, i32 -> vector<16x256xf32>
    %460 = vector.broadcast %57 : vector<1x256xf32> to vector<16x256xf32>
    %461 = arith.mulf %460, %459 : vector<16x256xf32>
    %462 = arith.addf %458, %461 : vector<16x256xf32>
    %c16_i32_130 = arith.constant 16 : i32
    %463 = tpu.dynamic_rotate %462 by %c16_i32_130 dim 1 : vector<16x256xf32>, i32 -> vector<16x256xf32>
    %464 = vector.broadcast %96 : vector<1x256xf32> to vector<16x256xf32>
    %465 = arith.mulf %464, %463 : vector<16x256xf32>
    %466 = arith.addf %462, %465 : vector<16x256xf32>
    %c240_i32_131 = arith.constant 240 : i32
    %467 = tpu.dynamic_rotate %462 by %c240_i32_131 dim 1 : vector<16x256xf32>, i32 -> vector<16x256xf32>
    %468 = vector.broadcast %135 : vector<1x256xf32> to vector<16x256xf32>
    %469 = arith.mulf %468, %467 : vector<16x256xf32>
    %470 = arith.addf %466, %469 : vector<16x256xf32>
    %471 = vector.broadcast %454 : vector<1x256xf32> to vector<16x256xf32>
    %472 = arith.mulf %470, %471 : vector<16x256xf32>
    %cst_132 = arith.constant dense<0.000000e+00> : vector<8x256xf32>
    %473 = tpu.matmul %453, %472, %cst_132 {dimension_numbers = #tpu.dot_dimension_numbers<[1], [0], [0], [1], [0, 0, 1, 1], [], []>} : vector<8x16xf32>, vector<16x256xf32>, vector<8x256xf32> -> vector<8x256xf32>
    %c0_133 = arith.constant 0 : index
    %c0_134 = arith.constant 0 : index
    %c0_135 = arith.constant 0 : index
    %474 = vector.load %arg9[%c0_133, %c0_134, %c0_135] : memref<1x8x256xf32, #tpu.memory_space<vmem>>, vector<1x8x256xf32>
    %475 = vector.shape_cast %474 : vector<1x8x256xf32> to vector<8x256xf32>
    %476 = vector.shape_cast %473 : vector<8x256xf32> to vector<1x8x256xf32>
    tpu.vector_store %arg9[%c0_133, %c0_134, %c0_135], %476 {strides = array<i32>} : memref<1x8x256xf32, #tpu.memory_space<vmem>>, vector<1x8x256xf32>,
    %c1_i32_136 = arith.constant 1 : i32
    %477 = tpu.dynamic_rotate %3 by %c1_i32_136 dim 1 : vector<16x256xf32>, i32 -> vector<16x256xf32>
    %478 = vector.broadcast %18 : vector<1x256xf32> to vector<16x256xf32>
    %479 = arith.mulf %478, %477 : vector<16x256xf32>
    %480 = arith.addf %3, %479 : vector<16x256xf32>
    %c255_i32_137 = arith.constant 255 : i32
    %481 = tpu.dynamic_rotate %3 by %c255_i32_137 dim 1 : vector<16x256xf32>, i32 -> vector<16x256xf32>
    %482 = vector.broadcast %57 : vector<1x256xf32> to vector<16x256xf32>
    %483 = arith.mulf %482, %481 : vector<16x256xf32>
    %484 = arith.addf %480, %483 : vector<16x256xf32>
    %c16_i32_138 = arith.constant 16 : i32
    %485 = tpu.dynamic_rotate %484 by %c16_i32_138 dim 1 : vector<16x256xf32>, i32 -> vector<16x256xf32>
    %486 = vector.broadcast %96 : vector<1x256xf32> to vector<16x256xf32>
    %487 = arith.mulf %486, %485 : vector<16x256xf32>
    %488 = arith.addf %484, %487 : vector<16x256xf32>
    %c240_i32_139 = arith.constant 240 : i32
    %489 = tpu.dynamic_rotate %484 by %c240_i32_139 dim 1 : vector<16x256xf32>, i32 -> vector<16x256xf32>
    %490 = vector.broadcast %135 : vector<1x256xf32> to vector<16x256xf32>
    %491 = arith.mulf %490, %489 : vector<16x256xf32>
    %492 = arith.addf %488, %491 : vector<16x256xf32>
    %493 = vector.broadcast %454 : vector<1x256xf32> to vector<16x256xf32>
    %494 = arith.mulf %492, %493 : vector<16x256xf32>
    %cst_140 = arith.constant dense<0.000000e+00> : vector<8x256xf32>
    %495 = tpu.matmul %453, %494, %cst_140 {dimension_numbers = #tpu.dot_dimension_numbers<[1], [0], [0], [1], [0, 0, 1, 1], [], []>} : vector<8x16xf32>, vector<16x256xf32>, vector<8x256xf32> -> vector<8x256xf32>
    %c0_141 = arith.constant 0 : index
    %c0_142 = arith.constant 0 : index
    %c0_143 = arith.constant 0 : index
    %496 = vector.load %arg10[%c0_141, %c0_142, %c0_143] : memref<1x8x256xf32, #tpu.memory_space<vmem>>, vector<1x8x256xf32>
    %497 = vector.shape_cast %496 : vector<1x8x256xf32> to vector<8x256xf32>
    %498 = vector.shape_cast %495 : vector<8x256xf32> to vector<1x8x256xf32>
    tpu.vector_store %arg10[%c0_141, %c0_142, %c0_143], %498 {strides = array<i32>} : memref<1x8x256xf32, #tpu.memory_space<vmem>>, vector<1x8x256xf32>,
    return
  }
  func.func @transform_0(%arg0: i32) -> (i32, i32, i32) {
    %c0_i32 = arith.constant 0 : i32
    %c0_i32_0 = arith.constant 0 : i32
    %c0_i32_1 = arith.constant 0 : i32
    return %arg0, %c0_i32, %c0_i32_0 : i32, i32, i32
  }
  func.func @transform_1(%arg0: i32) -> (i32, i32, i32) {
    %c0_i32 = arith.constant 0 : i32
    %c0_i32_0 = arith.constant 0 : i32
    %c0_i32_1 = arith.constant 0 : i32
    return %arg0, %c0_i32, %c0_i32_0 : i32, i32, i32
  }
  func.func @transform_2(%arg0: i32) -> (i32, i32) {
    %c0_i32 = arith.constant 0 : i32
    %c0_i32_0 = arith.constant 0 : i32
    %c0_i32_1 = arith.constant 0 : i32
    return %c0_i32, %c0_i32_0 : i32, i32
  }
  func.func @transform_3(%arg0: i32) -> (i32, i32) {
    %c0_i32 = arith.constant 0 : i32
    %c0_i32_0 = arith.constant 0 : i32
    %c0_i32_1 = arith.constant 0 : i32
    return %c0_i32, %c0_i32_0 : i32, i32
  }
  func.func @transform_4(%arg0: i32) -> (i32, i32) {
    %c0_i32 = arith.constant 0 : i32
    %c0_i32_0 = arith.constant 0 : i32
    %c0_i32_1 = arith.constant 0 : i32
    return %c0_i32, %c0_i32_0 : i32, i32
  }
  func.func @transform_5(%arg0: i32) -> (i32, i32) {
    %c0_i32 = arith.constant 0 : i32
    %c0_i32_0 = arith.constant 0 : i32
    %c0_i32_1 = arith.constant 0 : i32
    return %c0_i32, %c0_i32_0 : i32, i32
  }
  func.func @transform_6(%arg0: i32) -> (i32, i32) {
    %c0_i32 = arith.constant 0 : i32
    %c0_i32_0 = arith.constant 0 : i32
    %c0_i32_1 = arith.constant 0 : i32
    return %c0_i32, %c0_i32_0 : i32, i32
  }
  func.func @transform_7(%arg0: i32) -> (i32, i32, i32) {
    %c0_i32 = arith.constant 0 : i32
    %c0_i32_0 = arith.constant 0 : i32
    %c0_i32_1 = arith.constant 0 : i32
    return %arg0, %c0_i32, %c0_i32_0 : i32, i32, i32
  }
  func.func @transform_8(%arg0: i32) -> (i32, i32, i32) {
    %c0_i32 = arith.constant 0 : i32
    %c0_i32_0 = arith.constant 0 : i32
    %c0_i32_1 = arith.constant 0 : i32
    return %arg0, %c0_i32, %c0_i32_0 : i32, i32, i32
  }
  func.func @transform_9(%arg0: i32) -> (i32, i32, i32) {
    %c0_i32 = arith.constant 0 : i32
    %c0_i32_0 = arith.constant 0 : i32
    %c0_i32_1 = arith.constant 0 : i32
    return %arg0, %c0_i32, %c0_i32_0 : i32, i32, i32
  }
}

module attributes {stable_mosaic.version = 11 : i64} {
  func.func @_level_kernel(%arg0: i32, %arg1: memref<1x8x128xf32, #tpu.memory_space<vmem>>, %arg2: memref<1x8x128xf32, #tpu.memory_space<vmem>>, %arg3: memref<8x8xf32, #tpu.memory_space<vmem>>, %arg4: memref<1x128xf32, #tpu.memory_space<vmem>>, %arg5: memref<1x128xf32, #tpu.memory_space<vmem>>, %arg6: memref<4x8xf32, #tpu.memory_space<vmem>>, %arg7: memref<1x128xf32, #tpu.memory_space<vmem>>, %arg8: memref<1x1x1xf32, #tpu.memory_space<vmem>>, %arg9: memref<1x4x128xf32, #tpu.memory_space<vmem>>, %arg10: memref<1x4x128xf32, #tpu.memory_space<vmem>>) attributes {dimension_semantics = [#tpu.dimension_semantics<parallel>], iteration_bounds = array<i64: 2>, scalar_prefetch = 0 : i64, scratch_operands = 0 : i64, tpu.core_type = #tpu.core_type<tc>, window_params = [{transform_indices = @transform_0, window_bounds = array<i64: 1, 8, 128>}, {transform_indices = @transform_1, window_bounds = array<i64: 1, 8, 128>}, {pipeline_mode = #tpu.pipeline_mode<synchronous>, transform_indices = @transform_2, window_bounds = array<i64: 8, 8>}, {pipeline_mode = #tpu.pipeline_mode<synchronous>, transform_indices = @transform_3, window_bounds = array<i64: 1, 128>}, {pipeline_mode = #tpu.pipeline_mode<synchronous>, transform_indices = @transform_4, window_bounds = array<i64: 1, 128>}, {pipeline_mode = #tpu.pipeline_mode<synchronous>, transform_indices = @transform_5, window_bounds = array<i64: 4, 8>}, {pipeline_mode = #tpu.pipeline_mode<synchronous>, transform_indices = @transform_6, window_bounds = array<i64: 1, 128>}, {transform_indices = @transform_7, window_bounds = array<i64: 1, 1, 1>}, {transform_indices = @transform_8, window_bounds = array<i64: 1, 4, 128>}, {transform_indices = @transform_9, window_bounds = array<i64: 1, 4, 128>}]} {
    %c0 = arith.constant 0 : index
    %c0_0 = arith.constant 0 : index
    %c0_1 = arith.constant 0 : index
    %0 = vector.load %arg1[%c0, %c0_0, %c0_1] : memref<1x8x128xf32, #tpu.memory_space<vmem>>, vector<1x8x128xf32>
    %1 = vector.shape_cast %0 : vector<1x8x128xf32> to vector<8x128xf32>
    %c0_2 = arith.constant 0 : index
    %c0_3 = arith.constant 0 : index
    %c0_4 = arith.constant 0 : index
    %2 = vector.load %arg2[%c0_2, %c0_3, %c0_4] : memref<1x8x128xf32, #tpu.memory_space<vmem>>, vector<1x8x128xf32>
    %3 = vector.shape_cast %2 : vector<1x8x128xf32> to vector<8x128xf32>
    %c0_5 = arith.constant 0 : index
    %c0_6 = arith.constant 0 : index
    %4 = vector.load %arg4[%c0_5, %c0_6] : memref<1x128xf32, #tpu.memory_space<vmem>>, vector<1x128xf32>
    %c0_7 = arith.constant 0 : index
    %c0_8 = arith.constant 0 : index
    %5 = vector.load %arg5[%c0_7, %c0_8] : memref<1x128xf32, #tpu.memory_space<vmem>>, vector<1x128xf32>
    %c1_i32 = arith.constant 1 : i32
    %6 = tpu.dynamic_rotate %4 by %c1_i32 dim 1 : vector<1x128xf32>, i32 -> vector<1x128xf32>
    %c1_i32_9 = arith.constant 1 : i32
    %7 = tpu.dynamic_rotate %5 by %c1_i32_9 dim 1 : vector<1x128xf32>, i32 -> vector<1x128xf32>
    %8 = arith.subf %6, %4 : vector<1x128xf32>
    %9 = math.absf %8 : vector<1x128xf32>
    %cst = arith.constant 0.000000e+00 : f32
    %10 = vector.broadcast %cst : f32 to vector<1x128xf32>
    %11 = arith.cmpf ole, %9, %10 : vector<1x128xf32>
    %12 = arith.subf %7, %5 : vector<1x128xf32>
    %13 = math.absf %12 : vector<1x128xf32>
    %cst_10 = arith.constant 2.000000e+00 : f32
    %14 = vector.broadcast %cst_10 : f32 to vector<1x128xf32>
    %15 = arith.cmpf ole, %13, %14 : vector<1x128xf32>
    %16 = arith.andi %11, %15 : vector<1x128xi1>
    %17 = arith.extui %16 : vector<1x128xi1> to vector<1x128xi32>
    %18 = arith.sitofp %17 : vector<1x128xi32> to vector<1x128xf32>
    %c2_i32 = arith.constant 2 : i32
    %19 = tpu.dynamic_rotate %4 by %c2_i32 dim 1 : vector<1x128xf32>, i32 -> vector<1x128xf32>
    %c2_i32_11 = arith.constant 2 : i32
    %20 = tpu.dynamic_rotate %5 by %c2_i32_11 dim 1 : vector<1x128xf32>, i32 -> vector<1x128xf32>
    %21 = arith.subf %19, %4 : vector<1x128xf32>
    %22 = math.absf %21 : vector<1x128xf32>
    %cst_12 = arith.constant 0.000000e+00 : f32
    %23 = vector.broadcast %cst_12 : f32 to vector<1x128xf32>
    %24 = arith.cmpf ole, %22, %23 : vector<1x128xf32>
    %25 = arith.subf %20, %5 : vector<1x128xf32>
    %26 = math.absf %25 : vector<1x128xf32>
    %cst_13 = arith.constant 2.000000e+00 : f32
    %27 = vector.broadcast %cst_13 : f32 to vector<1x128xf32>
    %28 = arith.cmpf ole, %26, %27 : vector<1x128xf32>
    %29 = arith.andi %24, %28 : vector<1x128xi1>
    %30 = arith.extui %29 : vector<1x128xi1> to vector<1x128xi32>
    %31 = arith.sitofp %30 : vector<1x128xi32> to vector<1x128xf32>
    %c127_i32 = arith.constant 127 : i32
    %32 = tpu.dynamic_rotate %4 by %c127_i32 dim 1 : vector<1x128xf32>, i32 -> vector<1x128xf32>
    %c127_i32_14 = arith.constant 127 : i32
    %33 = tpu.dynamic_rotate %5 by %c127_i32_14 dim 1 : vector<1x128xf32>, i32 -> vector<1x128xf32>
    %34 = arith.subf %32, %4 : vector<1x128xf32>
    %35 = math.absf %34 : vector<1x128xf32>
    %cst_15 = arith.constant 0.000000e+00 : f32
    %36 = vector.broadcast %cst_15 : f32 to vector<1x128xf32>
    %37 = arith.cmpf ole, %35, %36 : vector<1x128xf32>
    %38 = arith.subf %33, %5 : vector<1x128xf32>
    %39 = math.absf %38 : vector<1x128xf32>
    %cst_16 = arith.constant 2.000000e+00 : f32
    %40 = vector.broadcast %cst_16 : f32 to vector<1x128xf32>
    %41 = arith.cmpf ole, %39, %40 : vector<1x128xf32>
    %42 = arith.andi %37, %41 : vector<1x128xi1>
    %43 = arith.extui %42 : vector<1x128xi1> to vector<1x128xi32>
    %44 = arith.sitofp %43 : vector<1x128xi32> to vector<1x128xf32>
    %c126_i32 = arith.constant 126 : i32
    %45 = tpu.dynamic_rotate %4 by %c126_i32 dim 1 : vector<1x128xf32>, i32 -> vector<1x128xf32>
    %c126_i32_17 = arith.constant 126 : i32
    %46 = tpu.dynamic_rotate %5 by %c126_i32_17 dim 1 : vector<1x128xf32>, i32 -> vector<1x128xf32>
    %47 = arith.subf %45, %4 : vector<1x128xf32>
    %48 = math.absf %47 : vector<1x128xf32>
    %cst_18 = arith.constant 0.000000e+00 : f32
    %49 = vector.broadcast %cst_18 : f32 to vector<1x128xf32>
    %50 = arith.cmpf ole, %48, %49 : vector<1x128xf32>
    %51 = arith.subf %46, %5 : vector<1x128xf32>
    %52 = math.absf %51 : vector<1x128xf32>
    %cst_19 = arith.constant 2.000000e+00 : f32
    %53 = vector.broadcast %cst_19 : f32 to vector<1x128xf32>
    %54 = arith.cmpf ole, %52, %53 : vector<1x128xf32>
    %55 = arith.andi %50, %54 : vector<1x128xi1>
    %56 = arith.extui %55 : vector<1x128xi1> to vector<1x128xi32>
    %57 = arith.sitofp %56 : vector<1x128xi32> to vector<1x128xf32>
    %c8_i32 = arith.constant 8 : i32
    %58 = tpu.dynamic_rotate %4 by %c8_i32 dim 1 : vector<1x128xf32>, i32 -> vector<1x128xf32>
    %c8_i32_20 = arith.constant 8 : i32
    %59 = tpu.dynamic_rotate %5 by %c8_i32_20 dim 1 : vector<1x128xf32>, i32 -> vector<1x128xf32>
    %60 = arith.subf %58, %4 : vector<1x128xf32>
    %61 = math.absf %60 : vector<1x128xf32>
    %cst_21 = arith.constant 2.000000e+00 : f32
    %62 = vector.broadcast %cst_21 : f32 to vector<1x128xf32>
    %63 = arith.cmpf ole, %61, %62 : vector<1x128xf32>
    %64 = arith.subf %59, %5 : vector<1x128xf32>
    %65 = math.absf %64 : vector<1x128xf32>
    %cst_22 = arith.constant 0.000000e+00 : f32
    %66 = vector.broadcast %cst_22 : f32 to vector<1x128xf32>
    %67 = arith.cmpf ole, %65, %66 : vector<1x128xf32>
    %68 = arith.andi %63, %67 : vector<1x128xi1>
    %69 = arith.extui %68 : vector<1x128xi1> to vector<1x128xi32>
    %70 = arith.sitofp %69 : vector<1x128xi32> to vector<1x128xf32>
    %c16_i32 = arith.constant 16 : i32
    %71 = tpu.dynamic_rotate %4 by %c16_i32 dim 1 : vector<1x128xf32>, i32 -> vector<1x128xf32>
    %c16_i32_23 = arith.constant 16 : i32
    %72 = tpu.dynamic_rotate %5 by %c16_i32_23 dim 1 : vector<1x128xf32>, i32 -> vector<1x128xf32>
    %73 = arith.subf %71, %4 : vector<1x128xf32>
    %74 = math.absf %73 : vector<1x128xf32>
    %cst_24 = arith.constant 2.000000e+00 : f32
    %75 = vector.broadcast %cst_24 : f32 to vector<1x128xf32>
    %76 = arith.cmpf ole, %74, %75 : vector<1x128xf32>
    %77 = arith.subf %72, %5 : vector<1x128xf32>
    %78 = math.absf %77 : vector<1x128xf32>
    %cst_25 = arith.constant 0.000000e+00 : f32
    %79 = vector.broadcast %cst_25 : f32 to vector<1x128xf32>
    %80 = arith.cmpf ole, %78, %79 : vector<1x128xf32>
    %81 = arith.andi %76, %80 : vector<1x128xi1>
    %82 = arith.extui %81 : vector<1x128xi1> to vector<1x128xi32>
    %83 = arith.sitofp %82 : vector<1x128xi32> to vector<1x128xf32>
    %c120_i32 = arith.constant 120 : i32
    %84 = tpu.dynamic_rotate %4 by %c120_i32 dim 1 : vector<1x128xf32>, i32 -> vector<1x128xf32>
    %c120_i32_26 = arith.constant 120 : i32
    %85 = tpu.dynamic_rotate %5 by %c120_i32_26 dim 1 : vector<1x128xf32>, i32 -> vector<1x128xf32>
    %86 = arith.subf %84, %4 : vector<1x128xf32>
    %87 = math.absf %86 : vector<1x128xf32>
    %cst_27 = arith.constant 2.000000e+00 : f32
    %88 = vector.broadcast %cst_27 : f32 to vector<1x128xf32>
    %89 = arith.cmpf ole, %87, %88 : vector<1x128xf32>
    %90 = arith.subf %85, %5 : vector<1x128xf32>
    %91 = math.absf %90 : vector<1x128xf32>
    %cst_28 = arith.constant 0.000000e+00 : f32
    %92 = vector.broadcast %cst_28 : f32 to vector<1x128xf32>
    %93 = arith.cmpf ole, %91, %92 : vector<1x128xf32>
    %94 = arith.andi %89, %93 : vector<1x128xi1>
    %95 = arith.extui %94 : vector<1x128xi1> to vector<1x128xi32>
    %96 = arith.sitofp %95 : vector<1x128xi32> to vector<1x128xf32>
    %c112_i32 = arith.constant 112 : i32
    %97 = tpu.dynamic_rotate %4 by %c112_i32 dim 1 : vector<1x128xf32>, i32 -> vector<1x128xf32>
    %c112_i32_29 = arith.constant 112 : i32
    %98 = tpu.dynamic_rotate %5 by %c112_i32_29 dim 1 : vector<1x128xf32>, i32 -> vector<1x128xf32>
    %99 = arith.subf %97, %4 : vector<1x128xf32>
    %100 = math.absf %99 : vector<1x128xf32>
    %cst_30 = arith.constant 2.000000e+00 : f32
    %101 = vector.broadcast %cst_30 : f32 to vector<1x128xf32>
    %102 = arith.cmpf ole, %100, %101 : vector<1x128xf32>
    %103 = arith.subf %98, %5 : vector<1x128xf32>
    %104 = math.absf %103 : vector<1x128xf32>
    %cst_31 = arith.constant 0.000000e+00 : f32
    %105 = vector.broadcast %cst_31 : f32 to vector<1x128xf32>
    %106 = arith.cmpf ole, %104, %105 : vector<1x128xf32>
    %107 = arith.andi %102, %106 : vector<1x128xi1>
    %108 = arith.extui %107 : vector<1x128xi1> to vector<1x128xi32>
    %109 = arith.sitofp %108 : vector<1x128xi32> to vector<1x128xf32>
    %c0_32 = arith.constant 0 : index
    %c0_33 = arith.constant 0 : index
    %110 = vector.load %arg3[%c0_32, %c0_33] : memref<8x8xf32, #tpu.memory_space<vmem>>, vector<8x8xf32>
    %c1_i32_34 = arith.constant 1 : i32
    %111 = tpu.dynamic_rotate %1 by %c1_i32_34 dim 1 : vector<8x128xf32>, i32 -> vector<8x128xf32>
    %112 = vector.broadcast %18 : vector<1x128xf32> to vector<8x128xf32>
    %113 = arith.mulf %112, %111 : vector<8x128xf32>
    %114 = arith.addf %1, %113 : vector<8x128xf32>
    %c2_i32_35 = arith.constant 2 : i32
    %115 = tpu.dynamic_rotate %1 by %c2_i32_35 dim 1 : vector<8x128xf32>, i32 -> vector<8x128xf32>
    %116 = vector.broadcast %31 : vector<1x128xf32> to vector<8x128xf32>
    %117 = arith.mulf %116, %115 : vector<8x128xf32>
    %118 = arith.addf %114, %117 : vector<8x128xf32>
    %c127_i32_36 = arith.constant 127 : i32
    %119 = tpu.dynamic_rotate %1 by %c127_i32_36 dim 1 : vector<8x128xf32>, i32 -> vector<8x128xf32>
    %120 = vector.broadcast %44 : vector<1x128xf32> to vector<8x128xf32>
    %121 = arith.mulf %120, %119 : vector<8x128xf32>
    %122 = arith.addf %118, %121 : vector<8x128xf32>
    %c126_i32_37 = arith.constant 126 : i32
    %123 = tpu.dynamic_rotate %1 by %c126_i32_37 dim 1 : vector<8x128xf32>, i32 -> vector<8x128xf32>
    %124 = vector.broadcast %57 : vector<1x128xf32> to vector<8x128xf32>
    %125 = arith.mulf %124, %123 : vector<8x128xf32>
    %126 = arith.addf %122, %125 : vector<8x128xf32>
    %c8_i32_38 = arith.constant 8 : i32
    %127 = tpu.dynamic_rotate %126 by %c8_i32_38 dim 1 : vector<8x128xf32>, i32 -> vector<8x128xf32>
    %128 = vector.broadcast %70 : vector<1x128xf32> to vector<8x128xf32>
    %129 = arith.mulf %128, %127 : vector<8x128xf32>
    %130 = arith.addf %126, %129 : vector<8x128xf32>
    %c16_i32_39 = arith.constant 16 : i32
    %131 = tpu.dynamic_rotate %126 by %c16_i32_39 dim 1 : vector<8x128xf32>, i32 -> vector<8x128xf32>
    %132 = vector.broadcast %83 : vector<1x128xf32> to vector<8x128xf32>
    %133 = arith.mulf %132, %131 : vector<8x128xf32>
    %134 = arith.addf %130, %133 : vector<8x128xf32>
    %c120_i32_40 = arith.constant 120 : i32
    %135 = tpu.dynamic_rotate %126 by %c120_i32_40 dim 1 : vector<8x128xf32>, i32 -> vector<8x128xf32>
    %136 = vector.broadcast %96 : vector<1x128xf32> to vector<8x128xf32>
    %137 = arith.mulf %136, %135 : vector<8x128xf32>
    %138 = arith.addf %134, %137 : vector<8x128xf32>
    %c112_i32_41 = arith.constant 112 : i32
    %139 = tpu.dynamic_rotate %126 by %c112_i32_41 dim 1 : vector<8x128xf32>, i32 -> vector<8x128xf32>
    %140 = vector.broadcast %109 : vector<1x128xf32> to vector<8x128xf32>
    %141 = arith.mulf %140, %139 : vector<8x128xf32>
    %142 = arith.addf %138, %141 : vector<8x128xf32>
    %cst_42 = arith.constant dense<0.000000e+00> : vector<8x128xf32>
    %143 = tpu.matmul %110, %142, %cst_42 {dimension_numbers = #tpu.dot_dimension_numbers<[1], [0], [0], [1], [0, 0, 1, 1], [], []>} : vector<8x8xf32>, vector<8x128xf32>, vector<8x128xf32> -> vector<8x128xf32>
    %c1_i32_43 = arith.constant 1 : i32
    %144 = tpu.dynamic_rotate %3 by %c1_i32_43 dim 1 : vector<8x128xf32>, i32 -> vector<8x128xf32>
    %145 = vector.broadcast %18 : vector<1x128xf32> to vector<8x128xf32>
    %146 = arith.mulf %145, %144 : vector<8x128xf32>
    %147 = arith.addf %3, %146 : vector<8x128xf32>
    %c2_i32_44 = arith.constant 2 : i32
    %148 = tpu.dynamic_rotate %3 by %c2_i32_44 dim 1 : vector<8x128xf32>, i32 -> vector<8x128xf32>
    %149 = vector.broadcast %31 : vector<1x128xf32> to vector<8x128xf32>
    %150 = arith.mulf %149, %148 : vector<8x128xf32>
    %151 = arith.addf %147, %150 : vector<8x128xf32>
    %c127_i32_45 = arith.constant 127 : i32
    %152 = tpu.dynamic_rotate %3 by %c127_i32_45 dim 1 : vector<8x128xf32>, i32 -> vector<8x128xf32>
    %153 = vector.broadcast %44 : vector<1x128xf32> to vector<8x128xf32>
    %154 = arith.mulf %153, %152 : vector<8x128xf32>
    %155 = arith.addf %151, %154 : vector<8x128xf32>
    %c126_i32_46 = arith.constant 126 : i32
    %156 = tpu.dynamic_rotate %3 by %c126_i32_46 dim 1 : vector<8x128xf32>, i32 -> vector<8x128xf32>
    %157 = vector.broadcast %57 : vector<1x128xf32> to vector<8x128xf32>
    %158 = arith.mulf %157, %156 : vector<8x128xf32>
    %159 = arith.addf %155, %158 : vector<8x128xf32>
    %c8_i32_47 = arith.constant 8 : i32
    %160 = tpu.dynamic_rotate %159 by %c8_i32_47 dim 1 : vector<8x128xf32>, i32 -> vector<8x128xf32>
    %161 = vector.broadcast %70 : vector<1x128xf32> to vector<8x128xf32>
    %162 = arith.mulf %161, %160 : vector<8x128xf32>
    %163 = arith.addf %159, %162 : vector<8x128xf32>
    %c16_i32_48 = arith.constant 16 : i32
    %164 = tpu.dynamic_rotate %159 by %c16_i32_48 dim 1 : vector<8x128xf32>, i32 -> vector<8x128xf32>
    %165 = vector.broadcast %83 : vector<1x128xf32> to vector<8x128xf32>
    %166 = arith.mulf %165, %164 : vector<8x128xf32>
    %167 = arith.addf %163, %166 : vector<8x128xf32>
    %c120_i32_49 = arith.constant 120 : i32
    %168 = tpu.dynamic_rotate %159 by %c120_i32_49 dim 1 : vector<8x128xf32>, i32 -> vector<8x128xf32>
    %169 = vector.broadcast %96 : vector<1x128xf32> to vector<8x128xf32>
    %170 = arith.mulf %169, %168 : vector<8x128xf32>
    %171 = arith.addf %167, %170 : vector<8x128xf32>
    %c112_i32_50 = arith.constant 112 : i32
    %172 = tpu.dynamic_rotate %159 by %c112_i32_50 dim 1 : vector<8x128xf32>, i32 -> vector<8x128xf32>
    %173 = vector.broadcast %109 : vector<1x128xf32> to vector<8x128xf32>
    %174 = arith.mulf %173, %172 : vector<8x128xf32>
    %175 = arith.addf %171, %174 : vector<8x128xf32>
    %cst_51 = arith.constant dense<0.000000e+00> : vector<8x128xf32>
    %176 = tpu.matmul %110, %175, %cst_51 {dimension_numbers = #tpu.dot_dimension_numbers<[1], [0], [0], [1], [0, 0, 1, 1], [], []>} : vector<8x8xf32>, vector<8x128xf32>, vector<8x128xf32> -> vector<8x128xf32>
    %177 = arith.mulf %1, %1 : vector<8x128xf32>
    %c1_i32_52 = arith.constant 1 : i32
    %178 = tpu.dynamic_rotate %177 by %c1_i32_52 dim 1 : vector<8x128xf32>, i32 -> vector<8x128xf32>
    %179 = vector.broadcast %18 : vector<1x128xf32> to vector<8x128xf32>
    %180 = arith.mulf %179, %178 : vector<8x128xf32>
    %181 = arith.addf %177, %180 : vector<8x128xf32>
    %c2_i32_53 = arith.constant 2 : i32
    %182 = tpu.dynamic_rotate %177 by %c2_i32_53 dim 1 : vector<8x128xf32>, i32 -> vector<8x128xf32>
    %183 = vector.broadcast %31 : vector<1x128xf32> to vector<8x128xf32>
    %184 = arith.mulf %183, %182 : vector<8x128xf32>
    %185 = arith.addf %181, %184 : vector<8x128xf32>
    %c127_i32_54 = arith.constant 127 : i32
    %186 = tpu.dynamic_rotate %177 by %c127_i32_54 dim 1 : vector<8x128xf32>, i32 -> vector<8x128xf32>
    %187 = vector.broadcast %44 : vector<1x128xf32> to vector<8x128xf32>
    %188 = arith.mulf %187, %186 : vector<8x128xf32>
    %189 = arith.addf %185, %188 : vector<8x128xf32>
    %c126_i32_55 = arith.constant 126 : i32
    %190 = tpu.dynamic_rotate %177 by %c126_i32_55 dim 1 : vector<8x128xf32>, i32 -> vector<8x128xf32>
    %191 = vector.broadcast %57 : vector<1x128xf32> to vector<8x128xf32>
    %192 = arith.mulf %191, %190 : vector<8x128xf32>
    %193 = arith.addf %189, %192 : vector<8x128xf32>
    %c8_i32_56 = arith.constant 8 : i32
    %194 = tpu.dynamic_rotate %193 by %c8_i32_56 dim 1 : vector<8x128xf32>, i32 -> vector<8x128xf32>
    %195 = vector.broadcast %70 : vector<1x128xf32> to vector<8x128xf32>
    %196 = arith.mulf %195, %194 : vector<8x128xf32>
    %197 = arith.addf %193, %196 : vector<8x128xf32>
    %c16_i32_57 = arith.constant 16 : i32
    %198 = tpu.dynamic_rotate %193 by %c16_i32_57 dim 1 : vector<8x128xf32>, i32 -> vector<8x128xf32>
    %199 = vector.broadcast %83 : vector<1x128xf32> to vector<8x128xf32>
    %200 = arith.mulf %199, %198 : vector<8x128xf32>
    %201 = arith.addf %197, %200 : vector<8x128xf32>
    %c120_i32_58 = arith.constant 120 : i32
    %202 = tpu.dynamic_rotate %193 by %c120_i32_58 dim 1 : vector<8x128xf32>, i32 -> vector<8x128xf32>
    %203 = vector.broadcast %96 : vector<1x128xf32> to vector<8x128xf32>
    %204 = arith.mulf %203, %202 : vector<8x128xf32>
    %205 = arith.addf %201, %204 : vector<8x128xf32>
    %c112_i32_59 = arith.constant 112 : i32
    %206 = tpu.dynamic_rotate %193 by %c112_i32_59 dim 1 : vector<8x128xf32>, i32 -> vector<8x128xf32>
    %207 = vector.broadcast %109 : vector<1x128xf32> to vector<8x128xf32>
    %208 = arith.mulf %207, %206 : vector<8x128xf32>
    %209 = arith.addf %205, %208 : vector<8x128xf32>
    %cst_60 = arith.constant dense<0.000000e+00> : vector<8x128xf32>
    %210 = tpu.matmul %110, %209, %cst_60 {dimension_numbers = #tpu.dot_dimension_numbers<[1], [0], [0], [1], [0, 0, 1, 1], [], []>} : vector<8x8xf32>, vector<8x128xf32>, vector<8x128xf32> -> vector<8x128xf32>
    %211 = arith.mulf %3, %3 : vector<8x128xf32>
    %c1_i32_61 = arith.constant 1 : i32
    %212 = tpu.dynamic_rotate %211 by %c1_i32_61 dim 1 : vector<8x128xf32>, i32 -> vector<8x128xf32>
    %213 = vector.broadcast %18 : vector<1x128xf32> to vector<8x128xf32>
    %214 = arith.mulf %213, %212 : vector<8x128xf32>
    %215 = arith.addf %211, %214 : vector<8x128xf32>
    %c2_i32_62 = arith.constant 2 : i32
    %216 = tpu.dynamic_rotate %211 by %c2_i32_62 dim 1 : vector<8x128xf32>, i32 -> vector<8x128xf32>
    %217 = vector.broadcast %31 : vector<1x128xf32> to vector<8x128xf32>
    %218 = arith.mulf %217, %216 : vector<8x128xf32>
    %219 = arith.addf %215, %218 : vector<8x128xf32>
    %c127_i32_63 = arith.constant 127 : i32
    %220 = tpu.dynamic_rotate %211 by %c127_i32_63 dim 1 : vector<8x128xf32>, i32 -> vector<8x128xf32>
    %221 = vector.broadcast %44 : vector<1x128xf32> to vector<8x128xf32>
    %222 = arith.mulf %221, %220 : vector<8x128xf32>
    %223 = arith.addf %219, %222 : vector<8x128xf32>
    %c126_i32_64 = arith.constant 126 : i32
    %224 = tpu.dynamic_rotate %211 by %c126_i32_64 dim 1 : vector<8x128xf32>, i32 -> vector<8x128xf32>
    %225 = vector.broadcast %57 : vector<1x128xf32> to vector<8x128xf32>
    %226 = arith.mulf %225, %224 : vector<8x128xf32>
    %227 = arith.addf %223, %226 : vector<8x128xf32>
    %c8_i32_65 = arith.constant 8 : i32
    %228 = tpu.dynamic_rotate %227 by %c8_i32_65 dim 1 : vector<8x128xf32>, i32 -> vector<8x128xf32>
    %229 = vector.broadcast %70 : vector<1x128xf32> to vector<8x128xf32>
    %230 = arith.mulf %229, %228 : vector<8x128xf32>
    %231 = arith.addf %227, %230 : vector<8x128xf32>
    %c16_i32_66 = arith.constant 16 : i32
    %232 = tpu.dynamic_rotate %227 by %c16_i32_66 dim 1 : vector<8x128xf32>, i32 -> vector<8x128xf32>
    %233 = vector.broadcast %83 : vector<1x128xf32> to vector<8x128xf32>
    %234 = arith.mulf %233, %232 : vector<8x128xf32>
    %235 = arith.addf %231, %234 : vector<8x128xf32>
    %c120_i32_67 = arith.constant 120 : i32
    %236 = tpu.dynamic_rotate %227 by %c120_i32_67 dim 1 : vector<8x128xf32>, i32 -> vector<8x128xf32>
    %237 = vector.broadcast %96 : vector<1x128xf32> to vector<8x128xf32>
    %238 = arith.mulf %237, %236 : vector<8x128xf32>
    %239 = arith.addf %235, %238 : vector<8x128xf32>
    %c112_i32_68 = arith.constant 112 : i32
    %240 = tpu.dynamic_rotate %227 by %c112_i32_68 dim 1 : vector<8x128xf32>, i32 -> vector<8x128xf32>
    %241 = vector.broadcast %109 : vector<1x128xf32> to vector<8x128xf32>
    %242 = arith.mulf %241, %240 : vector<8x128xf32>
    %243 = arith.addf %239, %242 : vector<8x128xf32>
    %cst_69 = arith.constant dense<0.000000e+00> : vector<8x128xf32>
    %244 = tpu.matmul %110, %243, %cst_69 {dimension_numbers = #tpu.dot_dimension_numbers<[1], [0], [0], [1], [0, 0, 1, 1], [], []>} : vector<8x8xf32>, vector<8x128xf32>, vector<8x128xf32> -> vector<8x128xf32>
    %245 = arith.mulf %1, %3 : vector<8x128xf32>
    %c1_i32_70 = arith.constant 1 : i32
    %246 = tpu.dynamic_rotate %245 by %c1_i32_70 dim 1 : vector<8x128xf32>, i32 -> vector<8x128xf32>
    %247 = vector.broadcast %18 : vector<1x128xf32> to vector<8x128xf32>
    %248 = arith.mulf %247, %246 : vector<8x128xf32>
    %249 = arith.addf %245, %248 : vector<8x128xf32>
    %c2_i32_71 = arith.constant 2 : i32
    %250 = tpu.dynamic_rotate %245 by %c2_i32_71 dim 1 : vector<8x128xf32>, i32 -> vector<8x128xf32>
    %251 = vector.broadcast %31 : vector<1x128xf32> to vector<8x128xf32>
    %252 = arith.mulf %251, %250 : vector<8x128xf32>
    %253 = arith.addf %249, %252 : vector<8x128xf32>
    %c127_i32_72 = arith.constant 127 : i32
    %254 = tpu.dynamic_rotate %245 by %c127_i32_72 dim 1 : vector<8x128xf32>, i32 -> vector<8x128xf32>
    %255 = vector.broadcast %44 : vector<1x128xf32> to vector<8x128xf32>
    %256 = arith.mulf %255, %254 : vector<8x128xf32>
    %257 = arith.addf %253, %256 : vector<8x128xf32>
    %c126_i32_73 = arith.constant 126 : i32
    %258 = tpu.dynamic_rotate %245 by %c126_i32_73 dim 1 : vector<8x128xf32>, i32 -> vector<8x128xf32>
    %259 = vector.broadcast %57 : vector<1x128xf32> to vector<8x128xf32>
    %260 = arith.mulf %259, %258 : vector<8x128xf32>
    %261 = arith.addf %257, %260 : vector<8x128xf32>
    %c8_i32_74 = arith.constant 8 : i32
    %262 = tpu.dynamic_rotate %261 by %c8_i32_74 dim 1 : vector<8x128xf32>, i32 -> vector<8x128xf32>
    %263 = vector.broadcast %70 : vector<1x128xf32> to vector<8x128xf32>
    %264 = arith.mulf %263, %262 : vector<8x128xf32>
    %265 = arith.addf %261, %264 : vector<8x128xf32>
    %c16_i32_75 = arith.constant 16 : i32
    %266 = tpu.dynamic_rotate %261 by %c16_i32_75 dim 1 : vector<8x128xf32>, i32 -> vector<8x128xf32>
    %267 = vector.broadcast %83 : vector<1x128xf32> to vector<8x128xf32>
    %268 = arith.mulf %267, %266 : vector<8x128xf32>
    %269 = arith.addf %265, %268 : vector<8x128xf32>
    %c120_i32_76 = arith.constant 120 : i32
    %270 = tpu.dynamic_rotate %261 by %c120_i32_76 dim 1 : vector<8x128xf32>, i32 -> vector<8x128xf32>
    %271 = vector.broadcast %96 : vector<1x128xf32> to vector<8x128xf32>
    %272 = arith.mulf %271, %270 : vector<8x128xf32>
    %273 = arith.addf %269, %272 : vector<8x128xf32>
    %c112_i32_77 = arith.constant 112 : i32
    %274 = tpu.dynamic_rotate %261 by %c112_i32_77 dim 1 : vector<8x128xf32>, i32 -> vector<8x128xf32>
    %275 = vector.broadcast %109 : vector<1x128xf32> to vector<8x128xf32>
    %276 = arith.mulf %275, %274 : vector<8x128xf32>
    %277 = arith.addf %273, %276 : vector<8x128xf32>
    %cst_78 = arith.constant dense<0.000000e+00> : vector<8x128xf32>
    %278 = tpu.matmul %110, %277, %cst_78 {dimension_numbers = #tpu.dot_dimension_numbers<[1], [0], [0], [1], [0, 0, 1, 1], [], []>} : vector<8x8xf32>, vector<8x128xf32>, vector<8x128xf32> -> vector<8x128xf32>
    %cst_79 = arith.constant 8.000000e-03 : f32
    %279 = vector.broadcast %cst_79 : f32 to vector<8x128xf32>
    %280 = arith.mulf %143, %279 : vector<8x128xf32>
    %cst_80 = arith.constant 8.000000e-03 : f32
    %281 = vector.broadcast %cst_80 : f32 to vector<8x128xf32>
    %282 = arith.mulf %176, %281 : vector<8x128xf32>
    %283 = arith.mulf %282, %143 : vector<8x128xf32>
    %284 = arith.subf %278, %283 : vector<8x128xf32>
    %285 = arith.mulf %280, %176 : vector<8x128xf32>
    %286 = arith.subf %284, %285 : vector<8x128xf32>
    %287 = arith.mulf %280, %282 : vector<8x128xf32>
    %cst_81 = arith.constant 1.250000e+02 : f32
    %288 = vector.broadcast %cst_81 : f32 to vector<8x128xf32>
    %289 = arith.mulf %287, %288 : vector<8x128xf32>
    %290 = arith.addf %286, %289 : vector<8x128xf32>
    %cst_82 = arith.constant 2.000000e+00 : f32
    %291 = vector.broadcast %cst_82 : f32 to vector<8x128xf32>
    %292 = arith.mulf %291, %280 : vector<8x128xf32>
    %293 = arith.mulf %292, %143 : vector<8x128xf32>
    %294 = arith.subf %210, %293 : vector<8x128xf32>
    %295 = arith.mulf %280, %280 : vector<8x128xf32>
    %cst_83 = arith.constant 1.250000e+02 : f32
    %296 = vector.broadcast %cst_83 : f32 to vector<8x128xf32>
    %297 = arith.mulf %295, %296 : vector<8x128xf32>
    %298 = arith.addf %294, %297 : vector<8x128xf32>
    %cst_84 = arith.constant 2.000000e+00 : f32
    %299 = vector.broadcast %cst_84 : f32 to vector<8x128xf32>
    %300 = arith.mulf %299, %282 : vector<8x128xf32>
    %301 = arith.mulf %300, %176 : vector<8x128xf32>
    %302 = arith.subf %244, %301 : vector<8x128xf32>
    %303 = arith.mulf %282, %282 : vector<8x128xf32>
    %cst_85 = arith.constant 1.250000e+02 : f32
    %304 = vector.broadcast %cst_85 : f32 to vector<8x128xf32>
    %305 = arith.mulf %303, %304 : vector<8x128xf32>
    %306 = arith.addf %302, %305 : vector<8x128xf32>
    %307 = arith.mulf %290, %290 : vector<8x128xf32>
    %308 = arith.mulf %298, %306 : vector<8x128xf32>
    %cst_86 = arith.constant 9.99999974E-6 : f32
    %309 = vector.broadcast %cst_86 : f32 to vector<8x128xf32>
    %310 = arith.addf %308, %309 : vector<8x128xf32>
    %311 = tpu.reciprocal %310 {approx = true} : vector<8x128xf32> -> vector<8x128xf32>
    %312 = arith.mulf %307, %311 : vector<8x128xf32>
    %cst_87 = arith.constant 0.000000e+00 : f32
    %313 = vector.broadcast %cst_87 : f32 to vector<1x1x1xf32>
    %314 = vector.shape_cast %312 : vector<8x128xf32> to vector<1x8x128xf32>
    %cst_88 = arith.constant dense<0.000000e+00> : vector<1xf32>
    %315 = vector.multi_reduction <add>, %314, %cst_88 [1, 2] : vector<1x8x128xf32> to vector<1xf32>
    %316 = vector.shape_cast %315 : vector<1xf32> to vector<1x1x1xf32>
    %317 = vector.extract %316[0, 0, 0] : f32 from vector<1x1x1xf32>
    %318 = vector.broadcast %317 : f32 to vector<1x1x1xf32>
    %319 = arith.addf %313, %318 : vector<1x1x1xf32>
    %c0_89 = arith.constant 0 : index
    %c0_90 = arith.constant 0 : index
    %c0_91 = arith.constant 0 : index
    %320 = vector.load %arg8[%c0_89, %c0_90, %c0_91] : memref<1x1x1xf32, #tpu.memory_space<vmem>>, vector<1x1x1xf32>
    tpu.vector_store %arg8[%c0_89, %c0_90, %c0_91], %319 {strides = array<i32>} : memref<1x1x1xf32, #tpu.memory_space<vmem>>, vector<1x1x1xf32>,
    %c0_92 = arith.constant 0 : index
    %c0_93 = arith.constant 0 : index
    %321 = vector.load %arg6[%c0_92, %c0_93] : memref<4x8xf32, #tpu.memory_space<vmem>>, vector<4x8xf32>
    %c0_94 = arith.constant 0 : index
    %c0_95 = arith.constant 0 : index
    %322 = vector.load %arg7[%c0_94, %c0_95] : memref<1x128xf32, #tpu.memory_space<vmem>>, vector<1x128xf32>
    %c1_i32_96 = arith.constant 1 : i32
    %323 = tpu.dynamic_rotate %1 by %c1_i32_96 dim 1 : vector<8x128xf32>, i32 -> vector<8x128xf32>
    %324 = vector.broadcast %18 : vector<1x128xf32> to vector<8x128xf32>
    %325 = arith.mulf %324, %323 : vector<8x128xf32>
    %326 = arith.addf %1, %325 : vector<8x128xf32>
    %c127_i32_97 = arith.constant 127 : i32
    %327 = tpu.dynamic_rotate %1 by %c127_i32_97 dim 1 : vector<8x128xf32>, i32 -> vector<8x128xf32>
    %328 = vector.broadcast %44 : vector<1x128xf32> to vector<8x128xf32>
    %329 = arith.mulf %328, %327 : vector<8x128xf32>
    %330 = arith.addf %326, %329 : vector<8x128xf32>
    %c8_i32_98 = arith.constant 8 : i32
    %331 = tpu.dynamic_rotate %330 by %c8_i32_98 dim 1 : vector<8x128xf32>, i32 -> vector<8x128xf32>
    %332 = vector.broadcast %70 : vector<1x128xf32> to vector<8x128xf32>
    %333 = arith.mulf %332, %331 : vector<8x128xf32>
    %334 = arith.addf %330, %333 : vector<8x128xf32>
    %c120_i32_99 = arith.constant 120 : i32
    %335 = tpu.dynamic_rotate %330 by %c120_i32_99 dim 1 : vector<8x128xf32>, i32 -> vector<8x128xf32>
    %336 = vector.broadcast %96 : vector<1x128xf32> to vector<8x128xf32>
    %337 = arith.mulf %336, %335 : vector<8x128xf32>
    %338 = arith.addf %334, %337 : vector<8x128xf32>
    %339 = vector.broadcast %322 : vector<1x128xf32> to vector<8x128xf32>
    %340 = arith.mulf %338, %339 : vector<8x128xf32>
    %cst_100 = arith.constant dense<0.000000e+00> : vector<4x128xf32>
    %341 = tpu.matmul %321, %340, %cst_100 {dimension_numbers = #tpu.dot_dimension_numbers<[1], [0], [0], [1], [0, 0, 1, 1], [], []>} : vector<4x8xf32>, vector<8x128xf32>, vector<4x128xf32> -> vector<4x128xf32>
    %c0_101 = arith.constant 0 : index
    %c0_102 = arith.constant 0 : index
    %c0_103 = arith.constant 0 : index
    %342 = vector.load %arg9[%c0_101, %c0_102, %c0_103] : memref<1x4x128xf32, #tpu.memory_space<vmem>>, vector<1x4x128xf32>
    %343 = vector.shape_cast %342 : vector<1x4x128xf32> to vector<4x128xf32>
    %344 = vector.shape_cast %341 : vector<4x128xf32> to vector<1x4x128xf32>
    tpu.vector_store %arg9[%c0_101, %c0_102, %c0_103], %344 {strides = array<i32>} : memref<1x4x128xf32, #tpu.memory_space<vmem>>, vector<1x4x128xf32>,
    %c1_i32_104 = arith.constant 1 : i32
    %345 = tpu.dynamic_rotate %3 by %c1_i32_104 dim 1 : vector<8x128xf32>, i32 -> vector<8x128xf32>
    %346 = vector.broadcast %18 : vector<1x128xf32> to vector<8x128xf32>
    %347 = arith.mulf %346, %345 : vector<8x128xf32>
    %348 = arith.addf %3, %347 : vector<8x128xf32>
    %c127_i32_105 = arith.constant 127 : i32
    %349 = tpu.dynamic_rotate %3 by %c127_i32_105 dim 1 : vector<8x128xf32>, i32 -> vector<8x128xf32>
    %350 = vector.broadcast %44 : vector<1x128xf32> to vector<8x128xf32>
    %351 = arith.mulf %350, %349 : vector<8x128xf32>
    %352 = arith.addf %348, %351 : vector<8x128xf32>
    %c8_i32_106 = arith.constant 8 : i32
    %353 = tpu.dynamic_rotate %352 by %c8_i32_106 dim 1 : vector<8x128xf32>, i32 -> vector<8x128xf32>
    %354 = vector.broadcast %70 : vector<1x128xf32> to vector<8x128xf32>
    %355 = arith.mulf %354, %353 : vector<8x128xf32>
    %356 = arith.addf %352, %355 : vector<8x128xf32>
    %c120_i32_107 = arith.constant 120 : i32
    %357 = tpu.dynamic_rotate %352 by %c120_i32_107 dim 1 : vector<8x128xf32>, i32 -> vector<8x128xf32>
    %358 = vector.broadcast %96 : vector<1x128xf32> to vector<8x128xf32>
    %359 = arith.mulf %358, %357 : vector<8x128xf32>
    %360 = arith.addf %356, %359 : vector<8x128xf32>
    %361 = vector.broadcast %322 : vector<1x128xf32> to vector<8x128xf32>
    %362 = arith.mulf %360, %361 : vector<8x128xf32>
    %cst_108 = arith.constant dense<0.000000e+00> : vector<4x128xf32>
    %363 = tpu.matmul %321, %362, %cst_108 {dimension_numbers = #tpu.dot_dimension_numbers<[1], [0], [0], [1], [0, 0, 1, 1], [], []>} : vector<4x8xf32>, vector<8x128xf32>, vector<4x128xf32> -> vector<4x128xf32>
    %c0_109 = arith.constant 0 : index
    %c0_110 = arith.constant 0 : index
    %c0_111 = arith.constant 0 : index
    %364 = vector.load %arg10[%c0_109, %c0_110, %c0_111] : memref<1x4x128xf32, #tpu.memory_space<vmem>>, vector<1x4x128xf32>
    %365 = vector.shape_cast %364 : vector<1x4x128xf32> to vector<4x128xf32>
    %366 = vector.shape_cast %363 : vector<4x128xf32> to vector<1x4x128xf32>
    tpu.vector_store %arg10[%c0_109, %c0_110, %c0_111], %366 {strides = array<i32>} : memref<1x4x128xf32, #tpu.memory_space<vmem>>, vector<1x4x128xf32>,
    return
  }
  func.func @transform_0(%arg0: i32) -> (i32, i32, i32) {
    %c0_i32 = arith.constant 0 : i32
    %c0_i32_0 = arith.constant 0 : i32
    %c0_i32_1 = arith.constant 0 : i32
    return %arg0, %c0_i32, %c0_i32_0 : i32, i32, i32
  }
  func.func @transform_1(%arg0: i32) -> (i32, i32, i32) {
    %c0_i32 = arith.constant 0 : i32
    %c0_i32_0 = arith.constant 0 : i32
    %c0_i32_1 = arith.constant 0 : i32
    return %arg0, %c0_i32, %c0_i32_0 : i32, i32, i32
  }
  func.func @transform_2(%arg0: i32) -> (i32, i32) {
    %c0_i32 = arith.constant 0 : i32
    %c0_i32_0 = arith.constant 0 : i32
    %c0_i32_1 = arith.constant 0 : i32
    return %c0_i32, %c0_i32_0 : i32, i32
  }
  func.func @transform_3(%arg0: i32) -> (i32, i32) {
    %c0_i32 = arith.constant 0 : i32
    %c0_i32_0 = arith.constant 0 : i32
    %c0_i32_1 = arith.constant 0 : i32
    return %c0_i32, %c0_i32_0 : i32, i32
  }
  func.func @transform_4(%arg0: i32) -> (i32, i32) {
    %c0_i32 = arith.constant 0 : i32
    %c0_i32_0 = arith.constant 0 : i32
    %c0_i32_1 = arith.constant 0 : i32
    return %c0_i32, %c0_i32_0 : i32, i32
  }
  func.func @transform_5(%arg0: i32) -> (i32, i32) {
    %c0_i32 = arith.constant 0 : i32
    %c0_i32_0 = arith.constant 0 : i32
    %c0_i32_1 = arith.constant 0 : i32
    return %c0_i32, %c0_i32_0 : i32, i32
  }
  func.func @transform_6(%arg0: i32) -> (i32, i32) {
    %c0_i32 = arith.constant 0 : i32
    %c0_i32_0 = arith.constant 0 : i32
    %c0_i32_1 = arith.constant 0 : i32
    return %c0_i32, %c0_i32_0 : i32, i32
  }
  func.func @transform_7(%arg0: i32) -> (i32, i32, i32) {
    %c0_i32 = arith.constant 0 : i32
    %c0_i32_0 = arith.constant 0 : i32
    %c0_i32_1 = arith.constant 0 : i32
    return %arg0, %c0_i32, %c0_i32_0 : i32, i32, i32
  }
  func.func @transform_8(%arg0: i32) -> (i32, i32, i32) {
    %c0_i32 = arith.constant 0 : i32
    %c0_i32_0 = arith.constant 0 : i32
    %c0_i32_1 = arith.constant 0 : i32
    return %arg0, %c0_i32, %c0_i32_0 : i32, i32, i32
  }
  func.func @transform_9(%arg0: i32) -> (i32, i32, i32) {
    %c0_i32 = arith.constant 0 : i32
    %c0_i32_0 = arith.constant 0 : i32
    %c0_i32_1 = arith.constant 0 : i32
    return %arg0, %c0_i32, %c0_i32_0 : i32, i32, i32
  }
}

module attributes {stable_mosaic.version = 11 : i64} {
  func.func @_level_kernel(%arg0: i32, %arg1: memref<1x4x128xf32, #tpu.memory_space<vmem>>, %arg2: memref<1x4x128xf32, #tpu.memory_space<vmem>>, %arg3: memref<4x4xf32, #tpu.memory_space<vmem>>, %arg4: memref<1x128xf32, #tpu.memory_space<vmem>>, %arg5: memref<1x128xf32, #tpu.memory_space<vmem>>, %arg6: memref<1x1x1xf32, #tpu.memory_space<vmem>>) attributes {dimension_semantics = [#tpu.dimension_semantics<parallel>], iteration_bounds = array<i64: 2>, scalar_prefetch = 0 : i64, scratch_operands = 0 : i64, tpu.core_type = #tpu.core_type<tc>, window_params = [{transform_indices = @transform_0, window_bounds = array<i64: 1, 4, 128>}, {transform_indices = @transform_1, window_bounds = array<i64: 1, 4, 128>}, {pipeline_mode = #tpu.pipeline_mode<synchronous>, transform_indices = @transform_2, window_bounds = array<i64: 4, 4>}, {pipeline_mode = #tpu.pipeline_mode<synchronous>, transform_indices = @transform_3, window_bounds = array<i64: 1, 128>}, {pipeline_mode = #tpu.pipeline_mode<synchronous>, transform_indices = @transform_4, window_bounds = array<i64: 1, 128>}, {transform_indices = @transform_5, window_bounds = array<i64: 1, 1, 1>}]} {
    %c0 = arith.constant 0 : index
    %c0_0 = arith.constant 0 : index
    %c0_1 = arith.constant 0 : index
    %0 = vector.load %arg1[%c0, %c0_0, %c0_1] : memref<1x4x128xf32, #tpu.memory_space<vmem>>, vector<1x4x128xf32>
    %1 = vector.shape_cast %0 : vector<1x4x128xf32> to vector<4x128xf32>
    %c0_2 = arith.constant 0 : index
    %c0_3 = arith.constant 0 : index
    %c0_4 = arith.constant 0 : index
    %2 = vector.load %arg2[%c0_2, %c0_3, %c0_4] : memref<1x4x128xf32, #tpu.memory_space<vmem>>, vector<1x4x128xf32>
    %3 = vector.shape_cast %2 : vector<1x4x128xf32> to vector<4x128xf32>
    %c0_5 = arith.constant 0 : index
    %c0_6 = arith.constant 0 : index
    %4 = vector.load %arg4[%c0_5, %c0_6] : memref<1x128xf32, #tpu.memory_space<vmem>>, vector<1x128xf32>
    %c0_7 = arith.constant 0 : index
    %c0_8 = arith.constant 0 : index
    %5 = vector.load %arg5[%c0_7, %c0_8] : memref<1x128xf32, #tpu.memory_space<vmem>>, vector<1x128xf32>
    %c1_i32 = arith.constant 1 : i32
    %6 = tpu.dynamic_rotate %4 by %c1_i32 dim 1 : vector<1x128xf32>, i32 -> vector<1x128xf32>
    %c1_i32_9 = arith.constant 1 : i32
    %7 = tpu.dynamic_rotate %5 by %c1_i32_9 dim 1 : vector<1x128xf32>, i32 -> vector<1x128xf32>
    %8 = arith.subf %6, %4 : vector<1x128xf32>
    %9 = math.absf %8 : vector<1x128xf32>
    %cst = arith.constant 0.000000e+00 : f32
    %10 = vector.broadcast %cst : f32 to vector<1x128xf32>
    %11 = arith.cmpf ole, %9, %10 : vector<1x128xf32>
    %12 = arith.subf %7, %5 : vector<1x128xf32>
    %13 = math.absf %12 : vector<1x128xf32>
    %cst_10 = arith.constant 1.000000e+00 : f32
    %14 = vector.broadcast %cst_10 : f32 to vector<1x128xf32>
    %15 = arith.cmpf ole, %13, %14 : vector<1x128xf32>
    %16 = arith.andi %11, %15 : vector<1x128xi1>
    %17 = arith.extui %16 : vector<1x128xi1> to vector<1x128xi32>
    %18 = arith.sitofp %17 : vector<1x128xi32> to vector<1x128xf32>
    %c127_i32 = arith.constant 127 : i32
    %19 = tpu.dynamic_rotate %4 by %c127_i32 dim 1 : vector<1x128xf32>, i32 -> vector<1x128xf32>
    %c127_i32_11 = arith.constant 127 : i32
    %20 = tpu.dynamic_rotate %5 by %c127_i32_11 dim 1 : vector<1x128xf32>, i32 -> vector<1x128xf32>
    %21 = arith.subf %19, %4 : vector<1x128xf32>
    %22 = math.absf %21 : vector<1x128xf32>
    %cst_12 = arith.constant 0.000000e+00 : f32
    %23 = vector.broadcast %cst_12 : f32 to vector<1x128xf32>
    %24 = arith.cmpf ole, %22, %23 : vector<1x128xf32>
    %25 = arith.subf %20, %5 : vector<1x128xf32>
    %26 = math.absf %25 : vector<1x128xf32>
    %cst_13 = arith.constant 1.000000e+00 : f32
    %27 = vector.broadcast %cst_13 : f32 to vector<1x128xf32>
    %28 = arith.cmpf ole, %26, %27 : vector<1x128xf32>
    %29 = arith.andi %24, %28 : vector<1x128xi1>
    %30 = arith.extui %29 : vector<1x128xi1> to vector<1x128xi32>
    %31 = arith.sitofp %30 : vector<1x128xi32> to vector<1x128xf32>
    %c4_i32 = arith.constant 4 : i32
    %32 = tpu.dynamic_rotate %4 by %c4_i32 dim 1 : vector<1x128xf32>, i32 -> vector<1x128xf32>
    %c4_i32_14 = arith.constant 4 : i32
    %33 = tpu.dynamic_rotate %5 by %c4_i32_14 dim 1 : vector<1x128xf32>, i32 -> vector<1x128xf32>
    %34 = arith.subf %32, %4 : vector<1x128xf32>
    %35 = math.absf %34 : vector<1x128xf32>
    %cst_15 = arith.constant 1.000000e+00 : f32
    %36 = vector.broadcast %cst_15 : f32 to vector<1x128xf32>
    %37 = arith.cmpf ole, %35, %36 : vector<1x128xf32>
    %38 = arith.subf %33, %5 : vector<1x128xf32>
    %39 = math.absf %38 : vector<1x128xf32>
    %cst_16 = arith.constant 0.000000e+00 : f32
    %40 = vector.broadcast %cst_16 : f32 to vector<1x128xf32>
    %41 = arith.cmpf ole, %39, %40 : vector<1x128xf32>
    %42 = arith.andi %37, %41 : vector<1x128xi1>
    %43 = arith.extui %42 : vector<1x128xi1> to vector<1x128xi32>
    %44 = arith.sitofp %43 : vector<1x128xi32> to vector<1x128xf32>
    %c124_i32 = arith.constant 124 : i32
    %45 = tpu.dynamic_rotate %4 by %c124_i32 dim 1 : vector<1x128xf32>, i32 -> vector<1x128xf32>
    %c124_i32_17 = arith.constant 124 : i32
    %46 = tpu.dynamic_rotate %5 by %c124_i32_17 dim 1 : vector<1x128xf32>, i32 -> vector<1x128xf32>
    %47 = arith.subf %45, %4 : vector<1x128xf32>
    %48 = math.absf %47 : vector<1x128xf32>
    %cst_18 = arith.constant 1.000000e+00 : f32
    %49 = vector.broadcast %cst_18 : f32 to vector<1x128xf32>
    %50 = arith.cmpf ole, %48, %49 : vector<1x128xf32>
    %51 = arith.subf %46, %5 : vector<1x128xf32>
    %52 = math.absf %51 : vector<1x128xf32>
    %cst_19 = arith.constant 0.000000e+00 : f32
    %53 = vector.broadcast %cst_19 : f32 to vector<1x128xf32>
    %54 = arith.cmpf ole, %52, %53 : vector<1x128xf32>
    %55 = arith.andi %50, %54 : vector<1x128xi1>
    %56 = arith.extui %55 : vector<1x128xi1> to vector<1x128xi32>
    %57 = arith.sitofp %56 : vector<1x128xi32> to vector<1x128xf32>
    %c0_20 = arith.constant 0 : index
    %c0_21 = arith.constant 0 : index
    %58 = vector.load %arg3[%c0_20, %c0_21] : memref<4x4xf32, #tpu.memory_space<vmem>>, vector<4x4xf32>
    %c1_i32_22 = arith.constant 1 : i32
    %59 = tpu.dynamic_rotate %1 by %c1_i32_22 dim 1 : vector<4x128xf32>, i32 -> vector<4x128xf32>
    %60 = vector.broadcast %18 : vector<1x128xf32> to vector<4x128xf32>
    %61 = arith.mulf %60, %59 : vector<4x128xf32>
    %62 = arith.addf %1, %61 : vector<4x128xf32>
    %c127_i32_23 = arith.constant 127 : i32
    %63 = tpu.dynamic_rotate %1 by %c127_i32_23 dim 1 : vector<4x128xf32>, i32 -> vector<4x128xf32>
    %64 = vector.broadcast %31 : vector<1x128xf32> to vector<4x128xf32>
    %65 = arith.mulf %64, %63 : vector<4x128xf32>
    %66 = arith.addf %62, %65 : vector<4x128xf32>
    %c4_i32_24 = arith.constant 4 : i32
    %67 = tpu.dynamic_rotate %66 by %c4_i32_24 dim 1 : vector<4x128xf32>, i32 -> vector<4x128xf32>
    %68 = vector.broadcast %44 : vector<1x128xf32> to vector<4x128xf32>
    %69 = arith.mulf %68, %67 : vector<4x128xf32>
    %70 = arith.addf %66, %69 : vector<4x128xf32>
    %c124_i32_25 = arith.constant 124 : i32
    %71 = tpu.dynamic_rotate %66 by %c124_i32_25 dim 1 : vector<4x128xf32>, i32 -> vector<4x128xf32>
    %72 = vector.broadcast %57 : vector<1x128xf32> to vector<4x128xf32>
    %73 = arith.mulf %72, %71 : vector<4x128xf32>
    %74 = arith.addf %70, %73 : vector<4x128xf32>
    %cst_26 = arith.constant dense<0.000000e+00> : vector<4x128xf32>
    %75 = tpu.matmul %58, %74, %cst_26 {dimension_numbers = #tpu.dot_dimension_numbers<[1], [0], [0], [1], [0, 0, 1, 1], [], []>} : vector<4x4xf32>, vector<4x128xf32>, vector<4x128xf32> -> vector<4x128xf32>
    %c1_i32_27 = arith.constant 1 : i32
    %76 = tpu.dynamic_rotate %3 by %c1_i32_27 dim 1 : vector<4x128xf32>, i32 -> vector<4x128xf32>
    %77 = vector.broadcast %18 : vector<1x128xf32> to vector<4x128xf32>
    %78 = arith.mulf %77, %76 : vector<4x128xf32>
    %79 = arith.addf %3, %78 : vector<4x128xf32>
    %c127_i32_28 = arith.constant 127 : i32
    %80 = tpu.dynamic_rotate %3 by %c127_i32_28 dim 1 : vector<4x128xf32>, i32 -> vector<4x128xf32>
    %81 = vector.broadcast %31 : vector<1x128xf32> to vector<4x128xf32>
    %82 = arith.mulf %81, %80 : vector<4x128xf32>
    %83 = arith.addf %79, %82 : vector<4x128xf32>
    %c4_i32_29 = arith.constant 4 : i32
    %84 = tpu.dynamic_rotate %83 by %c4_i32_29 dim 1 : vector<4x128xf32>, i32 -> vector<4x128xf32>
    %85 = vector.broadcast %44 : vector<1x128xf32> to vector<4x128xf32>
    %86 = arith.mulf %85, %84 : vector<4x128xf32>
    %87 = arith.addf %83, %86 : vector<4x128xf32>
    %c124_i32_30 = arith.constant 124 : i32
    %88 = tpu.dynamic_rotate %83 by %c124_i32_30 dim 1 : vector<4x128xf32>, i32 -> vector<4x128xf32>
    %89 = vector.broadcast %57 : vector<1x128xf32> to vector<4x128xf32>
    %90 = arith.mulf %89, %88 : vector<4x128xf32>
    %91 = arith.addf %87, %90 : vector<4x128xf32>
    %cst_31 = arith.constant dense<0.000000e+00> : vector<4x128xf32>
    %92 = tpu.matmul %58, %91, %cst_31 {dimension_numbers = #tpu.dot_dimension_numbers<[1], [0], [0], [1], [0, 0, 1, 1], [], []>} : vector<4x4xf32>, vector<4x128xf32>, vector<4x128xf32> -> vector<4x128xf32>
    %93 = arith.mulf %1, %1 : vector<4x128xf32>
    %c1_i32_32 = arith.constant 1 : i32
    %94 = tpu.dynamic_rotate %93 by %c1_i32_32 dim 1 : vector<4x128xf32>, i32 -> vector<4x128xf32>
    %95 = vector.broadcast %18 : vector<1x128xf32> to vector<4x128xf32>
    %96 = arith.mulf %95, %94 : vector<4x128xf32>
    %97 = arith.addf %93, %96 : vector<4x128xf32>
    %c127_i32_33 = arith.constant 127 : i32
    %98 = tpu.dynamic_rotate %93 by %c127_i32_33 dim 1 : vector<4x128xf32>, i32 -> vector<4x128xf32>
    %99 = vector.broadcast %31 : vector<1x128xf32> to vector<4x128xf32>
    %100 = arith.mulf %99, %98 : vector<4x128xf32>
    %101 = arith.addf %97, %100 : vector<4x128xf32>
    %c4_i32_34 = arith.constant 4 : i32
    %102 = tpu.dynamic_rotate %101 by %c4_i32_34 dim 1 : vector<4x128xf32>, i32 -> vector<4x128xf32>
    %103 = vector.broadcast %44 : vector<1x128xf32> to vector<4x128xf32>
    %104 = arith.mulf %103, %102 : vector<4x128xf32>
    %105 = arith.addf %101, %104 : vector<4x128xf32>
    %c124_i32_35 = arith.constant 124 : i32
    %106 = tpu.dynamic_rotate %101 by %c124_i32_35 dim 1 : vector<4x128xf32>, i32 -> vector<4x128xf32>
    %107 = vector.broadcast %57 : vector<1x128xf32> to vector<4x128xf32>
    %108 = arith.mulf %107, %106 : vector<4x128xf32>
    %109 = arith.addf %105, %108 : vector<4x128xf32>
    %cst_36 = arith.constant dense<0.000000e+00> : vector<4x128xf32>
    %110 = tpu.matmul %58, %109, %cst_36 {dimension_numbers = #tpu.dot_dimension_numbers<[1], [0], [0], [1], [0, 0, 1, 1], [], []>} : vector<4x4xf32>, vector<4x128xf32>, vector<4x128xf32> -> vector<4x128xf32>
    %111 = arith.mulf %3, %3 : vector<4x128xf32>
    %c1_i32_37 = arith.constant 1 : i32
    %112 = tpu.dynamic_rotate %111 by %c1_i32_37 dim 1 : vector<4x128xf32>, i32 -> vector<4x128xf32>
    %113 = vector.broadcast %18 : vector<1x128xf32> to vector<4x128xf32>
    %114 = arith.mulf %113, %112 : vector<4x128xf32>
    %115 = arith.addf %111, %114 : vector<4x128xf32>
    %c127_i32_38 = arith.constant 127 : i32
    %116 = tpu.dynamic_rotate %111 by %c127_i32_38 dim 1 : vector<4x128xf32>, i32 -> vector<4x128xf32>
    %117 = vector.broadcast %31 : vector<1x128xf32> to vector<4x128xf32>
    %118 = arith.mulf %117, %116 : vector<4x128xf32>
    %119 = arith.addf %115, %118 : vector<4x128xf32>
    %c4_i32_39 = arith.constant 4 : i32
    %120 = tpu.dynamic_rotate %119 by %c4_i32_39 dim 1 : vector<4x128xf32>, i32 -> vector<4x128xf32>
    %121 = vector.broadcast %44 : vector<1x128xf32> to vector<4x128xf32>
    %122 = arith.mulf %121, %120 : vector<4x128xf32>
    %123 = arith.addf %119, %122 : vector<4x128xf32>
    %c124_i32_40 = arith.constant 124 : i32
    %124 = tpu.dynamic_rotate %119 by %c124_i32_40 dim 1 : vector<4x128xf32>, i32 -> vector<4x128xf32>
    %125 = vector.broadcast %57 : vector<1x128xf32> to vector<4x128xf32>
    %126 = arith.mulf %125, %124 : vector<4x128xf32>
    %127 = arith.addf %123, %126 : vector<4x128xf32>
    %cst_41 = arith.constant dense<0.000000e+00> : vector<4x128xf32>
    %128 = tpu.matmul %58, %127, %cst_41 {dimension_numbers = #tpu.dot_dimension_numbers<[1], [0], [0], [1], [0, 0, 1, 1], [], []>} : vector<4x4xf32>, vector<4x128xf32>, vector<4x128xf32> -> vector<4x128xf32>
    %129 = arith.mulf %1, %3 : vector<4x128xf32>
    %c1_i32_42 = arith.constant 1 : i32
    %130 = tpu.dynamic_rotate %129 by %c1_i32_42 dim 1 : vector<4x128xf32>, i32 -> vector<4x128xf32>
    %131 = vector.broadcast %18 : vector<1x128xf32> to vector<4x128xf32>
    %132 = arith.mulf %131, %130 : vector<4x128xf32>
    %133 = arith.addf %129, %132 : vector<4x128xf32>
    %c127_i32_43 = arith.constant 127 : i32
    %134 = tpu.dynamic_rotate %129 by %c127_i32_43 dim 1 : vector<4x128xf32>, i32 -> vector<4x128xf32>
    %135 = vector.broadcast %31 : vector<1x128xf32> to vector<4x128xf32>
    %136 = arith.mulf %135, %134 : vector<4x128xf32>
    %137 = arith.addf %133, %136 : vector<4x128xf32>
    %c4_i32_44 = arith.constant 4 : i32
    %138 = tpu.dynamic_rotate %137 by %c4_i32_44 dim 1 : vector<4x128xf32>, i32 -> vector<4x128xf32>
    %139 = vector.broadcast %44 : vector<1x128xf32> to vector<4x128xf32>
    %140 = arith.mulf %139, %138 : vector<4x128xf32>
    %141 = arith.addf %137, %140 : vector<4x128xf32>
    %c124_i32_45 = arith.constant 124 : i32
    %142 = tpu.dynamic_rotate %137 by %c124_i32_45 dim 1 : vector<4x128xf32>, i32 -> vector<4x128xf32>
    %143 = vector.broadcast %57 : vector<1x128xf32> to vector<4x128xf32>
    %144 = arith.mulf %143, %142 : vector<4x128xf32>
    %145 = arith.addf %141, %144 : vector<4x128xf32>
    %cst_46 = arith.constant dense<0.000000e+00> : vector<4x128xf32>
    %146 = tpu.matmul %58, %145, %cst_46 {dimension_numbers = #tpu.dot_dimension_numbers<[1], [0], [0], [1], [0, 0, 1, 1], [], []>} : vector<4x4xf32>, vector<4x128xf32>, vector<4x128xf32> -> vector<4x128xf32>
    %cst_47 = arith.constant 0.0370370373 : f32
    %147 = vector.broadcast %cst_47 : f32 to vector<4x128xf32>
    %148 = arith.mulf %75, %147 : vector<4x128xf32>
    %cst_48 = arith.constant 0.0370370373 : f32
    %149 = vector.broadcast %cst_48 : f32 to vector<4x128xf32>
    %150 = arith.mulf %92, %149 : vector<4x128xf32>
    %151 = arith.mulf %150, %75 : vector<4x128xf32>
    %152 = arith.subf %146, %151 : vector<4x128xf32>
    %153 = arith.mulf %148, %92 : vector<4x128xf32>
    %154 = arith.subf %152, %153 : vector<4x128xf32>
    %155 = arith.mulf %148, %150 : vector<4x128xf32>
    %cst_49 = arith.constant 2.700000e+01 : f32
    %156 = vector.broadcast %cst_49 : f32 to vector<4x128xf32>
    %157 = arith.mulf %155, %156 : vector<4x128xf32>
    %158 = arith.addf %154, %157 : vector<4x128xf32>
    %cst_50 = arith.constant 2.000000e+00 : f32
    %159 = vector.broadcast %cst_50 : f32 to vector<4x128xf32>
    %160 = arith.mulf %159, %148 : vector<4x128xf32>
    %161 = arith.mulf %160, %75 : vector<4x128xf32>
    %162 = arith.subf %110, %161 : vector<4x128xf32>
    %163 = arith.mulf %148, %148 : vector<4x128xf32>
    %cst_51 = arith.constant 2.700000e+01 : f32
    %164 = vector.broadcast %cst_51 : f32 to vector<4x128xf32>
    %165 = arith.mulf %163, %164 : vector<4x128xf32>
    %166 = arith.addf %162, %165 : vector<4x128xf32>
    %cst_52 = arith.constant 2.000000e+00 : f32
    %167 = vector.broadcast %cst_52 : f32 to vector<4x128xf32>
    %168 = arith.mulf %167, %150 : vector<4x128xf32>
    %169 = arith.mulf %168, %92 : vector<4x128xf32>
    %170 = arith.subf %128, %169 : vector<4x128xf32>
    %171 = arith.mulf %150, %150 : vector<4x128xf32>
    %cst_53 = arith.constant 2.700000e+01 : f32
    %172 = vector.broadcast %cst_53 : f32 to vector<4x128xf32>
    %173 = arith.mulf %171, %172 : vector<4x128xf32>
    %174 = arith.addf %170, %173 : vector<4x128xf32>
    %175 = arith.mulf %158, %158 : vector<4x128xf32>
    %176 = arith.mulf %166, %174 : vector<4x128xf32>
    %cst_54 = arith.constant 9.99999974E-6 : f32
    %177 = vector.broadcast %cst_54 : f32 to vector<4x128xf32>
    %178 = arith.addf %176, %177 : vector<4x128xf32>
    %179 = tpu.reciprocal %178 {approx = true} : vector<4x128xf32> -> vector<4x128xf32>
    %180 = arith.mulf %175, %179 : vector<4x128xf32>
    %cst_55 = arith.constant 0.000000e+00 : f32
    %181 = vector.broadcast %cst_55 : f32 to vector<1x1x1xf32>
    %182 = vector.shape_cast %180 : vector<4x128xf32> to vector<1x4x128xf32>
    %cst_56 = arith.constant dense<0.000000e+00> : vector<1xf32>
    %183 = vector.multi_reduction <add>, %182, %cst_56 [1, 2] : vector<1x4x128xf32> to vector<1xf32>
    %184 = vector.shape_cast %183 : vector<1xf32> to vector<1x1x1xf32>
    %185 = vector.extract %184[0, 0, 0] : f32 from vector<1x1x1xf32>
    %186 = vector.broadcast %185 : f32 to vector<1x1x1xf32>
    %187 = arith.addf %181, %186 : vector<1x1x1xf32>
    %c0_57 = arith.constant 0 : index
    %c0_58 = arith.constant 0 : index
    %c0_59 = arith.constant 0 : index
    %188 = vector.load %arg6[%c0_57, %c0_58, %c0_59] : memref<1x1x1xf32, #tpu.memory_space<vmem>>, vector<1x1x1xf32>
    tpu.vector_store %arg6[%c0_57, %c0_58, %c0_59], %187 {strides = array<i32>} : memref<1x1x1xf32, #tpu.memory_space<vmem>>, vector<1x1x1xf32>,
    return
  }
  func.func @transform_0(%arg0: i32) -> (i32, i32, i32) {
    %c0_i32 = arith.constant 0 : i32
    %c0_i32_0 = arith.constant 0 : i32
    %c0_i32_1 = arith.constant 0 : i32
    return %arg0, %c0_i32, %c0_i32_0 : i32, i32, i32
  }
  func.func @transform_1(%arg0: i32) -> (i32, i32, i32) {
    %c0_i32 = arith.constant 0 : i32
    %c0_i32_0 = arith.constant 0 : i32
    %c0_i32_1 = arith.constant 0 : i32
    return %arg0, %c0_i32, %c0_i32_0 : i32, i32, i32
  }
  func.func @transform_2(%arg0: i32) -> (i32, i32) {
    %c0_i32 = arith.constant 0 : i32
    %c0_i32_0 = arith.constant 0 : i32
    %c0_i32_1 = arith.constant 0 : i32
    return %c0_i32, %c0_i32_0 : i32, i32
  }
  func.func @transform_3(%arg0: i32) -> (i32, i32) {
    %c0_i32 = arith.constant 0 : i32
    %c0_i32_0 = arith.constant 0 : i32
    %c0_i32_1 = arith.constant 0 : i32
    return %c0_i32, %c0_i32_0 : i32, i32
  }
  func.func @transform_4(%arg0: i32) -> (i32, i32) {
    %c0_i32 = arith.constant 0 : i32
    %c0_i32_0 = arith.constant 0 : i32
    %c0_i32_1 = arith.constant 0 : i32
    return %c0_i32, %c0_i32_0 : i32, i32
  }
  func.func @transform_5(%arg0: i32) -> (i32, i32, i32) {
    %c0_i32 = arith.constant 0 : i32
    %c0_i32_0 = arith.constant 0 : i32
    %c0_i32_1 = arith.constant 0 : i32
    return %arg0, %c0_i32, %c0_i32_0 : i32, i32, i32
  }
}

</mosaic_0001>

<llo_original>
// kernel: multi_resolution_ncc.4
$region0: #{multi_resolution_ncc.4}
  #allocation0 [shape = 'u32[]', space=smem, size = 0x4, offset = 0x4, fixed_abs, tag = 'smem constant byte address 0x4 - core index']
  #allocation1 [shape = 'u32[144,128]{1,0:T(1,128)}', space=vmem, size = 0x12000, scoped, tag = 'internal scratch']
  %s0 = inlined_call_operand.vmem [shape: f32[2,8,128], index: 0, kind: input, shape index: {}]
  %s1 = inlined_call_operand.vmem [shape: f32[2,8,128], index: 1, kind: input, shape index: {}]
  %s2 = inlined_call_operand.vmem [shape: f32[8,8], index: 2, kind: input, shape index: {}]
  %s3 = inlined_call_operand.vmem [shape: f32[1,128], index: 3, kind: input, shape index: {}]
  %s4 = inlined_call_operand.vmem [shape: f32[1,128], index: 4, kind: input, shape index: {}]
  %s5 = inlined_call_operand.vmem [shape: f32[4,8], index: 5, kind: input, shape index: {}]
  %s6 = inlined_call_operand.vmem [shape: f32[1,128], index: 6, kind: input, shape index: {}]
  %s7 = inlined_call_operand.vmem [shape: f32[2,1,1], index: 7, kind: output, shape index: {0}]
  %s8 = inlined_call_operand.vmem [shape: f32[2,4,128], index: 8, kind: output, shape index: {1}]
  %s9 = inlined_call_operand.vmem [shape: f32[2,4,128], index: 9, kind: output, shape index: {2}]
  %10 = xla_tuple %s7, %s8, %s9
  %s11 = sld [smem:[#allocation0]]
  $region77: #{multi_resolution_ncc.4} parent=0
    _
  %s13 = ssub.s32 1, %s11
  %s14 = scalar_select 0, %s13, %s11
  loop: start=0, step=1, limit=4
  $region2: #{multi_resolution_ncc.4} parent=0 // loop_pre_header
    _
  $region3: #{multi_resolution_ncc.4} parent=0 // loop_header
    %s16 = sphi 0, %s20
    %p17 = scmp.ge.s32.totalorder %s16, 4
    %s26 = sphi 0, %s28
    %s29 = sphi 0, %s26
    %s30 = sphi 0, %s29
    %s46 = sphi 0, %s30
    %s52 = sphi 0, %s54
    %s55 = sphi 0, %s52
    %s56 = sphi 0, %s55
    %s72 = sphi 0, %s56
    %s76 = sphi 0, %s76
    %s78 = sphi 0, %s76
    %s79 = sphi 0, %s78
    %s93 = sphi 0, %s79
    %s97 = sphi 0, %s97
    %s99 = sphi 0, %s97
    %s100 = sphi 0, %s99
    %s114 = sphi 0, %s100
    %s118 = sphi 0, %s118
    %s120 = sphi 0, %s118
    %s121 = sphi 0, %s120
    %s135 = sphi 0, %s121
    %s139 = sphi 0, %s139
    %s141 = sphi 0, %s139
    %s142 = sphi 0, %s141
    %s156 = sphi 0, %s142
    %s160 = sphi 0, %s160
    %s162 = sphi 0, %s160
    %s163 = sphi 0, %s162
    %s177 = sphi 0, %s163
    %s183 = sphi 0, %s185
    %s186 = sphi 0, %s183
    %s187 = sphi 0, %s186
    %s203 = sphi 0, %s187
    %s209 = sphi 0, %s211
    %s212 = sphi 0, %s209
    %s213 = sphi 0, %s212
    %s229 = sphi 0, %s213
    %s235 = sphi 0, %s237
    %s238 = sphi 0, %s235
    %s239 = sphi 0, %s238
    %s255 = sphi 0, %s239
  $region4: #{multi_resolution_ncc.4} parent=0 // loop_header_branch
    %19 = sbr.rel (%p17) target = $region8
  $region5: #{multi_resolution_ncc.4} parent=0 // loop_body
    %s21 = ssub.s32 %s16, 1
    %s22 = ssub.s32 %s16, 2
    %s23 = sadd.s32 %s16, 1
    %s24 = ssub.s32 %s16, %s23
    %p25 = scmp.eq.s32.totalorder %s24, 0
    %s27 = sadd.s32 %s26, 1
    %s28 = scalar_select %p25, %s26, %s27
    %p31 = pneg %p25
    %p32 = scmp.eq.s32.totalorder %s16, 1
    %p33 = por %p31, %p32
    %p34 = scmp.ne.s32.totalorder %s26, %s29
    %p35 = scmp.eq.s32.totalorder %s16, 0
    %p36 = por %p34, %p35
    %p37 = scmp.ne.s32.totalorder %s26, %s29
    %p38 = scmp.eq.s32.totalorder %s21, 1
    %p39 = por %p37, %p38
    %p40 = scmp.ne.s32.totalorder %s29, %s30
    %p41 = scmp.eq.s32.totalorder %s21, 0
    %p42 = por %p40, %p41
    %p43 = scmp.ne.s32.totalorder %s29, %s30
    %p44 = scmp.eq.s32.totalorder %s22, 1
    %p45 = por %p43, %p44
    %p47 = scmp.ne.s32.totalorder %s30, %s46
    %p48 = scmp.eq.s32.totalorder %s22, 0
    %p49 = por %p47, %p48
    %s50 = ssub.s32 %s16, %s23
    %p51 = scmp.eq.s32.totalorder %s50, 0
    %s53 = sadd.s32 %s52, 1
    %s54 = scalar_select %p51, %s52, %s53
    %p57 = pneg %p51
    %p58 = scmp.eq.s32.totalorder %s16, 1
    %p59 = por %p57, %p58
    %p60 = scmp.ne.s32.totalorder %s52, %s55
    %p61 = scmp.eq.s32.totalorder %s16, 0
    %p62 = por %p60, %p61
    %p63 = scmp.ne.s32.totalorder %s52, %s55
    %p64 = scmp.eq.s32.totalorder %s21, 1
    %p65 = por %p63, %p64
    %p66 = scmp.ne.s32.totalorder %s55, %s56
    %p67 = scmp.eq.s32.totalorder %s21, 0
    %p68 = por %p66, %p67
    %p69 = scmp.ne.s32.totalorder %s55, %s56
    %p70 = scmp.eq.s32.totalorder %s22, 1
    %p71 = por %p69, %p70
    %p73 = scmp.ne.s32.totalorder %s56, %s72
    %p74 = scmp.eq.s32.totalorder %s22, 0
    %p75 = por %p73, %p74
    %s77 = sadd.s32 %s76, 1
    %p80 = scmp.eq.s32.totalorder %s16, 1
    %p81 = scmp.ne.s32.totalorder %s76, %s78
    %p82 = scmp.eq.s32.totalorder %s16, 0
    %p83 = por %p81, %p82
    %p84 = scmp.ne.s32.totalorder %s76, %s78
    %p85 = scmp.eq.s32.totalorder %s21, 1
    %p86 = por %p84, %p85
    %p87 = scmp.ne.s32.totalorder %s78, %s79
    %p88 = scmp.eq.s32.totalorder %s21, 0
    %p89 = por %p87, %p88
    %p90 = scmp.ne.s32.totalorder %s78, %s79
    %p91 = scmp.eq.s32.totalorder %s22, 1
    %p92 = por %p90, %p91
    %p94 = scmp.ne.s32.totalorder %s79, %s93
    %p95 = scmp.eq.s32.totalorder %s22, 0
    %p96 = por %p94, %p95
    %s98 = sadd.s32 %s97, 1
    %p101 = scmp.eq.s32.totalorder %s16, 1
    %p102 = scmp.ne.s32.totalorder %s97, %s99
    %p103 = scmp.eq.s32.totalorder %s16, 0
    %p104 = por %p102, %p103
    %p105 = scmp.ne.s32.totalorder %s97, %s99
    %p106 = scmp.eq.s32.totalorder %s21, 1
    %p107 = por %p105, %p106
    %p108 = scmp.ne.s32.totalorder %s99, %s100
    %p109 = scmp.eq.s32.totalorder %s21, 0
    %p110 = por %p108, %p109
    %p111 = scmp.ne.s32.totalorder %s99, %s100
    %p112 = scmp.eq.s32.totalorder %s22, 1
    %p113 = por %p111, %p112
    %p115 = scmp.ne.s32.totalorder %s100, %s114
    %p116 = scmp.eq.s32.totalorder %s22, 0
    %p117 = por %p115, %p116
    %s119 = sadd.s32 %s118, 1
    %p122 = scmp.eq.s32.totalorder %s16, 1
    %p123 = scmp.ne.s32.totalorder %s118, %s120
    %p124 = scmp.eq.s32.totalorder %s16, 0
    %p125 = por %p123, %p124
    %p126 = scmp.ne.s32.totalorder %s118, %s120
    %p127 = scmp.eq.s32.totalorder %s21, 1
    %p128 = por %p126, %p127
    %p129 = scmp.ne.s32.totalorder %s120, %s121
    %p130 = scmp.eq.s32.totalorder %s21, 0
    %p131 = por %p129, %p130
    %p132 = scmp.ne.s32.totalorder %s120, %s121
    %p133 = scmp.eq.s32.totalorder %s22, 1
    %p134 = por %p132, %p133
    %p136 = scmp.ne.s32.totalorder %s121, %s135
    %p137 = scmp.eq.s32.totalorder %s22, 0
    %p138 = por %p136, %p137
    %s140 = sadd.s32 %s139, 1
    %p143 = scmp.eq.s32.totalorder %s16, 1
    %p144 = scmp.ne.s32.totalorder %s139, %s141
    %p145 = scmp.eq.s32.totalorder %s16, 0
    %p146 = por %p144, %p145
    %p147 = scmp.ne.s32.totalorder %s139, %s141
    %p148 = scmp.eq.s32.totalorder %s21, 1
    %p149 = por %p147, %p148
    %p150 = scmp.ne.s32.totalorder %s141, %s142
    %p151 = scmp.eq.s32.totalorder %s21, 0
    %p152 = por %p150, %p151
    %p153 = scmp.ne.s32.totalorder %s141, %s142
    %p154 = scmp.eq.s32.totalorder %s22, 1
    %p155 = por %p153, %p154
    %p157 = scmp.ne.s32.totalorder %s142, %s156
    %p158 = scmp.eq.s32.totalorder %s22, 0
    %p159 = por %p157, %p158
    %s161 = sadd.s32 %s160, 1
    %p164 = scmp.eq.s32.totalorder %s16, 1
    %p165 = scmp.ne.s32.totalorder %s160, %s162
    %p166 = scmp.eq.s32.totalorder %s16, 0
    %p167 = por %p165, %p166
    %p168 = scmp.ne.s32.totalorder %s160, %s162
    %p169 = scmp.eq.s32.totalorder %s21, 1
    %p170 = por %p168, %p169
    %p171 = scmp.ne.s32.totalorder %s162, %s163
    %p172 = scmp.eq.s32.totalorder %s21, 0
    %p173 = por %p171, %p172
    %p174 = scmp.ne.s32.totalorder %s162, %s163
    %p175 = scmp.eq.s32.totalorder %s22, 1
    %p176 = por %p174, %p175
    %p178 = scmp.ne.s32.totalorder %s163, %s177
    %p179 = scmp.eq.s32.totalorder %s22, 0
    %p180 = por %p178, %p179
    %s181 = ssub.s32 %s16, %s23
    %p182 = scmp.eq.s32.totalorder %s181, 0
    %s184 = sadd.s32 %s183, 1
    %s185 = scalar_select %p182, %s183, %s184
    %p188 = pneg %p182
    %p189 = scmp.eq.s32.totalorder %s16, 1
    %p190 = por %p188, %p189
    %p191 = scmp.ne.s32.totalorder %s183, %s186
    %p192 = scmp.eq.s32.totalorder %s16, 0
    %p193 = por %p191, %p192
    %p194 = scmp.ne.s32.totalorder %s183, %s186
    %p195 = scmp.eq.s32.totalorder %s21, 1
    %p196 = por %p194, %p195
    %p197 = scmp.ne.s32.totalorder %s186, %s187
    %p198 = scmp.eq.s32.totalorder %s21, 0
    %p199 = por %p197, %p198
    %p200 = scmp.ne.s32.totalorder %s186, %s187
    %p201 = scmp.eq.s32.totalorder %s22, 1
    %p202 = por %p200, %p201
    %p204 = scmp.ne.s32.totalorder %s187, %s203
    %p205 = scmp.eq.s32.totalorder %s22, 0
    %p206 = por %p204, %p205
    %s207 = ssub.s32 %s16, %s23
    %p208 = scmp.eq.s32.totalorder %s207, 0
    %s210 = sadd.s32 %s209, 1
    %s211 = scalar_select %p208, %s209, %s210
    %p214 = pneg %p208
    %p215 = scmp.eq.s32.totalorder %s16, 1
    %p216 = por %p214, %p215
    %p217 = scmp.ne.s32.totalorder %s209, %s212
    %p218 = scmp.eq.s32.totalorder %s16, 0
    %p219 = por %p217, %p218
    %p220 = scmp.ne.s32.totalorder %s209, %s212
    %p221 = scmp.eq.s32.totalorder %s21, 1
    %p222 = por %p220, %p221
    %p223 = scmp.ne.s32.totalorder %s212, %s213
    %p224 = scmp.eq.s32.totalorder %s21, 0
    %p225 = por %p223, %p224
    %p226 = scmp.ne.s32.totalorder %s212, %s213
    %p227 = scmp.eq.s32.totalorder %s22, 1
    %p228 = por %p226, %p227
    %p230 = scmp.ne.s32.totalorder %s213, %s229
    %p231 = scmp.eq.s32.totalorder %s22, 0
    %p232 = por %p230, %p231
    %s233 = ssub.s32 %s16, %s23
    %p234 = scmp.eq.s32.totalorder %s233, 0
    %s236 = sadd.s32 %s235, 1
    %s237 = scalar_select %p234, %s235, %s236
    %p240 = pneg %p234
    %p241 = scmp.eq.s32.totalorder %s16, 1
    %p242 = por %p240, %p241
    %p243 = scmp.ne.s32.totalorder %s235, %s238
    %p244 = scmp.eq.s32.totalorder %s16, 0
    %p245 = por %p243, %p244
    %p246 = scmp.ne.s32.totalorder %s235, %s238
    %p247 = scmp.eq.s32.totalorder %s21, 1
    %p248 = por %p246, %p247
    %p249 = scmp.ne.s32.totalorder %s238, %s239
    %p250 = scmp.eq.s32.totalorder %s21, 0
    %p251 = por %p249, %p250
    %p252 = scmp.ne.s32.totalorder %s238, %s239
    %p253 = scmp.eq.s32.totalorder %s22, 1
    %p254 = por %p252, %p253
    %p256 = scmp.ne.s32.totalorder %s239, %s255
    %p257 = scmp.eq.s32.totalorder %s22, 0
    %p258 = por %p256, %p257
    %p259 = scmp.le.s32.totalorder 1, %s16
    %p260 = scmp.lt.s32.totalorder %s16, 3
    %p261 = pnand %p259, %p260
    %p262 = pneg %p261
    // Predicated region
    $region9: #{multi_resolution_ncc.4} parent=5 // pred_check
      _
    $region10: #{multi_resolution_ncc.4} parent=5 // pred_check_branch
      %264 = sbr.rel (%p261) target = $region12
    $region11: #{multi_resolution_ncc.4} parent=5 // pred_region
      %s265 = ssub.s32 %s16, 1
      // Predicated region
      $region13: #{multi_resolution_ncc.4} parent=11 // pred_check
        %p266 = pneg %p89
      $region14: #{multi_resolution_ncc.4} parent=11 // pred_check_branch
        %268 = sbr.rel (%p266) target = $region16
      $region15: #{multi_resolution_ncc.4} parent=11 // pred_region
        _
      $region16: #{multi_resolution_ncc.4} parent=11 // pred_fallthru
        _
      // Predicated region
      $region17: #{multi_resolution_ncc.4} parent=11 // pred_check
        %p269 = pneg %p110
      $region18: #{multi_resolution_ncc.4} parent=11 // pred_check_branch
        %271 = sbr.rel (%p269) target = $region20
      $region19: #{multi_resolution_ncc.4} parent=11 // pred_region
        _
      $region20: #{multi_resolution_ncc.4} parent=11 // pred_fallthru
        _
      // Predicated region
      $region21: #{multi_resolution_ncc.4} parent=11 // pred_check
        %p272 = pneg %p131
      $region22: #{multi_resolution_ncc.4} parent=11 // pred_check_branch
        %274 = sbr.rel (%p272) target = $region24
      $region23: #{multi_resolution_ncc.4} parent=11 // pred_region
        _
      $region24: #{multi_resolution_ncc.4} parent=11 // pred_fallthru
        _
      // Predicated region
      $region25: #{multi_resolution_ncc.4} parent=11 // pred_check
        %p275 = pneg %p152
      $region26: #{multi_resolution_ncc.4} parent=11 // pred_check_branch
        %277 = sbr.rel (%p275) target = $region28
      $region27: #{multi_resolution_ncc.4} parent=11 // pred_region
        _
      $region28: #{multi_resolution_ncc.4} parent=11 // pred_fallthru
        _
      // Predicated region
      $region29: #{multi_resolution_ncc.4} parent=11 // pred_check
        %p278 = pneg %p173
      $region30: #{multi_resolution_ncc.4} parent=11 // pred_check_branch
        %280 = sbr.rel (%p278) target = $region32
      $region31: #{multi_resolution_ncc.4} parent=11 // pred_region
        _
      $region32: #{multi_resolution_ncc.4} parent=11 // pred_fallthru
        _
    $region12: #{multi_resolution_ncc.4} parent=5 // pred_fallthru
      _
    %p281 = scmp.lt.s32.totalorder %s16, 2
    // Predicated region
    $region33: #{multi_resolution_ncc.4} parent=5 // pred_check
      %p282 = pneg %p281
    $region34: #{multi_resolution_ncc.4} parent=5 // pred_check_branch
      %284 = sbr.rel (%p282) target = $region36
    $region35: #{multi_resolution_ncc.4} parent=5 // pred_region
      // Predicated region
      $region37: #{multi_resolution_ncc.4} parent=35 // pred_check
        %p285 = pneg %p36
      $region38: #{multi_resolution_ncc.4} parent=35 // pred_check_branch
        %287 = sbr.rel (%p285) target = $region40
      $region39: #{multi_resolution_ncc.4} parent=35 // pred_region
        %p288 = scmp.lt.s32.totalorder %s16, 1
        %s289 = scalar_select %p288, %s16, 1
        %s290 = smul.addr %s289, 8
        %s291 = scalar_lea.vmem %s0, %s290
      $region40: #{multi_resolution_ncc.4} parent=35 // pred_fallthru
        _
      // Predicated region
      $region41: #{multi_resolution_ncc.4} parent=35 // pred_check
        %p292 = pneg %p62
      $region42: #{multi_resolution_ncc.4} parent=35 // pred_check_branch
        %294 = sbr.rel (%p292) target = $region44
      $region43: #{multi_resolution_ncc.4} parent=35 // pred_region
        %p295 = scmp.lt.s32.totalorder %s16, 1
        %s296 = scalar_select %p295, %s16, 1
        %s297 = smul.addr %s296, 8
        %s298 = scalar_lea.vmem %s1, %s297
      $region44: #{multi_resolution_ncc.4} parent=35 // pred_fallthru
        _
    $region36: #{multi_resolution_ncc.4} parent=5 // pred_fallthru
      _
    %p299 = scmp.le.s32.totalorder 1, %s16
    %p300 = scmp.lt.s32.totalorder %s16, 3
    %p301 = pnand %p299, %p300
    %p302 = pneg %p301
    // Predicated region
    $region45: #{multi_resolution_ncc.4} parent=5 // pred_check
      _
    $region46: #{multi_resolution_ncc.4} parent=5 // pred_check_branch
      %304 = sbr.rel (%p301) target = $region48
    $region47: #{multi_resolution_ncc.4} parent=5 // pred_region
      %s305 = ssub.s32 %s16, 1
      %p306 = scmp.lt.s32.totalorder %s21, 1
      %s307 = scalar_select %p306, %s21, 1
      %s308 = smul.addr %s307, 8
      %s309 = scalar_lea.vmem %s0, %s308
      %p310 = pneg %p42
      %p311 = pneg %p39
      %p312 = scmp.lt.s32.totalorder %s21, 1
      %s313 = scalar_select %p312, %s21, 1
      %s314 = smul.addr %s313, 8
      %s315 = scalar_lea.vmem %s1, %s314
      %p316 = pneg %p68
      %p317 = pneg %p65
      %p318 = pneg %p89
      %p319 = pneg %p86
      %p320 = pneg %p110
      %p321 = pneg %p107
      %p322 = pneg %p131
      %p323 = pneg %p128
      %p324 = pneg %p152
      %p325 = pneg %p149
      %p326 = pneg %p173
      %p327 = pneg %p170
      %p328 = pneg %p199
      %p329 = pneg %p196
      %p330 = scmp.lt.s32.totalorder %s21, 1
      %s331 = scalar_select %p330, %s21, 1
      %s332 = scalar_lea.vmem %s7, %s331
      %p333 = pneg %p225
      %p334 = pneg %p222
      %p335 = scmp.lt.s32.totalorder %s21, 1
      %s336 = scalar_select %p335, %s21, 1
      %s337 = smul.addr %s336, 4
      %s338 = scalar_lea.vmem %s8, %s337
      %p339 = pneg %p251
      %p340 = pneg %p248
      %p341 = scmp.lt.s32.totalorder %s21, 1
      %s342 = scalar_select %p341, %s21, 1
      %s343 = smul.addr %s342, 4
      %s344 = scalar_lea.vmem %s9, %s343
      %p345 = scmp.lt.s32.totalorder %s21, 1
      %s346 = scalar_select %p345, %s21, 1
      %s347 = smul.addr %s346, 8
      %s348 = scalar_lea.vmem %s0, %s347
      %p349 = scmp.lt.s32.totalorder %s21, 1
      %s350 = scalar_select %p349, %s21, 1
      %s351 = smul.addr %s350, 8
      %s352 = scalar_lea.vmem %s1, %s351
      %p353 = scmp.lt.s32.totalorder %s21, 1
      %s354 = scalar_select %p353, %s21, 1
      %s355 = scalar_lea.vmem %s7, %s354
      %p356 = scmp.lt.s32.totalorder %s21, 1
      %s357 = scalar_select %p356, %s21, 1
      %s358 = smul.addr %s357, 4
      %s359 = scalar_lea.vmem %s8, %s358
      %p360 = scmp.lt.s32.totalorder %s21, 1
      %s361 = scalar_select %p360, %s21, 1
      %s362 = smul.addr %s361, 4
      %s363 = scalar_lea.vmem %s9, %s362
      %v364 = vld [vmem:[%s348] sm:$0xff]
      %v365 = vld [vmem:[%s352] sm:$0xff]
      %v366 = vld [vmem:[%s3] sm:$0x1]
      %v367 = vld [vmem:[%s4] sm:$0x1]
      %368 = vrot.lane.b32.xlu0 %v366, 1
      %v369 = vpop.permute.xlu0 %368
      %370 = vrot.lane.b32.xlu0 %v367, 1
      %v371 = vpop.permute.xlu0 %370
      %v372 = vsub.f32 %v369, %v366
      %v373 = vand.u32 2147483647, %v372
      %vm374 = vcmp.le.f32.partialorder %v373, 0.0
      %v375 = vsub.f32 %v371, %v367
      %v376 = vand.u32 2147483647, %v375
      %vm377 = vcmp.le.f32.partialorder %v376, 2.0
      %vm378 = vmand %vm374, %vm377
      %v379 = vsel %vm378, 1, 0
      %v380 = vcvt.s32.f32 %v379
      %381 = vrot.lane.b32.xlu0 %v366, 2
      %v382 = vpop.permute.xlu0 %381
      %383 = vrot.lane.b32.xlu0 %v367, 2
      %v384 = vpop.permute.xlu0 %383
      %v385 = vsub.f32 %v382, %v366
      %v386 = vand.u32 2147483647, %v385
      %vm387 = vcmp.le.f32.partialorder %v386, 0.0
      %v388 = vsub.f32 %v384, %v367
      %v389 = vand.u32 2147483647, %v388
      %vm390 = vcmp.le.f32.partialorder %v389, 2.0
      %vm391 = vmand %vm387, %vm390
      %v392 = vsel %vm391, 1, 0
      %v393 = vcvt.s32.f32 %v392
      %394 = vrot.lane.b32.xlu0 %v366, 127
      %v395 = vpop.permute.xlu0 %394
      %396 = vrot.lane.b32.xlu0 %v367, 127
      %v397 = vpop.permute.xlu0 %396
      %v398 = vsub.f32 %v395, %v366
      %v399 = vand.u32 2147483647, %v398
      %vm400 = vcmp.le.f32.partialorder %v399, 0.0
      %v401 = vsub.f32 %v397, %v367
      %v402 = vand.u32 2147483647, %v401
      %vm403 = vcmp.le.f32.partialorder %v402, 2.0
      %vm404 = vmand %vm400, %vm403
      %v405 = vsel %vm404, 1, 0
      %v406 = vcvt.s32.f32 %v405
      %407 = vrot.lane.b32.xlu0 %v366, 126
      %v408 = vpop.permute.xlu0 %407
      %409 = vrot.lane.b32.xlu0 %v367, 126
      %v410 = vpop.permute.xlu0 %409
      %v411 = vsub.f32 %v408, %v366
      %v412 = vand.u32 2147483647, %v411
      %vm413 = vcmp.le.f32.partialorder %v412, 0.0
      %v414 = vsub.f32 %v410, %v367
      %v415 = vand.u32 2147483647, %v414
      %vm416 = vcmp.le.f32.partialorder %v415, 2.0
      %vm417 = vmand %vm413, %vm416
      %v418 = vsel %vm417, 1, 0
      %v419 = vcvt.s32.f32 %v418
      %420 = vrot.lane.b32.xlu0 %v366, 8
      %v421 = vpop.permute.xlu0 %420
      %422 = vrot.lane.b32.xlu0 %v367, 8
      %v423 = vpop.permute.xlu0 %422
      %v424 = vsub.f32 %v421, %v366
      %v425 = vand.u32 2147483647, %v424
      %vm426 = vcmp.le.f32.partialorder %v425, 2.0
      %v427 = vsub.f32 %v423, %v367
      %v428 = vand.u32 2147483647, %v427
      %vm429 = vcmp.le.f32.partialorder %v428, 0.0
      %vm430 = vmand %vm426, %vm429
      %v431 = vsel %vm430, 1, 0
      %v432 = vcvt.s32.f32 %v431
      %433 = vrot.lane.b32.xlu0 %v366, 16
      %v434 = vpop.permute.xlu0 %433
      %435 = vrot.lane.b32.xlu0 %v367, 16
      %v436 = vpop.permute.xlu0 %435
      %v437 = vsub.f32 %v434, %v366
      %v438 = vand.u32 2147483647, %v437
      %vm439 = vcmp.le.f32.partialorder %v438, 2.0
      %v440 = vsub.f32 %v436, %v367
      %v441 = vand.u32 2147483647, %v440
      %vm442 = vcmp.le.f32.partialorder %v441, 0.0
      %vm443 = vmand %vm439, %vm442
      %v444 = vsel %vm443, 1, 0
      %v445 = vcvt.s32.f32 %v444
      %446 = vrot.lane.b32.xlu0 %v366, 120
      %v447 = vpop.permute.xlu0 %446
      %448 = vrot.lane.b32.xlu0 %v367, 120
      %v449 = vpop.permute.xlu0 %448
      %v450 = vsub.f32 %v447, %v366
      %v451 = vand.u32 2147483647, %v450
      %vm452 = vcmp.le.f32.partialorder %v451, 2.0
      %v453 = vsub.f32 %v449, %v367
      %v454 = vand.u32 2147483647, %v453
      %vm455 = vcmp.le.f32.partialorder %v454, 0.0
      %vm456 = vmand %vm452, %vm455
      %v457 = vsel %vm456, 1, 0
      %v458 = vcvt.s32.f32 %v457
      %459 = vrot.lane.b32.xlu0 %v366, 112
      %v460 = vpop.permute.xlu0 %459
      %461 = vrot.lane.b32.xlu0 %v367, 112
      %v462 = vpop.permute.xlu0 %461
      %v463 = vsub.f32 %v460, %v366
      %v464 = vand.u32 2147483647, %v463
      %vm465 = vcmp.le.f32.partialorder %v464, 2.0
      %v466 = vsub.f32 %v462, %v367
      %v467 = vand.u32 2147483647, %v466
      %vm468 = vcmp.le.f32.partialorder %v467, 0.0
      %vm469 = vmand %vm465, %vm468
      %v470 = vsel %vm469, 1, 0
      %v471 = vcvt.s32.f32 %v470
      %v472 = vld [vmem:[%s2] sm:$0xff]
      %473 = vrot.lane.b32.xlu0 %v364, 1
      %v474 = vpop.permute.xlu0 %473
      %v475 = vlaneseq
      %v476 = vshrl.u32 %v475, 7
      %v477 = vsub.s32 0, %v476
      %v478 = vrot.slane %v380, %v477
      %v479 = vmul.f32 %v478, %v474
      %v480 = vadd.f32 %v364, %v479
      %481 = vrot.lane.b32.xlu0 %v364, 2
      %v482 = vpop.permute.xlu0 %481
      %v483 = vlaneseq
      %v484 = vshrl.u32 %v483, 7
      %v485 = vsub.s32 0, %v484
      %v486 = vrot.slane %v393, %v485
      %v487 = vmul.f32 %v486, %v482
      %v488 = vadd.f32 %v480, %v487
      %489 = vrot.lane.b32.xlu0 %v364, 127
      %v490 = vpop.permute.xlu0 %489
      %v491 = vlaneseq
      %v492 = vshrl.u32 %v491, 7
      %v493 = vsub.s32 0, %v492
      %v494 = vrot.slane %v406, %v493
      %v495 = vmul.f32 %v494, %v490
      %v496 = vadd.f32 %v488, %v495
      %497 = vrot.lane.b32.xlu0 %v364, 126
      %v498 = vpop.permute.xlu0 %497
      %v499 = vlaneseq
      %v500 = vshrl.u32 %v499, 7
      %v501 = vsub.s32 0, %v500
      %v502 = vrot.slane %v419, %v501
      %v503 = vmul.f32 %v502, %v498
      %v504 = vadd.f32 %v496, %v503
      %505 = vrot.lane.b32.xlu0 %v504, 8
      %v506 = vpop.permute.xlu0 %505
      %v507 = vlaneseq
      %v508 = vshrl.u32 %v507, 7
      %v509 = vsub.s32 0, %v508
      %v510 = vrot.slane %v432, %v509
      %v511 = vmul.f32 %v510, %v506
      %v512 = vadd.f32 %v504, %v511
      %513 = vrot.lane.b32.xlu0 %v504, 16
      %v514 = vpop.permute.xlu0 %513
      %v515 = vlaneseq
      %v516 = vshrl.u32 %v515, 7
      %v517 = vsub.s32 0, %v516
      %v518 = vrot.slane %v445, %v517
      %v519 = vmul.f32 %v518, %v514
      %v520 = vadd.f32 %v512, %v519
      %521 = vrot.lane.b32.xlu0 %v504, 120
      %v522 = vpop.permute.xlu0 %521
      %v523 = vlaneseq
      %v524 = vshrl.u32 %v523, 7
      %v525 = vsub.s32 0, %v524
      %v526 = vrot.slane %v458, %v525
      %v527 = vmul.f32 %v526, %v522
      %v528 = vadd.f32 %v520, %v527
      %529 = vrot.lane.b32.xlu0 %v504, 112
      %v530 = vpop.permute.xlu0 %529
      %v531 = vlaneseq
      %v532 = vshrl.u32 %v531, 7
      %v533 = vsub.s32 0, %v532
      %v534 = vrot.slane %v471, %v533
      %v535 = vmul.f32 %v534, %v530
      %v536 = vadd.f32 %v528, %v535
      %vm537 = vcmask 64512
      %v539 = vsel %vm537, %v472, 0
      %541 = vmatprep.subr.mxu0 0.0
      %542 = vmatpush1.msra.mxu0 0.0
      %543 = vmatprep.subr.mxu0 0.0
      %544 = vmatpush1.msra.mxu0 0.0
      %545 = vmatprep.subr.mxu0 0.0
      %546 = vmatpush1.msra.mxu0 0.0
      %547 = vmatprep.subr.mxu0 0.0
      %548 = vmatpush1.msra.mxu0 0.0
      %549 = vmatprep.subr.mxu0 0.0
      %550 = vmatpush1.msra.mxu0 0.0
      %551 = vmatprep.subr.mxu0 0.0
      %552 = vmatpush1.msra.mxu0 0.0
      %553 = vmatprep.subr.mxu0 0.0
      %554 = vmatpush1.msra.mxu0 0.0
      %555 = vmatprep.subr.mxu0 0.0
      %556 = vmatpush1.msra.mxu0 0.0
      %557 = vmatprep.subr.mxu0 0.0
      %558 = vmatpush1.msra.mxu0 0.0
      %559 = vmatprep.subr.mxu0 0.0
      %560 = vmatpush1.msra.mxu0 0.0
      %561 = vmatprep.subr.mxu0 0.0
      %562 = vmatpush1.msra.mxu0 0.0
      %563 = vmatprep.subr.mxu0 0.0
      %564 = vmatpush1.msra.mxu0 0.0
      %565 = vmatprep.subr.mxu0 0.0
      %566 = vmatpush1.msra.mxu0 0.0
      %567 = vmatprep.subr.mxu0 0.0
      %568 = vmatpush1.msra.mxu0 0.0
      %569 = vmatprep.subr.mxu0 0.0
      %570 = vmatpush1.msra.mxu0 0.0
      %571 = vmatprep.subr.mxu0 0.0
      %572 = vmatpush1.msra.mxu0 %v536
      %573 = vmatprep.subr.mxu0 0.0
      %574 = vmatpush2.msra.mxu0 0.0
      %575 = vmatprep.subr.mxu0 0.0
      %576 = vmatpush2.msra.mxu0 0.0
      %577 = vmatprep.subr.mxu0 0.0
      %578 = vmatpush2.msra.mxu0 0.0
      %579 = vmatprep.subr.mxu0 0.0
      %580 = vmatpush2.msra.mxu0 0.0
      %581 = vmatprep.subr.mxu0 0.0
      %582 = vmatpush2.msra.mxu0 0.0
      %583 = vmatprep.subr.mxu0 0.0
      %584 = vmatpush2.msra.mxu0 0.0
      %585 = vmatprep.subr.mxu0 0.0
      %586 = vmatpush2.msra.mxu0 0.0
      %587 = vmatprep.subr.mxu0 0.0
      %588 = vmatpush2.msra.mxu0 0.0
      %589 = vmatprep.subr.mxu0 0.0
      %590 = vmatpush2.msra.mxu0 0.0
      %591 = vmatprep.subr.mxu0 0.0
      %592 = vmatpush2.msra.mxu0 0.0
      %593 = vmatprep.subr.mxu0 0.0
      %594 = vmatpush2.msra.mxu0 0.0
      %595 = vmatprep.subr.mxu0 0.0
      %596 = vmatpush2.msra.mxu0 0.0
      %597 = vmatprep.subr.mxu0 0.0
      %598 = vmatpush2.msra.mxu0 0.0
      %599 = vmatprep.subr.mxu0 0.0
      %600 = vmatpush2.msra.mxu0 0.0
      %601 = vmatprep.subr.mxu0 0.0
      %602 = vmatpush2.msra.mxu0 0.0
      %603 = vmatprep.subr.mxu0 0.0
      %604 = vmatpush2.msra.mxu0 0.0
      %605 = vmatprep.mubr.f32.mxu0 0.0
      %606 = vmatmul.mubr.f32.gmra.mxu0 %v539
      %v607 = vpop.f32.mrf.mxu0
      %v608 = vadd.f32 0.0, %v607
      %v609 = vpop.f32.mrf.mxu0
      %610 = vdwg.mxu0
      %611 = vrot.lane.b32.xlu0 %v365, 1
      %v612 = vpop.permute.xlu0 %611
      %v613 = vmul.f32 %v478, %v612
      %v614 = vadd.f32 %v365, %v613
      %615 = vrot.lane.b32.xlu0 %v365, 2
      %v616 = vpop.permute.xlu0 %615
      %v617 = vmul.f32 %v486, %v616
      %v618 = vadd.f32 %v614, %v617
      %619 = vrot.lane.b32.xlu0 %v365, 127
      %v620 = vpop.permute.xlu0 %619
      %v621 = vmul.f32 %v494, %v620
      %v622 = vadd.f32 %v618, %v621
      %623 = vrot.lane.b32.xlu0 %v365, 126
      %v624 = vpop.permute.xlu0 %623
      %v625 = vmul.f32 %v502, %v624
      %v626 = vadd.f32 %v622, %v625
      %627 = vrot.lane.b32.xlu0 %v626, 8
      %v628 = vpop.permute.xlu0 %627
      %v629 = vmul.f32 %v510, %v628
      %v630 = vadd.f32 %v626, %v629
      %631 = vrot.lane.b32.xlu0 %v626, 16
      %v632 = vpop.permute.xlu0 %631
      %v633 = vmul.f32 %v518, %v632
      %v634 = vadd.f32 %v630, %v633
      %635 = vrot.lane.b32.xlu0 %v626, 120
      %v636 = vpop.permute.xlu0 %635
      %v637 = vmul.f32 %v526, %v636
      %v638 = vadd.f32 %v634, %v637
      %639 = vrot.lane.b32.xlu0 %v626, 112
      %v640 = vpop.permute.xlu0 %639
      %v641 = vmul.f32 %v534, %v640
      %v642 = vadd.f32 %v638, %v641
      %643 = vmatprep.subr.mxu0 0.0
      %644 = vmatpush1.msra.mxu0 0.0
      %645 = vmatprep.subr.mxu0 0.0
      %646 = vmatpush1.msra.mxu0 0.0
      %647 = vmatprep.subr.mxu0 0.0
      %648 = vmatpush1.msra.mxu0 0.0
      %649 = vmatprep.subr.mxu0 0.0
      %650 = vmatpush1.msra.mxu0 0.0
      %651 = vmatprep.subr.mxu0 0.0
      %652 = vmatpush1.msra.mxu0 0.0
      %653 = vmatprep.subr.mxu0 0.0
      %654 = vmatpush1.msra.mxu0 0.0
      %655 = vmatprep.subr.mxu0 0.0
      %656 = vmatpush1.msra.mxu0 0.0
      %657 = vmatprep.subr.mxu0 0.0
      %658 = vmatpush1.msra.mxu0 0.0
      %659 = vmatprep.subr.mxu0 0.0
      %660 = vmatpush1.msra.mxu0 0.0
      %661 = vmatprep.subr.mxu0 0.0
      %662 = vmatpush1.msra.mxu0 0.0
      %663 = vmatprep.subr.mxu0 0.0
      %664 = vmatpush1.msra.mxu0 0.0
      %665 = vmatprep.subr.mxu0 0.0
      %666 = vmatpush1.msra.mxu0 0.0
      %667 = vmatprep.subr.mxu0 0.0
      %668 = vmatpush1.msra.mxu0 0.0
      %669 = vmatprep.subr.mxu0 0.0
      %670 = vmatpush1.msra.mxu0 0.0
      %671 = vmatprep.subr.mxu0 0.0
      %672 = vmatpush1.msra.mxu0 0.0
      %673 = vmatprep.subr.mxu0 0.0
      %674 = vmatpush1.msra.mxu0 %v642
      %675 = vmatprep.subr.mxu0 0.0
      %676 = vmatpush2.msra.mxu0 0.0
      %677 = vmatprep.subr.mxu0 0.0
      %678 = vmatpush2.msra.mxu0 0.0
      %679 = vmatprep.subr.mxu0 0.0
      %680 = vmatpush2.msra.mxu0 0.0
      %681 = vmatprep.subr.mxu0 0.0
      %682 = vmatpush2.msra.mxu0 0.0
      %683 = vmatprep.subr.mxu0 0.0
      %684 = vmatpush2.msra.mxu0 0.0
      %685 = vmatprep.subr.mxu0 0.0
      %686 = vmatpush2.msra.mxu0 0.0
      %687 = vmatprep.subr.mxu0 0.0
      %688 = vmatpush2.msra.mxu0 0.0
      %689 = vmatprep.subr.mxu0 0.0
      %690 = vmatpush2.msra.mxu0 0.0
      %691 = vmatprep.subr.mxu0 0.0
      %692 = vmatpush2.msra.mxu0 0.0
      %693 = vmatprep.subr.mxu0 0.0
      %694 = vmatpush2.msra.mxu0 0.0
      %695 = vmatprep.subr.mxu0 0.0
      %696 = vmatpush2.msra.mxu0 0.0
      %697 = vmatprep.subr.mxu0 0.0
      %698 = vmatpush2.msra.mxu0 0.0
      %699 = vmatprep.subr.mxu0 0.0
      %700 = vmatpush2.msra.mxu0 0.0
      %701 = vmatprep.subr.mxu0 0.0
      %702 = vmatpush2.msra.mxu0 0.0
      %703 = vmatprep.subr.mxu0 0.0
      %704 = vmatpush2.msra.mxu0 0.0
      %705 = vmatprep.subr.mxu0 0.0
      %706 = vmatpush2.msra.mxu0 0.0
      %707 = vmatprep.mubr.f32.mxu0 0.0
      %708 = vmatmul.mubr.f32.gmra.mxu0 %v539
      %v709 = vpop.f32.mrf.mxu0
      %v710 = vadd.f32 0.0, %v709
      %v711 = vpop.f32.mrf.mxu0
      %712 = vdwg.mxu0
      %v713 = vmul.f32 %v364, %v364
      %714 = vrot.lane.b32.xlu0 %v713, 1
      %v715 = vpop.permute.xlu0 %714
      %v716 = vmul.f32 %v478, %v715
      %v717 = vadd.f32 %v713, %v716
      %718 = vrot.lane.b32.xlu0 %v713, 2
      %v719 = vpop.permute.xlu0 %718
      %v720 = vmul.f32 %v486, %v719
      %v721 = vadd.f32 %v717, %v720
      %722 = vrot.lane.b32.xlu0 %v713, 127
      %v723 = vpop.permute.xlu0 %722
      %v724 = vmul.f32 %v494, %v723
      %v725 = vadd.f32 %v721, %v724
      %726 = vrot.lane.b32.xlu0 %v713, 126
      %v727 = vpop.permute.xlu0 %726
      %v728 = vmul.f32 %v502, %v727
      %v729 = vadd.f32 %v725, %v728
      %730 = vrot.lane.b32.xlu0 %v729, 8
      %v731 = vpop.permute.xlu0 %730
      %v732 = vmul.f32 %v510, %v731
      %v733 = vadd.f32 %v729, %v732
      %734 = vrot.lane.b32.xlu0 %v729, 16
      %v735 = vpop.permute.xlu0 %734
      %v736 = vmul.f32 %v518, %v735
      %v737 = vadd.f32 %v733, %v736
      %738 = vrot.lane.b32.xlu0 %v729, 120
      %v739 = vpop.permute.xlu0 %738
      %v740 = vmul.f32 %v526, %v739
      %v741 = vadd.f32 %v737, %v740
      %742 = vrot.lane.b32.xlu0 %v729, 112
      %v743 = vpop.permute.xlu0 %742
      %v744 = vmul.f32 %v534, %v743
      %v745 = vadd.f32 %v741, %v744
      %746 = vmatprep.subr.mxu0 0.0
      %747 = vmatpush1.msra.mxu0 0.0
      %748 = vmatprep.subr.mxu0 0.0
      %749 = vmatpush1.msra.mxu0 0.0
      %750 = vmatprep.subr.mxu0 0.0
      %751 = vmatpush1.msra.mxu0 0.0
      %752 = vmatprep.subr.mxu0 0.0
      %753 = vmatpush1.msra.mxu0 0.0
      %754 = vmatprep.subr.mxu0 0.0
      %755 = vmatpush1.msra.mxu0 0.0
      %756 = vmatprep.subr.mxu0 0.0
      %757 = vmatpush1.msra.mxu0 0.0
      %758 = vmatprep.subr.mxu0 0.0
      %759 = vmatpush1.msra.mxu0 0.0
      %760 = vmatprep.subr.mxu0 0.0
      %761 = vmatpush1.msra.mxu0 0.0
      %762 = vmatprep.subr.mxu0 0.0
      %763 = vmatpush1.msra.mxu0 0.0
      %764 = vmatprep.subr.mxu0 0.0
      %765 = vmatpush1.msra.mxu0 0.0
      %766 = vmatprep.subr.mxu0 0.0
      %767 = vmatpush1.msra.mxu0 0.0
      %768 = vmatprep.subr.mxu0 0.0
      %769 = vmatpush1.msra.mxu0 0.0
      %770 = vmatprep.subr.mxu0 0.0
      %771 = vmatpush1.msra.mxu0 0.0
      %772 = vmatprep.subr.mxu0 0.0
      %773 = vmatpush1.msra.mxu0 0.0
      %774 = vmatprep.subr.mxu0 0.0
      %775 = vmatpush1.msra.mxu0 0.0
      %776 = vmatprep.subr.mxu0 0.0
      %777 = vmatpush1.msra.mxu0 %v745
      %778 = vmatprep.subr.mxu0 0.0
      %779 = vmatpush2.msra.mxu0 0.0
      %780 = vmatprep.subr.mxu0 0.0
      %781 = vmatpush2.msra.mxu0 0.0
      %782 = vmatprep.subr.mxu0 0.0
      %783 = vmatpush2.msra.mxu0 0.0
      %784 = vmatprep.subr.mxu0 0.0
      %785 = vmatpush2.msra.mxu0 0.0
      %786 = vmatprep.subr.mxu0 0.0
      %787 = vmatpush2.msra.mxu0 0.0
      %788 = vmatprep.subr.mxu0 0.0
      %789 = vmatpush2.msra.mxu0 0.0
      %790 = vmatprep.subr.mxu0 0.0
      %791 = vmatpush2.msra.mxu0 0.0
      %792 = vmatprep.subr.mxu0 0.0
      %793 = vmatpush2.msra.mxu0 0.0
      %794 = vmatprep.subr.mxu0 0.0
      %795 = vmatpush2.msra.mxu0 0.0
      %796 = vmatprep.subr.mxu0 0.0
      %797 = vmatpush2.msra.mxu0 0.0
      %798 = vmatprep.subr.mxu0 0.0
      %799 = vmatpush2.msra.mxu0 0.0
      %800 = vmatprep.subr.mxu0 0.0
      %801 = vmatpush2.msra.mxu0 0.0
      %802 = vmatprep.subr.mxu0 0.0
      %803 = vmatpush2.msra.mxu0 0.0
      %804 = vmatprep.subr.mxu0 0.0
      %805 = vmatpush2.msra.mxu0 0.0
      %806 = vmatprep.subr.mxu0 0.0
      %807 = vmatpush2.msra.mxu0 0.0
      %808 = vmatprep.subr.mxu0 0.0
      %809 = vmatpush2.msra.mxu0 0.0
      %810 = vmatprep.mubr.f32.mxu0 0.0
      %811 = vmatmul.mubr.f32.gmra.mxu0 %v539
      %v812 = vpop.f32.mrf.mxu0
      %v813 = vadd.f32 0.0, %v812
      %v814 = vpop.f32.mrf.mxu0
      %815 = vdwg.mxu0
      %v816 = vmul.f32 %v365, %v365
      %817 = vrot.lane.b32.xlu0 %v816, 1
      %v818 = vpop.permute.xlu0 %817
      %v819 = vmul.f32 %v478, %v818
      %v820 = vadd.f32 %v816, %v819
      %821 = vrot.lane.b32.xlu0 %v816, 2
      %v822 = vpop.permute.xlu0 %821
      %v823 = vmul.f32 %v486, %v822
      %v824 = vadd.f32 %v820, %v823
      %825 = vrot.lane.b32.xlu0 %v816, 127
      %v826 = vpop.permute.xlu0 %825
      %v827 = vmul.f32 %v494, %v826
      %v828 = vadd.f32 %v824, %v827
      %829 = vrot.lane.b32.xlu0 %v816, 126
      %v830 = vpop.permute.xlu0 %829
      %v831 = vmul.f32 %v502, %v830
      %v832 = vadd.f32 %v828, %v831
      %833 = vrot.lane.b32.xlu0 %v832, 8
      %v834 = vpop.permute.xlu0 %833
      %v835 = vmul.f32 %v510, %v834
      %v836 = vadd.f32 %v832, %v835
      %837 = vrot.lane.b32.xlu0 %v832, 16
      %v838 = vpop.permute.xlu0 %837
      %v839 = vmul.f32 %v518, %v838
      %v840 = vadd.f32 %v836, %v839
      %841 = vrot.lane.b32.xlu0 %v832, 120
      %v842 = vpop.permute.xlu0 %841
      %v843 = vmul.f32 %v526, %v842
      %v844 = vadd.f32 %v840, %v843
      %845 = vrot.lane.b32.xlu0 %v832, 112
      %v846 = vpop.permute.xlu0 %845
      %v847 = vmul.f32 %v534, %v846
      %v848 = vadd.f32 %v844, %v847
      %849 = vmatprep.subr.mxu0 0.0
      %850 = vmatpush1.msra.mxu0 0.0
      %851 = vmatprep.subr.mxu0 0.0
      %852 = vmatpush1.msra.mxu0 0.0
      %853 = vmatprep.subr.mxu0 0.0
      %854 = vmatpush1.msra.mxu0 0.0
      %855 = vmatprep.subr.mxu0 0.0
      %856 = vmatpush1.msra.mxu0 0.0
      %857 = vmatprep.subr.mxu0 0.0
      %858 = vmatpush1.msra.mxu0 0.0
      %859 = vmatprep.subr.mxu0 0.0
      %860 = vmatpush1.msra.mxu0 0.0
      %861 = vmatprep.subr.mxu0 0.0
      %862 = vmatpush1.msra.mxu0 0.0
      %863 = vmatprep.subr.mxu0 0.0
      %864 = vmatpush1.msra.mxu0 0.0
      %865 = vmatprep.subr.mxu0 0.0
      %866 = vmatpush1.msra.mxu0 0.0
      %867 = vmatprep.subr.mxu0 0.0
      %868 = vmatpush1.msra.mxu0 0.0
      %869 = vmatprep.subr.mxu0 0.0
      %870 = vmatpush1.msra.mxu0 0.0
      %871 = vmatprep.subr.mxu0 0.0
      %872 = vmatpush1.msra.mxu0 0.0
      %873 = vmatprep.subr.mxu0 0.0
      %874 = vmatpush1.msra.mxu0 0.0
      %875 = vmatprep.subr.mxu0 0.0
      %876 = vmatpush1.msra.mxu0 0.0
      %877 = vmatprep.subr.mxu0 0.0
      %878 = vmatpush1.msra.mxu0 0.0
      %879 = vmatprep.subr.mxu0 0.0
      %880 = vmatpush1.msra.mxu0 %v848
      %881 = vmatprep.subr.mxu0 0.0
      %882 = vmatpush2.msra.mxu0 0.0
      %883 = vmatprep.subr.mxu0 0.0
      %884 = vmatpush2.msra.mxu0 0.0
      %885 = vmatprep.subr.mxu0 0.0
      %886 = vmatpush2.msra.mxu0 0.0
      %887 = vmatprep.subr.mxu0 0.0
      %888 = vmatpush2.msra.mxu0 0.0
      %889 = vmatprep.subr.mxu0 0.0
      %890 = vmatpush2.msra.mxu0 0.0
      %891 = vmatprep.subr.mxu0 0.0
      %892 = vmatpush2.msra.mxu0 0.0
      %893 = vmatprep.subr.mxu0 0.0
      %894 = vmatpush2.msra.mxu0 0.0
      %895 = vmatprep.subr.mxu0 0.0
      %896 = vmatpush2.msra.mxu0 0.0
      %897 = vmatprep.subr.mxu0 0.0
      %898 = vmatpush2.msra.mxu0 0.0
      %899 = vmatprep.subr.mxu0 0.0
      %900 = vmatpush2.msra.mxu0 0.0
      %901 = vmatprep.subr.mxu0 0.0
      %902 = vmatpush2.msra.mxu0 0.0
      %903 = vmatprep.subr.mxu0 0.0
      %904 = vmatpush2.msra.mxu0 0.0
      %905 = vmatprep.subr.mxu0 0.0
      %906 = vmatpush2.msra.mxu0 0.0
      %907 = vmatprep.subr.mxu0 0.0
      %908 = vmatpush2.msra.mxu0 0.0
      %909 = vmatprep.subr.mxu0 0.0
      %910 = vmatpush2.msra.mxu0 0.0
      %911 = vmatprep.subr.mxu0 0.0
      %912 = vmatpush2.msra.mxu0 0.0
      %913 = vmatprep.mubr.f32.mxu0 0.0
      %914 = vmatmul.mubr.f32.gmra.mxu0 %v539
      %v915 = vpop.f32.mrf.mxu0
      %v916 = vadd.f32 0.0, %v915
      %v917 = vpop.f32.mrf.mxu0
      %918 = vdwg.mxu0
      %v919 = vmul.f32 %v364, %v365
      %920 = vrot.lane.b32.xlu0 %v919, 1
      %v921 = vpop.permute.xlu0 %920
      %v922 = vmul.f32 %v478, %v921
      %v923 = vadd.f32 %v919, %v922
      %924 = vrot.lane.b32.xlu0 %v919, 2
      %v925 = vpop.permute.xlu0 %924
      %v926 = vmul.f32 %v486, %v925
      %v927 = vadd.f32 %v923, %v926
      %928 = vrot.lane.b32.xlu0 %v919, 127
      %v929 = vpop.permute.xlu0 %928
      %v930 = vmul.f32 %v494, %v929
      %v931 = vadd.f32 %v927, %v930
      %932 = vrot.lane.b32.xlu0 %v919, 126
      %v933 = vpop.permute.xlu0 %932
      %v934 = vmul.f32 %v502, %v933
      %v935 = vadd.f32 %v931, %v934
      %936 = vrot.lane.b32.xlu0 %v935, 8
      %v937 = vpop.permute.xlu0 %936
      %v938 = vmul.f32 %v510, %v937
      %v939 = vadd.f32 %v935, %v938
      %940 = vrot.lane.b32.xlu0 %v935, 16
      %v941 = vpop.permute.xlu0 %940
      %v942 = vmul.f32 %v518, %v941
      %v943 = vadd.f32 %v939, %v942
      %944 = vrot.lane.b32.xlu0 %v935, 120
      %v945 = vpop.permute.xlu0 %944
      %v946 = vmul.f32 %v526, %v945
      %v947 = vadd.f32 %v943, %v946
      %948 = vrot.lane.b32.xlu0 %v935, 112
      %v949 = vpop.permute.xlu0 %948
      %v950 = vmul.f32 %v534, %v949
      %v951 = vadd.f32 %v947, %v950
      %952 = vmatprep.subr.mxu0 0.0
      %953 = vmatpush1.msra.mxu0 0.0
      %954 = vmatprep.subr.mxu0 0.0
      %955 = vmatpush1.msra.mxu0 0.0
      %956 = vmatprep.subr.mxu0 0.0
      %957 = vmatpush1.msra.mxu0 0.0
      %958 = vmatprep.subr.mxu0 0.0
      %959 = vmatpush1.msra.mxu0 0.0
      %960 = vmatprep.subr.mxu0 0.0
      %961 = vmatpush1.msra.mxu0 0.0
      %962 = vmatprep.subr.mxu0 0.0
      %963 = vmatpush1.msra.mxu0 0.0
      %964 = vmatprep.subr.mxu0 0.0
      %965 = vmatpush1.msra.mxu0 0.0
      %966 = vmatprep.subr.mxu0 0.0
      %967 = vmatpush1.msra.mxu0 0.0
      %968 = vmatprep.subr.mxu0 0.0
      %969 = vmatpush1.msra.mxu0 0.0
      %970 = vmatprep.subr.mxu0 0.0
      %971 = vmatpush1.msra.mxu0 0.0
      %972 = vmatprep.subr.mxu0 0.0
      %973 = vmatpush1.msra.mxu0 0.0
      %974 = vmatprep.subr.mxu0 0.0
      %975 = vmatpush1.msra.mxu0 0.0
      %976 = vmatprep.subr.mxu0 0.0
      %977 = vmatpush1.msra.mxu0 0.0
      %978 = vmatprep.subr.mxu0 0.0
      %979 = vmatpush1.msra.mxu0 0.0
      %980 = vmatprep.subr.mxu0 0.0
      %981 = vmatpush1.msra.mxu0 0.0
      %982 = vmatprep.subr.mxu0 0.0
      %983 = vmatpush1.msra.mxu0 %v951
      %984 = vmatprep.subr.mxu0 0.0
      %985 = vmatpush2.msra.mxu0 0.0
      %986 = vmatprep.subr.mxu0 0.0
      %987 = vmatpush2.msra.mxu0 0.0
      %988 = vmatprep.subr.mxu0 0.0
      %989 = vmatpush2.msra.mxu0 0.0
      %990 = vmatprep.subr.mxu0 0.0
      %991 = vmatpush2.msra.mxu0 0.0
      %992 = vmatprep.subr.mxu0 0.0
      %993 = vmatpush2.msra.mxu0 0.0
      %994 = vmatprep.subr.mxu0 0.0
      %995 = vmatpush2.msra.mxu0 0.0
      %996 = vmatprep.subr.mxu0 0.0
      %997 = vmatpush2.msra.mxu0 0.0
      %998 = vmatprep.subr.mxu0 0.0
      %999 = vmatpush2.msra.mxu0 0.0
      %1000 = vmatprep.subr.mxu0 0.0
      %1001 = vmatpush2.msra.mxu0 0.0
      %1002 = vmatprep.subr.mxu0 0.0
      %1003 = vmatpush2.msra.mxu0 0.0
      %1004 = vmatprep.subr.mxu0 0.0
      %1005 = vmatpush2.msra.mxu0 0.0
      %1006 = vmatprep.subr.mxu0 0.0
      %1007 = vmatpush2.msra.mxu0 0.0
      %1008 = vmatprep.subr.mxu0 0.0
      %1009 = vmatpush2.msra.mxu0 0.0
      %1010 = vmatprep.subr.mxu0 0.0
      %1011 = vmatpush2.msra.mxu0 0.0
      %1012 = vmatprep.subr.mxu0 0.0
      %1013 = vmatpush2.msra.mxu0 0.0
      %1014 = vmatprep.subr.mxu0 0.0
      %1015 = vmatpush2.msra.mxu0 0.0
      %1016 = vmatprep.mubr.f32.mxu0 0.0
      %1017 = vmatmul.mubr.f32.gmra.mxu0 %v539
      %v1018 = vpop.f32.mrf.mxu0
      %v1019 = vadd.f32 0.0, %v1018
      %v1020 = vpop.f32.mrf.mxu0
      %1021 = vdwg.mxu0
      %v1022 = vmul.f32 %v608, 0.008
      %v1023 = vmul.f32 %v710, 0.008
      %v1024 = vmul.f32 %v1023, %v608
      %v1025 = vsub.f32 %v1019, %v1024
      %v1026 = vmul.f32 %v1022, %v710
      %v1027 = vsub.f32 %v1025, %v1026
      %v1028 = vmul.f32 %v1022, %v1023
      %v1029 = vmul.f32 %v1028, 125.0
      %v1030 = vadd.f32 %v1027, %v1029
      %v1031 = vmul.f32 %v1022, 2.0
      %v1032 = vmul.f32 %v1031, %v608
      %v1033 = vsub.f32 %v813, %v1032
      %v1034 = vmul.f32 %v1022, %v1022
      %v1035 = vmul.f32 %v1034, 125.0
      %v1036 = vadd.f32 %v1033, %v1035
      %v1037 = vmul.f32 %v1023, 2.0
      %v1038 = vmul.f32 %v1037, %v710
      %v1039 = vsub.f32 %v916, %v1038
      %v1040 = vmul.f32 %v1023, %v1023
      %v1041 = vmul.f32 %v1040, 125.0
      %v1042 = vadd.f32 %v1039, %v1041
      %v1043 = vmul.f32 %v1030, %v1030
      %v1044 = vmul.f32 %v1036, %v1042
      %v1045 = vadd.f32 %v1044, 1e-05
      %v1046 = vrcp.pop %v1045
      %v1047 = vmul.f32 %v1043, %v1046
      %1048 = vadd.xlane.f32.xlu0 %v1047
      %v1049 = vpop.xlane.xlu0 %1048
      %v1050 = vrot.slane %v1049, 4
      %v1051 = vadd.f32 %v1049, %v1050
      %v1052 = vrot.slane %v1051, 2
      %v1053 = vadd.f32 %v1051, %v1052
      %v1054 = vrot.slane %v1053, 1
      %v1055 = vadd.f32 %v1053, %v1054
      %s1056 = vtos %v1055
      %v1057 = vstv %s1056
      %v1058 = vadd.f32 %v1057, 0.0
      %vm1059 = vcmask 0
      %1060 = vst.msk [vmem:[%s355] sm:$0x1] %vm1059, %v1058
      %v1061 = vld [vmem:[%s5] sm:$0xf]
      %v1062 = vld [vmem:[%s6] sm:$0x1]
      %v1063 = vadd.f32 %v480, %v495
      %1064 = vrot.lane.b32.xlu0 %v1063, 8
      %v1065 = vpop.permute.xlu0 %1064
      %v1066 = vmul.f32 %v510, %v1065
      %v1067 = vadd.f32 %v1063, %v1066
      %1068 = vrot.lane.b32.xlu0 %v1063, 120
      %v1069 = vpop.permute.xlu0 %1068
      %v1070 = vmul.f32 %v526, %v1069
      %v1071 = vadd.f32 %v1067, %v1070
      %v1073 = vlaneseq
      %v1074 = vshrl.u32 %v1073, 7
      %v1075 = vsub.s32 0, %v1074
      %v1076 = vrot.slane %v1062, %v1075
      %v1078 = vmul.f32 %v1071, %v1076
      %v1080 = vsel %vm537, %v1061, 0
      %1082 = vmatprep.subr.mxu0 0.0
      %1083 = vmatpush1.msra.mxu0 0.0
      %1084 = vmatprep.subr.mxu0 0.0
      %1085 = vmatpush1.msra.mxu0 0.0
      %1086 = vmatprep.subr.mxu0 0.0
      %1087 = vmatpush1.msra.mxu0 0.0
      %1088 = vmatprep.subr.mxu0 0.0
      %1089 = vmatpush1.msra.mxu0 0.0
      %1090 = vmatprep.subr.mxu0 0.0
      %1091 = vmatpush1.msra.mxu0 0.0
      %1092 = vmatprep.subr.mxu0 0.0
      %1093 = vmatpush1.msra.mxu0 0.0
      %1094 = vmatprep.subr.mxu0 0.0
      %1095 = vmatpush1.msra.mxu0 0.0
      %1096 = vmatprep.subr.mxu0 0.0
      %1097 = vmatpush1.msra.mxu0 0.0
      %1098 = vmatprep.subr.mxu0 0.0
      %1099 = vmatpush1.msra.mxu0 0.0
      %1100 = vmatprep.subr.mxu0 0.0
      %1101 = vmatpush1.msra.mxu0 0.0
      %1102 = vmatprep.subr.mxu0 0.0
      %1103 = vmatpush1.msra.mxu0 0.0
      %1104 = vmatprep.subr.mxu0 0.0
      %1105 = vmatpush1.msra.mxu0 0.0
      %1106 = vmatprep.subr.mxu0 0.0
      %1107 = vmatpush1.msra.mxu0 0.0
      %1108 = vmatprep.subr.mxu0 0.0
      %1109 = vmatpush1.msra.mxu0 0.0
      %1110 = vmatprep.subr.mxu0 0.0
      %1111 = vmatpush1.msra.mxu0 0.0
      %1112 = vmatprep.subr.mxu0 0.0
      %1113 = vmatpush1.msra.mxu0 %v1078
      %1114 = vmatprep.subr.mxu0 0.0
      %1115 = vmatpush2.msra.mxu0 0.0
      %1116 = vmatprep.subr.mxu0 0.0
      %1117 = vmatpush2.msra.mxu0 0.0
      %1118 = vmatprep.subr.mxu0 0.0
      %1119 = vmatpush2.msra.mxu0 0.0
      %1120 = vmatprep.subr.mxu0 0.0
      %1121 = vmatpush2.msra.mxu0 0.0
      %1122 = vmatprep.subr.mxu0 0.0
      %1123 = vmatpush2.msra.mxu0 0.0
      %1124 = vmatprep.subr.mxu0 0.0
      %1125 = vmatpush2.msra.mxu0 0.0
      %1126 = vmatprep.subr.mxu0 0.0
      %1127 = vmatpush2.msra.mxu0 0.0
      %1128 = vmatprep.subr.mxu0 0.0
      %1129 = vmatpush2.msra.mxu0 0.0
      %1130 = vmatprep.subr.mxu0 0.0
      %1131 = vmatpush2.msra.mxu0 0.0
      %1132 = vmatprep.subr.mxu0 0.0
      %1133 = vmatpush2.msra.mxu0 0.0
      %1134 = vmatprep.subr.mxu0 0.0
      %1135 = vmatpush2.msra.mxu0 0.0
      %1136 = vmatprep.subr.mxu0 0.0
      %1137 = vmatpush2.msra.mxu0 0.0
      %1138 = vmatprep.subr.mxu0 0.0
      %1139 = vmatpush2.msra.mxu0 0.0
      %1140 = vmatprep.subr.mxu0 0.0
      %1141 = vmatpush2.msra.mxu0 0.0
      %1142 = vmatprep.subr.mxu0 0.0
      %1143 = vmatpush2.msra.mxu0 0.0
      %1144 = vmatprep.subr.mxu0 0.0
      %1145 = vmatpush2.msra.mxu0 0.0
      %1146 = vmatprep.mubr.f32.mxu0 0.0
      %1147 = vmatmul.mubr.f32.gmra.mxu0 %v1080
      %v1148 = vpop.f32.mrf.mxu0
      %v1149 = vadd.f32 0.0, %v1148
      %v1150 = vpop.f32.mrf.mxu0
      %1151 = vdwg.mxu0
      %1152 = vst [vmem:[%s359] sm:$0xf] %v1149
      %v1153 = vadd.f32 %v614, %v621
      %1154 = vrot.lane.b32.xlu0 %v1153, 8
      %v1155 = vpop.permute.xlu0 %1154
      %v1156 = vmul.f32 %v510, %v1155
      %v1157 = vadd.f32 %v1153, %v1156
      %1158 = vrot.lane.b32.xlu0 %v1153, 120
      %v1159 = vpop.permute.xlu0 %1158
      %v1160 = vmul.f32 %v526, %v1159
      %v1161 = vadd.f32 %v1157, %v1160
      %v1162 = vmul.f32 %v1161, %v1076
      %1163 = vmatprep.subr.mxu0 0.0
      %1164 = vmatpush1.msra.mxu0 0.0
      %1165 = vmatprep.subr.mxu0 0.0
      %1166 = vmatpush1.msra.mxu0 0.0
      %1167 = vmatprep.subr.mxu0 0.0
      %1168 = vmatpush1.msra.mxu0 0.0
      %1169 = vmatprep.subr.mxu0 0.0
      %1170 = vmatpush1.msra.mxu0 0.0
      %1171 = vmatprep.subr.mxu0 0.0
      %1172 = vmatpush1.msra.mxu0 0.0
      %1173 = vmatprep.subr.mxu0 0.0
      %1174 = vmatpush1.msra.mxu0 0.0
      %1175 = vmatprep.subr.mxu0 0.0
      %1176 = vmatpush1.msra.mxu0 0.0
      %1177 = vmatprep.subr.mxu0 0.0
      %1178 = vmatpush1.msra.mxu0 0.0
      %1179 = vmatprep.subr.mxu0 0.0
      %1180 = vmatpush1.msra.mxu0 0.0
      %1181 = vmatprep.subr.mxu0 0.0
      %1182 = vmatpush1.msra.mxu0 0.0
      %1183 = vmatprep.subr.mxu0 0.0
      %1184 = vmatpush1.msra.mxu0 0.0
      %1185 = vmatprep.subr.mxu0 0.0
      %1186 = vmatpush1.msra.mxu0 0.0
      %1187 = vmatprep.subr.mxu0 0.0
      %1188 = vmatpush1.msra.mxu0 0.0
      %1189 = vmatprep.subr.mxu0 0.0
      %1190 = vmatpush1.msra.mxu0 0.0
      %1191 = vmatprep.subr.mxu0 0.0
      %1192 = vmatpush1.msra.mxu0 0.0
      %1193 = vmatprep.subr.mxu0 0.0
      %1194 = vmatpush1.msra.mxu0 %v1162
      %1195 = vmatprep.subr.mxu0 0.0
      %1196 = vmatpush2.msra.mxu0 0.0
      %1197 = vmatprep.subr.mxu0 0.0
      %1198 = vmatpush2.msra.mxu0 0.0
      %1199 = vmatprep.subr.mxu0 0.0
      %1200 = vmatpush2.msra.mxu0 0.0
      %1201 = vmatprep.subr.mxu0 0.0
      %1202 = vmatpush2.msra.mxu0 0.0
      %1203 = vmatprep.subr.mxu0 0.0
      %1204 = vmatpush2.msra.mxu0 0.0
      %1205 = vmatprep.subr.mxu0 0.0
      %1206 = vmatpush2.msra.mxu0 0.0
      %1207 = vmatprep.subr.mxu0 0.0
      %1208 = vmatpush2.msra.mxu0 0.0
      %1209 = vmatprep.subr.mxu0 0.0
      %1210 = vmatpush2.msra.mxu0 0.0
      %1211 = vmatprep.subr.mxu0 0.0
      %1212 = vmatpush2.msra.mxu0 0.0
      %1213 = vmatprep.subr.mxu0 0.0
      %1214 = vmatpush2.msra.mxu0 0.0
      %1215 = vmatprep.subr.mxu0 0.0
      %1216 = vmatpush2.msra.mxu0 0.0
      %1217 = vmatprep.subr.mxu0 0.0
      %1218 = vmatpush2.msra.mxu0 0.0
      %1219 = vmatprep.subr.mxu0 0.0
      %1220 = vmatpush2.msra.mxu0 0.0
      %1221 = vmatprep.subr.mxu0 0.0
      %1222 = vmatpush2.msra.mxu0 0.0
      %1223 = vmatprep.subr.mxu0 0.0
      %1224 = vmatpush2.msra.mxu0 0.0
      %1225 = vmatprep.subr.mxu0 0.0
      %1226 = vmatpush2.msra.mxu0 0.0
      %1227 = vmatprep.mubr.f32.mxu0 0.0
      %1228 = vmatmul.mubr.f32.gmra.mxu0 %v1080
      %v1229 = vpop.f32.mrf.mxu0
      %v1230 = vadd.f32 0.0, %v1229
      %v1231 = vpop.f32.mrf.mxu0
      %1232 = vdwg.mxu0
      %1233 = vst [vmem:[%s363] sm:$0xf] %v1230
      %p1234 = scmp.lt.s32.totalorder %s21, 1
      %s1235 = scalar_select %p1234, %s21, 1
      %s1236 = scalar_lea.vmem %s7, %s1235
      %p1237 = scmp.lt.s32.totalorder %s21, 1
      %s1238 = scalar_select %p1237, %s21, 1
      %s1239 = smul.addr %s1238, 4
      %s1240 = scalar_lea.vmem %s8, %s1239
      %p1241 = scmp.lt.s32.totalorder %s21, 1
      %s1242 = scalar_select %p1241, %s21, 1
      %s1243 = smul.addr %s1242, 4
      %s1244 = scalar_lea.vmem %s9, %s1243
      // Predicated region
      $region49: #{multi_resolution_ncc.4} parent=47 // pred_check
        %p1245 = pneg %p196
      $region50: #{multi_resolution_ncc.4} parent=47 // pred_check_branch
        %1247 = sbr.rel (%p1245) target = $region52
      $region51: #{multi_resolution_ncc.4} parent=47 // pred_region
        _
      $region52: #{multi_resolution_ncc.4} parent=47 // pred_fallthru
        _
      // Predicated region
      $region53: #{multi_resolution_ncc.4} parent=47 // pred_check
        %p1248 = pneg %p222
      $region54: #{multi_resolution_ncc.4} parent=47 // pred_check_branch
        %1250 = sbr.rel (%p1248) target = $region56
      $region55: #{multi_resolution_ncc.4} parent=47 // pred_region
        _
      $region56: #{multi_resolution_ncc.4} parent=47 // pred_fallthru
        _
      // Predicated region
      $region57: #{multi_resolution_ncc.4} parent=47 // pred_check
        %p1251 = pneg %p248
      $region58: #{multi_resolution_ncc.4} parent=47 // pred_check_branch
        %1253 = sbr.rel (%p1251) target = $region60
      $region59: #{multi_resolution_ncc.4} parent=47 // pred_region
        _
      $region60: #{multi_resolution_ncc.4} parent=47 // pred_fallthru
        _
    $region48: #{multi_resolution_ncc.4} parent=5 // pred_fallthru
      _
    %p1254 = scmp.le.s32.totalorder 2, %s16
    // Predicated region
    $region61: #{multi_resolution_ncc.4} parent=5 // pred_check
      %p1255 = pneg %p1254
    $region62: #{multi_resolution_ncc.4} parent=5 // pred_check_branch
      %1257 = sbr.rel (%p1255) target = $region64
    $region63: #{multi_resolution_ncc.4} parent=5 // pred_region
      %s1258 = ssub.s32 %s16, 2
      // Predicated region
      $region65: #{multi_resolution_ncc.4} parent=63 // pred_check
        %p1259 = pneg %p202
      $region66: #{multi_resolution_ncc.4} parent=63 // pred_check_branch
        %1261 = sbr.rel (%p1259) target = $region68
      $region67: #{multi_resolution_ncc.4} parent=63 // pred_region
        %p1262 = scmp.lt.s32.totalorder %s22, 1
        %s1263 = scalar_select %p1262, %s22, 1
        %s1264 = scalar_lea.vmem %s7, %s1263
      $region68: #{multi_resolution_ncc.4} parent=63 // pred_fallthru
        _
      // Predicated region
      $region69: #{multi_resolution_ncc.4} parent=63 // pred_check
        %p1265 = pneg %p228
      $region70: #{multi_resolution_ncc.4} parent=63 // pred_check_branch
        %1267 = sbr.rel (%p1265) target = $region72
      $region71: #{multi_resolution_ncc.4} parent=63 // pred_region
        %p1268 = scmp.lt.s32.totalorder %s22, 1
        %s1269 = scalar_select %p1268, %s22, 1
        %s1270 = smul.addr %s1269, 4
        %s1271 = scalar_lea.vmem %s8, %s1270
      $region72: #{multi_resolution_ncc.4} parent=63 // pred_fallthru
        _
      // Predicated region
      $region73: #{multi_resolution_ncc.4} parent=63 // pred_check
        %p1272 = pneg %p254
      $region74: #{multi_resolution_ncc.4} parent=63 // pred_check_branch
        %1274 = sbr.rel (%p1272) target = $region76
      $region75: #{multi_resolution_ncc.4} parent=63 // pred_region
        %p1275 = scmp.lt.s32.totalorder %s22, 1
        %s1276 = scalar_select %p1275, %s22, 1
        %s1277 = smul.addr %s1276, 4
        %s1278 = scalar_lea.vmem %s9, %s1277
      $region76: #{multi_resolution_ncc.4} parent=63 // pred_fallthru
        _
    $region64: #{multi_resolution_ncc.4} parent=5 // pred_fallthru
      _
  $region6: #{multi_resolution_ncc.4} parent=0 // loop_footer
    %s20 = sadd.s32 1, %s16
  $region7: #{multi_resolution_ncc.4} parent=0 // loop_footer_branch
    %15 = sbr.rel target = $region3
  $region8: #{multi_resolution_ncc.4} parent=0 // loop_exit
    _

// kernel: multi_resolution_ncc.5
$region0: #{multi_resolution_ncc.5}
  #allocation0 [shape = 'u32[]', space=smem, size = 0x4, offset = 0x4, fixed_abs, tag = 'smem constant byte address 0x4 - core index']
  #allocation1 [shape = 'u32[144,128]{1,0:T(1,128)}', space=vmem, size = 0x12000, scoped, tag = 'internal scratch']
  %s0 = inlined_call_operand.vmem [shape: f32[2,4,128], index: 0, kind: input, shape index: {}]
  %s1 = inlined_call_operand.vmem [shape: f32[2,4,128], index: 1, kind: input, shape index: {}]
  %s2 = inlined_call_operand.vmem [shape: f32[4,4], index: 2, kind: input, shape index: {}]
  %s3 = inlined_call_operand.vmem [shape: f32[1,128], index: 3, kind: input, shape index: {}]
  %s4 = inlined_call_operand.vmem [shape: f32[1,128], index: 4, kind: input, shape index: {}]
  %s5 = inlined_call_operand.vmem [shape: f32[2,1,1], index: 5, kind: output, shape index: {}]
  %s6 = sld [smem:[#allocation0]]
  $region53: #{multi_resolution_ncc.5} parent=0
    _
  %s8 = ssub.s32 1, %s6
  %s9 = scalar_select 0, %s8, %s6
  loop: start=0, step=1, limit=4
  $region2: #{multi_resolution_ncc.5} parent=0 // loop_pre_header
    _
  $region3: #{multi_resolution_ncc.5} parent=0 // loop_header
    %s11 = sphi 0, %s15
    %p12 = scmp.ge.s32.totalorder %s11, 4
    %s21 = sphi 0, %s23
    %s24 = sphi 0, %s21
    %s25 = sphi 0, %s24
    %s41 = sphi 0, %s25
    %s47 = sphi 0, %s49
    %s50 = sphi 0, %s47
    %s51 = sphi 0, %s50
    %s67 = sphi 0, %s51
    %s71 = sphi 0, %s71
    %s73 = sphi 0, %s71
    %s74 = sphi 0, %s73
    %s88 = sphi 0, %s74
    %s92 = sphi 0, %s92
    %s94 = sphi 0, %s92
    %s95 = sphi 0, %s94
    %s109 = sphi 0, %s95
    %s113 = sphi 0, %s113
    %s115 = sphi 0, %s113
    %s116 = sphi 0, %s115
    %s130 = sphi 0, %s116
    %s136 = sphi 0, %s138
    %s139 = sphi 0, %s136
    %s140 = sphi 0, %s139
    %s156 = sphi 0, %s140
  $region4: #{multi_resolution_ncc.5} parent=0 // loop_header_branch
    %14 = sbr.rel (%p12) target = $region8
  $region5: #{multi_resolution_ncc.5} parent=0 // loop_body
    %s16 = ssub.s32 %s11, 1
    %s17 = ssub.s32 %s11, 2
    %s18 = sadd.s32 %s11, 1
    %s19 = ssub.s32 %s11, %s18
    %p20 = scmp.eq.s32.totalorder %s19, 0
    %s22 = sadd.s32 %s21, 1
    %s23 = scalar_select %p20, %s21, %s22
    %p26 = pneg %p20
    %p27 = scmp.eq.s32.totalorder %s11, 1
    %p28 = por %p26, %p27
    %p29 = scmp.ne.s32.totalorder %s21, %s24
    %p30 = scmp.eq.s32.totalorder %s11, 0
    %p31 = por %p29, %p30
    %p32 = scmp.ne.s32.totalorder %s21, %s24
    %p33 = scmp.eq.s32.totalorder %s16, 1
    %p34 = por %p32, %p33
    %p35 = scmp.ne.s32.totalorder %s24, %s25
    %p36 = scmp.eq.s32.totalorder %s16, 0
    %p37 = por %p35, %p36
    %p38 = scmp.ne.s32.totalorder %s24, %s25
    %p39 = scmp.eq.s32.totalorder %s17, 1
    %p40 = por %p38, %p39
    %p42 = scmp.ne.s32.totalorder %s25, %s41
    %p43 = scmp.eq.s32.totalorder %s17, 0
    %p44 = por %p42, %p43
    %s45 = ssub.s32 %s11, %s18
    %p46 = scmp.eq.s32.totalorder %s45, 0
    %s48 = sadd.s32 %s47, 1
    %s49 = scalar_select %p46, %s47, %s48
    %p52 = pneg %p46
    %p53 = scmp.eq.s32.totalorder %s11, 1
    %p54 = por %p52, %p53
    %p55 = scmp.ne.s32.totalorder %s47, %s50
    %p56 = scmp.eq.s32.totalorder %s11, 0
    %p57 = por %p55, %p56
    %p58 = scmp.ne.s32.totalorder %s47, %s50
    %p59 = scmp.eq.s32.totalorder %s16, 1
    %p60 = por %p58, %p59
    %p61 = scmp.ne.s32.totalorder %s50, %s51
    %p62 = scmp.eq.s32.totalorder %s16, 0
    %p63 = por %p61, %p62
    %p64 = scmp.ne.s32.totalorder %s50, %s51
    %p65 = scmp.eq.s32.totalorder %s17, 1
    %p66 = por %p64, %p65
    %p68 = scmp.ne.s32.totalorder %s51, %s67
    %p69 = scmp.eq.s32.totalorder %s17, 0
    %p70 = por %p68, %p69
    %s72 = sadd.s32 %s71, 1
    %p75 = scmp.eq.s32.totalorder %s11, 1
    %p76 = scmp.ne.s32.totalorder %s71, %s73
    %p77 = scmp.eq.s32.totalorder %s11, 0
    %p78 = por %p76, %p77
    %p79 = scmp.ne.s32.totalorder %s71, %s73
    %p80 = scmp.eq.s32.totalorder %s16, 1
    %p81 = por %p79, %p80
    %p82 = scmp.ne.s32.totalorder %s73, %s74
    %p83 = scmp.eq.s32.totalorder %s16, 0
    %p84 = por %p82, %p83
    %p85 = scmp.ne.s32.totalorder %s73, %s74
    %p86 = scmp.eq.s32.totalorder %s17, 1
    %p87 = por %p85, %p86
    %p89 = scmp.ne.s32.totalorder %s74, %s88
    %p90 = scmp.eq.s32.totalorder %s17, 0
    %p91 = por %p89, %p90
    %s93 = sadd.s32 %s92, 1
    %p96 = scmp.eq.s32.totalorder %s11, 1
    %p97 = scmp.ne.s32.totalorder %s92, %s94
    %p98 = scmp.eq.s32.totalorder %s11, 0
    %p99 = por %p97, %p98
    %p100 = scmp.ne.s32.totalorder %s92, %s94
    %p101 = scmp.eq.s32.totalorder %s16, 1
    %p102 = por %p100, %p101
    %p103 = scmp.ne.s32.totalorder %s94, %s95
    %p104 = scmp.eq.s32.totalorder %s16, 0
    %p105 = por %p103, %p104
    %p106 = scmp.ne.s32.totalorder %s94, %s95
    %p107 = scmp.eq.s32.totalorder %s17, 1
    %p108 = por %p106, %p107
    %p110 = scmp.ne.s32.totalorder %s95, %s109
    %p111 = scmp.eq.s32.totalorder %s17, 0
    %p112 = por %p110, %p111
    %s114 = sadd.s32 %s113, 1
    %p117 = scmp.eq.s32.totalorder %s11, 1
    %p118 = scmp.ne.s32.totalorder %s113, %s115
    %p119 = scmp.eq.s32.totalorder %s11, 0
    %p120 = por %p118, %p119
    %p121 = scmp.ne.s32.totalorder %s113, %s115
    %p122 = scmp.eq.s32.totalorder %s16, 1
    %p123 = por %p121, %p122
    %p124 = scmp.ne.s32.totalorder %s115, %s116
    %p125 = scmp.eq.s32.totalorder %s16, 0
    %p126 = por %p124, %p125
    %p127 = scmp.ne.s32.totalorder %s115, %s116
    %p128 = scmp.eq.s32.totalorder %s17, 1
    %p129 = por %p127, %p128
    %p131 = scmp.ne.s32.totalorder %s116, %s130
    %p132 = scmp.eq.s32.totalorder %s17, 0
    %p133 = por %p131, %p132
    %s134 = ssub.s32 %s11, %s18
    %p135 = scmp.eq.s32.totalorder %s134, 0
    %s137 = sadd.s32 %s136, 1
    %s138 = scalar_select %p135, %s136, %s137
    %p141 = pneg %p135
    %p142 = scmp.eq.s32.totalorder %s11, 1
    %p143 = por %p141, %p142
    %p144 = scmp.ne.s32.totalorder %s136, %s139
    %p145 = scmp.eq.s32.totalorder %s11, 0
    %p146 = por %p144, %p145
    %p147 = scmp.ne.s32.totalorder %s136, %s139
    %p148 = scmp.eq.s32.totalorder %s16, 1
    %p149 = por %p147, %p148
    %p150 = scmp.ne.s32.totalorder %s139, %s140
    %p151 = scmp.eq.s32.totalorder %s16, 0
    %p152 = por %p150, %p151
    %p153 = scmp.ne.s32.totalorder %s139, %s140
    %p154 = scmp.eq.s32.totalorder %s17, 1
    %p155 = por %p153, %p154
    %p157 = scmp.ne.s32.totalorder %s140, %s156
    %p158 = scmp.eq.s32.totalorder %s17, 0
    %p159 = por %p157, %p158
    %p160 = scmp.le.s32.totalorder 1, %s11
    %p161 = scmp.lt.s32.totalorder %s11, 3
    %p162 = pnand %p160, %p161
    %p163 = pneg %p162
    // Predicated region
    $region9: #{multi_resolution_ncc.5} parent=5 // pred_check
      _
    $region10: #{multi_resolution_ncc.5} parent=5 // pred_check_branch
      %165 = sbr.rel (%p162) target = $region12
    $region11: #{multi_resolution_ncc.5} parent=5 // pred_region
      %s166 = ssub.s32 %s11, 1
      // Predicated region
      $region13: #{multi_resolution_ncc.5} parent=11 // pred_check
        %p167 = pneg %p84
      $region14: #{multi_resolution_ncc.5} parent=11 // pred_check_branch
        %169 = sbr.rel (%p167) target = $region16
      $region15: #{multi_resolution_ncc.5} parent=11 // pred_region
        _
      $region16: #{multi_resolution_ncc.5} parent=11 // pred_fallthru
        _
      // Predicated region
      $region17: #{multi_resolution_ncc.5} parent=11 // pred_check
        %p170 = pneg %p105
      $region18: #{multi_resolution_ncc.5} parent=11 // pred_check_branch
        %172 = sbr.rel (%p170) target = $region20
      $region19: #{multi_resolution_ncc.5} parent=11 // pred_region
        _
      $region20: #{multi_resolution_ncc.5} parent=11 // pred_fallthru
        _
      // Predicated region
      $region21: #{multi_resolution_ncc.5} parent=11 // pred_check
        %p173 = pneg %p126
      $region22: #{multi_resolution_ncc.5} parent=11 // pred_check_branch
        %175 = sbr.rel (%p173) target = $region24
      $region23: #{multi_resolution_ncc.5} parent=11 // pred_region
        _
      $region24: #{multi_resolution_ncc.5} parent=11 // pred_fallthru
        _
    $region12: #{multi_resolution_ncc.5} parent=5 // pred_fallthru
      _
    %p176 = scmp.lt.s32.totalorder %s11, 2
    // Predicated region
    $region25: #{multi_resolution_ncc.5} parent=5 // pred_check
      %p177 = pneg %p176
    $region26: #{multi_resolution_ncc.5} parent=5 // pred_check_branch
      %179 = sbr.rel (%p177) target = $region28
    $region27: #{multi_resolution_ncc.5} parent=5 // pred_region
      // Predicated region
      $region29: #{multi_resolution_ncc.5} parent=27 // pred_check
        %p180 = pneg %p31
      $region30: #{multi_resolution_ncc.5} parent=27 // pred_check_branch
        %182 = sbr.rel (%p180) target = $region32
      $region31: #{multi_resolution_ncc.5} parent=27 // pred_region
        %p183 = scmp.lt.s32.totalorder %s11, 1
        %s184 = scalar_select %p183, %s11, 1
        %s185 = smul.addr %s184, 4
        %s186 = scalar_lea.vmem %s0, %s185
      $region32: #{multi_resolution_ncc.5} parent=27 // pred_fallthru
        _
      // Predicated region
      $region33: #{multi_resolution_ncc.5} parent=27 // pred_check
        %p187 = pneg %p57
      $region34: #{multi_resolution_ncc.5} parent=27 // pred_check_branch
        %189 = sbr.rel (%p187) target = $region36
      $region35: #{multi_resolution_ncc.5} parent=27 // pred_region
        %p190 = scmp.lt.s32.totalorder %s11, 1
        %s191 = scalar_select %p190, %s11, 1
        %s192 = smul.addr %s191, 4
        %s193 = scalar_lea.vmem %s1, %s192
      $region36: #{multi_resolution_ncc.5} parent=27 // pred_fallthru
        _
    $region28: #{multi_resolution_ncc.5} parent=5 // pred_fallthru
      _
    %p194 = scmp.le.s32.totalorder 1, %s11
    %p195 = scmp.lt.s32.totalorder %s11, 3
    %p196 = pnand %p194, %p195
    %p197 = pneg %p196
    // Predicated region
    $region37: #{multi_resolution_ncc.5} parent=5 // pred_check
      _
    $region38: #{multi_resolution_ncc.5} parent=5 // pred_check_branch
      %199 = sbr.rel (%p196) target = $region40
    $region39: #{multi_resolution_ncc.5} parent=5 // pred_region
      %s200 = ssub.s32 %s11, 1
      %p201 = scmp.lt.s32.totalorder %s16, 1
      %s202 = scalar_select %p201, %s16, 1
      %s203 = smul.addr %s202, 4
      %s204 = scalar_lea.vmem %s0, %s203
      %p205 = pneg %p37
      %p206 = pneg %p34
      %p207 = scmp.lt.s32.totalorder %s16, 1
      %s208 = scalar_select %p207, %s16, 1
      %s209 = smul.addr %s208, 4
      %s210 = scalar_lea.vmem %s1, %s209
      %p211 = pneg %p63
      %p212 = pneg %p60
      %p213 = pneg %p84
      %p214 = pneg %p81
      %p215 = pneg %p105
      %p216 = pneg %p102
      %p217 = pneg %p126
      %p218 = pneg %p123
      %p219 = pneg %p152
      %p220 = pneg %p149
      %p221 = scmp.lt.s32.totalorder %s16, 1
      %s222 = scalar_select %p221, %s16, 1
      %s223 = scalar_lea.vmem %s5, %s222
      %p224 = scmp.lt.s32.totalorder %s16, 1
      %s225 = scalar_select %p224, %s16, 1
      %s226 = smul.addr %s225, 4
      %s227 = scalar_lea.vmem %s0, %s226
      %p228 = scmp.lt.s32.totalorder %s16, 1
      %s229 = scalar_select %p228, %s16, 1
      %s230 = smul.addr %s229, 4
      %s231 = scalar_lea.vmem %s1, %s230
      %p232 = scmp.lt.s32.totalorder %s16, 1
      %s233 = scalar_select %p232, %s16, 1
      %s234 = scalar_lea.vmem %s5, %s233
      %v235 = vld [vmem:[%s227] sm:$0xf]
      %v236 = vld [vmem:[%s231] sm:$0xf]
      %v237 = vld [vmem:[%s3] sm:$0x1]
      %v238 = vld [vmem:[%s4] sm:$0x1]
      %239 = vrot.lane.b32.xlu0 %v237, 1
      %v240 = vpop.permute.xlu0 %239
      %241 = vrot.lane.b32.xlu0 %v238, 1
      %v242 = vpop.permute.xlu0 %241
      %v243 = vsub.f32 %v240, %v237
      %v244 = vand.u32 2147483647, %v243
      %vm245 = vcmp.le.f32.partialorder %v244, 0.0
      %v246 = vsub.f32 %v242, %v238
      %v247 = vand.u32 2147483647, %v246
      %vm248 = vcmp.le.f32.partialorder %v247, 1.0
      %vm249 = vmand %vm245, %vm248
      %v250 = vsel %vm249, 1, 0
      %v251 = vcvt.s32.f32 %v250
      %252 = vrot.lane.b32.xlu0 %v237, 127
      %v253 = vpop.permute.xlu0 %252
      %254 = vrot.lane.b32.xlu0 %v238, 127
      %v255 = vpop.permute.xlu0 %254
      %v256 = vsub.f32 %v253, %v237
      %v257 = vand.u32 2147483647, %v256
      %vm258 = vcmp.le.f32.partialorder %v257, 0.0
      %v259 = vsub.f32 %v255, %v238
      %v260 = vand.u32 2147483647, %v259
      %vm261 = vcmp.le.f32.partialorder %v260, 1.0
      %vm262 = vmand %vm258, %vm261
      %v263 = vsel %vm262, 1, 0
      %v264 = vcvt.s32.f32 %v263
      %265 = vrot.lane.b32.xlu0 %v237, 4
      %v266 = vpop.permute.xlu0 %265
      %267 = vrot.lane.b32.xlu0 %v238, 4
      %v268 = vpop.permute.xlu0 %267
      %v269 = vsub.f32 %v266, %v237
      %v270 = vand.u32 2147483647, %v269
      %vm271 = vcmp.le.f32.partialorder %v270, 1.0
      %v272 = vsub.f32 %v268, %v238
      %v273 = vand.u32 2147483647, %v272
      %vm274 = vcmp.le.f32.partialorder %v273, 0.0
      %vm275 = vmand %vm271, %vm274
      %v276 = vsel %vm275, 1, 0
      %v277 = vcvt.s32.f32 %v276
      %278 = vrot.lane.b32.xlu0 %v237, 124
      %v279 = vpop.permute.xlu0 %278
      %280 = vrot.lane.b32.xlu0 %v238, 124
      %v281 = vpop.permute.xlu0 %280
      %v282 = vsub.f32 %v279, %v237
      %v283 = vand.u32 2147483647, %v282
      %vm284 = vcmp.le.f32.partialorder %v283, 1.0
      %v285 = vsub.f32 %v281, %v238
      %v286 = vand.u32 2147483647, %v285
      %vm287 = vcmp.le.f32.partialorder %v286, 0.0
      %vm288 = vmand %vm284, %vm287
      %v289 = vsel %vm288, 1, 0
      %v290 = vcvt.s32.f32 %v289
      %v291 = vld [vmem:[%s2] sm:$0xf]
      %292 = vrot.lane.b32.xlu0 %v235, 1
      %v293 = vpop.permute.xlu0 %292
      %v294 = vlaneseq
      %v295 = vshrl.u32 %v294, 7
      %v296 = vsub.s32 0, %v295
      %v297 = vrot.slane %v251, %v296
      %v298 = vmul.f32 %v297, %v293
      %v299 = vadd.f32 %v235, %v298
      %300 = vrot.lane.b32.xlu0 %v235, 127
      %v301 = vpop.permute.xlu0 %300
      %v302 = vlaneseq
      %v303 = vshrl.u32 %v302, 7
      %v304 = vsub.s32 0, %v303
      %v305 = vrot.slane %v264, %v304
      %v306 = vmul.f32 %v305, %v301
      %v307 = vadd.f32 %v299, %v306
      %308 = vrot.lane.b32.xlu0 %v307, 4
      %v309 = vpop.permute.xlu0 %308
      %v310 = vlaneseq
      %v311 = vshrl.u32 %v310, 7
      %v312 = vsub.s32 0, %v311
      %v313 = vrot.slane %v277, %v312
      %v314 = vmul.f32 %v313, %v309
      %v315 = vadd.f32 %v307, %v314
      %316 = vrot.lane.b32.xlu0 %v307, 124
      %v317 = vpop.permute.xlu0 %316
      %v318 = vlaneseq
      %v319 = vshrl.u32 %v318, 7
      %v320 = vsub.s32 0, %v319
      %v321 = vrot.slane %v290, %v320
      %v322 = vmul.f32 %v321, %v317
      %v323 = vadd.f32 %v315, %v322
      %vm324 = vcmask 31744
      %v326 = vsel %vm324, %v291, 0
      %vm328 = vcmask 1043456
      %v330 = vsel %vm328, %v323, 0
      %332 = vmatprep.subr.mxu0 0.0
      %333 = vmatpush1.msra.mxu0 0.0
      %334 = vmatprep.subr.mxu0 0.0
      %335 = vmatpush1.msra.mxu0 0.0
      %336 = vmatprep.subr.mxu0 0.0
      %337 = vmatpush1.msra.mxu0 0.0
      %338 = vmatprep.subr.mxu0 0.0
      %339 = vmatpush1.msra.mxu0 0.0
      %340 = vmatprep.subr.mxu0 0.0
      %341 = vmatpush1.msra.mxu0 0.0
      %342 = vmatprep.subr.mxu0 0.0
      %343 = vmatpush1.msra.mxu0 0.0
      %344 = vmatprep.subr.mxu0 0.0
      %345 = vmatpush1.msra.mxu0 0.0
      %346 = vmatprep.subr.mxu0 0.0
      %347 = vmatpush1.msra.mxu0 0.0
      %348 = vmatprep.subr.mxu0 0.0
      %349 = vmatpush1.msra.mxu0 0.0
      %350 = vmatprep.subr.mxu0 0.0
      %351 = vmatpush1.msra.mxu0 0.0
      %352 = vmatprep.subr.mxu0 0.0
      %353 = vmatpush1.msra.mxu0 0.0
      %354 = vmatprep.subr.mxu0 0.0
      %355 = vmatpush1.msra.mxu0 0.0
      %356 = vmatprep.subr.mxu0 0.0
      %357 = vmatpush1.msra.mxu0 0.0
      %358 = vmatprep.subr.mxu0 0.0
      %359 = vmatpush1.msra.mxu0 0.0
      %360 = vmatprep.subr.mxu0 0.0
      %361 = vmatpush1.msra.mxu0 0.0
      %362 = vmatprep.subr.mxu0 0.0
      %363 = vmatpush1.msra.mxu0 %v330
      %364 = vmatprep.subr.mxu0 0.0
      %365 = vmatpush2.msra.mxu0 0.0
      %366 = vmatprep.subr.mxu0 0.0
      %367 = vmatpush2.msra.mxu0 0.0
      %368 = vmatprep.subr.mxu0 0.0
      %369 = vmatpush2.msra.mxu0 0.0
      %370 = vmatprep.subr.mxu0 0.0
      %371 = vmatpush2.msra.mxu0 0.0
      %372 = vmatprep.subr.mxu0 0.0
      %373 = vmatpush2.msra.mxu0 0.0
      %374 = vmatprep.subr.mxu0 0.0
      %375 = vmatpush2.msra.mxu0 0.0
      %376 = vmatprep.subr.mxu0 0.0
      %377 = vmatpush2.msra.mxu0 0.0
      %378 = vmatprep.subr.mxu0 0.0
      %379 = vmatpush2.msra.mxu0 0.0
      %380 = vmatprep.subr.mxu0 0.0
      %381 = vmatpush2.msra.mxu0 0.0
      %382 = vmatprep.subr.mxu0 0.0
      %383 = vmatpush2.msra.mxu0 0.0
      %384 = vmatprep.subr.mxu0 0.0
      %385 = vmatpush2.msra.mxu0 0.0
      %386 = vmatprep.subr.mxu0 0.0
      %387 = vmatpush2.msra.mxu0 0.0
      %388 = vmatprep.subr.mxu0 0.0
      %389 = vmatpush2.msra.mxu0 0.0
      %390 = vmatprep.subr.mxu0 0.0
      %391 = vmatpush2.msra.mxu0 0.0
      %392 = vmatprep.subr.mxu0 0.0
      %393 = vmatpush2.msra.mxu0 0.0
      %394 = vmatprep.subr.mxu0 0.0
      %395 = vmatpush2.msra.mxu0 0.0
      %396 = vmatprep.mubr.f32.mxu0 0.0
      %397 = vmatmul.mubr.f32.gmra.mxu0 %v326
      %v398 = vpop.f32.mrf.mxu0
      %v399 = vadd.f32 0.0, %v398
      %v400 = vpop.f32.mrf.mxu0
      %401 = vdwg.mxu0
      %402 = vrot.lane.b32.xlu0 %v236, 1
      %v403 = vpop.permute.xlu0 %402
      %v404 = vmul.f32 %v297, %v403
      %v405 = vadd.f32 %v236, %v404
      %406 = vrot.lane.b32.xlu0 %v236, 127
      %v407 = vpop.permute.xlu0 %406
      %v408 = vmul.f32 %v305, %v407
      %v409 = vadd.f32 %v405, %v408
      %410 = vrot.lane.b32.xlu0 %v409, 4
      %v411 = vpop.permute.xlu0 %410
      %v412 = vmul.f32 %v313, %v411
      %v413 = vadd.f32 %v409, %v412
      %414 = vrot.lane.b32.xlu0 %v409, 124
      %v415 = vpop.permute.xlu0 %414
      %v416 = vmul.f32 %v321, %v415
      %v417 = vadd.f32 %v413, %v416
      %v419 = vsel %vm328, %v417, 0
      %421 = vmatprep.subr.mxu0 0.0
      %422 = vmatpush1.msra.mxu0 0.0
      %423 = vmatprep.subr.mxu0 0.0
      %424 = vmatpush1.msra.mxu0 0.0
      %425 = vmatprep.subr.mxu0 0.0
      %426 = vmatpush1.msra.mxu0 0.0
      %427 = vmatprep.subr.mxu0 0.0
      %428 = vmatpush1.msra.mxu0 0.0
      %429 = vmatprep.subr.mxu0 0.0
      %430 = vmatpush1.msra.mxu0 0.0
      %431 = vmatprep.subr.mxu0 0.0
      %432 = vmatpush1.msra.mxu0 0.0
      %433 = vmatprep.subr.mxu0 0.0
      %434 = vmatpush1.msra.mxu0 0.0
      %435 = vmatprep.subr.mxu0 0.0
      %436 = vmatpush1.msra.mxu0 0.0
      %437 = vmatprep.subr.mxu0 0.0
      %438 = vmatpush1.msra.mxu0 0.0
      %439 = vmatprep.subr.mxu0 0.0
      %440 = vmatpush1.msra.mxu0 0.0
      %441 = vmatprep.subr.mxu0 0.0
      %442 = vmatpush1.msra.mxu0 0.0
      %443 = vmatprep.subr.mxu0 0.0
      %444 = vmatpush1.msra.mxu0 0.0
      %445 = vmatprep.subr.mxu0 0.0
      %446 = vmatpush1.msra.mxu0 0.0
      %447 = vmatprep.subr.mxu0 0.0
      %448 = vmatpush1.msra.mxu0 0.0
      %449 = vmatprep.subr.mxu0 0.0
      %450 = vmatpush1.msra.mxu0 0.0
      %451 = vmatprep.subr.mxu0 0.0
      %452 = vmatpush1.msra.mxu0 %v419
      %453 = vmatprep.subr.mxu0 0.0
      %454 = vmatpush2.msra.mxu0 0.0
      %455 = vmatprep.subr.mxu0 0.0
      %456 = vmatpush2.msra.mxu0 0.0
      %457 = vmatprep.subr.mxu0 0.0
      %458 = vmatpush2.msra.mxu0 0.0
      %459 = vmatprep.subr.mxu0 0.0
      %460 = vmatpush2.msra.mxu0 0.0
      %461 = vmatprep.subr.mxu0 0.0
      %462 = vmatpush2.msra.mxu0 0.0
      %463 = vmatprep.subr.mxu0 0.0
      %464 = vmatpush2.msra.mxu0 0.0
      %465 = vmatprep.subr.mxu0 0.0
      %466 = vmatpush2.msra.mxu0 0.0
      %467 = vmatprep.subr.mxu0 0.0
      %468 = vmatpush2.msra.mxu0 0.0
      %469 = vmatprep.subr.mxu0 0.0
      %470 = vmatpush2.msra.mxu0 0.0
      %471 = vmatprep.subr.mxu0 0.0
      %472 = vmatpush2.msra.mxu0 0.0
      %473 = vmatprep.subr.mxu0 0.0
      %474 = vmatpush2.msra.mxu0 0.0
      %475 = vmatprep.subr.mxu0 0.0
      %476 = vmatpush2.msra.mxu0 0.0
      %477 = vmatprep.subr.mxu0 0.0
      %478 = vmatpush2.msra.mxu0 0.0
      %479 = vmatprep.subr.mxu0 0.0
      %480 = vmatpush2.msra.mxu0 0.0
      %481 = vmatprep.subr.mxu0 0.0
      %482 = vmatpush2.msra.mxu0 0.0
      %483 = vmatprep.subr.mxu0 0.0
      %484 = vmatpush2.msra.mxu0 0.0
      %485 = vmatprep.mubr.f32.mxu0 0.0
      %486 = vmatmul.mubr.f32.gmra.mxu0 %v326
      %v487 = vpop.f32.mrf.mxu0
      %v488 = vadd.f32 0.0, %v487
      %v489 = vpop.f32.mrf.mxu0
      %490 = vdwg.mxu0
      %v491 = vmul.f32 %v235, %v235
      %492 = vrot.lane.b32.xlu0 %v491, 1
      %v493 = vpop.permute.xlu0 %492
      %v494 = vmul.f32 %v297, %v493
      %v495 = vadd.f32 %v491, %v494
      %496 = vrot.lane.b32.xlu0 %v491, 127
      %v497 = vpop.permute.xlu0 %496
      %v498 = vmul.f32 %v305, %v497
      %v499 = vadd.f32 %v495, %v498
      %500 = vrot.lane.b32.xlu0 %v499, 4
      %v501 = vpop.permute.xlu0 %500
      %v502 = vmul.f32 %v313, %v501
      %v503 = vadd.f32 %v499, %v502
      %504 = vrot.lane.b32.xlu0 %v499, 124
      %v505 = vpop.permute.xlu0 %504
      %v506 = vmul.f32 %v321, %v505
      %v507 = vadd.f32 %v503, %v506
      %v509 = vsel %vm328, %v507, 0
      %511 = vmatprep.subr.mxu0 0.0
      %512 = vmatpush1.msra.mxu0 0.0
      %513 = vmatprep.subr.mxu0 0.0
      %514 = vmatpush1.msra.mxu0 0.0
      %515 = vmatprep.subr.mxu0 0.0
      %516 = vmatpush1.msra.mxu0 0.0
      %517 = vmatprep.subr.mxu0 0.0
      %518 = vmatpush1.msra.mxu0 0.0
      %519 = vmatprep.subr.mxu0 0.0
      %520 = vmatpush1.msra.mxu0 0.0
      %521 = vmatprep.subr.mxu0 0.0
      %522 = vmatpush1.msra.mxu0 0.0
      %523 = vmatprep.subr.mxu0 0.0
      %524 = vmatpush1.msra.mxu0 0.0
      %525 = vmatprep.subr.mxu0 0.0
      %526 = vmatpush1.msra.mxu0 0.0
      %527 = vmatprep.subr.mxu0 0.0
      %528 = vmatpush1.msra.mxu0 0.0
      %529 = vmatprep.subr.mxu0 0.0
      %530 = vmatpush1.msra.mxu0 0.0
      %531 = vmatprep.subr.mxu0 0.0
      %532 = vmatpush1.msra.mxu0 0.0
      %533 = vmatprep.subr.mxu0 0.0
      %534 = vmatpush1.msra.mxu0 0.0
      %535 = vmatprep.subr.mxu0 0.0
      %536 = vmatpush1.msra.mxu0 0.0
      %537 = vmatprep.subr.mxu0 0.0
      %538 = vmatpush1.msra.mxu0 0.0
      %539 = vmatprep.subr.mxu0 0.0
      %540 = vmatpush1.msra.mxu0 0.0
      %541 = vmatprep.subr.mxu0 0.0
      %542 = vmatpush1.msra.mxu0 %v509
      %543 = vmatprep.subr.mxu0 0.0
      %544 = vmatpush2.msra.mxu0 0.0
      %545 = vmatprep.subr.mxu0 0.0
      %546 = vmatpush2.msra.mxu0 0.0
      %547 = vmatprep.subr.mxu0 0.0
      %548 = vmatpush2.msra.mxu0 0.0
      %549 = vmatprep.subr.mxu0 0.0
      %550 = vmatpush2.msra.mxu0 0.0
      %551 = vmatprep.subr.mxu0 0.0
      %552 = vmatpush2.msra.mxu0 0.0
      %553 = vmatprep.subr.mxu0 0.0
      %554 = vmatpush2.msra.mxu0 0.0
      %555 = vmatprep.subr.mxu0 0.0
      %556 = vmatpush2.msra.mxu0 0.0
      %557 = vmatprep.subr.mxu0 0.0
      %558 = vmatpush2.msra.mxu0 0.0
      %559 = vmatprep.subr.mxu0 0.0
      %560 = vmatpush2.msra.mxu0 0.0
      %561 = vmatprep.subr.mxu0 0.0
      %562 = vmatpush2.msra.mxu0 0.0
      %563 = vmatprep.subr.mxu0 0.0
      %564 = vmatpush2.msra.mxu0 0.0
      %565 = vmatprep.subr.mxu0 0.0
      %566 = vmatpush2.msra.mxu0 0.0
      %567 = vmatprep.subr.mxu0 0.0
      %568 = vmatpush2.msra.mxu0 0.0
      %569 = vmatprep.subr.mxu0 0.0
      %570 = vmatpush2.msra.mxu0 0.0
      %571 = vmatprep.subr.mxu0 0.0
      %572 = vmatpush2.msra.mxu0 0.0
      %573 = vmatprep.subr.mxu0 0.0
      %574 = vmatpush2.msra.mxu0 0.0
      %575 = vmatprep.mubr.f32.mxu0 0.0
      %576 = vmatmul.mubr.f32.gmra.mxu0 %v326
      %v577 = vpop.f32.mrf.mxu0
      %v578 = vadd.f32 0.0, %v577
      %v579 = vpop.f32.mrf.mxu0
      %580 = vdwg.mxu0
      %v581 = vmul.f32 %v236, %v236
      %582 = vrot.lane.b32.xlu0 %v581, 1
      %v583 = vpop.permute.xlu0 %582
      %v584 = vmul.f32 %v297, %v583
      %v585 = vadd.f32 %v581, %v584
      %586 = vrot.lane.b32.xlu0 %v581, 127
      %v587 = vpop.permute.xlu0 %586
      %v588 = vmul.f32 %v305, %v587
      %v589 = vadd.f32 %v585, %v588
      %590 = vrot.lane.b32.xlu0 %v589, 4
      %v591 = vpop.permute.xlu0 %590
      %v592 = vmul.f32 %v313, %v591
      %v593 = vadd.f32 %v589, %v592
      %594 = vrot.lane.b32.xlu0 %v589, 124
      %v595 = vpop.permute.xlu0 %594
      %v596 = vmul.f32 %v321, %v595
      %v597 = vadd.f32 %v593, %v596
      %v599 = vsel %vm328, %v597, 0
      %601 = vmatprep.subr.mxu0 0.0
      %602 = vmatpush1.msra.mxu0 0.0
      %603 = vmatprep.subr.mxu0 0.0
      %604 = vmatpush1.msra.mxu0 0.0
      %605 = vmatprep.subr.mxu0 0.0
      %606 = vmatpush1.msra.mxu0 0.0
      %607 = vmatprep.subr.mxu0 0.0
      %608 = vmatpush1.msra.mxu0 0.0
      %609 = vmatprep.subr.mxu0 0.0
      %610 = vmatpush1.msra.mxu0 0.0
      %611 = vmatprep.subr.mxu0 0.0
      %612 = vmatpush1.msra.mxu0 0.0
      %613 = vmatprep.subr.mxu0 0.0
      %614 = vmatpush1.msra.mxu0 0.0
      %615 = vmatprep.subr.mxu0 0.0
      %616 = vmatpush1.msra.mxu0 0.0
      %617 = vmatprep.subr.mxu0 0.0
      %618 = vmatpush1.msra.mxu0 0.0
      %619 = vmatprep.subr.mxu0 0.0
      %620 = vmatpush1.msra.mxu0 0.0
      %621 = vmatprep.subr.mxu0 0.0
      %622 = vmatpush1.msra.mxu0 0.0
      %623 = vmatprep.subr.mxu0 0.0
      %624 = vmatpush1.msra.mxu0 0.0
      %625 = vmatprep.subr.mxu0 0.0
      %626 = vmatpush1.msra.mxu0 0.0
      %627 = vmatprep.subr.mxu0 0.0
      %628 = vmatpush1.msra.mxu0 0.0
      %629 = vmatprep.subr.mxu0 0.0
      %630 = vmatpush1.msra.mxu0 0.0
      %631 = vmatprep.subr.mxu0 0.0
      %632 = vmatpush1.msra.mxu0 %v599
      %633 = vmatprep.subr.mxu0 0.0
      %634 = vmatpush2.msra.mxu0 0.0
      %635 = vmatprep.subr.mxu0 0.0
      %636 = vmatpush2.msra.mxu0 0.0
      %637 = vmatprep.subr.mxu0 0.0
      %638 = vmatpush2.msra.mxu0 0.0
      %639 = vmatprep.subr.mxu0 0.0
      %640 = vmatpush2.msra.mxu0 0.0
      %641 = vmatprep.subr.mxu0 0.0
      %642 = vmatpush2.msra.mxu0 0.0
      %643 = vmatprep.subr.mxu0 0.0
      %644 = vmatpush2.msra.mxu0 0.0
      %645 = vmatprep.subr.mxu0 0.0
      %646 = vmatpush2.msra.mxu0 0.0
      %647 = vmatprep.subr.mxu0 0.0
      %648 = vmatpush2.msra.mxu0 0.0
      %649 = vmatprep.subr.mxu0 0.0
      %650 = vmatpush2.msra.mxu0 0.0
      %651 = vmatprep.subr.mxu0 0.0
      %652 = vmatpush2.msra.mxu0 0.0
      %653 = vmatprep.subr.mxu0 0.0
      %654 = vmatpush2.msra.mxu0 0.0
      %655 = vmatprep.subr.mxu0 0.0
      %656 = vmatpush2.msra.mxu0 0.0
      %657 = vmatprep.subr.mxu0 0.0
      %658 = vmatpush2.msra.mxu0 0.0
      %659 = vmatprep.subr.mxu0 0.0
      %660 = vmatpush2.msra.mxu0 0.0
      %661 = vmatprep.subr.mxu0 0.0
      %662 = vmatpush2.msra.mxu0 0.0
      %663 = vmatprep.subr.mxu0 0.0
      %664 = vmatpush2.msra.mxu0 0.0
      %665 = vmatprep.mubr.f32.mxu0 0.0
      %666 = vmatmul.mubr.f32.gmra.mxu0 %v326
      %v667 = vpop.f32.mrf.mxu0
      %v668 = vadd.f32 0.0, %v667
      %v669 = vpop.f32.mrf.mxu0
      %670 = vdwg.mxu0
      %v671 = vmul.f32 %v235, %v236
      %672 = vrot.lane.b32.xlu0 %v671, 1
      %v673 = vpop.permute.xlu0 %672
      %v674 = vmul.f32 %v297, %v673
      %v675 = vadd.f32 %v671, %v674
      %676 = vrot.lane.b32.xlu0 %v671, 127
      %v677 = vpop.permute.xlu0 %676
      %v678 = vmul.f32 %v305, %v677
      %v679 = vadd.f32 %v675, %v678
      %680 = vrot.lane.b32.xlu0 %v679, 4
      %v681 = vpop.permute.xlu0 %680
      %v682 = vmul.f32 %v313, %v681
      %v683 = vadd.f32 %v679, %v682
      %684 = vrot.lane.b32.xlu0 %v679, 124
      %v685 = vpop.permute.xlu0 %684
      %v686 = vmul.f32 %v321, %v685
      %v687 = vadd.f32 %v683, %v686
      %v689 = vsel %vm328, %v687, 0
      %691 = vmatprep.subr.mxu0 0.0
      %692 = vmatpush1.msra.mxu0 0.0
      %693 = vmatprep.subr.mxu0 0.0
      %694 = vmatpush1.msra.mxu0 0.0
      %695 = vmatprep.subr.mxu0 0.0
      %696 = vmatpush1.msra.mxu0 0.0
      %697 = vmatprep.subr.mxu0 0.0
      %698 = vmatpush1.msra.mxu0 0.0
      %699 = vmatprep.subr.mxu0 0.0
      %700 = vmatpush1.msra.mxu0 0.0
      %701 = vmatprep.subr.mxu0 0.0
      %702 = vmatpush1.msra.mxu0 0.0
      %703 = vmatprep.subr.mxu0 0.0
      %704 = vmatpush1.msra.mxu0 0.0
      %705 = vmatprep.subr.mxu0 0.0
      %706 = vmatpush1.msra.mxu0 0.0
      %707 = vmatprep.subr.mxu0 0.0
      %708 = vmatpush1.msra.mxu0 0.0
      %709 = vmatprep.subr.mxu0 0.0
      %710 = vmatpush1.msra.mxu0 0.0
      %711 = vmatprep.subr.mxu0 0.0
      %712 = vmatpush1.msra.mxu0 0.0
      %713 = vmatprep.subr.mxu0 0.0
      %714 = vmatpush1.msra.mxu0 0.0
      %715 = vmatprep.subr.mxu0 0.0
      %716 = vmatpush1.msra.mxu0 0.0
      %717 = vmatprep.subr.mxu0 0.0
      %718 = vmatpush1.msra.mxu0 0.0
      %719 = vmatprep.subr.mxu0 0.0
      %720 = vmatpush1.msra.mxu0 0.0
      %721 = vmatprep.subr.mxu0 0.0
      %722 = vmatpush1.msra.mxu0 %v689
      %723 = vmatprep.subr.mxu0 0.0
      %724 = vmatpush2.msra.mxu0 0.0
      %725 = vmatprep.subr.mxu0 0.0
      %726 = vmatpush2.msra.mxu0 0.0
      %727 = vmatprep.subr.mxu0 0.0
      %728 = vmatpush2.msra.mxu0 0.0
      %729 = vmatprep.subr.mxu0 0.0
      %730 = vmatpush2.msra.mxu0 0.0
      %731 = vmatprep.subr.mxu0 0.0
      %732 = vmatpush2.msra.mxu0 0.0
      %733 = vmatprep.subr.mxu0 0.0
      %734 = vmatpush2.msra.mxu0 0.0
      %735 = vmatprep.subr.mxu0 0.0
      %736 = vmatpush2.msra.mxu0 0.0
      %737 = vmatprep.subr.mxu0 0.0
      %738 = vmatpush2.msra.mxu0 0.0
      %739 = vmatprep.subr.mxu0 0.0
      %740 = vmatpush2.msra.mxu0 0.0
      %741 = vmatprep.subr.mxu0 0.0
      %742 = vmatpush2.msra.mxu0 0.0
      %743 = vmatprep.subr.mxu0 0.0
      %744 = vmatpush2.msra.mxu0 0.0
      %745 = vmatprep.subr.mxu0 0.0
      %746 = vmatpush2.msra.mxu0 0.0
      %747 = vmatprep.subr.mxu0 0.0
      %748 = vmatpush2.msra.mxu0 0.0
      %749 = vmatprep.subr.mxu0 0.0
      %750 = vmatpush2.msra.mxu0 0.0
      %751 = vmatprep.subr.mxu0 0.0
      %752 = vmatpush2.msra.mxu0 0.0
      %753 = vmatprep.subr.mxu0 0.0
      %754 = vmatpush2.msra.mxu0 0.0
      %755 = vmatprep.mubr.f32.mxu0 0.0
      %756 = vmatmul.mubr.f32.gmra.mxu0 %v326
      %v757 = vpop.f32.mrf.mxu0
      %v758 = vadd.f32 0.0, %v757
      %v759 = vpop.f32.mrf.mxu0
      %760 = vdwg.mxu0
      %v761 = vmul.f32 %v399, 0.037037037
      %v762 = vmul.f32 %v488, 0.037037037
      %v763 = vmul.f32 %v762, %v399
      %v764 = vsub.f32 %v758, %v763
      %v765 = vmul.f32 %v761, %v488
      %v766 = vsub.f32 %v764, %v765
      %v767 = vmul.f32 %v761, %v762
      %v768 = vmul.f32 %v767, 27.0
      %v769 = vadd.f32 %v766, %v768
      %v770 = vmul.f32 %v761, 2.0
      %v771 = vmul.f32 %v770, %v399
      %v772 = vsub.f32 %v578, %v771
      %v773 = vmul.f32 %v761, %v761
      %v774 = vmul.f32 %v773, 27.0
      %v775 = vadd.f32 %v772, %v774
      %v776 = vmul.f32 %v762, 2.0
      %v777 = vmul.f32 %v776, %v488
      %v778 = vsub.f32 %v668, %v777
      %v779 = vmul.f32 %v762, %v762
      %v780 = vmul.f32 %v779, 27.0
      %v781 = vadd.f32 %v778, %v780
      %v782 = vmul.f32 %v769, %v769
      %v783 = vmul.f32 %v775, %v781
      %v784 = vadd.f32 %v783, 1e-05
      %v785 = vrcp.pop %v784
      %v786 = vmul.f32 %v782, %v785
      %v787 = vsel %vm328, %v786, 0.0
      %788 = vadd.xlane.f32.xlu0 %v787
      %v789 = vpop.xlane.xlu0 %788
      %v790 = vrot.slane %v789, 4
      %v791 = vadd.f32 %v789, %v790
      %v792 = vrot.slane %v791, 2
      %v793 = vadd.f32 %v791, %v792
      %v794 = vrot.slane %v793, 1
      %v795 = vadd.f32 %v793, %v794
      %s796 = vtos %v795
      %v797 = vstv %s796
      %v798 = vadd.f32 %v797, 0.0
      %vm799 = vcmask 0
      %800 = vst.msk [vmem:[%s234] sm:$0x1] %vm799, %v798
      %p801 = scmp.lt.s32.totalorder %s16, 1
      %s802 = scalar_select %p801, %s16, 1
      %s803 = scalar_lea.vmem %s5, %s802
      // Predicated region
      $region41: #{multi_resolution_ncc.5} parent=39 // pred_check
        %p804 = pneg %p149
      $region42: #{multi_resolution_ncc.5} parent=39 // pred_check_branch
        %806 = sbr.rel (%p804) target = $region44
      $region43: #{multi_resolution_ncc.5} parent=39 // pred_region
        _
      $region44: #{multi_resolution_ncc.5} parent=39 // pred_fallthru
        _
    $region40: #{multi_resolution_ncc.5} parent=5 // pred_fallthru
      _
    %p807 = scmp.le.s32.totalorder 2, %s11
    // Predicated region
    $region45: #{multi_resolution_ncc.5} parent=5 // pred_check
      %p808 = pneg %p807
    $region46: #{multi_resolution_ncc.5} parent=5 // pred_check_branch
      %810 = sbr.rel (%p808) target = $region48
    $region47: #{multi_resolution_ncc.5} parent=5 // pred_region
      %s811 = ssub.s32 %s11, 2
      // Predicated region
      $region49: #{multi_resolution_ncc.5} parent=47 // pred_check
        %p812 = pneg %p155
      $region50: #{multi_resolution_ncc.5} parent=47 // pred_check_branch
        %814 = sbr.rel (%p812) target = $region52
      $region51: #{multi_resolution_ncc.5} parent=47 // pred_region
        %p815 = scmp.lt.s32.totalorder %s17, 1
        %s816 = scalar_select %p815, %s17, 1
        %s817 = scalar_lea.vmem %s5, %s816
      $region52: #{multi_resolution_ncc.5} parent=47 // pred_fallthru
        _
    $region48: #{multi_resolution_ncc.5} parent=5 // pred_fallthru
      _
  $region6: #{multi_resolution_ncc.5} parent=0 // loop_footer
    %s15 = sadd.s32 1, %s11
  $region7: #{multi_resolution_ncc.5} parent=0 // loop_footer_branch
    %10 = sbr.rel target = $region3
  $region8: #{multi_resolution_ncc.5} parent=0 // loop_exit
    _

// kernel: multi_resolution_ncc.3
$region0: #{multi_resolution_ncc.3}
  #allocation0 [shape = 'u32[]', space=smem, size = 0x4, offset = 0x4, fixed_abs, tag = 'smem constant byte address 0x4 - core index']
  #allocation1 [shape = 'u32[144,128]{1,0:T(1,128)}', space=vmem, size = 0x12000, scoped, tag = 'internal scratch']
  %s0 = inlined_call_operand.vmem [shape: f32[2,16,256], index: 0, kind: input, shape index: {}]
  %s1 = inlined_call_operand.vmem [shape: f32[2,16,256], index: 1, kind: input, shape index: {}]
  %s2 = inlined_call_operand.vmem [shape: f32[16,16], index: 2, kind: input, shape index: {}]
  %s3 = inlined_call_operand.vmem [shape: f32[1,256], index: 3, kind: input, shape index: {}]
  %s4 = inlined_call_operand.vmem [shape: f32[1,256], index: 4, kind: input, shape index: {}]
  %s5 = inlined_call_operand.vmem [shape: f32[8,16], index: 5, kind: input, shape index: {}]
  %s6 = inlined_call_operand.vmem [shape: f32[1,256], index: 6, kind: input, shape index: {}]
  %s7 = inlined_call_operand.vmem [shape: f32[2,1,1], index: 7, kind: output, shape index: {0}]
  %s8 = inlined_call_operand.vmem [shape: f32[2,8,256], index: 8, kind: output, shape index: {1}]
  %s9 = inlined_call_operand.vmem [shape: f32[2,8,256], index: 9, kind: output, shape index: {2}]
  %10 = xla_tuple %s7, %s8, %s9
  %s11 = sld [smem:[#allocation0]]
  $region77: #{multi_resolution_ncc.3} parent=0
    _
  %s13 = ssub.s32 1, %s11
  %s14 = scalar_select 0, %s13, %s11
  loop: start=0, step=1, limit=4
  $region2: #{multi_resolution_ncc.3} parent=0 // loop_pre_header
    _
  $region3: #{multi_resolution_ncc.3} parent=0 // loop_header
    %s16 = sphi 0, %s20
    %p17 = scmp.ge.s32.totalorder %s16, 4
    %s26 = sphi 0, %s28
    %s29 = sphi 0, %s26
    %s30 = sphi 0, %s29
    %s46 = sphi 0, %s30
    %s52 = sphi 0, %s54
    %s55 = sphi 0, %s52
    %s56 = sphi 0, %s55
    %s72 = sphi 0, %s56
    %s76 = sphi 0, %s76
    %s78 = sphi 0, %s76
    %s79 = sphi 0, %s78
    %s93 = sphi 0, %s79
    %s97 = sphi 0, %s97
    %s99 = sphi 0, %s97
    %s100 = sphi 0, %s99
    %s114 = sphi 0, %s100
    %s118 = sphi 0, %s118
    %s120 = sphi 0, %s118
    %s121 = sphi 0, %s120
    %s135 = sphi 0, %s121
    %s139 = sphi 0, %s139
    %s141 = sphi 0, %s139
    %s142 = sphi 0, %s141
    %s156 = sphi 0, %s142
    %s160 = sphi 0, %s160
    %s162 = sphi 0, %s160
    %s163 = sphi 0, %s162
    %s177 = sphi 0, %s163
    %s183 = sphi 0, %s185
    %s186 = sphi 0, %s183
    %s187 = sphi 0, %s186
    %s203 = sphi 0, %s187
    %s209 = sphi 0, %s211
    %s212 = sphi 0, %s209
    %s213 = sphi 0, %s212
    %s229 = sphi 0, %s213
    %s235 = sphi 0, %s237
    %s238 = sphi 0, %s235
    %s239 = sphi 0, %s238
    %s255 = sphi 0, %s239
  $region4: #{multi_resolution_ncc.3} parent=0 // loop_header_branch
    %19 = sbr.rel (%p17) target = $region8
  $region5: #{multi_resolution_ncc.3} parent=0 // loop_body
    %s21 = ssub.s32 %s16, 1
    %s22 = ssub.s32 %s16, 2
    %s23 = sadd.s32 %s16, 1
    %s24 = ssub.s32 %s16, %s23
    %p25 = scmp.eq.s32.totalorder %s24, 0
    %s27 = sadd.s32 %s26, 1
    %s28 = scalar_select %p25, %s26, %s27
    %p31 = pneg %p25
    %p32 = scmp.eq.s32.totalorder %s16, 1
    %p33 = por %p31, %p32
    %p34 = scmp.ne.s32.totalorder %s26, %s29
    %p35 = scmp.eq.s32.totalorder %s16, 0
    %p36 = por %p34, %p35
    %p37 = scmp.ne.s32.totalorder %s26, %s29
    %p38 = scmp.eq.s32.totalorder %s21, 1
    %p39 = por %p37, %p38
    %p40 = scmp.ne.s32.totalorder %s29, %s30
    %p41 = scmp.eq.s32.totalorder %s21, 0
    %p42 = por %p40, %p41
    %p43 = scmp.ne.s32.totalorder %s29, %s30
    %p44 = scmp.eq.s32.totalorder %s22, 1
    %p45 = por %p43, %p44
    %p47 = scmp.ne.s32.totalorder %s30, %s46
    %p48 = scmp.eq.s32.totalorder %s22, 0
    %p49 = por %p47, %p48
    %s50 = ssub.s32 %s16, %s23
    %p51 = scmp.eq.s32.totalorder %s50, 0
    %s53 = sadd.s32 %s52, 1
    %s54 = scalar_select %p51, %s52, %s53
    %p57 = pneg %p51
    %p58 = scmp.eq.s32.totalorder %s16, 1
    %p59 = por %p57, %p58
    %p60 = scmp.ne.s32.totalorder %s52, %s55
    %p61 = scmp.eq.s32.totalorder %s16, 0
    %p62 = por %p60, %p61
    %p63 = scmp.ne.s32.totalorder %s52, %s55
    %p64 = scmp.eq.s32.totalorder %s21, 1
    %p65 = por %p63, %p64
    %p66 = scmp.ne.s32.totalorder %s55, %s56
    %p67 = scmp.eq.s32.totalorder %s21, 0
    %p68 = por %p66, %p67
    %p69 = scmp.ne.s32.totalorder %s55, %s56
    %p70 = scmp.eq.s32.totalorder %s22, 1
    %p71 = por %p69, %p70
    %p73 = scmp.ne.s32.totalorder %s56, %s72
    %p74 = scmp.eq.s32.totalorder %s22, 0
    %p75 = por %p73, %p74
    %s77 = sadd.s32 %s76, 1
    %p80 = scmp.eq.s32.totalorder %s16, 1
    %p81 = scmp.ne.s32.totalorder %s76, %s78
    %p82 = scmp.eq.s32.totalorder %s16, 0
    %p83 = por %p81, %p82
    %p84 = scmp.ne.s32.totalorder %s76, %s78
    %p85 = scmp.eq.s32.totalorder %s21, 1
    %p86 = por %p84, %p85
    %p87 = scmp.ne.s32.totalorder %s78, %s79
    %p88 = scmp.eq.s32.totalorder %s21, 0
    %p89 = por %p87, %p88
    %p90 = scmp.ne.s32.totalorder %s78, %s79
    %p91 = scmp.eq.s32.totalorder %s22, 1
    %p92 = por %p90, %p91
    %p94 = scmp.ne.s32.totalorder %s79, %s93
    %p95 = scmp.eq.s32.totalorder %s22, 0
    %p96 = por %p94, %p95
    %s98 = sadd.s32 %s97, 1
    %p101 = scmp.eq.s32.totalorder %s16, 1
    %p102 = scmp.ne.s32.totalorder %s97, %s99
    %p103 = scmp.eq.s32.totalorder %s16, 0
    %p104 = por %p102, %p103
    %p105 = scmp.ne.s32.totalorder %s97, %s99
    %p106 = scmp.eq.s32.totalorder %s21, 1
    %p107 = por %p105, %p106
    %p108 = scmp.ne.s32.totalorder %s99, %s100
    %p109 = scmp.eq.s32.totalorder %s21, 0
    %p110 = por %p108, %p109
    %p111 = scmp.ne.s32.totalorder %s99, %s100
    %p112 = scmp.eq.s32.totalorder %s22, 1
    %p113 = por %p111, %p112
    %p115 = scmp.ne.s32.totalorder %s100, %s114
    %p116 = scmp.eq.s32.totalorder %s22, 0
    %p117 = por %p115, %p116
    %s119 = sadd.s32 %s118, 1
    %p122 = scmp.eq.s32.totalorder %s16, 1
    %p123 = scmp.ne.s32.totalorder %s118, %s120
    %p124 = scmp.eq.s32.totalorder %s16, 0
    %p125 = por %p123, %p124
    %p126 = scmp.ne.s32.totalorder %s118, %s120
    %p127 = scmp.eq.s32.totalorder %s21, 1
    %p128 = por %p126, %p127
    %p129 = scmp.ne.s32.totalorder %s120, %s121
    %p130 = scmp.eq.s32.totalorder %s21, 0
    %p131 = por %p129, %p130
    %p132 = scmp.ne.s32.totalorder %s120, %s121
    %p133 = scmp.eq.s32.totalorder %s22, 1
    %p134 = por %p132, %p133
    %p136 = scmp.ne.s32.totalorder %s121, %s135
    %p137 = scmp.eq.s32.totalorder %s22, 0
    %p138 = por %p136, %p137
    %s140 = sadd.s32 %s139, 1
    %p143 = scmp.eq.s32.totalorder %s16, 1
    %p144 = scmp.ne.s32.totalorder %s139, %s141
    %p145 = scmp.eq.s32.totalorder %s16, 0
    %p146 = por %p144, %p145
    %p147 = scmp.ne.s32.totalorder %s139, %s141
    %p148 = scmp.eq.s32.totalorder %s21, 1
    %p149 = por %p147, %p148
    %p150 = scmp.ne.s32.totalorder %s141, %s142
    %p151 = scmp.eq.s32.totalorder %s21, 0
    %p152 = por %p150, %p151
    %p153 = scmp.ne.s32.totalorder %s141, %s142
    %p154 = scmp.eq.s32.totalorder %s22, 1
    %p155 = por %p153, %p154
    %p157 = scmp.ne.s32.totalorder %s142, %s156
    %p158 = scmp.eq.s32.totalorder %s22, 0
    %p159 = por %p157, %p158
    %s161 = sadd.s32 %s160, 1
    %p164 = scmp.eq.s32.totalorder %s16, 1
    %p165 = scmp.ne.s32.totalorder %s160, %s162
    %p166 = scmp.eq.s32.totalorder %s16, 0
    %p167 = por %p165, %p166
    %p168 = scmp.ne.s32.totalorder %s160, %s162
    %p169 = scmp.eq.s32.totalorder %s21, 1
    %p170 = por %p168, %p169
    %p171 = scmp.ne.s32.totalorder %s162, %s163
    %p172 = scmp.eq.s32.totalorder %s21, 0
    %p173 = por %p171, %p172
    %p174 = scmp.ne.s32.totalorder %s162, %s163
    %p175 = scmp.eq.s32.totalorder %s22, 1
    %p176 = por %p174, %p175
    %p178 = scmp.ne.s32.totalorder %s163, %s177
    %p179 = scmp.eq.s32.totalorder %s22, 0
    %p180 = por %p178, %p179
    %s181 = ssub.s32 %s16, %s23
    %p182 = scmp.eq.s32.totalorder %s181, 0
    %s184 = sadd.s32 %s183, 1
    %s185 = scalar_select %p182, %s183, %s184
    %p188 = pneg %p182
    %p189 = scmp.eq.s32.totalorder %s16, 1
    %p190 = por %p188, %p189
    %p191 = scmp.ne.s32.totalorder %s183, %s186
    %p192 = scmp.eq.s32.totalorder %s16, 0
    %p193 = por %p191, %p192
    %p194 = scmp.ne.s32.totalorder %s183, %s186
    %p195 = scmp.eq.s32.totalorder %s21, 1
    %p196 = por %p194, %p195
    %p197 = scmp.ne.s32.totalorder %s186, %s187
    %p198 = scmp.eq.s32.totalorder %s21, 0
    %p199 = por %p197, %p198
    %p200 = scmp.ne.s32.totalorder %s186, %s187
    %p201 = scmp.eq.s32.totalorder %s22, 1
    %p202 = por %p200, %p201
    %p204 = scmp.ne.s32.totalorder %s187, %s203
    %p205 = scmp.eq.s32.totalorder %s22, 0
    %p206 = por %p204, %p205
    %s207 = ssub.s32 %s16, %s23
    %p208 = scmp.eq.s32.totalorder %s207, 0
    %s210 = sadd.s32 %s209, 1
    %s211 = scalar_select %p208, %s209, %s210
    %p214 = pneg %p208
    %p215 = scmp.eq.s32.totalorder %s16, 1
    %p216 = por %p214, %p215
    %p217 = scmp.ne.s32.totalorder %s209, %s212
    %p218 = scmp.eq.s32.totalorder %s16, 0
    %p219 = por %p217, %p218
    %p220 = scmp.ne.s32.totalorder %s209, %s212
    %p221 = scmp.eq.s32.totalorder %s21, 1
    %p222 = por %p220, %p221
    %p223 = scmp.ne.s32.totalorder %s212, %s213
    %p224 = scmp.eq.s32.totalorder %s21, 0
    %p225 = por %p223, %p224
    %p226 = scmp.ne.s32.totalorder %s212, %s213
    %p227 = scmp.eq.s32.totalorder %s22, 1
    %p228 = por %p226, %p227
    %p230 = scmp.ne.s32.totalorder %s213, %s229
    %p231 = scmp.eq.s32.totalorder %s22, 0
    %p232 = por %p230, %p231
    %s233 = ssub.s32 %s16, %s23
    %p234 = scmp.eq.s32.totalorder %s233, 0
    %s236 = sadd.s32 %s235, 1
    %s237 = scalar_select %p234, %s235, %s236
    %p240 = pneg %p234
    %p241 = scmp.eq.s32.totalorder %s16, 1
    %p242 = por %p240, %p241
    %p243 = scmp.ne.s32.totalorder %s235, %s238
    %p244 = scmp.eq.s32.totalorder %s16, 0
    %p245 = por %p243, %p244
    %p246 = scmp.ne.s32.totalorder %s235, %s238
    %p247 = scmp.eq.s32.totalorder %s21, 1
    %p248 = por %p246, %p247
    %p249 = scmp.ne.s32.totalorder %s238, %s239
    %p250 = scmp.eq.s32.totalorder %s21, 0
    %p251 = por %p249, %p250
    %p252 = scmp.ne.s32.totalorder %s238, %s239
    %p253 = scmp.eq.s32.totalorder %s22, 1
    %p254 = por %p252, %p253
    %p256 = scmp.ne.s32.totalorder %s239, %s255
    %p257 = scmp.eq.s32.totalorder %s22, 0
    %p258 = por %p256, %p257
    %p259 = scmp.le.s32.totalorder 1, %s16
    %p260 = scmp.lt.s32.totalorder %s16, 3
    %p261 = pnand %p259, %p260
    %p262 = pneg %p261
    // Predicated region
    $region9: #{multi_resolution_ncc.3} parent=5 // pred_check
      _
    $region10: #{multi_resolution_ncc.3} parent=5 // pred_check_branch
      %264 = sbr.rel (%p261) target = $region12
    $region11: #{multi_resolution_ncc.3} parent=5 // pred_region
      %s265 = ssub.s32 %s16, 1
      // Predicated region
      $region13: #{multi_resolution_ncc.3} parent=11 // pred_check
        %p266 = pneg %p89
      $region14: #{multi_resolution_ncc.3} parent=11 // pred_check_branch
        %268 = sbr.rel (%p266) target = $region16
      $region15: #{multi_resolution_ncc.3} parent=11 // pred_region
        _
      $region16: #{multi_resolution_ncc.3} parent=11 // pred_fallthru
        _
      // Predicated region
      $region17: #{multi_resolution_ncc.3} parent=11 // pred_check
        %p269 = pneg %p110
      $region18: #{multi_resolution_ncc.3} parent=11 // pred_check_branch
        %271 = sbr.rel (%p269) target = $region20
      $region19: #{multi_resolution_ncc.3} parent=11 // pred_region
        _
      $region20: #{multi_resolution_ncc.3} parent=11 // pred_fallthru
        _
      // Predicated region
      $region21: #{multi_resolution_ncc.3} parent=11 // pred_check
        %p272 = pneg %p131
      $region22: #{multi_resolution_ncc.3} parent=11 // pred_check_branch
        %274 = sbr.rel (%p272) target = $region24
      $region23: #{multi_resolution_ncc.3} parent=11 // pred_region
        _
      $region24: #{multi_resolution_ncc.3} parent=11 // pred_fallthru
        _
      // Predicated region
      $region25: #{multi_resolution_ncc.3} parent=11 // pred_check
        %p275 = pneg %p152
      $region26: #{multi_resolution_ncc.3} parent=11 // pred_check_branch
        %277 = sbr.rel (%p275) target = $region28
      $region27: #{multi_resolution_ncc.3} parent=11 // pred_region
        _
      $region28: #{multi_resolution_ncc.3} parent=11 // pred_fallthru
        _
      // Predicated region
      $region29: #{multi_resolution_ncc.3} parent=11 // pred_check
        %p278 = pneg %p173
      $region30: #{multi_resolution_ncc.3} parent=11 // pred_check_branch
        %280 = sbr.rel (%p278) target = $region32
      $region31: #{multi_resolution_ncc.3} parent=11 // pred_region
        _
      $region32: #{multi_resolution_ncc.3} parent=11 // pred_fallthru
        _
    $region12: #{multi_resolution_ncc.3} parent=5 // pred_fallthru
      _
    %p281 = scmp.lt.s32.totalorder %s16, 2
    // Predicated region
    $region33: #{multi_resolution_ncc.3} parent=5 // pred_check
      %p282 = pneg %p281
    $region34: #{multi_resolution_ncc.3} parent=5 // pred_check_branch
      %284 = sbr.rel (%p282) target = $region36
    $region35: #{multi_resolution_ncc.3} parent=5 // pred_region
      // Predicated region
      $region37: #{multi_resolution_ncc.3} parent=35 // pred_check
        %p285 = pneg %p36
      $region38: #{multi_resolution_ncc.3} parent=35 // pred_check_branch
        %287 = sbr.rel (%p285) target = $region40
      $region39: #{multi_resolution_ncc.3} parent=35 // pred_region
        %p288 = scmp.lt.s32.totalorder %s16, 1
        %s289 = scalar_select %p288, %s16, 1
        %s290 = smul.addr %s289, 4
        %s291 = smul.addr %s290, 8
        %s292 = scalar_lea.vmem %s0, %s291
      $region40: #{multi_resolution_ncc.3} parent=35 // pred_fallthru
        _
      // Predicated region
      $region41: #{multi_resolution_ncc.3} parent=35 // pred_check
        %p293 = pneg %p62
      $region42: #{multi_resolution_ncc.3} parent=35 // pred_check_branch
        %295 = sbr.rel (%p293) target = $region44
      $region43: #{multi_resolution_ncc.3} parent=35 // pred_region
        %p296 = scmp.lt.s32.totalorder %s16, 1
        %s297 = scalar_select %p296, %s16, 1
        %s298 = smul.addr %s297, 4
        %s299 = smul.addr %s298, 8
        %s300 = scalar_lea.vmem %s1, %s299
      $region44: #{multi_resolution_ncc.3} parent=35 // pred_fallthru
        _
    $region36: #{multi_resolution_ncc.3} parent=5 // pred_fallthru
      _
    %p301 = scmp.le.s32.totalorder 1, %s16
    %p302 = scmp.lt.s32.totalorder %s16, 3
    %p303 = pnand %p301, %p302
    %p304 = pneg %p303
    // Predicated region
    $region45: #{multi_resolution_ncc.3} parent=5 // pred_check
      _
    $region46: #{multi_resolution_ncc.3} parent=5 // pred_check_branch
      %306 = sbr.rel (%p303) target = $region48
    $region47: #{multi_resolution_ncc.3} parent=5 // pred_region
      %s307 = ssub.s32 %s16, 1
      %p308 = scmp.lt.s32.totalorder %s21, 1
      %s309 = scalar_select %p308, %s21, 1
      %s310 = smul.addr %s309, 4
      %s311 = smul.addr %s310, 8
      %s312 = scalar_lea.vmem %s0, %s311
      %p313 = pneg %p42
      %p314 = pneg %p39
      %p315 = scmp.lt.s32.totalorder %s21, 1
      %s316 = scalar_select %p315, %s21, 1
      %s317 = smul.addr %s316, 4
      %s318 = smul.addr %s317, 8
      %s319 = scalar_lea.vmem %s1, %s318
      %p320 = pneg %p68
      %p321 = pneg %p65
      %p322 = pneg %p89
      %p323 = pneg %p86
      %p324 = pneg %p110
      %p325 = pneg %p107
      %p326 = pneg %p131
      %p327 = pneg %p128
      %p328 = pneg %p152
      %p329 = pneg %p149
      %p330 = pneg %p173
      %p331 = pneg %p170
      %p332 = pneg %p199
      %p333 = pneg %p196
      %p334 = scmp.lt.s32.totalorder %s21, 1
      %s335 = scalar_select %p334, %s21, 1
      %s336 = scalar_lea.vmem %s7, %s335
      %p337 = pneg %p225
      %p338 = pneg %p222
      %p339 = scmp.lt.s32.totalorder %s21, 1
      %s340 = scalar_select %p339, %s21, 1
      %s341 = smul.addr %s340, 2
      %s342 = smul.addr %s341, 8
      %s343 = scalar_lea.vmem %s8, %s342
      %p344 = pneg %p251
      %p345 = pneg %p248
      %p346 = scmp.lt.s32.totalorder %s21, 1
      %s347 = scalar_select %p346, %s21, 1
      %s348 = smul.addr %s347, 2
      %s349 = smul.addr %s348, 8
      %s350 = scalar_lea.vmem %s9, %s349
      %p351 = scmp.lt.s32.totalorder %s21, 1
      %s352 = scalar_select %p351, %s21, 1
      %s353 = smul.addr %s352, 4
      %s354 = smul.addr %s353, 8
      %s355 = scalar_lea.vmem %s0, %s354
      %p356 = scmp.lt.s32.totalorder %s21, 1
      %s357 = scalar_select %p356, %s21, 1
      %s358 = smul.addr %s357, 4
      %s359 = smul.addr %s358, 8
      %s360 = scalar_lea.vmem %s1, %s359
      %p361 = scmp.lt.s32.totalorder %s21, 1
      %s362 = scalar_select %p361, %s21, 1
      %s363 = scalar_lea.vmem %s7, %s362
      %p364 = scmp.lt.s32.totalorder %s21, 1
      %s365 = scalar_select %p364, %s21, 1
      %s366 = smul.addr %s365, 2
      %s367 = smul.addr %s366, 8
      %s368 = scalar_lea.vmem %s8, %s367
      %p369 = scmp.lt.s32.totalorder %s21, 1
      %s370 = scalar_select %p369, %s21, 1
      %s371 = smul.addr %s370, 2
      %s372 = smul.addr %s371, 8
      %s373 = scalar_lea.vmem %s9, %s372
      %v374 = vld [vmem:[%s355] sm:$0xff]
      %v375 = vld [vmem:[%s355 + $0x8] sm:$0xff]
      %v376 = vld [vmem:[%s355 + $0x10] sm:$0xff]
      %v377 = vld [vmem:[%s355 + $0x18] sm:$0xff]
      %v378 = vld [vmem:[%s360] sm:$0xff]
      %v379 = vld [vmem:[%s360 + $0x8] sm:$0xff]
      %v380 = vld [vmem:[%s360 + $0x10] sm:$0xff]
      %v381 = vld [vmem:[%s360 + $0x18] sm:$0xff]
      %v382 = vld [vmem:[%s3] sm:$0x3]
      %v383 = vld [vmem:[%s4] sm:$0x3]
      %v385 = vlaneseq
      %v386 = vshrl.u32 %v385, 7
      %v387 = vsub.s32 0, %v386
      %v388 = vrot.slane %v382, %v387
      %v389 = vlaneseq
      %v390 = vshrl.u32 %v389, 7
      %v391 = vsub.s32 1, %v390
      %v392 = vrot.slane %v382, %v391
      %395 = vrot.lane.b32.xlu0 %v388, 1
      %v396 = vpop.permute.xlu0 %395
      %397 = vrot.lane.b32.xlu0 %v392, 1
      %v398 = vpop.permute.xlu0 %397
      %v399 = vlaneseq
      %v400 = vand.u32 %v399, 127
      %vm401 = vcmp.lt.s32.totalorder %v400, 1
      %v402 = vsel %vm401, %v396, %v398
      %v403 = vsel %vm401, %v398, %v396
      %v405 = vlaneseq
      %v406 = vshrl.u32 %v405, 7
      %v407 = vsub.s32 0, %v406
      %v408 = vrot.slane %v383, %v407
      %v409 = vlaneseq
      %v410 = vshrl.u32 %v409, 7
      %v411 = vsub.s32 1, %v410
      %v412 = vrot.slane %v383, %v411
      %415 = vrot.lane.b32.xlu0 %v408, 1
      %v416 = vpop.permute.xlu0 %415
      %417 = vrot.lane.b32.xlu0 %v412, 1
      %v418 = vpop.permute.xlu0 %417
      %v419 = vsel %vm401, %v416, %v418
      %v420 = vsel %vm401, %v418, %v416
      %v421 = vsub.f32 %v403, %v388
      %v422 = vsub.f32 %v402, %v392
      %v423 = vand.u32 2147483647, %v421
      %v424 = vand.u32 2147483647, %v422
      %vm425 = vcmp.le.f32.partialorder %v423, 0.0
      %vm426 = vcmp.le.f32.partialorder %v424, 0.0
      %v427 = vsub.f32 %v420, %v408
      %v428 = vsub.f32 %v419, %v412
      %v429 = vand.u32 2147483647, %v427
      %v430 = vand.u32 2147483647, %v428
      %vm431 = vcmp.le.f32.partialorder %v429, 3.0
      %vm432 = vcmp.le.f32.partialorder %v430, 3.0
      %vm433 = vmand %vm425, %vm431
      %vm434 = vmand %vm426, %vm432
      %v435 = vsel %vm433, 1, 0
      %v436 = vsel %vm434, 1, 0
      %v437 = vcvt.s32.f32 %v435
      %v438 = vcvt.s32.f32 %v436
      %439 = vrot.lane.b32.xlu0 %v388, 2
      %v440 = vpop.permute.xlu0 %439
      %441 = vrot.lane.b32.xlu0 %v392, 2
      %v442 = vpop.permute.xlu0 %441
      %vm443 = vcmp.lt.s32.totalorder %v400, 2
      %v444 = vsel %vm443, %v440, %v442
      %v445 = vsel %vm443, %v442, %v440
      %446 = vrot.lane.b32.xlu0 %v408, 2
      %v447 = vpop.permute.xlu0 %446
      %448 = vrot.lane.b32.xlu0 %v412, 2
      %v449 = vpop.permute.xlu0 %448
      %v450 = vsel %vm443, %v447, %v449
      %v451 = vsel %vm443, %v449, %v447
      %v452 = vsub.f32 %v445, %v388
      %v453 = vsub.f32 %v444, %v392
      %v454 = vand.u32 2147483647, %v452
      %v455 = vand.u32 2147483647, %v453
      %vm456 = vcmp.le.f32.partialorder %v454, 0.0
      %vm457 = vcmp.le.f32.partialorder %v455, 0.0
      %v458 = vsub.f32 %v451, %v408
      %v459 = vsub.f32 %v450, %v412
      %v460 = vand.u32 2147483647, %v458
      %v461 = vand.u32 2147483647, %v459
      %vm462 = vcmp.le.f32.partialorder %v460, 3.0
      %vm463 = vcmp.le.f32.partialorder %v461, 3.0
      %vm464 = vmand %vm456, %vm462
      %vm465 = vmand %vm457, %vm463
      %v466 = vsel %vm464, 1, 0
      %v467 = vsel %vm465, 1, 0
      %v468 = vcvt.s32.f32 %v466
      %v469 = vcvt.s32.f32 %v467
      %470 = vrot.lane.b32.xlu0 %v388, 3
      %v471 = vpop.permute.xlu0 %470
      %472 = vrot.lane.b32.xlu0 %v392, 3
      %v473 = vpop.permute.xlu0 %472
      %vm474 = vcmp.lt.s32.totalorder %v400, 3
      %v475 = vsel %vm474, %v471, %v473
      %v476 = vsel %vm474, %v473, %v471
      %477 = vrot.lane.b32.xlu0 %v408, 3
      %v478 = vpop.permute.xlu0 %477
      %479 = vrot.lane.b32.xlu0 %v412, 3
      %v480 = vpop.permute.xlu0 %479
      %v481 = vsel %vm474, %v478, %v480
      %v482 = vsel %vm474, %v480, %v478
      %v483 = vsub.f32 %v476, %v388
      %v484 = vsub.f32 %v475, %v392
      %v485 = vand.u32 2147483647, %v483
      %v486 = vand.u32 2147483647, %v484
      %vm487 = vcmp.le.f32.partialorder %v485, 0.0
      %vm488 = vcmp.le.f32.partialorder %v486, 0.0
      %v489 = vsub.f32 %v482, %v408
      %v490 = vsub.f32 %v481, %v412
      %v491 = vand.u32 2147483647, %v489
      %v492 = vand.u32 2147483647, %v490
      %vm493 = vcmp.le.f32.partialorder %v491, 3.0
      %vm494 = vcmp.le.f32.partialorder %v492, 3.0
      %vm495 = vmand %vm487, %vm493
      %vm496 = vmand %vm488, %vm494
      %v497 = vsel %vm495, 1, 0
      %v498 = vsel %vm496, 1, 0
      %v499 = vcvt.s32.f32 %v497
      %v500 = vcvt.s32.f32 %v498
      %501 = vrot.lane.b32.xlu0 %v388, 127
      %v502 = vpop.permute.xlu0 %501
      %503 = vrot.lane.b32.xlu0 %v392, 127
      %v504 = vpop.permute.xlu0 %503
      %vm505 = vcmp.lt.s32.totalorder %v400, 127
      %v506 = vsel %vm505, %v502, %v504
      %v507 = vsel %vm505, %v504, %v502
      %508 = vrot.lane.b32.xlu0 %v408, 127
      %v509 = vpop.permute.xlu0 %508
      %510 = vrot.lane.b32.xlu0 %v412, 127
      %v511 = vpop.permute.xlu0 %510
      %v512 = vsel %vm505, %v509, %v511
      %v513 = vsel %vm505, %v511, %v509
      %v514 = vsub.f32 %v506, %v388
      %v515 = vsub.f32 %v507, %v392
      %v516 = vand.u32 2147483647, %v514
      %v517 = vand.u32 2147483647, %v515
      %vm518 = vcmp.le.f32.partialorder %v516, 0.0
      %vm519 = vcmp.le.f32.partialorder %v517, 0.0
      %v520 = vsub.f32 %v512, %v408
      %v521 = vsub.f32 %v513, %v412
      %v522 = vand.u32 2147483647, %v520
      %v523 = vand.u32 2147483647, %v521
      %vm524 = vcmp.le.f32.partialorder %v522, 3.0
      %vm525 = vcmp.le.f32.partialorder %v523, 3.0
      %vm526 = vmand %vm518, %vm524
      %vm527 = vmand %vm519, %vm525
      %v528 = vsel %vm526, 1, 0
      %v529 = vsel %vm527, 1, 0
      %v530 = vcvt.s32.f32 %v528
      %v531 = vcvt.s32.f32 %v529
      %532 = vrot.lane.b32.xlu0 %v388, 126
      %v533 = vpop.permute.xlu0 %532
      %534 = vrot.lane.b32.xlu0 %v392, 126
      %v535 = vpop.permute.xlu0 %534
      %vm536 = vcmp.lt.s32.totalorder %v400, 126
      %v537 = vsel %vm536, %v533, %v535
      %v538 = vsel %vm536, %v535, %v533
      %539 = vrot.lane.b32.xlu0 %v408, 126
      %v540 = vpop.permute.xlu0 %539
      %541 = vrot.lane.b32.xlu0 %v412, 126
      %v542 = vpop.permute.xlu0 %541
      %v543 = vsel %vm536, %v540, %v542
      %v544 = vsel %vm536, %v542, %v540
      %v545 = vsub.f32 %v537, %v388
      %v546 = vsub.f32 %v538, %v392
      %v547 = vand.u32 2147483647, %v545
      %v548 = vand.u32 2147483647, %v546
      %vm549 = vcmp.le.f32.partialorder %v547, 0.0
      %vm550 = vcmp.le.f32.partialorder %v548, 0.0
      %v551 = vsub.f32 %v543, %v408
      %v552 = vsub.f32 %v544, %v412
      %v553 = vand.u32 2147483647, %v551
      %v554 = vand.u32 2147483647, %v552
      %vm555 = vcmp.le.f32.partialorder %v553, 3.0
      %vm556 = vcmp.le.f32.partialorder %v554, 3.0
      %vm557 = vmand %vm549, %vm555
      %vm558 = vmand %vm550, %vm556
      %v559 = vsel %vm557, 1, 0
      %v560 = vsel %vm558, 1, 0
      %v561 = vcvt.s32.f32 %v559
      %v562 = vcvt.s32.f32 %v560
      %563 = vrot.lane.b32.xlu0 %v388, 125
      %v564 = vpop.permute.xlu0 %563
      %565 = vrot.lane.b32.xlu0 %v392, 125
      %v566 = vpop.permute.xlu0 %565
      %vm567 = vcmp.lt.s32.totalorder %v400, 125
      %v568 = vsel %vm567, %v564, %v566
      %v569 = vsel %vm567, %v566, %v564
      %570 = vrot.lane.b32.xlu0 %v408, 125
      %v571 = vpop.permute.xlu0 %570
      %572 = vrot.lane.b32.xlu0 %v412, 125
      %v573 = vpop.permute.xlu0 %572
      %v574 = vsel %vm567, %v571, %v573
      %v575 = vsel %vm567, %v573, %v571
      %v576 = vsub.f32 %v568, %v388
      %v577 = vsub.f32 %v569, %v392
      %v578 = vand.u32 2147483647, %v576
      %v579 = vand.u32 2147483647, %v577
      %vm580 = vcmp.le.f32.partialorder %v578, 0.0
      %vm581 = vcmp.le.f32.partialorder %v579, 0.0
      %v582 = vsub.f32 %v574, %v408
      %v583 = vsub.f32 %v575, %v412
      %v584 = vand.u32 2147483647, %v582
      %v585 = vand.u32 2147483647, %v583
      %vm586 = vcmp.le.f32.partialorder %v584, 3.0
      %vm587 = vcmp.le.f32.partialorder %v585, 3.0
      %vm588 = vmand %vm580, %vm586
      %vm589 = vmand %vm581, %vm587
      %v590 = vsel %vm588, 1, 0
      %v591 = vsel %vm589, 1, 0
      %v592 = vcvt.s32.f32 %v590
      %v593 = vcvt.s32.f32 %v591
      %594 = vrot.lane.b32.xlu0 %v388, 16
      %v595 = vpop.permute.xlu0 %594
      %596 = vrot.lane.b32.xlu0 %v392, 16
      %v597 = vpop.permute.xlu0 %596
      %vm598 = vcmp.lt.s32.totalorder %v400, 16
      %v599 = vsel %vm598, %v595, %v597
      %v600 = vsel %vm598, %v597, %v595
      %601 = vrot.lane.b32.xlu0 %v408, 16
      %v602 = vpop.permute.xlu0 %601
      %603 = vrot.lane.b32.xlu0 %v412, 16
      %v604 = vpop.permute.xlu0 %603
      %v605 = vsel %vm598, %v602, %v604
      %v606 = vsel %vm598, %v604, %v602
      %v607 = vsub.f32 %v600, %v388
      %v608 = vsub.f32 %v599, %v392
      %v609 = vand.u32 2147483647, %v607
      %v610 = vand.u32 2147483647, %v608
      %vm611 = vcmp.le.f32.partialorder %v609, 3.0
      %vm612 = vcmp.le.f32.partialorder %v610, 3.0
      %v613 = vsub.f32 %v606, %v408
      %v614 = vsub.f32 %v605, %v412
      %v615 = vand.u32 2147483647, %v613
      %v616 = vand.u32 2147483647, %v614
      %vm617 = vcmp.le.f32.partialorder %v615, 0.0
      %vm618 = vcmp.le.f32.partialorder %v616, 0.0
      %vm619 = vmand %vm611, %vm617
      %vm620 = vmand %vm612, %vm618
      %v621 = vsel %vm619, 1, 0
      %v622 = vsel %vm620, 1, 0
      %v623 = vcvt.s32.f32 %v621
      %v624 = vcvt.s32.f32 %v622
      %625 = vrot.lane.b32.xlu0 %v388, 32
      %v626 = vpop.permute.xlu0 %625
      %627 = vrot.lane.b32.xlu0 %v392, 32
      %v628 = vpop.permute.xlu0 %627
      %vm629 = vcmp.lt.s32.totalorder %v400, 32
      %v630 = vsel %vm629, %v626, %v628
      %v631 = vsel %vm629, %v628, %v626
      %632 = vrot.lane.b32.xlu0 %v408, 32
      %v633 = vpop.permute.xlu0 %632
      %634 = vrot.lane.b32.xlu0 %v412, 32
      %v635 = vpop.permute.xlu0 %634
      %v636 = vsel %vm629, %v633, %v635
      %v637 = vsel %vm629, %v635, %v633
      %v638 = vsub.f32 %v631, %v388
      %v639 = vsub.f32 %v630, %v392
      %v640 = vand.u32 2147483647, %v638
      %v641 = vand.u32 2147483647, %v639
      %vm642 = vcmp.le.f32.partialorder %v640, 3.0
      %vm643 = vcmp.le.f32.partialorder %v641, 3.0
      %v644 = vsub.f32 %v637, %v408
      %v645 = vsub.f32 %v636, %v412
      %v646 = vand.u32 2147483647, %v644
      %v647 = vand.u32 2147483647, %v645
      %vm648 = vcmp.le.f32.partialorder %v646, 0.0
      %vm649 = vcmp.le.f32.partialorder %v647, 0.0
      %vm650 = vmand %vm642, %vm648
      %vm651 = vmand %vm643, %vm649
      %v652 = vsel %vm650, 1, 0
      %v653 = vsel %vm651, 1, 0
      %v654 = vcvt.s32.f32 %v652
      %v655 = vcvt.s32.f32 %v653
      %656 = vrot.lane.b32.xlu0 %v388, 48
      %v657 = vpop.permute.xlu0 %656
      %658 = vrot.lane.b32.xlu0 %v392, 48
      %v659 = vpop.permute.xlu0 %658
      %vm660 = vcmp.lt.s32.totalorder %v400, 48
      %v661 = vsel %vm660, %v657, %v659
      %v662 = vsel %vm660, %v659, %v657
      %663 = vrot.lane.b32.xlu0 %v408, 48
      %v664 = vpop.permute.xlu0 %663
      %665 = vrot.lane.b32.xlu0 %v412, 48
      %v666 = vpop.permute.xlu0 %665
      %v667 = vsel %vm660, %v664, %v666
      %v668 = vsel %vm660, %v666, %v664
      %v669 = vsub.f32 %v662, %v388
      %v670 = vsub.f32 %v661, %v392
      %v671 = vand.u32 2147483647, %v669
      %v672 = vand.u32 2147483647, %v670
      %vm673 = vcmp.le.f32.partialorder %v671, 3.0
      %vm674 = vcmp.le.f32.partialorder %v672, 3.0
      %v675 = vsub.f32 %v668, %v408
      %v676 = vsub.f32 %v667, %v412
      %v677 = vand.u32 2147483647, %v675
      %v678 = vand.u32 2147483647, %v676
      %vm679 = vcmp.le.f32.partialorder %v677, 0.0
      %vm680 = vcmp.le.f32.partialorder %v678, 0.0
      %vm681 = vmand %vm673, %vm679
      %vm682 = vmand %vm674, %vm680
      %v683 = vsel %vm681, 1, 0
      %v684 = vsel %vm682, 1, 0
      %v685 = vcvt.s32.f32 %v683
      %v686 = vcvt.s32.f32 %v684
      %687 = vrot.lane.b32.xlu0 %v388, 112
      %v688 = vpop.permute.xlu0 %687
      %689 = vrot.lane.b32.xlu0 %v392, 112
      %v690 = vpop.permute.xlu0 %689
      %vm691 = vcmp.lt.s32.totalorder %v400, 112
      %v692 = vsel %vm691, %v688, %v690
      %v693 = vsel %vm691, %v690, %v688
      %694 = vrot.lane.b32.xlu0 %v408, 112
      %v695 = vpop.permute.xlu0 %694
      %696 = vrot.lane.b32.xlu0 %v412, 112
      %v697 = vpop.permute.xlu0 %696
      %v698 = vsel %vm691, %v695, %v697
      %v699 = vsel %vm691, %v697, %v695
      %v700 = vsub.f32 %v692, %v388
      %v701 = vsub.f32 %v693, %v392
      %v702 = vand.u32 2147483647, %v700
      %v703 = vand.u32 2147483647, %v701
      %vm704 = vcmp.le.f32.partialorder %v702, 3.0
      %vm705 = vcmp.le.f32.partialorder %v703, 3.0
      %v706 = vsub.f32 %v698, %v408
      %v707 = vsub.f32 %v699, %v412
      %v708 = vand.u32 2147483647, %v706
      %v709 = vand.u32 2147483647, %v707
      %vm710 = vcmp.le.f32.partialorder %v708, 0.0
      %vm711 = vcmp.le.f32.partialorder %v709, 0.0
      %vm712 = vmand %vm704, %vm710
      %vm713 = vmand %vm705, %vm711
      %v714 = vsel %vm712, 1, 0
      %v715 = vsel %vm713, 1, 0
      %v716 = vcvt.s32.f32 %v714
      %v717 = vcvt.s32.f32 %v715
      %718 = vrot.lane.b32.xlu0 %v388, 96
      %v719 = vpop.permute.xlu0 %718
      %720 = vrot.lane.b32.xlu0 %v392, 96
      %v721 = vpop.permute.xlu0 %720
      %vm722 = vcmp.lt.s32.totalorder %v400, 96
      %v723 = vsel %vm722, %v719, %v721
      %v724 = vsel %vm722, %v721, %v719
      %725 = vrot.lane.b32.xlu0 %v408, 96
      %v726 = vpop.permute.xlu0 %725
      %727 = vrot.lane.b32.xlu0 %v412, 96
      %v728 = vpop.permute.xlu0 %727
      %v729 = vsel %vm722, %v726, %v728
      %v730 = vsel %vm722, %v728, %v726
      %v731 = vsub.f32 %v723, %v388
      %v732 = vsub.f32 %v724, %v392
      %v733 = vand.u32 2147483647, %v731
      %v734 = vand.u32 2147483647, %v732
      %vm735 = vcmp.le.f32.partialorder %v733, 3.0
      %vm736 = vcmp.le.f32.partialorder %v734, 3.0
      %v737 = vsub.f32 %v729, %v408
      %v738 = vsub.f32 %v730, %v412
      %v739 = vand.u32 2147483647, %v737
      %v740 = vand.u32 2147483647, %v738
      %vm741 = vcmp.le.f32.partialorder %v739, 0.0
      %vm742 = vcmp.le.f32.partialorder %v740, 0.0
      %vm743 = vmand %vm735, %vm741
      %vm744 = vmand %vm736, %vm742
      %v745 = vsel %vm743, 1, 0
      %v746 = vsel %vm744, 1, 0
      %v747 = vcvt.s32.f32 %v745
      %v748 = vcvt.s32.f32 %v746
      %749 = vrot.lane.b32.xlu0 %v388, 80
      %v750 = vpop.permute.xlu0 %749
      %751 = vrot.lane.b32.xlu0 %v392, 80
      %v752 = vpop.permute.xlu0 %751
      %vm753 = vcmp.lt.s32.totalorder %v400, 80
      %v754 = vsel %vm753, %v750, %v752
      %v755 = vsel %vm753, %v752, %v750
      %756 = vrot.lane.b32.xlu0 %v408, 80
      %v757 = vpop.permute.xlu0 %756
      %758 = vrot.lane.b32.xlu0 %v412, 80
      %v759 = vpop.permute.xlu0 %758
      %v760 = vsel %vm753, %v757, %v759
      %v761 = vsel %vm753, %v759, %v757
      %v762 = vsub.f32 %v754, %v388
      %v763 = vsub.f32 %v755, %v392
      %v764 = vand.u32 2147483647, %v762
      %v765 = vand.u32 2147483647, %v763
      %vm766 = vcmp.le.f32.partialorder %v764, 3.0
      %vm767 = vcmp.le.f32.partialorder %v765, 3.0
      %v768 = vsub.f32 %v760, %v408
      %v769 = vsub.f32 %v761, %v412
      %v770 = vand.u32 2147483647, %v768
      %v771 = vand.u32 2147483647, %v769
      %vm772 = vcmp.le.f32.partialorder %v770, 0.0
      %vm773 = vcmp.le.f32.partialorder %v771, 0.0
      %vm774 = vmand %vm766, %vm772
      %vm775 = vmand %vm767, %vm773
      %v776 = vsel %vm774, 1, 0
      %v777 = vsel %vm775, 1, 0
      %v778 = vcvt.s32.f32 %v776
      %v779 = vcvt.s32.f32 %v777
      %v780 = vld [vmem:[%s2] sm:$0xff]
      %v781 = vld [vmem:[%s2 + $0x8] sm:$0xff]
      %782 = vrot.lane.b32.xlu0 %v374, 1
      %v783 = vpop.permute.xlu0 %782
      %784 = vrot.lane.b32.xlu0 %v376, 1
      %v785 = vpop.permute.xlu0 %784
      %786 = vrot.lane.b32.xlu0 %v375, 1
      %v787 = vpop.permute.xlu0 %786
      %788 = vrot.lane.b32.xlu0 %v377, 1
      %v789 = vpop.permute.xlu0 %788
      %v790 = vsel %vm401, %v783, %v787
      %v791 = vsel %vm401, %v785, %v789
      %v792 = vsel %vm401, %v787, %v783
      %v793 = vsel %vm401, %v789, %v785
      %v794 = vlaneseq
      %v795 = vshrl.u32 %v794, 7
      %v796 = vsub.s32 0, %v795
      %v797 = vrot.slane %v437, %v796
      %v798 = vlaneseq
      %v799 = vshrl.u32 %v798, 7
      %v800 = vsub.s32 0, %v799
      %v801 = vrot.slane %v438, %v800
      %v802 = vmul.f32 %v797, %v792
      %v803 = vmul.f32 %v801, %v790
      %v804 = vmul.f32 %v797, %v793
      %v805 = vmul.f32 %v801, %v791
      %v806 = vadd.f32 %v374, %v802
      %v807 = vadd.f32 %v375, %v803
      %v808 = vadd.f32 %v376, %v804
      %v809 = vadd.f32 %v377, %v805
      %810 = vrot.lane.b32.xlu0 %v374, 2
      %v811 = vpop.permute.xlu0 %810
      %812 = vrot.lane.b32.xlu0 %v376, 2
      %v813 = vpop.permute.xlu0 %812
      %814 = vrot.lane.b32.xlu0 %v375, 2
      %v815 = vpop.permute.xlu0 %814
      %816 = vrot.lane.b32.xlu0 %v377, 2
      %v817 = vpop.permute.xlu0 %816
      %v818 = vsel %vm443, %v811, %v815
      %v819 = vsel %vm443, %v813, %v817
      %v820 = vsel %vm443, %v815, %v811
      %v821 = vsel %vm443, %v817, %v813
      %v822 = vlaneseq
      %v823 = vshrl.u32 %v822, 7
      %v824 = vsub.s32 0, %v823
      %v825 = vrot.slane %v468, %v824
      %v826 = vlaneseq
      %v827 = vshrl.u32 %v826, 7
      %v828 = vsub.s32 0, %v827
      %v829 = vrot.slane %v469, %v828
      %v830 = vmul.f32 %v825, %v820
      %v831 = vmul.f32 %v829, %v818
      %v832 = vmul.f32 %v825, %v821
      %v833 = vmul.f32 %v829, %v819
      %v834 = vadd.f32 %v806, %v830
      %v835 = vadd.f32 %v807, %v831
      %v836 = vadd.f32 %v808, %v832
      %v837 = vadd.f32 %v809, %v833
      %838 = vrot.lane.b32.xlu0 %v374, 3
      %v839 = vpop.permute.xlu0 %838
      %840 = vrot.lane.b32.xlu0 %v376, 3
      %v841 = vpop.permute.xlu0 %840
      %842 = vrot.lane.b32.xlu0 %v375, 3
      %v843 = vpop.permute.xlu0 %842
      %844 = vrot.lane.b32.xlu0 %v377, 3
      %v845 = vpop.permute.xlu0 %844
      %v846 = vsel %vm474, %v839, %v843
      %v847 = vsel %vm474, %v841, %v845
      %v848 = vsel %vm474, %v843, %v839
      %v849 = vsel %vm474, %v845, %v841
      %v850 = vlaneseq
      %v851 = vshrl.u32 %v850, 7
      %v852 = vsub.s32 0, %v851
      %v853 = vrot.slane %v499, %v852
      %v854 = vlaneseq
      %v855 = vshrl.u32 %v854, 7
      %v856 = vsub.s32 0, %v855
      %v857 = vrot.slane %v500, %v856
      %v858 = vmul.f32 %v853, %v848
      %v859 = vmul.f32 %v857, %v846
      %v860 = vmul.f32 %v853, %v849
      %v861 = vmul.f32 %v857, %v847
      %v862 = vadd.f32 %v834, %v858
      %v863 = vadd.f32 %v835, %v859
      %v864 = vadd.f32 %v836, %v860
      %v865 = vadd.f32 %v837, %v861
      %866 = vrot.lane.b32.xlu0 %v374, 127
      %v867 = vpop.permute.xlu0 %866
      %868 = vrot.lane.b32.xlu0 %v376, 127
      %v869 = vpop.permute.xlu0 %868
      %870 = vrot.lane.b32.xlu0 %v375, 127
      %v871 = vpop.permute.xlu0 %870
      %872 = vrot.lane.b32.xlu0 %v377, 127
      %v873 = vpop.permute.xlu0 %872
      %v874 = vsel %vm505, %v867, %v871
      %v875 = vsel %vm505, %v869, %v873
      %v876 = vsel %vm505, %v871, %v867
      %v877 = vsel %vm505, %v873, %v869
      %v878 = vlaneseq
      %v879 = vshrl.u32 %v878, 7
      %v880 = vsub.s32 0, %v879
      %v881 = vrot.slane %v530, %v880
      %v882 = vlaneseq
      %v883 = vshrl.u32 %v882, 7
      %v884 = vsub.s32 0, %v883
      %v885 = vrot.slane %v531, %v884
      %v886 = vmul.f32 %v881, %v874
      %v887 = vmul.f32 %v885, %v876
      %v888 = vmul.f32 %v881, %v875
      %v889 = vmul.f32 %v885, %v877
      %v890 = vadd.f32 %v862, %v886
      %v891 = vadd.f32 %v863, %v887
      %v892 = vadd.f32 %v864, %v888
      %v893 = vadd.f32 %v865, %v889
      %894 = vrot.lane.b32.xlu0 %v374, 126
      %v895 = vpop.permute.xlu0 %894
      %896 = vrot.lane.b32.xlu0 %v376, 126
      %v897 = vpop.permute.xlu0 %896
      %898 = vrot.lane.b32.xlu0 %v375, 126
      %v899 = vpop.permute.xlu0 %898
      %900 = vrot.lane.b32.xlu0 %v377, 126
      %v901 = vpop.permute.xlu0 %900
      %v902 = vsel %vm536, %v895, %v899
      %v903 = vsel %vm536, %v897, %v901
      %v904 = vsel %vm536, %v899, %v895
      %v905 = vsel %vm536, %v901, %v897
      %v906 = vlaneseq
      %v907 = vshrl.u32 %v906, 7
      %v908 = vsub.s32 0, %v907
      %v909 = vrot.slane %v561, %v908
      %v910 = vlaneseq
      %v911 = vshrl.u32 %v910, 7
      %v912 = vsub.s32 0, %v911
      %v913 = vrot.slane %v562, %v912
      %v914 = vmul.f32 %v909, %v902
      %v915 = vmul.f32 %v913, %v904
      %v916 = vmul.f32 %v909, %v903
      %v917 = vmul.f32 %v913, %v905
      %v918 = vadd.f32 %v890, %v914
      %v919 = vadd.f32 %v891, %v915
      %v920 = vadd.f32 %v892, %v916
      %v921 = vadd.f32 %v893, %v917
      %922 = vrot.lane.b32.xlu0 %v374, 125
      %v923 = vpop.permute.xlu0 %922
      %924 = vrot.lane.b32.xlu0 %v376, 125
      %v925 = vpop.permute.xlu0 %924
      %926 = vrot.lane.b32.xlu0 %v375, 125
      %v927 = vpop.permute.xlu0 %926
      %928 = vrot.lane.b32.xlu0 %v377, 125
      %v929 = vpop.permute.xlu0 %928
      %v930 = vsel %vm567, %v923, %v927
      %v931 = vsel %vm567, %v925, %v929
      %v932 = vsel %vm567, %v927, %v923
      %v933 = vsel %vm567, %v929, %v925
      %v934 = vlaneseq
      %v935 = vshrl.u32 %v934, 7
      %v936 = vsub.s32 0, %v935
      %v937 = vrot.slane %v592, %v936
      %v938 = vlaneseq
      %v939 = vshrl.u32 %v938, 7
      %v940 = vsub.s32 0, %v939
      %v941 = vrot.slane %v593, %v940
      %v942 = vmul.f32 %v937, %v930
      %v943 = vmul.f32 %v941, %v932
      %v944 = vmul.f32 %v937, %v931
      %v945 = vmul.f32 %v941, %v933
      %v946 = vadd.f32 %v918, %v942
      %v947 = vadd.f32 %v919, %v943
      %v948 = vadd.f32 %v920, %v944
      %v949 = vadd.f32 %v921, %v945
      %950 = vrot.lane.b32.xlu0 %v946, 16
      %v951 = vpop.permute.xlu0 %950
      %952 = vrot.lane.b32.xlu0 %v948, 16
      %v953 = vpop.permute.xlu0 %952
      %954 = vrot.lane.b32.xlu0 %v947, 16
      %v955 = vpop.permute.xlu0 %954
      %956 = vrot.lane.b32.xlu0 %v949, 16
      %v957 = vpop.permute.xlu0 %956
      %v958 = vsel %vm598, %v951, %v955
      %v959 = vsel %vm598, %v953, %v957
      %v960 = vsel %vm598, %v955, %v951
      %v961 = vsel %vm598, %v957, %v953
      %v962 = vlaneseq
      %v963 = vshrl.u32 %v962, 7
      %v964 = vsub.s32 0, %v963
      %v965 = vrot.slane %v623, %v964
      %v966 = vlaneseq
      %v967 = vshrl.u32 %v966, 7
      %v968 = vsub.s32 0, %v967
      %v969 = vrot.slane %v624, %v968
      %v970 = vmul.f32 %v965, %v960
      %v971 = vmul.f32 %v969, %v958
      %v972 = vmul.f32 %v965, %v961
      %v973 = vmul.f32 %v969, %v959
      %v974 = vadd.f32 %v946, %v970
      %v975 = vadd.f32 %v947, %v971
      %v976 = vadd.f32 %v948, %v972
      %v977 = vadd.f32 %v949, %v973
      %978 = vrot.lane.b32.xlu0 %v946, 32
      %v979 = vpop.permute.xlu0 %978
      %980 = vrot.lane.b32.xlu0 %v948, 32
      %v981 = vpop.permute.xlu0 %980
      %982 = vrot.lane.b32.xlu0 %v947, 32
      %v983 = vpop.permute.xlu0 %982
      %984 = vrot.lane.b32.xlu0 %v949, 32
      %v985 = vpop.permute.xlu0 %984
      %v986 = vsel %vm629, %v979, %v983
      %v987 = vsel %vm629, %v981, %v985
      %v988 = vsel %vm629, %v983, %v979
      %v989 = vsel %vm629, %v985, %v981
      %v990 = vlaneseq
      %v991 = vshrl.u32 %v990, 7
      %v992 = vsub.s32 0, %v991
      %v993 = vrot.slane %v654, %v992
      %v994 = vlaneseq
      %v995 = vshrl.u32 %v994, 7
      %v996 = vsub.s32 0, %v995
      %v997 = vrot.slane %v655, %v996
      %v998 = vmul.f32 %v993, %v988
      %v999 = vmul.f32 %v997, %v986
      %v1000 = vmul.f32 %v993, %v989
      %v1001 = vmul.f32 %v997, %v987
      %v1002 = vadd.f32 %v974, %v998
      %v1003 = vadd.f32 %v975, %v999
      %v1004 = vadd.f32 %v976, %v1000
      %v1005 = vadd.f32 %v977, %v1001
      %1006 = vrot.lane.b32.xlu0 %v946, 48
      %v1007 = vpop.permute.xlu0 %1006
      %1008 = vrot.lane.b32.xlu0 %v948, 48
      %v1009 = vpop.permute.xlu0 %1008
      %1010 = vrot.lane.b32.xlu0 %v947, 48
      %v1011 = vpop.permute.xlu0 %1010
      %1012 = vrot.lane.b32.xlu0 %v949, 48
      %v1013 = vpop.permute.xlu0 %1012
      %v1014 = vsel %vm660, %v1007, %v1011
      %v1015 = vsel %vm660, %v1009, %v1013
      %v1016 = vsel %vm660, %v1011, %v1007
      %v1017 = vsel %vm660, %v1013, %v1009
      %v1018 = vlaneseq
      %v1019 = vshrl.u32 %v1018, 7
      %v1020 = vsub.s32 0, %v1019
      %v1021 = vrot.slane %v685, %v1020
      %v1022 = vlaneseq
      %v1023 = vshrl.u32 %v1022, 7
      %v1024 = vsub.s32 0, %v1023
      %v1025 = vrot.slane %v686, %v1024
      %v1026 = vmul.f32 %v1021, %v1016
      %v1027 = vmul.f32 %v1025, %v1014
      %v1028 = vmul.f32 %v1021, %v1017
      %v1029 = vmul.f32 %v1025, %v1015
      %v1030 = vadd.f32 %v1002, %v1026
      %v1031 = vadd.f32 %v1003, %v1027
      %v1032 = vadd.f32 %v1004, %v1028
      %v1033 = vadd.f32 %v1005, %v1029
      %1034 = vrot.lane.b32.xlu0 %v946, 112
      %v1035 = vpop.permute.xlu0 %1034
      %1036 = vrot.lane.b32.xlu0 %v948, 112
      %v1037 = vpop.permute.xlu0 %1036
      %1038 = vrot.lane.b32.xlu0 %v947, 112
      %v1039 = vpop.permute.xlu0 %1038
      %1040 = vrot.lane.b32.xlu0 %v949, 112
      %v1041 = vpop.permute.xlu0 %1040
      %v1042 = vsel %vm691, %v1035, %v1039
      %v1043 = vsel %vm691, %v1037, %v1041
      %v1044 = vsel %vm691, %v1039, %v1035
      %v1045 = vsel %vm691, %v1041, %v1037
      %v1046 = vlaneseq
      %v1047 = vshrl.u32 %v1046, 7
      %v1048 = vsub.s32 0, %v1047
      %v1049 = vrot.slane %v716, %v1048
      %v1050 = vlaneseq
      %v1051 = vshrl.u32 %v1050, 7
      %v1052 = vsub.s32 0, %v1051
      %v1053 = vrot.slane %v717, %v1052
      %v1054 = vmul.f32 %v1049, %v1042
      %v1055 = vmul.f32 %v1053, %v1044
      %v1056 = vmul.f32 %v1049, %v1043
      %v1057 = vmul.f32 %v1053, %v1045
      %v1058 = vadd.f32 %v1030, %v1054
      %v1059 = vadd.f32 %v1031, %v1055
      %v1060 = vadd.f32 %v1032, %v1056
      %v1061 = vadd.f32 %v1033, %v1057
      %1062 = vrot.lane.b32.xlu0 %v946, 96
      %v1063 = vpop.permute.xlu0 %1062
      %1064 = vrot.lane.b32.xlu0 %v948, 96
      %v1065 = vpop.permute.xlu0 %1064
      %1066 = vrot.lane.b32.xlu0 %v947, 96
      %v1067 = vpop.permute.xlu0 %1066
      %1068 = vrot.lane.b32.xlu0 %v949, 96
      %v1069 = vpop.permute.xlu0 %1068
      %v1070 = vsel %vm722, %v1063, %v1067
      %v1071 = vsel %vm722, %v1065, %v1069
      %v1072 = vsel %vm722, %v1067, %v1063
      %v1073 = vsel %vm722, %v1069, %v1065
      %v1074 = vlaneseq
      %v1075 = vshrl.u32 %v1074, 7
      %v1076 = vsub.s32 0, %v1075
      %v1077 = vrot.slane %v747, %v1076
      %v1078 = vlaneseq
      %v1079 = vshrl.u32 %v1078, 7
      %v1080 = vsub.s32 0, %v1079
      %v1081 = vrot.slane %v748, %v1080
      %v1082 = vmul.f32 %v1077, %v1070
      %v1083 = vmul.f32 %v1081, %v1072
      %v1084 = vmul.f32 %v1077, %v1071
      %v1085 = vmul.f32 %v1081, %v1073
      %v1086 = vadd.f32 %v1058, %v1082
      %v1087 = vadd.f32 %v1059, %v1083
      %v1088 = vadd.f32 %v1060, %v1084
      %v1089 = vadd.f32 %v1061, %v1085
      %1090 = vrot.lane.b32.xlu0 %v946, 80
      %v1091 = vpop.permute.xlu0 %1090
      %1092 = vrot.lane.b32.xlu0 %v948, 80
      %v1093 = vpop.permute.xlu0 %1092
      %1094 = vrot.lane.b32.xlu0 %v947, 80
      %v1095 = vpop.permute.xlu0 %1094
      %1096 = vrot.lane.b32.xlu0 %v949, 80
      %v1097 = vpop.permute.xlu0 %1096
      %v1098 = vsel %vm753, %v1091, %v1095
      %v1099 = vsel %vm753, %v1093, %v1097
      %v1100 = vsel %vm753, %v1095, %v1091
      %v1101 = vsel %vm753, %v1097, %v1093
      %v1102 = vlaneseq
      %v1103 = vshrl.u32 %v1102, 7
      %v1104 = vsub.s32 0, %v1103
      %v1105 = vrot.slane %v778, %v1104
      %v1106 = vlaneseq
      %v1107 = vshrl.u32 %v1106, 7
      %v1108 = vsub.s32 0, %v1107
      %v1109 = vrot.slane %v779, %v1108
      %v1110 = vmul.f32 %v1105, %v1098
      %v1111 = vmul.f32 %v1109, %v1100
      %v1112 = vmul.f32 %v1105, %v1099
      %v1113 = vmul.f32 %v1109, %v1101
      %v1114 = vadd.f32 %v1086, %v1110
      %v1115 = vadd.f32 %v1087, %v1111
      %v1116 = vadd.f32 %v1088, %v1112
      %v1117 = vadd.f32 %v1089, %v1113
      %vm1118 = vcmask 130048
      %v1120 = vsel %vm1118, %v780, 0
      %v1123 = vsel %vm1118, %v781, 0
      %1125 = vmatprep.subr.mxu0 0.0
      %1126 = vmatpush1.msra.mxu0 0.0
      %1127 = vmatprep.subr.mxu0 0.0
      %1128 = vmatpush1.msra.mxu0 0.0
      %1129 = vmatprep.subr.mxu0 0.0
      %1130 = vmatpush1.msra.mxu0 0.0
      %1131 = vmatprep.subr.mxu0 0.0
      %1132 = vmatpush1.msra.mxu0 0.0
      %1133 = vmatprep.subr.mxu0 0.0
      %1134 = vmatpush1.msra.mxu0 0.0
      %1135 = vmatprep.subr.mxu0 0.0
      %1136 = vmatpush1.msra.mxu0 0.0
      %1137 = vmatprep.subr.mxu0 0.0
      %1138 = vmatpush1.msra.mxu0 0.0
      %1139 = vmatprep.subr.mxu0 0.0
      %1140 = vmatpush1.msra.mxu0 0.0
      %1141 = vmatprep.subr.mxu0 0.0
      %1142 = vmatpush1.msra.mxu0 0.0
      %1143 = vmatprep.subr.mxu0 0.0
      %1144 = vmatpush1.msra.mxu0 0.0
      %1145 = vmatprep.subr.mxu0 0.0
      %1146 = vmatpush1.msra.mxu0 0.0
      %1147 = vmatprep.subr.mxu0 0.0
      %1148 = vmatpush1.msra.mxu0 0.0
      %1149 = vmatprep.subr.mxu0 0.0
      %1150 = vmatpush1.msra.mxu0 0.0
      %1151 = vmatprep.subr.mxu0 0.0
      %1152 = vmatpush1.msra.mxu0 0.0
      %1153 = vmatprep.subr.mxu0 %v1117
      %1154 = vmatpush1.msra.mxu0 %v1116
      %1155 = vmatprep.subr.mxu0 %v1115
      %1156 = vmatpush1.msra.mxu0 %v1114
      %1157 = vmatprep.subr.mxu0 0.0
      %1158 = vmatpush2.msra.mxu0 0.0
      %1159 = vmatprep.subr.mxu0 0.0
      %1160 = vmatpush2.msra.mxu0 0.0
      %1161 = vmatprep.subr.mxu0 0.0
      %1162 = vmatpush2.msra.mxu0 0.0
      %1163 = vmatprep.subr.mxu0 0.0
      %1164 = vmatpush2.msra.mxu0 0.0
      %1165 = vmatprep.subr.mxu0 0.0
      %1166 = vmatpush2.msra.mxu0 0.0
      %1167 = vmatprep.subr.mxu0 0.0
      %1168 = vmatpush2.msra.mxu0 0.0
      %1169 = vmatprep.subr.mxu0 0.0
      %1170 = vmatpush2.msra.mxu0 0.0
      %1171 = vmatprep.subr.mxu0 0.0
      %1172 = vmatpush2.msra.mxu0 0.0
      %1173 = vmatprep.subr.mxu0 0.0
      %1174 = vmatpush2.msra.mxu0 0.0
      %1175 = vmatprep.subr.mxu0 0.0
      %1176 = vmatpush2.msra.mxu0 0.0
      %1177 = vmatprep.subr.mxu0 0.0
      %1178 = vmatpush2.msra.mxu0 0.0
      %1179 = vmatprep.subr.mxu0 0.0
      %1180 = vmatpush2.msra.mxu0 0.0
      %1181 = vmatprep.subr.mxu0 0.0
      %1182 = vmatpush2.msra.mxu0 0.0
      %1183 = vmatprep.subr.mxu0 0.0
      %1184 = vmatpush2.msra.mxu0 0.0
      %1185 = vmatprep.subr.mxu0 0.0
      %1186 = vmatpush2.msra.mxu0 0.0
      %1187 = vmatprep.subr.mxu0 0.0
      %1188 = vmatpush2.msra.mxu0 0.0
      %1189 = vmatprep.mubr.f32.mxu0 0.0
      %1190 = vmatmul.mubr.f32.gmra.mxu0 %v1120
      %v1191 = vpop.f32.mrf.mxu0
      %v1192 = vadd.f32 0.0, %v1191
      %v1193 = vpop.f32.mrf.mxu0
      %v1194 = vadd.f32 0.0, %v1193
      %1195 = vmatprep.mubr.f32.mxu0 0.0
      %1196 = vmatmul.mubr.f32.gmra.mxu0 %v1123
      %v1197 = vpop.f32.mrf.mxu0
      %v1198 = vadd.f32 0.0, %v1197
      %v1199 = vpop.f32.mrf.mxu0
      %v1200 = vadd.f32 0.0, %v1199
      %1201 = vdwg.mxu0
      %1202 = vrot.lane.b32.xlu0 %v378, 1
      %v1203 = vpop.permute.xlu0 %1202
      %1204 = vrot.lane.b32.xlu0 %v380, 1
      %v1205 = vpop.permute.xlu0 %1204
      %1206 = vrot.lane.b32.xlu0 %v379, 1
      %v1207 = vpop.permute.xlu0 %1206
      %1208 = vrot.lane.b32.xlu0 %v381, 1
      %v1209 = vpop.permute.xlu0 %1208
      %v1210 = vsel %vm401, %v1203, %v1207
      %v1211 = vsel %vm401, %v1205, %v1209
      %v1212 = vsel %vm401, %v1207, %v1203
      %v1213 = vsel %vm401, %v1209, %v1205
      %v1214 = vmul.f32 %v797, %v1212
      %v1215 = vmul.f32 %v801, %v1210
      %v1216 = vmul.f32 %v797, %v1213
      %v1217 = vmul.f32 %v801, %v1211
      %v1218 = vadd.f32 %v378, %v1214
      %v1219 = vadd.f32 %v379, %v1215
      %v1220 = vadd.f32 %v380, %v1216
      %v1221 = vadd.f32 %v381, %v1217
      %1222 = vrot.lane.b32.xlu0 %v378, 2
      %v1223 = vpop.permute.xlu0 %1222
      %1224 = vrot.lane.b32.xlu0 %v380, 2
      %v1225 = vpop.permute.xlu0 %1224
      %1226 = vrot.lane.b32.xlu0 %v379, 2
      %v1227 = vpop.permute.xlu0 %1226
      %1228 = vrot.lane.b32.xlu0 %v381, 2
      %v1229 = vpop.permute.xlu0 %1228
      %v1230 = vsel %vm443, %v1223, %v1227
      %v1231 = vsel %vm443, %v1225, %v1229
      %v1232 = vsel %vm443, %v1227, %v1223
      %v1233 = vsel %vm443, %v1229, %v1225
      %v1234 = vmul.f32 %v825, %v1232
      %v1235 = vmul.f32 %v829, %v1230
      %v1236 = vmul.f32 %v825, %v1233
      %v1237 = vmul.f32 %v829, %v1231
      %v1238 = vadd.f32 %v1218, %v1234
      %v1239 = vadd.f32 %v1219, %v1235
      %v1240 = vadd.f32 %v1220, %v1236
      %v1241 = vadd.f32 %v1221, %v1237
      %1242 = vrot.lane.b32.xlu0 %v378, 3
      %v1243 = vpop.permute.xlu0 %1242
      %1244 = vrot.lane.b32.xlu0 %v380, 3
      %v1245 = vpop.permute.xlu0 %1244
      %1246 = vrot.lane.b32.xlu0 %v379, 3
      %v1247 = vpop.permute.xlu0 %1246
      %1248 = vrot.lane.b32.xlu0 %v381, 3
      %v1249 = vpop.permute.xlu0 %1248
      %v1250 = vsel %vm474, %v1243, %v1247
      %v1251 = vsel %vm474, %v1245, %v1249
      %v1252 = vsel %vm474, %v1247, %v1243
      %v1253 = vsel %vm474, %v1249, %v1245
      %v1254 = vmul.f32 %v853, %v1252
      %v1255 = vmul.f32 %v857, %v1250
      %v1256 = vmul.f32 %v853, %v1253
      %v1257 = vmul.f32 %v857, %v1251
      %v1258 = vadd.f32 %v1238, %v1254
      %v1259 = vadd.f32 %v1239, %v1255
      %v1260 = vadd.f32 %v1240, %v1256
      %v1261 = vadd.f32 %v1241, %v1257
      %1262 = vrot.lane.b32.xlu0 %v378, 127
      %v1263 = vpop.permute.xlu0 %1262
      %1264 = vrot.lane.b32.xlu0 %v380, 127
      %v1265 = vpop.permute.xlu0 %1264
      %1266 = vrot.lane.b32.xlu0 %v379, 127
      %v1267 = vpop.permute.xlu0 %1266
      %1268 = vrot.lane.b32.xlu0 %v381, 127
      %v1269 = vpop.permute.xlu0 %1268
      %v1270 = vsel %vm505, %v1263, %v1267
      %v1271 = vsel %vm505, %v1265, %v1269
      %v1272 = vsel %vm505, %v1267, %v1263
      %v1273 = vsel %vm505, %v1269, %v1265
      %v1274 = vmul.f32 %v881, %v1270
      %v1275 = vmul.f32 %v885, %v1272
      %v1276 = vmul.f32 %v881, %v1271
      %v1277 = vmul.f32 %v885, %v1273
      %v1278 = vadd.f32 %v1258, %v1274
      %v1279 = vadd.f32 %v1259, %v1275
      %v1280 = vadd.f32 %v1260, %v1276
      %v1281 = vadd.f32 %v1261, %v1277
      %1282 = vrot.lane.b32.xlu0 %v378, 126
      %v1283 = vpop.permute.xlu0 %1282
      %1284 = vrot.lane.b32.xlu0 %v380, 126
      %v1285 = vpop.permute.xlu0 %1284
      %1286 = vrot.lane.b32.xlu0 %v379, 126
      %v1287 = vpop.permute.xlu0 %1286
      %1288 = vrot.lane.b32.xlu0 %v381, 126
      %v1289 = vpop.permute.xlu0 %1288
      %v1290 = vsel %vm536, %v1283, %v1287
      %v1291 = vsel %vm536, %v1285, %v1289
      %v1292 = vsel %vm536, %v1287, %v1283
      %v1293 = vsel %vm536, %v1289, %v1285
      %v1294 = vmul.f32 %v909, %v1290
      %v1295 = vmul.f32 %v913, %v1292
      %v1296 = vmul.f32 %v909, %v1291
      %v1297 = vmul.f32 %v913, %v1293
      %v1298 = vadd.f32 %v1278, %v1294
      %v1299 = vadd.f32 %v1279, %v1295
      %v1300 = vadd.f32 %v1280, %v1296
      %v1301 = vadd.f32 %v1281, %v1297
      %1302 = vrot.lane.b32.xlu0 %v378, 125
      %v1303 = vpop.permute.xlu0 %1302
      %1304 = vrot.lane.b32.xlu0 %v380, 125
      %v1305 = vpop.permute.xlu0 %1304
      %1306 = vrot.lane.b32.xlu0 %v379, 125
      %v1307 = vpop.permute.xlu0 %1306
      %1308 = vrot.lane.b32.xlu0 %v381, 125
      %v1309 = vpop.permute.xlu0 %1308
      %v1310 = vsel %vm567, %v1303, %v1307
      %v1311 = vsel %vm567, %v1305, %v1309
      %v1312 = vsel %vm567, %v1307, %v1303
      %v1313 = vsel %vm567, %v1309, %v1305
      %v1314 = vmul.f32 %v937, %v1310
      %v1315 = vmul.f32 %v941, %v1312
      %v1316 = vmul.f32 %v937, %v1311
      %v1317 = vmul.f32 %v941, %v1313
      %v1318 = vadd.f32 %v1298, %v1314
      %v1319 = vadd.f32 %v1299, %v1315
      %v1320 = vadd.f32 %v1300, %v1316
      %v1321 = vadd.f32 %v1301, %v1317
      %1322 = vrot.lane.b32.xlu0 %v1318, 16
      %v1323 = vpop.permute.xlu0 %1322
      %1324 = vrot.lane.b32.xlu0 %v1320, 16
      %v1325 = vpop.permute.xlu0 %1324
      %1326 = vrot.lane.b32.xlu0 %v1319, 16
      %v1327 = vpop.permute.xlu0 %1326
      %1328 = vrot.lane.b32.xlu0 %v1321, 16
      %v1329 = vpop.permute.xlu0 %1328
      %v1330 = vsel %vm598, %v1323, %v1327
      %v1331 = vsel %vm598, %v1325, %v1329
      %v1332 = vsel %vm598, %v1327, %v1323
      %v1333 = vsel %vm598, %v1329, %v1325
      %v1334 = vmul.f32 %v965, %v1332
      %v1335 = vmul.f32 %v969, %v1330
      %v1336 = vmul.f32 %v965, %v1333
      %v1337 = vmul.f32 %v969, %v1331
      %v1338 = vadd.f32 %v1318, %v1334
      %v1339 = vadd.f32 %v1319, %v1335
      %v1340 = vadd.f32 %v1320, %v1336
      %v1341 = vadd.f32 %v1321, %v1337
      %1342 = vrot.lane.b32.xlu0 %v1318, 32
      %v1343 = vpop.permute.xlu0 %1342
      %1344 = vrot.lane.b32.xlu0 %v1320, 32
      %v1345 = vpop.permute.xlu0 %1344
      %1346 = vrot.lane.b32.xlu0 %v1319, 32
      %v1347 = vpop.permute.xlu0 %1346
      %1348 = vrot.lane.b32.xlu0 %v1321, 32
      %v1349 = vpop.permute.xlu0 %1348
      %v1350 = vsel %vm629, %v1343, %v1347
      %v1351 = vsel %vm629, %v1345, %v1349
      %v1352 = vsel %vm629, %v1347, %v1343
      %v1353 = vsel %vm629, %v1349, %v1345
      %v1354 = vmul.f32 %v993, %v1352
      %v1355 = vmul.f32 %v997, %v1350
      %v1356 = vmul.f32 %v993, %v1353
      %v1357 = vmul.f32 %v997, %v1351
      %v1358 = vadd.f32 %v1338, %v1354
      %v1359 = vadd.f32 %v1339, %v1355
      %v1360 = vadd.f32 %v1340, %v1356
      %v1361 = vadd.f32 %v1341, %v1357
      %1362 = vrot.lane.b32.xlu0 %v1318, 48
      %v1363 = vpop.permute.xlu0 %1362
      %1364 = vrot.lane.b32.xlu0 %v1320, 48
      %v1365 = vpop.permute.xlu0 %1364
      %1366 = vrot.lane.b32.xlu0 %v1319, 48
      %v1367 = vpop.permute.xlu0 %1366
      %1368 = vrot.lane.b32.xlu0 %v1321, 48
      %v1369 = vpop.permute.xlu0 %1368
      %v1370 = vsel %vm660, %v1363, %v1367
      %v1371 = vsel %vm660, %v1365, %v1369
      %v1372 = vsel %vm660, %v1367, %v1363
      %v1373 = vsel %vm660, %v1369, %v1365
      %v1374 = vmul.f32 %v1021, %v1372
      %v1375 = vmul.f32 %v1025, %v1370
      %v1376 = vmul.f32 %v1021, %v1373
      %v1377 = vmul.f32 %v1025, %v1371
      %v1378 = vadd.f32 %v1358, %v1374
      %v1379 = vadd.f32 %v1359, %v1375
      %v1380 = vadd.f32 %v1360, %v1376
      %v1381 = vadd.f32 %v1361, %v1377
      %1382 = vrot.lane.b32.xlu0 %v1318, 112
      %v1383 = vpop.permute.xlu0 %1382
      %1384 = vrot.lane.b32.xlu0 %v1320, 112
      %v1385 = vpop.permute.xlu0 %1384
      %1386 = vrot.lane.b32.xlu0 %v1319, 112
      %v1387 = vpop.permute.xlu0 %1386
      %1388 = vrot.lane.b32.xlu0 %v1321, 112
      %v1389 = vpop.permute.xlu0 %1388
      %v1390 = vsel %vm691, %v1383, %v1387
      %v1391 = vsel %vm691, %v1385, %v1389
      %v1392 = vsel %vm691, %v1387, %v1383
      %v1393 = vsel %vm691, %v1389, %v1385
      %v1394 = vmul.f32 %v1049, %v1390
      %v1395 = vmul.f32 %v1053, %v1392
      %v1396 = vmul.f32 %v1049, %v1391
      %v1397 = vmul.f32 %v1053, %v1393
      %v1398 = vadd.f32 %v1378, %v1394
      %v1399 = vadd.f32 %v1379, %v1395
      %v1400 = vadd.f32 %v1380, %v1396
      %v1401 = vadd.f32 %v1381, %v1397
      %1402 = vrot.lane.b32.xlu0 %v1318, 96
      %v1403 = vpop.permute.xlu0 %1402
      %1404 = vrot.lane.b32.xlu0 %v1320, 96
      %v1405 = vpop.permute.xlu0 %1404
      %1406 = vrot.lane.b32.xlu0 %v1319, 96
      %v1407 = vpop.permute.xlu0 %1406
      %1408 = vrot.lane.b32.xlu0 %v1321, 96
      %v1409 = vpop.permute.xlu0 %1408
      %v1410 = vsel %vm722, %v1403, %v1407
      %v1411 = vsel %vm722, %v1405, %v1409
      %v1412 = vsel %vm722, %v1407, %v1403
      %v1413 = vsel %vm722, %v1409, %v1405
      %v1414 = vmul.f32 %v1077, %v1410
      %v1415 = vmul.f32 %v1081, %v1412
      %v1416 = vmul.f32 %v1077, %v1411
      %v1417 = vmul.f32 %v1081, %v1413
      %v1418 = vadd.f32 %v1398, %v1414
      %v1419 = vadd.f32 %v1399, %v1415
      %v1420 = vadd.f32 %v1400, %v1416
      %v1421 = vadd.f32 %v1401, %v1417
      %1422 = vrot.lane.b32.xlu0 %v1318, 80
      %v1423 = vpop.permute.xlu0 %1422
      %1424 = vrot.lane.b32.xlu0 %v1320, 80
      %v1425 = vpop.permute.xlu0 %1424
      %1426 = vrot.lane.b32.xlu0 %v1319, 80
      %v1427 = vpop.permute.xlu0 %1426
      %1428 = vrot.lane.b32.xlu0 %v1321, 80
      %v1429 = vpop.permute.xlu0 %1428
      %v1430 = vsel %vm753, %v1423, %v1427
      %v1431 = vsel %vm753, %v1425, %v1429
      %v1432 = vsel %vm753, %v1427, %v1423
      %v1433 = vsel %vm753, %v1429, %v1425
      %v1434 = vmul.f32 %v1105, %v1430
      %v1435 = vmul.f32 %v1109, %v1432
      %v1436 = vmul.f32 %v1105, %v1431
      %v1437 = vmul.f32 %v1109, %v1433
      %v1438 = vadd.f32 %v1418, %v1434
      %v1439 = vadd.f32 %v1419, %v1435
      %v1440 = vadd.f32 %v1420, %v1436
      %v1441 = vadd.f32 %v1421, %v1437
      %1442 = vmatprep.subr.mxu0 0.0
      %1443 = vmatpush1.msra.mxu0 0.0
      %1444 = vmatprep.subr.mxu0 0.0
      %1445 = vmatpush1.msra.mxu0 0.0
      %1446 = vmatprep.subr.mxu0 0.0
      %1447 = vmatpush1.msra.mxu0 0.0
      %1448 = vmatprep.subr.mxu0 0.0
      %1449 = vmatpush1.msra.mxu0 0.0
      %1450 = vmatprep.subr.mxu0 0.0
      %1451 = vmatpush1.msra.mxu0 0.0
      %1452 = vmatprep.subr.mxu0 0.0
      %1453 = vmatpush1.msra.mxu0 0.0
      %1454 = vmatprep.subr.mxu0 0.0
      %1455 = vmatpush1.msra.mxu0 0.0
      %1456 = vmatprep.subr.mxu0 0.0
      %1457 = vmatpush1.msra.mxu0 0.0
      %1458 = vmatprep.subr.mxu0 0.0
      %1459 = vmatpush1.msra.mxu0 0.0
      %1460 = vmatprep.subr.mxu0 0.0
      %1461 = vmatpush1.msra.mxu0 0.0
      %1462 = vmatprep.subr.mxu0 0.0
      %1463 = vmatpush1.msra.mxu0 0.0
      %1464 = vmatprep.subr.mxu0 0.0
      %1465 = vmatpush1.msra.mxu0 0.0
      %1466 = vmatprep.subr.mxu0 0.0
      %1467 = vmatpush1.msra.mxu0 0.0
      %1468 = vmatprep.subr.mxu0 0.0
      %1469 = vmatpush1.msra.mxu0 0.0
      %1470 = vmatprep.subr.mxu0 %v1441
      %1471 = vmatpush1.msra.mxu0 %v1440
      %1472 = vmatprep.subr.mxu0 %v1439
      %1473 = vmatpush1.msra.mxu0 %v1438
      %1474 = vmatprep.subr.mxu0 0.0
      %1475 = vmatpush2.msra.mxu0 0.0
      %1476 = vmatprep.subr.mxu0 0.0
      %1477 = vmatpush2.msra.mxu0 0.0
      %1478 = vmatprep.subr.mxu0 0.0
      %1479 = vmatpush2.msra.mxu0 0.0
      %1480 = vmatprep.subr.mxu0 0.0
      %1481 = vmatpush2.msra.mxu0 0.0
      %1482 = vmatprep.subr.mxu0 0.0
      %1483 = vmatpush2.msra.mxu0 0.0
      %1484 = vmatprep.subr.mxu0 0.0
      %1485 = vmatpush2.msra.mxu0 0.0
      %1486 = vmatprep.subr.mxu0 0.0
      %1487 = vmatpush2.msra.mxu0 0.0
      %1488 = vmatprep.subr.mxu0 0.0
      %1489 = vmatpush2.msra.mxu0 0.0
      %1490 = vmatprep.subr.mxu0 0.0
      %1491 = vmatpush2.msra.mxu0 0.0
      %1492 = vmatprep.subr.mxu0 0.0
      %1493 = vmatpush2.msra.mxu0 0.0
      %1494 = vmatprep.subr.mxu0 0.0
      %1495 = vmatpush2.msra.mxu0 0.0
      %1496 = vmatprep.subr.mxu0 0.0
      %1497 = vmatpush2.msra.mxu0 0.0
      %1498 = vmatprep.subr.mxu0 0.0
      %1499 = vmatpush2.msra.mxu0 0.0
      %1500 = vmatprep.subr.mxu0 0.0
      %1501 = vmatpush2.msra.mxu0 0.0
      %1502 = vmatprep.subr.mxu0 0.0
      %1503 = vmatpush2.msra.mxu0 0.0
      %1504 = vmatprep.subr.mxu0 0.0
      %1505 = vmatpush2.msra.mxu0 0.0
      %1506 = vmatprep.mubr.f32.mxu0 0.0
      %1507 = vmatmul.mubr.f32.gmra.mxu0 %v1120
      %v1508 = vpop.f32.mrf.mxu0
      %v1509 = vadd.f32 0.0, %v1508
      %v1510 = vpop.f32.mrf.mxu0
      %v1511 = vadd.f32 0.0, %v1510
      %1512 = vmatprep.mubr.f32.mxu0 0.0
      %1513 = vmatmul.mubr.f32.gmra.mxu0 %v1123
      %v1514 = vpop.f32.mrf.mxu0
      %v1515 = vadd.f32 0.0, %v1514
      %v1516 = vpop.f32.mrf.mxu0
      %v1517 = vadd.f32 0.0, %v1516
      %1518 = vdwg.mxu0
      %v1519 = vmul.f32 %v374, %v374
      %v1520 = vmul.f32 %v375, %v375
      %v1521 = vmul.f32 %v376, %v376
      %v1522 = vmul.f32 %v377, %v377
      %1523 = vrot.lane.b32.xlu0 %v1519, 1
      %v1524 = vpop.permute.xlu0 %1523
      %1525 = vrot.lane.b32.xlu0 %v1521, 1
      %v1526 = vpop.permute.xlu0 %1525
      %1527 = vrot.lane.b32.xlu0 %v1520, 1
      %v1528 = vpop.permute.xlu0 %1527
      %1529 = vrot.lane.b32.xlu0 %v1522, 1
      %v1530 = vpop.permute.xlu0 %1529
      %v1531 = vsel %vm401, %v1524, %v1528
      %v1532 = vsel %vm401, %v1526, %v1530
      %v1533 = vsel %vm401, %v1528, %v1524
      %v1534 = vsel %vm401, %v1530, %v1526
      %v1535 = vmul.f32 %v797, %v1533
      %v1536 = vmul.f32 %v801, %v1531
      %v1537 = vmul.f32 %v797, %v1534
      %v1538 = vmul.f32 %v801, %v1532
      %v1539 = vadd.f32 %v1519, %v1535
      %v1540 = vadd.f32 %v1520, %v1536
      %v1541 = vadd.f32 %v1521, %v1537
      %v1542 = vadd.f32 %v1522, %v1538
      %1543 = vrot.lane.b32.xlu0 %v1519, 2
      %v1544 = vpop.permute.xlu0 %1543
      %1545 = vrot.lane.b32.xlu0 %v1521, 2
      %v1546 = vpop.permute.xlu0 %1545
      %1547 = vrot.lane.b32.xlu0 %v1520, 2
      %v1548 = vpop.permute.xlu0 %1547
      %1549 = vrot.lane.b32.xlu0 %v1522, 2
      %v1550 = vpop.permute.xlu0 %1549
      %v1551 = vsel %vm443, %v1544, %v1548
      %v1552 = vsel %vm443, %v1546, %v1550
      %v1553 = vsel %vm443, %v1548, %v1544
      %v1554 = vsel %vm443, %v1550, %v1546
      %v1555 = vmul.f32 %v825, %v1553
      %v1556 = vmul.f32 %v829, %v1551
      %v1557 = vmul.f32 %v825, %v1554
      %v1558 = vmul.f32 %v829, %v1552
      %v1559 = vadd.f32 %v1539, %v1555
      %v1560 = vadd.f32 %v1540, %v1556
      %v1561 = vadd.f32 %v1541, %v1557
      %v1562 = vadd.f32 %v1542, %v1558
      %1563 = vrot.lane.b32.xlu0 %v1519, 3
      %v1564 = vpop.permute.xlu0 %1563
      %1565 = vrot.lane.b32.xlu0 %v1521, 3
      %v1566 = vpop.permute.xlu0 %1565
      %1567 = vrot.lane.b32.xlu0 %v1520, 3
      %v1568 = vpop.permute.xlu0 %1567
      %1569 = vrot.lane.b32.xlu0 %v1522, 3
      %v1570 = vpop.permute.xlu0 %1569
      %v1571 = vsel %vm474, %v1564, %v1568
      %v1572 = vsel %vm474, %v1566, %v1570
      %v1573 = vsel %vm474, %v1568, %v1564
      %v1574 = vsel %vm474, %v1570, %v1566
      %v1575 = vmul.f32 %v853, %v1573
      %v1576 = vmul.f32 %v857, %v1571
      %v1577 = vmul.f32 %v853, %v1574
      %v1578 = vmul.f32 %v857, %v1572
      %v1579 = vadd.f32 %v1559, %v1575
      %v1580 = vadd.f32 %v1560, %v1576
      %v1581 = vadd.f32 %v1561, %v1577
      %v1582 = vadd.f32 %v1562, %v1578
      %1583 = vrot.lane.b32.xlu0 %v1519, 127
      %v1584 = vpop.permute.xlu0 %1583
      %1585 = vrot.lane.b32.xlu0 %v1521, 127
      %v1586 = vpop.permute.xlu0 %1585
      %1587 = vrot.lane.b32.xlu0 %v1520, 127
      %v1588 = vpop.permute.xlu0 %1587
      %1589 = vrot.lane.b32.xlu0 %v1522, 127
      %v1590 = vpop.permute.xlu0 %1589
      %v1591 = vsel %vm505, %v1584, %v1588
      %v1592 = vsel %vm505, %v1586, %v1590
      %v1593 = vsel %vm505, %v1588, %v1584
      %v1594 = vsel %vm505, %v1590, %v1586
      %v1595 = vmul.f32 %v881, %v1591
      %v1596 = vmul.f32 %v885, %v1593
      %v1597 = vmul.f32 %v881, %v1592
      %v1598 = vmul.f32 %v885, %v1594
      %v1599 = vadd.f32 %v1579, %v1595
      %v1600 = vadd.f32 %v1580, %v1596
      %v1601 = vadd.f32 %v1581, %v1597
      %v1602 = vadd.f32 %v1582, %v1598
      %1603 = vrot.lane.b32.xlu0 %v1519, 126
      %v1604 = vpop.permute.xlu0 %1603
      %1605 = vrot.lane.b32.xlu0 %v1521, 126
      %v1606 = vpop.permute.xlu0 %1605
      %1607 = vrot.lane.b32.xlu0 %v1520, 126
      %v1608 = vpop.permute.xlu0 %1607
      %1609 = vrot.lane.b32.xlu0 %v1522, 126
      %v1610 = vpop.permute.xlu0 %1609
      %v1611 = vsel %vm536, %v1604, %v1608
      %v1612 = vsel %vm536, %v1606, %v1610
      %v1613 = vsel %vm536, %v1608, %v1604
      %v1614 = vsel %vm536, %v1610, %v1606
      %v1615 = vmul.f32 %v909, %v1611
      %v1616 = vmul.f32 %v913, %v1613
      %v1617 = vmul.f32 %v909, %v1612
      %v1618 = vmul.f32 %v913, %v1614
      %v1619 = vadd.f32 %v1599, %v1615
      %v1620 = vadd.f32 %v1600, %v1616
      %v1621 = vadd.f32 %v1601, %v1617
      %v1622 = vadd.f32 %v1602, %v1618
      %1623 = vrot.lane.b32.xlu0 %v1519, 125
      %v1624 = vpop.permute.xlu0 %1623
      %1625 = vrot.lane.b32.xlu0 %v1521, 125
      %v1626 = vpop.permute.xlu0 %1625
      %1627 = vrot.lane.b32.xlu0 %v1520, 125
      %v1628 = vpop.permute.xlu0 %1627
      %1629 = vrot.lane.b32.xlu0 %v1522, 125
      %v1630 = vpop.permute.xlu0 %1629
      %v1631 = vsel %vm567, %v1624, %v1628
      %v1632 = vsel %vm567, %v1626, %v1630
      %v1633 = vsel %vm567, %v1628, %v1624
      %v1634 = vsel %vm567, %v1630, %v1626
      %v1635 = vmul.f32 %v937, %v1631
      %v1636 = vmul.f32 %v941, %v1633
      %v1637 = vmul.f32 %v937, %v1632
      %v1638 = vmul.f32 %v941, %v1634
      %v1639 = vadd.f32 %v1619, %v1635
      %v1640 = vadd.f32 %v1620, %v1636
      %v1641 = vadd.f32 %v1621, %v1637
      %v1642 = vadd.f32 %v1622, %v1638
      %1643 = vrot.lane.b32.xlu0 %v1639, 16
      %v1644 = vpop.permute.xlu0 %1643
      %1645 = vrot.lane.b32.xlu0 %v1641, 16
      %v1646 = vpop.permute.xlu0 %1645
      %1647 = vrot.lane.b32.xlu0 %v1640, 16
      %v1648 = vpop.permute.xlu0 %1647
      %1649 = vrot.lane.b32.xlu0 %v1642, 16
      %v1650 = vpop.permute.xlu0 %1649
      %v1651 = vsel %vm598, %v1644, %v1648
      %v1652 = vsel %vm598, %v1646, %v1650
      %v1653 = vsel %vm598, %v1648, %v1644
      %v1654 = vsel %vm598, %v1650, %v1646
      %v1655 = vmul.f32 %v965, %v1653
      %v1656 = vmul.f32 %v969, %v1651
      %v1657 = vmul.f32 %v965, %v1654
      %v1658 = vmul.f32 %v969, %v1652
      %v1659 = vadd.f32 %v1639, %v1655
      %v1660 = vadd.f32 %v1640, %v1656
      %v1661 = vadd.f32 %v1641, %v1657
      %v1662 = vadd.f32 %v1642, %v1658
      %1663 = vrot.lane.b32.xlu0 %v1639, 32
      %v1664 = vpop.permute.xlu0 %1663
      %1665 = vrot.lane.b32.xlu0 %v1641, 32
      %v1666 = vpop.permute.xlu0 %1665
      %1667 = vrot.lane.b32.xlu0 %v1640, 32
      %v1668 = vpop.permute.xlu0 %1667
      %1669 = vrot.lane.b32.xlu0 %v1642, 32
      %v1670 = vpop.permute.xlu0 %1669
      %v1671 = vsel %vm629, %v1664, %v1668
      %v1672 = vsel %vm629, %v1666, %v1670
      %v1673 = vsel %vm629, %v1668, %v1664
      %v1674 = vsel %vm629, %v1670, %v1666
      %v1675 = vmul.f32 %v993, %v1673
      %v1676 = vmul.f32 %v997, %v1671
      %v1677 = vmul.f32 %v993, %v1674
      %v1678 = vmul.f32 %v997, %v1672
      %v1679 = vadd.f32 %v1659, %v1675
      %v1680 = vadd.f32 %v1660, %v1676
      %v1681 = vadd.f32 %v1661, %v1677
      %v1682 = vadd.f32 %v1662, %v1678
      %1683 = vrot.lane.b32.xlu0 %v1639, 48
      %v1684 = vpop.permute.xlu0 %1683
      %1685 = vrot.lane.b32.xlu0 %v1641, 48
      %v1686 = vpop.permute.xlu0 %1685
      %1687 = vrot.lane.b32.xlu0 %v1640, 48
      %v1688 = vpop.permute.xlu0 %1687
      %1689 = vrot.lane.b32.xlu0 %v1642, 48
      %v1690 = vpop.permute.xlu0 %1689
      %v1691 = vsel %vm660, %v1684, %v1688
      %v1692 = vsel %vm660, %v1686, %v1690
      %v1693 = vsel %vm660, %v1688, %v1684
      %v1694 = vsel %vm660, %v1690, %v1686
      %v1695 = vmul.f32 %v1021, %v1693
      %v1696 = vmul.f32 %v1025, %v1691
      %v1697 = vmul.f32 %v1021, %v1694
      %v1698 = vmul.f32 %v1025, %v1692
      %v1699 = vadd.f32 %v1679, %v1695
      %v1700 = vadd.f32 %v1680, %v1696
      %v1701 = vadd.f32 %v1681, %v1697
      %v1702 = vadd.f32 %v1682, %v1698
      %1703 = vrot.lane.b32.xlu0 %v1639, 112
      %v1704 = vpop.permute.xlu0 %1703
      %1705 = vrot.lane.b32.xlu0 %v1641, 112
      %v1706 = vpop.permute.xlu0 %1705
      %1707 = vrot.lane.b32.xlu0 %v1640, 112
      %v1708 = vpop.permute.xlu0 %1707
      %1709 = vrot.lane.b32.xlu0 %v1642, 112
      %v1710 = vpop.permute.xlu0 %1709
      %v1711 = vsel %vm691, %v1704, %v1708
      %v1712 = vsel %vm691, %v1706, %v1710
      %v1713 = vsel %vm691, %v1708, %v1704
      %v1714 = vsel %vm691, %v1710, %v1706
      %v1715 = vmul.f32 %v1049, %v1711
      %v1716 = vmul.f32 %v1053, %v1713
      %v1717 = vmul.f32 %v1049, %v1712
      %v1718 = vmul.f32 %v1053, %v1714
      %v1719 = vadd.f32 %v1699, %v1715
      %v1720 = vadd.f32 %v1700, %v1716
      %v1721 = vadd.f32 %v1701, %v1717
      %v1722 = vadd.f32 %v1702, %v1718
      %1723 = vrot.lane.b32.xlu0 %v1639, 96
      %v1724 = vpop.permute.xlu0 %1723
      %1725 = vrot.lane.b32.xlu0 %v1641, 96
      %v1726 = vpop.permute.xlu0 %1725
      %1727 = vrot.lane.b32.xlu0 %v1640, 96
      %v1728 = vpop.permute.xlu0 %1727
      %1729 = vrot.lane.b32.xlu0 %v1642, 96
      %v1730 = vpop.permute.xlu0 %1729
      %v1731 = vsel %vm722, %v1724, %v1728
      %v1732 = vsel %vm722, %v1726, %v1730
      %v1733 = vsel %vm722, %v1728, %v1724
      %v1734 = vsel %vm722, %v1730, %v1726
      %v1735 = vmul.f32 %v1077, %v1731
      %v1736 = vmul.f32 %v1081, %v1733
      %v1737 = vmul.f32 %v1077, %v1732
      %v1738 = vmul.f32 %v1081, %v1734
      %v1739 = vadd.f32 %v1719, %v1735
      %v1740 = vadd.f32 %v1720, %v1736
      %v1741 = vadd.f32 %v1721, %v1737
      %v1742 = vadd.f32 %v1722, %v1738
      %1743 = vrot.lane.b32.xlu0 %v1639, 80
      %v1744 = vpop.permute.xlu0 %1743
      %1745 = vrot.lane.b32.xlu0 %v1641, 80
      %v1746 = vpop.permute.xlu0 %1745
      %1747 = vrot.lane.b32.xlu0 %v1640, 80
      %v1748 = vpop.permute.xlu0 %1747
      %1749 = vrot.lane.b32.xlu0 %v1642, 80
      %v1750 = vpop.permute.xlu0 %1749
      %v1751 = vsel %vm753, %v1744, %v1748
      %v1752 = vsel %vm753, %v1746, %v1750
      %v1753 = vsel %vm753, %v1748, %v1744
      %v1754 = vsel %vm753, %v1750, %v1746
      %v1755 = vmul.f32 %v1105, %v1751
      %v1756 = vmul.f32 %v1109, %v1753
      %v1757 = vmul.f32 %v1105, %v1752
      %v1758 = vmul.f32 %v1109, %v1754
      %v1759 = vadd.f32 %v1739, %v1755
      %v1760 = vadd.f32 %v1740, %v1756
      %v1761 = vadd.f32 %v1741, %v1757
      %v1762 = vadd.f32 %v1742, %v1758
      %1763 = vmatprep.subr.mxu0 0.0
      %1764 = vmatpush1.msra.mxu0 0.0
      %1765 = vmatprep.subr.mxu0 0.0
      %1766 = vmatpush1.msra.mxu0 0.0
      %1767 = vmatprep.subr.mxu0 0.0
      %1768 = vmatpush1.msra.mxu0 0.0
      %1769 = vmatprep.subr.mxu0 0.0
      %1770 = vmatpush1.msra.mxu0 0.0
      %1771 = vmatprep.subr.mxu0 0.0
      %1772 = vmatpush1.msra.mxu0 0.0
      %1773 = vmatprep.subr.mxu0 0.0
      %1774 = vmatpush1.msra.mxu0 0.0
      %1775 = vmatprep.subr.mxu0 0.0
      %1776 = vmatpush1.msra.mxu0 0.0
      %1777 = vmatprep.subr.mxu0 0.0
      %1778 = vmatpush1.msra.mxu0 0.0
      %1779 = vmatprep.subr.mxu0 0.0
      %1780 = vmatpush1.msra.mxu0 0.0
      %1781 = vmatprep.subr.mxu0 0.0
      %1782 = vmatpush1.msra.mxu0 0.0
      %1783 = vmatprep.subr.mxu0 0.0
      %1784 = vmatpush1.msra.mxu0 0.0
      %1785 = vmatprep.subr.mxu0 0.0
      %1786 = vmatpush1.msra.mxu0 0.0
      %1787 = vmatprep.subr.mxu0 0.0
      %1788 = vmatpush1.msra.mxu0 0.0
      %1789 = vmatprep.subr.mxu0 0.0
      %1790 = vmatpush1.msra.mxu0 0.0
      %1791 = vmatprep.subr.mxu0 %v1762
      %1792 = vmatpush1.msra.mxu0 %v1761
      %1793 = vmatprep.subr.mxu0 %v1760
      %1794 = vmatpush1.msra.mxu0 %v1759
      %1795 = vmatprep.subr.mxu0 0.0
      %1796 = vmatpush2.msra.mxu0 0.0
      %1797 = vmatprep.subr.mxu0 0.0
      %1798 = vmatpush2.msra.mxu0 0.0
      %1799 = vmatprep.subr.mxu0 0.0
      %1800 = vmatpush2.msra.mxu0 0.0
      %1801 = vmatprep.subr.mxu0 0.0
      %1802 = vmatpush2.msra.mxu0 0.0
      %1803 = vmatprep.subr.mxu0 0.0
      %1804 = vmatpush2.msra.mxu0 0.0
      %1805 = vmatprep.subr.mxu0 0.0
      %1806 = vmatpush2.msra.mxu0 0.0
      %1807 = vmatprep.subr.mxu0 0.0
      %1808 = vmatpush2.msra.mxu0 0.0
      %1809 = vmatprep.subr.mxu0 0.0
      %1810 = vmatpush2.msra.mxu0 0.0
      %1811 = vmatprep.subr.mxu0 0.0
      %1812 = vmatpush2.msra.mxu0 0.0
      %1813 = vmatprep.subr.mxu0 0.0
      %1814 = vmatpush2.msra.mxu0 0.0
      %1815 = vmatprep.subr.mxu0 0.0
      %1816 = vmatpush2.msra.mxu0 0.0
      %1817 = vmatprep.subr.mxu0 0.0
      %1818 = vmatpush2.msra.mxu0 0.0
      %1819 = vmatprep.subr.mxu0 0.0
      %1820 = vmatpush2.msra.mxu0 0.0
      %1821 = vmatprep.subr.mxu0 0.0
      %1822 = vmatpush2.msra.mxu0 0.0
      %1823 = vmatprep.subr.mxu0 0.0
      %1824 = vmatpush2.msra.mxu0 0.0
      %1825 = vmatprep.subr.mxu0 0.0
      %1826 = vmatpush2.msra.mxu0 0.0
      %1827 = vmatprep.mubr.f32.mxu0 0.0
      %1828 = vmatmul.mubr.f32.gmra.mxu0 %v1120
      %v1829 = vpop.f32.mrf.mxu0
      %v1830 = vadd.f32 0.0, %v1829
      %v1831 = vpop.f32.mrf.mxu0
      %v1832 = vadd.f32 0.0, %v1831
      %1833 = vmatprep.mubr.f32.mxu0 0.0
      %1834 = vmatmul.mubr.f32.gmra.mxu0 %v1123
      %v1835 = vpop.f32.mrf.mxu0
      %v1836 = vadd.f32 0.0, %v1835
      %v1837 = vpop.f32.mrf.mxu0
      %v1838 = vadd.f32 0.0, %v1837
      %1839 = vdwg.mxu0
      %v1840 = vmul.f32 %v378, %v378
      %v1841 = vmul.f32 %v379, %v379
      %v1842 = vmul.f32 %v380, %v380
      %v1843 = vmul.f32 %v381, %v381
      %1844 = vrot.lane.b32.xlu0 %v1840, 1
      %v1845 = vpop.permute.xlu0 %1844
      %1846 = vrot.lane.b32.xlu0 %v1842, 1
      %v1847 = vpop.permute.xlu0 %1846
      %1848 = vrot.lane.b32.xlu0 %v1841, 1
      %v1849 = vpop.permute.xlu0 %1848
      %1850 = vrot.lane.b32.xlu0 %v1843, 1
      %v1851 = vpop.permute.xlu0 %1850
      %v1852 = vsel %vm401, %v1845, %v1849
      %v1853 = vsel %vm401, %v1847, %v1851
      %v1854 = vsel %vm401, %v1849, %v1845
      %v1855 = vsel %vm401, %v1851, %v1847
      %v1856 = vmul.f32 %v797, %v1854
      %v1857 = vmul.f32 %v801, %v1852
      %v1858 = vmul.f32 %v797, %v1855
      %v1859 = vmul.f32 %v801, %v1853
      %v1860 = vadd.f32 %v1840, %v1856
      %v1861 = vadd.f32 %v1841, %v1857
      %v1862 = vadd.f32 %v1842, %v1858
      %v1863 = vadd.f32 %v1843, %v1859
      %1864 = vrot.lane.b32.xlu0 %v1840, 2
      %v1865 = vpop.permute.xlu0 %1864
      %1866 = vrot.lane.b32.xlu0 %v1842, 2
      %v1867 = vpop.permute.xlu0 %1866
      %1868 = vrot.lane.b32.xlu0 %v1841, 2
      %v1869 = vpop.permute.xlu0 %1868
      %1870 = vrot.lane.b32.xlu0 %v1843, 2
      %v1871 = vpop.permute.xlu0 %1870
      %v1872 = vsel %vm443, %v1865, %v1869
      %v1873 = vsel %vm443, %v1867, %v1871
      %v1874 = vsel %vm443, %v1869, %v1865
      %v1875 = vsel %vm443, %v1871, %v1867
      %v1876 = vmul.f32 %v825, %v1874
      %v1877 = vmul.f32 %v829, %v1872
      %v1878 = vmul.f32 %v825, %v1875
      %v1879 = vmul.f32 %v829, %v1873
      %v1880 = vadd.f32 %v1860, %v1876
      %v1881 = vadd.f32 %v1861, %v1877
      %v1882 = vadd.f32 %v1862, %v1878
      %v1883 = vadd.f32 %v1863, %v1879
      %1884 = vrot.lane.b32.xlu0 %v1840, 3
      %v1885 = vpop.permute.xlu0 %1884
      %1886 = vrot.lane.b32.xlu0 %v1842, 3
      %v1887 = vpop.permute.xlu0 %1886
      %1888 = vrot.lane.b32.xlu0 %v1841, 3
      %v1889 = vpop.permute.xlu0 %1888
      %1890 = vrot.lane.b32.xlu0 %v1843, 3
      %v1891 = vpop.permute.xlu0 %1890
      %v1892 = vsel %vm474, %v1885, %v1889
      %v1893 = vsel %vm474, %v1887, %v1891
      %v1894 = vsel %vm474, %v1889, %v1885
      %v1895 = vsel %vm474, %v1891, %v1887
      %v1896 = vmul.f32 %v853, %v1894
      %v1897 = vmul.f32 %v857, %v1892
      %v1898 = vmul.f32 %v853, %v1895
      %v1899 = vmul.f32 %v857, %v1893
      %v1900 = vadd.f32 %v1880, %v1896
      %v1901 = vadd.f32 %v1881, %v1897
      %v1902 = vadd.f32 %v1882, %v1898
      %v1903 = vadd.f32 %v1883, %v1899
      %1904 = vrot.lane.b32.xlu0 %v1840, 127
      %v1905 = vpop.permute.xlu0 %1904
      %1906 = vrot.lane.b32.xlu0 %v1842, 127
      %v1907 = vpop.permute.xlu0 %1906
      %1908 = vrot.lane.b32.xlu0 %v1841, 127
      %v1909 = vpop.permute.xlu0 %1908
      %1910 = vrot.lane.b32.xlu0 %v1843, 127
      %v1911 = vpop.permute.xlu0 %1910
      %v1912 = vsel %vm505, %v1905, %v1909
      %v1913 = vsel %vm505, %v1907, %v1911
      %v1914 = vsel %vm505, %v1909, %v1905
      %v1915 = vsel %vm505, %v1911, %v1907
      %v1916 = vmul.f32 %v881, %v1912
      %v1917 = vmul.f32 %v885, %v1914
      %v1918 = vmul.f32 %v881, %v1913
      %v1919 = vmul.f32 %v885, %v1915
      %v1920 = vadd.f32 %v1900, %v1916
      %v1921 = vadd.f32 %v1901, %v1917
      %v1922 = vadd.f32 %v1902, %v1918
      %v1923 = vadd.f32 %v1903, %v1919
      %1924 = vrot.lane.b32.xlu0 %v1840, 126
      %v1925 = vpop.permute.xlu0 %1924
      %1926 = vrot.lane.b32.xlu0 %v1842, 126
      %v1927 = vpop.permute.xlu0 %1926
      %1928 = vrot.lane.b32.xlu0 %v1841, 126
      %v1929 = vpop.permute.xlu0 %1928
      %1930 = vrot.lane.b32.xlu0 %v1843, 126
      %v1931 = vpop.permute.xlu0 %1930
      %v1932 = vsel %vm536, %v1925, %v1929
      %v1933 = vsel %vm536, %v1927, %v1931
      %v1934 = vsel %vm536, %v1929, %v1925
      %v1935 = vsel %vm536, %v1931, %v1927
      %v1936 = vmul.f32 %v909, %v1932
      %v1937 = vmul.f32 %v913, %v1934
      %v1938 = vmul.f32 %v909, %v1933
      %v1939 = vmul.f32 %v913, %v1935
      %v1940 = vadd.f32 %v1920, %v1936
      %v1941 = vadd.f32 %v1921, %v1937
      %v1942 = vadd.f32 %v1922, %v1938
      %v1943 = vadd.f32 %v1923, %v1939
      %1944 = vrot.lane.b32.xlu0 %v1840, 125
      %v1945 = vpop.permute.xlu0 %1944
      %1946 = vrot.lane.b32.xlu0 %v1842, 125
      %v1947 = vpop.permute.xlu0 %1946
      %1948 = vrot.lane.b32.xlu0 %v1841, 125
      %v1949 = vpop.permute.xlu0 %1948
      %1950 = vrot.lane.b32.xlu0 %v1843, 125
      %v1951 = vpop.permute.xlu0 %1950
      %v1952 = vsel %vm567, %v1945, %v1949
      %v1953 = vsel %vm567, %v1947, %v1951
      %v1954 = vsel %vm567, %v1949, %v1945
      %v1955 = vsel %vm567, %v1951, %v1947
      %v1956 = vmul.f32 %v937, %v1952
      %v1957 = vmul.f32 %v941, %v1954
      %v1958 = vmul.f32 %v937, %v1953
      %v1959 = vmul.f32 %v941, %v1955
      %v1960 = vadd.f32 %v1940, %v1956
      %v1961 = vadd.f32 %v1941, %v1957
      %v1962 = vadd.f32 %v1942, %v1958
      %v1963 = vadd.f32 %v1943, %v1959
      %1964 = vrot.lane.b32.xlu0 %v1960, 16
      %v1965 = vpop.permute.xlu0 %1964
      %1966 = vrot.lane.b32.xlu0 %v1962, 16
      %v1967 = vpop.permute.xlu0 %1966
      %1968 = vrot.lane.b32.xlu0 %v1961, 16
      %v1969 = vpop.permute.xlu0 %1968
      %1970 = vrot.lane.b32.xlu0 %v1963, 16
      %v1971 = vpop.permute.xlu0 %1970
      %v1972 = vsel %vm598, %v1965, %v1969
      %v1973 = vsel %vm598, %v1967, %v1971
      %v1974 = vsel %vm598, %v1969, %v1965
      %v1975 = vsel %vm598, %v1971, %v1967
      %v1976 = vmul.f32 %v965, %v1974
      %v1977 = vmul.f32 %v969, %v1972
      %v1978 = vmul.f32 %v965, %v1975
      %v1979 = vmul.f32 %v969, %v1973
      %v1980 = vadd.f32 %v1960, %v1976
      %v1981 = vadd.f32 %v1961, %v1977
      %v1982 = vadd.f32 %v1962, %v1978
      %v1983 = vadd.f32 %v1963, %v1979
      %1984 = vrot.lane.b32.xlu0 %v1960, 32
      %v1985 = vpop.permute.xlu0 %1984
      %1986 = vrot.lane.b32.xlu0 %v1962, 32
      %v1987 = vpop.permute.xlu0 %1986
      %1988 = vrot.lane.b32.xlu0 %v1961, 32
      %v1989 = vpop.permute.xlu0 %1988
      %1990 = vrot.lane.b32.xlu0 %v1963, 32
      %v1991 = vpop.permute.xlu0 %1990
      %v1992 = vsel %vm629, %v1985, %v1989
      %v1993 = vsel %vm629, %v1987, %v1991
      %v1994 = vsel %vm629, %v1989, %v1985
      %v1995 = vsel %vm629, %v1991, %v1987
      %v1996 = vmul.f32 %v993, %v1994
      %v1997 = vmul.f32 %v997, %v1992
      %v1998 = vmul.f32 %v993, %v1995
      %v1999 = vmul.f32 %v997, %v1993
      %v2000 = vadd.f32 %v1980, %v1996
      %v2001 = vadd.f32 %v1981, %v1997
      %v2002 = vadd.f32 %v1982, %v1998
      %v2003 = vadd.f32 %v1983, %v1999
      %2004 = vrot.lane.b32.xlu0 %v1960, 48
      %v2005 = vpop.permute.xlu0 %2004
      %2006 = vrot.lane.b32.xlu0 %v1962, 48
      %v2007 = vpop.permute.xlu0 %2006
      %2008 = vrot.lane.b32.xlu0 %v1961, 48
      %v2009 = vpop.permute.xlu0 %2008
      %2010 = vrot.lane.b32.xlu0 %v1963, 48
      %v2011 = vpop.permute.xlu0 %2010
      %v2012 = vsel %vm660, %v2005, %v2009
      %v2013 = vsel %vm660, %v2007, %v2011
      %v2014 = vsel %vm660, %v2009, %v2005
      %v2015 = vsel %vm660, %v2011, %v2007
      %v2016 = vmul.f32 %v1021, %v2014
      %v2017 = vmul.f32 %v1025, %v2012
      %v2018 = vmul.f32 %v1021, %v2015
      %v2019 = vmul.f32 %v1025, %v2013
      %v2020 = vadd.f32 %v2000, %v2016
      %v2021 = vadd.f32 %v2001, %v2017
      %v2022 = vadd.f32 %v2002, %v2018
      %v2023 = vadd.f32 %v2003, %v2019
      %2024 = vrot.lane.b32.xlu0 %v1960, 112
      %v2025 = vpop.permute.xlu0 %2024
      %2026 = vrot.lane.b32.xlu0 %v1962, 112
      %v2027 = vpop.permute.xlu0 %2026
      %2028 = vrot.lane.b32.xlu0 %v1961, 112
      %v2029 = vpop.permute.xlu0 %2028
      %2030 = vrot.lane.b32.xlu0 %v1963, 112
      %v2031 = vpop.permute.xlu0 %2030
      %v2032 = vsel %vm691, %v2025, %v2029
      %v2033 = vsel %vm691, %v2027, %v2031
      %v2034 = vsel %vm691, %v2029, %v2025
      %v2035 = vsel %vm691, %v2031, %v2027
      %v2036 = vmul.f32 %v1049, %v2032
      %v2037 = vmul.f32 %v1053, %v2034
      %v2038 = vmul.f32 %v1049, %v2033
      %v2039 = vmul.f32 %v1053, %v2035
      %v2040 = vadd.f32 %v2020, %v2036
      %v2041 = vadd.f32 %v2021, %v2037
      %v2042 = vadd.f32 %v2022, %v2038
      %v2043 = vadd.f32 %v2023, %v2039
      %2044 = vrot.lane.b32.xlu0 %v1960, 96
      %v2045 = vpop.permute.xlu0 %2044
      %2046 = vrot.lane.b32.xlu0 %v1962, 96
      %v2047 = vpop.permute.xlu0 %2046
      %2048 = vrot.lane.b32.xlu0 %v1961, 96
      %v2049 = vpop.permute.xlu0 %2048
      %2050 = vrot.lane.b32.xlu0 %v1963, 96
      %v2051 = vpop.permute.xlu0 %2050
      %v2052 = vsel %vm722, %v2045, %v2049
      %v2053 = vsel %vm722, %v2047, %v2051
      %v2054 = vsel %vm722, %v2049, %v2045
      %v2055 = vsel %vm722, %v2051, %v2047
      %v2056 = vmul.f32 %v1077, %v2052
      %v2057 = vmul.f32 %v1081, %v2054
      %v2058 = vmul.f32 %v1077, %v2053
      %v2059 = vmul.f32 %v1081, %v2055
      %v2060 = vadd.f32 %v2040, %v2056
      %v2061 = vadd.f32 %v2041, %v2057
      %v2062 = vadd.f32 %v2042, %v2058
      %v2063 = vadd.f32 %v2043, %v2059
      %2064 = vrot.lane.b32.xlu0 %v1960, 80
      %v2065 = vpop.permute.xlu0 %2064
      %2066 = vrot.lane.b32.xlu0 %v1962, 80
      %v2067 = vpop.permute.xlu0 %2066
      %2068 = vrot.lane.b32.xlu0 %v1961, 80
      %v2069 = vpop.permute.xlu0 %2068
      %2070 = vrot.lane.b32.xlu0 %v1963, 80
      %v2071 = vpop.permute.xlu0 %2070
      %v2072 = vsel %vm753, %v2065, %v2069
      %v2073 = vsel %vm753, %v2067, %v2071
      %v2074 = vsel %vm753, %v2069, %v2065
      %v2075 = vsel %vm753, %v2071, %v2067
      %v2076 = vmul.f32 %v1105, %v2072
      %v2077 = vmul.f32 %v1109, %v2074
      %v2078 = vmul.f32 %v1105, %v2073
      %v2079 = vmul.f32 %v1109, %v2075
      %v2080 = vadd.f32 %v2060, %v2076
      %v2081 = vadd.f32 %v2061, %v2077
      %v2082 = vadd.f32 %v2062, %v2078
      %v2083 = vadd.f32 %v2063, %v2079
      %2084 = vmatprep.subr.mxu0 0.0
      %2085 = vmatpush1.msra.mxu0 0.0
      %2086 = vmatprep.subr.mxu0 0.0
      %2087 = vmatpush1.msra.mxu0 0.0
      %2088 = vmatprep.subr.mxu0 0.0
      %2089 = vmatpush1.msra.mxu0 0.0
      %2090 = vmatprep.subr.mxu0 0.0
      %2091 = vmatpush1.msra.mxu0 0.0
      %2092 = vmatprep.subr.mxu0 0.0
      %2093 = vmatpush1.msra.mxu0 0.0
      %2094 = vmatprep.subr.mxu0 0.0
      %2095 = vmatpush1.msra.mxu0 0.0
      %2096 = vmatprep.subr.mxu0 0.0
      %2097 = vmatpush1.msra.mxu0 0.0
      %2098 = vmatprep.subr.mxu0 0.0
      %2099 = vmatpush1.msra.mxu0 0.0
      %2100 = vmatprep.subr.mxu0 0.0
      %2101 = vmatpush1.msra.mxu0 0.0
      %2102 = vmatprep.subr.mxu0 0.0
      %2103 = vmatpush1.msra.mxu0 0.0
      %2104 = vmatprep.subr.mxu0 0.0
      %2105 = vmatpush1.msra.mxu0 0.0
      %2106 = vmatprep.subr.mxu0 0.0
      %2107 = vmatpush1.msra.mxu0 0.0
      %2108 = vmatprep.subr.mxu0 0.0
      %2109 = vmatpush1.msra.mxu0 0.0
      %2110 = vmatprep.subr.mxu0 0.0
      %2111 = vmatpush1.msra.mxu0 0.0
      %2112 = vmatprep.subr.mxu0 %v2083
      %2113 = vmatpush1.msra.mxu0 %v2082
      %2114 = vmatprep.subr.mxu0 %v2081
      %2115 = vmatpush1.msra.mxu0 %v2080
      %2116 = vmatprep.subr.mxu0 0.0
      %2117 = vmatpush2.msra.mxu0 0.0
      %2118 = vmatprep.subr.mxu0 0.0
      %2119 = vmatpush2.msra.mxu0 0.0
      %2120 = vmatprep.subr.mxu0 0.0
      %2121 = vmatpush2.msra.mxu0 0.0
      %2122 = vmatprep.subr.mxu0 0.0
      %2123 = vmatpush2.msra.mxu0 0.0
      %2124 = vmatprep.subr.mxu0 0.0
      %2125 = vmatpush2.msra.mxu0 0.0
      %2126 = vmatprep.subr.mxu0 0.0
      %2127 = vmatpush2.msra.mxu0 0.0
      %2128 = vmatprep.subr.mxu0 0.0
      %2129 = vmatpush2.msra.mxu0 0.0
      %2130 = vmatprep.subr.mxu0 0.0
      %2131 = vmatpush2.msra.mxu0 0.0
      %2132 = vmatprep.subr.mxu0 0.0
      %2133 = vmatpush2.msra.mxu0 0.0
      %2134 = vmatprep.subr.mxu0 0.0
      %2135 = vmatpush2.msra.mxu0 0.0
      %2136 = vmatprep.subr.mxu0 0.0
      %2137 = vmatpush2.msra.mxu0 0.0
      %2138 = vmatprep.subr.mxu0 0.0
      %2139 = vmatpush2.msra.mxu0 0.0
      %2140 = vmatprep.subr.mxu0 0.0
      %2141 = vmatpush2.msra.mxu0 0.0
      %2142 = vmatprep.subr.mxu0 0.0
      %2143 = vmatpush2.msra.mxu0 0.0
      %2144 = vmatprep.subr.mxu0 0.0
      %2145 = vmatpush2.msra.mxu0 0.0
      %2146 = vmatprep.subr.mxu0 0.0
      %2147 = vmatpush2.msra.mxu0 0.0
      %2148 = vmatprep.mubr.f32.mxu0 0.0
      %2149 = vmatmul.mubr.f32.gmra.mxu0 %v1120
      %v2150 = vpop.f32.mrf.mxu0
      %v2151 = vadd.f32 0.0, %v2150
      %v2152 = vpop.f32.mrf.mxu0
      %v2153 = vadd.f32 0.0, %v2152
      %2154 = vmatprep.mubr.f32.mxu0 0.0
      %2155 = vmatmul.mubr.f32.gmra.mxu0 %v1123
      %v2156 = vpop.f32.mrf.mxu0
      %v2157 = vadd.f32 0.0, %v2156
      %v2158 = vpop.f32.mrf.mxu0
      %v2159 = vadd.f32 0.0, %v2158
      %2160 = vdwg.mxu0
      %v2161 = vmul.f32 %v374, %v378
      %v2162 = vmul.f32 %v375, %v379
      %v2163 = vmul.f32 %v376, %v380
      %v2164 = vmul.f32 %v377, %v381
      %2165 = vrot.lane.b32.xlu0 %v2161, 1
      %v2166 = vpop.permute.xlu0 %2165
      %2167 = vrot.lane.b32.xlu0 %v2163, 1
      %v2168 = vpop.permute.xlu0 %2167
      %2169 = vrot.lane.b32.xlu0 %v2162, 1
      %v2170 = vpop.permute.xlu0 %2169
      %2171 = vrot.lane.b32.xlu0 %v2164, 1
      %v2172 = vpop.permute.xlu0 %2171
      %v2173 = vsel %vm401, %v2166, %v2170
      %v2174 = vsel %vm401, %v2168, %v2172
      %v2175 = vsel %vm401, %v2170, %v2166
      %v2176 = vsel %vm401, %v2172, %v2168
      %v2177 = vmul.f32 %v797, %v2175
      %v2178 = vmul.f32 %v801, %v2173
      %v2179 = vmul.f32 %v797, %v2176
      %v2180 = vmul.f32 %v801, %v2174
      %v2181 = vadd.f32 %v2161, %v2177
      %v2182 = vadd.f32 %v2162, %v2178
      %v2183 = vadd.f32 %v2163, %v2179
      %v2184 = vadd.f32 %v2164, %v2180
      %2185 = vrot.lane.b32.xlu0 %v2161, 2
      %v2186 = vpop.permute.xlu0 %2185
      %2187 = vrot.lane.b32.xlu0 %v2163, 2
      %v2188 = vpop.permute.xlu0 %2187
      %2189 = vrot.lane.b32.xlu0 %v2162, 2
      %v2190 = vpop.permute.xlu0 %2189
      %2191 = vrot.lane.b32.xlu0 %v2164, 2
      %v2192 = vpop.permute.xlu0 %2191
      %v2193 = vsel %vm443, %v2186, %v2190
      %v2194 = vsel %vm443, %v2188, %v2192
      %v2195 = vsel %vm443, %v2190, %v2186
      %v2196 = vsel %vm443, %v2192, %v2188
      %v2197 = vmul.f32 %v825, %v2195
      %v2198 = vmul.f32 %v829, %v2193
      %v2199 = vmul.f32 %v825, %v2196
      %v2200 = vmul.f32 %v829, %v2194
      %v2201 = vadd.f32 %v2181, %v2197
      %v2202 = vadd.f32 %v2182, %v2198
      %v2203 = vadd.f32 %v2183, %v2199
      %v2204 = vadd.f32 %v2184, %v2200
      %2205 = vrot.lane.b32.xlu0 %v2161, 3
      %v2206 = vpop.permute.xlu0 %2205
      %2207 = vrot.lane.b32.xlu0 %v2163, 3
      %v2208 = vpop.permute.xlu0 %2207
      %2209 = vrot.lane.b32.xlu0 %v2162, 3
      %v2210 = vpop.permute.xlu0 %2209
      %2211 = vrot.lane.b32.xlu0 %v2164, 3
      %v2212 = vpop.permute.xlu0 %2211
      %v2213 = vsel %vm474, %v2206, %v2210
      %v2214 = vsel %vm474, %v2208, %v2212
      %v2215 = vsel %vm474, %v2210, %v2206
      %v2216 = vsel %vm474, %v2212, %v2208
      %v2217 = vmul.f32 %v853, %v2215
      %v2218 = vmul.f32 %v857, %v2213
      %v2219 = vmul.f32 %v853, %v2216
      %v2220 = vmul.f32 %v857, %v2214
      %v2221 = vadd.f32 %v2201, %v2217
      %v2222 = vadd.f32 %v2202, %v2218
      %v2223 = vadd.f32 %v2203, %v2219
      %v2224 = vadd.f32 %v2204, %v2220
      %2225 = vrot.lane.b32.xlu0 %v2161, 127
      %v2226 = vpop.permute.xlu0 %2225
      %2227 = vrot.lane.b32.xlu0 %v2163, 127
      %v2228 = vpop.permute.xlu0 %2227
      %2229 = vrot.lane.b32.xlu0 %v2162, 127
      %v2230 = vpop.permute.xlu0 %2229
      %2231 = vrot.lane.b32.xlu0 %v2164, 127
      %v2232 = vpop.permute.xlu0 %2231
      %v2233 = vsel %vm505, %v2226, %v2230
      %v2234 = vsel %vm505, %v2228, %v2232
      %v2235 = vsel %vm505, %v2230, %v2226
      %v2236 = vsel %vm505, %v2232, %v2228
      %v2237 = vmul.f32 %v881, %v2233
      %v2238 = vmul.f32 %v885, %v2235
      %v2239 = vmul.f32 %v881, %v2234
      %v2240 = vmul.f32 %v885, %v2236
      %v2241 = vadd.f32 %v2221, %v2237
      %v2242 = vadd.f32 %v2222, %v2238
      %v2243 = vadd.f32 %v2223, %v2239
      %v2244 = vadd.f32 %v2224, %v2240
      %2245 = vrot.lane.b32.xlu0 %v2161, 126
      %v2246 = vpop.permute.xlu0 %2245
      %2247 = vrot.lane.b32.xlu0 %v2163, 126
      %v2248 = vpop.permute.xlu0 %2247
      %2249 = vrot.lane.b32.xlu0 %v2162, 126
      %v2250 = vpop.permute.xlu0 %2249
      %2251 = vrot.lane.b32.xlu0 %v2164, 126
      %v2252 = vpop.permute.xlu0 %2251
      %v2253 = vsel %vm536, %v2246, %v2250
      %v2254 = vsel %vm536, %v2248, %v2252
      %v2255 = vsel %vm536, %v2250, %v2246
      %v2256 = vsel %vm536, %v2252, %v2248
      %v2257 = vmul.f32 %v909, %v2253
      %v2258 = vmul.f32 %v913, %v2255
      %v2259 = vmul.f32 %v909, %v2254
      %v2260 = vmul.f32 %v913, %v2256
      %v2261 = vadd.f32 %v2241, %v2257
      %v2262 = vadd.f32 %v2242, %v2258
      %v2263 = vadd.f32 %v2243, %v2259
      %v2264 = vadd.f32 %v2244, %v2260
      %2265 = vrot.lane.b32.xlu0 %v2161, 125
      %v2266 = vpop.permute.xlu0 %2265
      %2267 = vrot.lane.b32.xlu0 %v2163, 125
      %v2268 = vpop.permute.xlu0 %2267
      %2269 = vrot.lane.b32.xlu0 %v2162, 125
      %v2270 = vpop.permute.xlu0 %2269
      %2271 = vrot.lane.b32.xlu0 %v2164, 125
      %v2272 = vpop.permute.xlu0 %2271
      %v2273 = vsel %vm567, %v2266, %v2270
      %v2274 = vsel %vm567, %v2268, %v2272
      %v2275 = vsel %vm567, %v2270, %v2266
      %v2276 = vsel %vm567, %v2272, %v2268
      %v2277 = vmul.f32 %v937, %v2273
      %v2278 = vmul.f32 %v941, %v2275
      %v2279 = vmul.f32 %v937, %v2274
      %v2280 = vmul.f32 %v941, %v2276
      %v2281 = vadd.f32 %v2261, %v2277
      %v2282 = vadd.f32 %v2262, %v2278
      %v2283 = vadd.f32 %v2263, %v2279
      %v2284 = vadd.f32 %v2264, %v2280
      %2285 = vrot.lane.b32.xlu0 %v2281, 16
      %v2286 = vpop.permute.xlu0 %2285
      %2287 = vrot.lane.b32.xlu0 %v2283, 16
      %v2288 = vpop.permute.xlu0 %2287
      %2289 = vrot.lane.b32.xlu0 %v2282, 16
      %v2290 = vpop.permute.xlu0 %2289
      %2291 = vrot.lane.b32.xlu0 %v2284, 16
      %v2292 = vpop.permute.xlu0 %2291
      %v2293 = vsel %vm598, %v2286, %v2290
      %v2294 = vsel %vm598, %v2288, %v2292
      %v2295 = vsel %vm598, %v2290, %v2286
      %v2296 = vsel %vm598, %v2292, %v2288
      %v2297 = vmul.f32 %v965, %v2295
      %v2298 = vmul.f32 %v969, %v2293
      %v2299 = vmul.f32 %v965, %v2296
      %v2300 = vmul.f32 %v969, %v2294
      %v2301 = vadd.f32 %v2281, %v2297
      %v2302 = vadd.f32 %v2282, %v2298
      %v2303 = vadd.f32 %v2283, %v2299
      %v2304 = vadd.f32 %v2284, %v2300
      %2305 = vrot.lane.b32.xlu0 %v2281, 32
      %v2306 = vpop.permute.xlu0 %2305
      %2307 = vrot.lane.b32.xlu0 %v2283, 32
      %v2308 = vpop.permute.xlu0 %2307
      %2309 = vrot.lane.b32.xlu0 %v2282, 32
      %v2310 = vpop.permute.xlu0 %2309
      %2311 = vrot.lane.b32.xlu0 %v2284, 32
      %v2312 = vpop.permute.xlu0 %2311
      %v2313 = vsel %vm629, %v2306, %v2310
      %v2314 = vsel %vm629, %v2308, %v2312
      %v2315 = vsel %vm629, %v2310, %v2306
      %v2316 = vsel %vm629, %v2312, %v2308
      %v2317 = vmul.f32 %v993, %v2315
      %v2318 = vmul.f32 %v997, %v2313
      %v2319 = vmul.f32 %v993, %v2316
      %v2320 = vmul.f32 %v997, %v2314
      %v2321 = vadd.f32 %v2301, %v2317
      %v2322 = vadd.f32 %v2302, %v2318
      %v2323 = vadd.f32 %v2303, %v2319
      %v2324 = vadd.f32 %v2304, %v2320
      %2325 = vrot.lane.b32.xlu0 %v2281, 48
      %v2326 = vpop.permute.xlu0 %2325
      %2327 = vrot.lane.b32.xlu0 %v2283, 48
      %v2328 = vpop.permute.xlu0 %2327
      %2329 = vrot.lane.b32.xlu0 %v2282, 48
      %v2330 = vpop.permute.xlu0 %2329
      %2331 = vrot.lane.b32.xlu0 %v2284, 48
      %v2332 = vpop.permute.xlu0 %2331
      %v2333 = vsel %vm660, %v2326, %v2330
      %v2334 = vsel %vm660, %v2328, %v2332
      %v2335 = vsel %vm660, %v2330, %v2326
      %v2336 = vsel %vm660, %v2332, %v2328
      %v2337 = vmul.f32 %v1021, %v2335
      %v2338 = vmul.f32 %v1025, %v2333
      %v2339 = vmul.f32 %v1021, %v2336
      %v2340 = vmul.f32 %v1025, %v2334
      %v2341 = vadd.f32 %v2321, %v2337
      %v2342 = vadd.f32 %v2322, %v2338
      %v2343 = vadd.f32 %v2323, %v2339
      %v2344 = vadd.f32 %v2324, %v2340
      %2345 = vrot.lane.b32.xlu0 %v2281, 112
      %v2346 = vpop.permute.xlu0 %2345
      %2347 = vrot.lane.b32.xlu0 %v2283, 112
      %v2348 = vpop.permute.xlu0 %2347
      %2349 = vrot.lane.b32.xlu0 %v2282, 112
      %v2350 = vpop.permute.xlu0 %2349
      %2351 = vrot.lane.b32.xlu0 %v2284, 112
      %v2352 = vpop.permute.xlu0 %2351
      %v2353 = vsel %vm691, %v2346, %v2350
      %v2354 = vsel %vm691, %v2348, %v2352
      %v2355 = vsel %vm691, %v2350, %v2346
      %v2356 = vsel %vm691, %v2352, %v2348
      %v2357 = vmul.f32 %v1049, %v2353
      %v2358 = vmul.f32 %v1053, %v2355
      %v2359 = vmul.f32 %v1049, %v2354
      %v2360 = vmul.f32 %v1053, %v2356
      %v2361 = vadd.f32 %v2341, %v2357
      %v2362 = vadd.f32 %v2342, %v2358
      %v2363 = vadd.f32 %v2343, %v2359
      %v2364 = vadd.f32 %v2344, %v2360
      %2365 = vrot.lane.b32.xlu0 %v2281, 96
      %v2366 = vpop.permute.xlu0 %2365
      %2367 = vrot.lane.b32.xlu0 %v2283, 96
      %v2368 = vpop.permute.xlu0 %2367
      %2369 = vrot.lane.b32.xlu0 %v2282, 96
      %v2370 = vpop.permute.xlu0 %2369
      %2371 = vrot.lane.b32.xlu0 %v2284, 96
      %v2372 = vpop.permute.xlu0 %2371
      %v2373 = vsel %vm722, %v2366, %v2370
      %v2374 = vsel %vm722, %v2368, %v2372
      %v2375 = vsel %vm722, %v2370, %v2366
      %v2376 = vsel %vm722, %v2372, %v2368
      %v2377 = vmul.f32 %v1077, %v2373
      %v2378 = vmul.f32 %v1081, %v2375
      %v2379 = vmul.f32 %v1077, %v2374
      %v2380 = vmul.f32 %v1081, %v2376
      %v2381 = vadd.f32 %v2361, %v2377
      %v2382 = vadd.f32 %v2362, %v2378
      %v2383 = vadd.f32 %v2363, %v2379
      %v2384 = vadd.f32 %v2364, %v2380
      %2385 = vrot.lane.b32.xlu0 %v2281, 80
      %v2386 = vpop.permute.xlu0 %2385
      %2387 = vrot.lane.b32.xlu0 %v2283, 80
      %v2388 = vpop.permute.xlu0 %2387
      %2389 = vrot.lane.b32.xlu0 %v2282, 80
      %v2390 = vpop.permute.xlu0 %2389
      %2391 = vrot.lane.b32.xlu0 %v2284, 80
      %v2392 = vpop.permute.xlu0 %2391
      %v2393 = vsel %vm753, %v2386, %v2390
      %v2394 = vsel %vm753, %v2388, %v2392
      %v2395 = vsel %vm753, %v2390, %v2386
      %v2396 = vsel %vm753, %v2392, %v2388
      %v2397 = vmul.f32 %v1105, %v2393
      %v2398 = vmul.f32 %v1109, %v2395
      %v2399 = vmul.f32 %v1105, %v2394
      %v2400 = vmul.f32 %v1109, %v2396
      %v2401 = vadd.f32 %v2381, %v2397
      %v2402 = vadd.f32 %v2382, %v2398
      %v2403 = vadd.f32 %v2383, %v2399
      %v2404 = vadd.f32 %v2384, %v2400
      %2405 = vmatprep.subr.mxu0 0.0
      %2406 = vmatpush1.msra.mxu0 0.0
      %2407 = vmatprep.subr.mxu0 0.0
      %2408 = vmatpush1.msra.mxu0 0.0
      %2409 = vmatprep.subr.mxu0 0.0
      %2410 = vmatpush1.msra.mxu0 0.0
      %2411 = vmatprep.subr.mxu0 0.0
      %2412 = vmatpush1.msra.mxu0 0.0
      %2413 = vmatprep.subr.mxu0 0.0
      %2414 = vmatpush1.msra.mxu0 0.0
      %2415 = vmatprep.subr.mxu0 0.0
      %2416 = vmatpush1.msra.mxu0 0.0
      %2417 = vmatprep.subr.mxu0 0.0
      %2418 = vmatpush1.msra.mxu0 0.0
      %2419 = vmatprep.subr.mxu0 0.0
      %2420 = vmatpush1.msra.mxu0 0.0
      %2421 = vmatprep.subr.mxu0 0.0
      %2422 = vmatpush1.msra.mxu0 0.0
      %2423 = vmatprep.subr.mxu0 0.0
      %2424 = vmatpush1.msra.mxu0 0.0
      %2425 = vmatprep.subr.mxu0 0.0
      %2426 = vmatpush1.msra.mxu0 0.0
      %2427 = vmatprep.subr.mxu0 0.0
      %2428 = vmatpush1.msra.mxu0 0.0
      %2429 = vmatprep.subr.mxu0 0.0
      %2430 = vmatpush1.msra.mxu0 0.0
      %2431 = vmatprep.subr.mxu0 0.0
      %2432 = vmatpush1.msra.mxu0 0.0
      %2433 = vmatprep.subr.mxu0 %v2404
      %2434 = vmatpush1.msra.mxu0 %v2403
      %2435 = vmatprep.subr.mxu0 %v2402
      %2436 = vmatpush1.msra.mxu0 %v2401
      %2437 = vmatprep.subr.mxu0 0.0
      %2438 = vmatpush2.msra.mxu0 0.0
      %2439 = vmatprep.subr.mxu0 0.0
      %2440 = vmatpush2.msra.mxu0 0.0
      %2441 = vmatprep.subr.mxu0 0.0
      %2442 = vmatpush2.msra.mxu0 0.0
      %2443 = vmatprep.subr.mxu0 0.0
      %2444 = vmatpush2.msra.mxu0 0.0
      %2445 = vmatprep.subr.mxu0 0.0
      %2446 = vmatpush2.msra.mxu0 0.0
      %2447 = vmatprep.subr.mxu0 0.0
      %2448 = vmatpush2.msra.mxu0 0.0
      %2449 = vmatprep.subr.mxu0 0.0
      %2450 = vmatpush2.msra.mxu0 0.0
      %2451 = vmatprep.subr.mxu0 0.0
      %2452 = vmatpush2.msra.mxu0 0.0
      %2453 = vmatprep.subr.mxu0 0.0
      %2454 = vmatpush2.msra.mxu0 0.0
      %2455 = vmatprep.subr.mxu0 0.0
      %2456 = vmatpush2.msra.mxu0 0.0
      %2457 = vmatprep.subr.mxu0 0.0
      %2458 = vmatpush2.msra.mxu0 0.0
      %2459 = vmatprep.subr.mxu0 0.0
      %2460 = vmatpush2.msra.mxu0 0.0
      %2461 = vmatprep.subr.mxu0 0.0
      %2462 = vmatpush2.msra.mxu0 0.0
      %2463 = vmatprep.subr.mxu0 0.0
      %2464 = vmatpush2.msra.mxu0 0.0
      %2465 = vmatprep.subr.mxu0 0.0
      %2466 = vmatpush2.msra.mxu0 0.0
      %2467 = vmatprep.subr.mxu0 0.0
      %2468 = vmatpush2.msra.mxu0 0.0
      %2469 = vmatprep.mubr.f32.mxu0 0.0
      %2470 = vmatmul.mubr.f32.gmra.mxu0 %v1120
      %v2471 = vpop.f32.mrf.mxu0
      %v2472 = vadd.f32 0.0, %v2471
      %v2473 = vpop.f32.mrf.mxu0
      %v2474 = vadd.f32 0.0, %v2473
      %2475 = vmatprep.mubr.f32.mxu0 0.0
      %2476 = vmatmul.mubr.f32.gmra.mxu0 %v1123
      %v2477 = vpop.f32.mrf.mxu0
      %v2478 = vadd.f32 0.0, %v2477
      %v2479 = vpop.f32.mrf.mxu0
      %v2480 = vadd.f32 0.0, %v2479
      %2481 = vdwg.mxu0
      %v2482 = vmul.f32 %v1192, 0.002915452
      %v2483 = vmul.f32 %v1194, 0.002915452
      %v2484 = vmul.f32 %v1198, 0.002915452
      %v2485 = vmul.f32 %v1200, 0.002915452
      %v2486 = vmul.f32 %v1509, 0.002915452
      %v2487 = vmul.f32 %v1511, 0.002915452
      %v2488 = vmul.f32 %v1515, 0.002915452
      %v2489 = vmul.f32 %v1517, 0.002915452
      %v2490 = vmul.f32 %v2486, %v1192
      %v2491 = vmul.f32 %v2487, %v1194
      %v2492 = vmul.f32 %v2488, %v1198
      %v2493 = vmul.f32 %v2489, %v1200
      %v2494 = vsub.f32 %v2472, %v2490
      %v2495 = vsub.f32 %v2474, %v2491
      %v2496 = vsub.f32 %v2478, %v2492
      %v2497 = vsub.f32 %v2480, %v2493
      %v2498 = vmul.f32 %v2482, %v1509
      %v2499 = vmul.f32 %v2483, %v1511
      %v2500 = vmul.f32 %v2484, %v1515
      %v2501 = vmul.f32 %v2485, %v1517
      %v2502 = vsub.f32 %v2494, %v2498
      %v2503 = vsub.f32 %v2495, %v2499
      %v2504 = vsub.f32 %v2496, %v2500
      %v2505 = vsub.f32 %v2497, %v2501
      %v2506 = vmul.f32 %v2482, %v2486
      %v2507 = vmul.f32 %v2483, %v2487
      %v2508 = vmul.f32 %v2484, %v2488
      %v2509 = vmul.f32 %v2485, %v2489
      %v2510 = vmul.f32 %v2506, 343.0
      %v2511 = vmul.f32 %v2507, 343.0
      %v2512 = vmul.f32 %v2508, 343.0
      %v2513 = vmul.f32 %v2509, 343.0
      %v2514 = vadd.f32 %v2502, %v2510
      %v2515 = vadd.f32 %v2503, %v2511
      %v2516 = vadd.f32 %v2504, %v2512
      %v2517 = vadd.f32 %v2505, %v2513
      %v2518 = vmul.f32 %v2482, 2.0
      %v2519 = vmul.f32 %v2483, 2.0
      %v2520 = vmul.f32 %v2484, 2.0
      %v2521 = vmul.f32 %v2485, 2.0
      %v2522 = vmul.f32 %v2518, %v1192
      %v2523 = vmul.f32 %v2519, %v1194
      %v2524 = vmul.f32 %v2520, %v1198
      %v2525 = vmul.f32 %v2521, %v1200
      %v2526 = vsub.f32 %v1830, %v2522
      %v2527 = vsub.f32 %v1832, %v2523
      %v2528 = vsub.f32 %v1836, %v2524
      %v2529 = vsub.f32 %v1838, %v2525
      %v2530 = vmul.f32 %v2482, %v2482
      %v2531 = vmul.f32 %v2483, %v2483
      %v2532 = vmul.f32 %v2484, %v2484
      %v2533 = vmul.f32 %v2485, %v2485
      %v2534 = vmul.f32 %v2530, 343.0
      %v2535 = vmul.f32 %v2531, 343.0
      %v2536 = vmul.f32 %v2532, 343.0
      %v2537 = vmul.f32 %v2533, 343.0
      %v2538 = vadd.f32 %v2526, %v2534
      %v2539 = vadd.f32 %v2527, %v2535
      %v2540 = vadd.f32 %v2528, %v2536
      %v2541 = vadd.f32 %v2529, %v2537
      %v2542 = vmul.f32 %v2486, 2.0
      %v2543 = vmul.f32 %v2487, 2.0
      %v2544 = vmul.f32 %v2488, 2.0
      %v2545 = vmul.f32 %v2489, 2.0
      %v2546 = vmul.f32 %v2542, %v1509
      %v2547 = vmul.f32 %v2543, %v1511
      %v2548 = vmul.f32 %v2544, %v1515
      %v2549 = vmul.f32 %v2545, %v1517
      %v2550 = vsub.f32 %v2151, %v2546
      %v2551 = vsub.f32 %v2153, %v2547
      %v2552 = vsub.f32 %v2157, %v2548
      %v2553 = vsub.f32 %v2159, %v2549
      %v2554 = vmul.f32 %v2486, %v2486
      %v2555 = vmul.f32 %v2487, %v2487
      %v2556 = vmul.f32 %v2488, %v2488
      %v2557 = vmul.f32 %v2489, %v2489
      %v2558 = vmul.f32 %v2554, 343.0
      %v2559 = vmul.f32 %v2555, 343.0
      %v2560 = vmul.f32 %v2556, 343.0
      %v2561 = vmul.f32 %v2557, 343.0
      %v2562 = vadd.f32 %v2550, %v2558
      %v2563 = vadd.f32 %v2551, %v2559
      %v2564 = vadd.f32 %v2552, %v2560
      %v2565 = vadd.f32 %v2553, %v2561
      %v2566 = vmul.f32 %v2514, %v2514
      %v2567 = vmul.f32 %v2515, %v2515
      %v2568 = vmul.f32 %v2516, %v2516
      %v2569 = vmul.f32 %v2517, %v2517
      %v2570 = vmul.f32 %v2538, %v2562
      %v2571 = vmul.f32 %v2539, %v2563
      %v2572 = vmul.f32 %v2540, %v2564
      %v2573 = vmul.f32 %v2541, %v2565
      %v2574 = vadd.f32 %v2570, 1e-05
      %v2575 = vadd.f32 %v2571, 1e-05
      %v2576 = vadd.f32 %v2572, 1e-05
      %v2577 = vadd.f32 %v2573, 1e-05
      %v2578 = vrcp.pop %v2574
      %v2579 = vrcp.pop %v2575
      %v2580 = vrcp.pop %v2576
      %v2581 = vrcp.pop %v2577
      %v2582 = vmul.f32 %v2566, %v2578
      %v2583 = vmul.f32 %v2567, %v2579
      %v2584 = vmul.f32 %v2568, %v2580
      %v2585 = vmul.f32 %v2569, %v2581
      %v2586 = vadd.f32 %v2582, %v2583
      %v2587 = vadd.f32 %v2586, %v2584
      %v2588 = vadd.f32 %v2587, %v2585
      %2589 = vadd.xlane.f32.xlu0 %v2588
      %v2590 = vpop.xlane.xlu0 %2589
      %v2591 = vrot.slane %v2590, 4
      %v2592 = vadd.f32 %v2590, %v2591
      %v2593 = vrot.slane %v2592, 2
      %v2594 = vadd.f32 %v2592, %v2593
      %v2595 = vrot.slane %v2594, 1
      %v2596 = vadd.f32 %v2594, %v2595
      %s2597 = vtos %v2596
      %v2598 = vstv %s2597
      %v2599 = vadd.f32 %v2598, 0.0
      %vm2600 = vcmask 0
      %2601 = vst.msk [vmem:[%s363] sm:$0x1] %vm2600, %v2599
      %v2602 = vld [vmem:[%s5] sm:$0xff]
      %v2603 = vld [vmem:[%s6] sm:$0x3]
      %v2604 = vadd.f32 %v806, %v886
      %v2605 = vadd.f32 %v807, %v887
      %v2606 = vadd.f32 %v808, %v888
      %v2607 = vadd.f32 %v809, %v889
      %2608 = vrot.lane.b32.xlu0 %v2604, 16
      %v2609 = vpop.permute.xlu0 %2608
      %2610 = vrot.lane.b32.xlu0 %v2606, 16
      %v2611 = vpop.permute.xlu0 %2610
      %2612 = vrot.lane.b32.xlu0 %v2605, 16
      %v2613 = vpop.permute.xlu0 %2612
      %2614 = vrot.lane.b32.xlu0 %v2607, 16
      %v2615 = vpop.permute.xlu0 %2614
      %v2616 = vsel %vm598, %v2609, %v2613
      %v2617 = vsel %vm598, %v2611, %v2615
      %v2618 = vsel %vm598, %v2613, %v2609
      %v2619 = vsel %vm598, %v2615, %v2611
      %v2620 = vmul.f32 %v965, %v2618
      %v2621 = vmul.f32 %v969, %v2616
      %v2622 = vmul.f32 %v965, %v2619
      %v2623 = vmul.f32 %v969, %v2617
      %v2624 = vadd.f32 %v2604, %v2620
      %v2625 = vadd.f32 %v2605, %v2621
      %v2626 = vadd.f32 %v2606, %v2622
      %v2627 = vadd.f32 %v2607, %v2623
      %2628 = vrot.lane.b32.xlu0 %v2604, 112
      %v2629 = vpop.permute.xlu0 %2628
      %2630 = vrot.lane.b32.xlu0 %v2606, 112
      %v2631 = vpop.permute.xlu0 %2630
      %2632 = vrot.lane.b32.xlu0 %v2605, 112
      %v2633 = vpop.permute.xlu0 %2632
      %2634 = vrot.lane.b32.xlu0 %v2607, 112
      %v2635 = vpop.permute.xlu0 %2634
      %v2636 = vsel %vm691, %v2629, %v2633
      %v2637 = vsel %vm691, %v2631, %v2635
      %v2638 = vsel %vm691, %v2633, %v2629
      %v2639 = vsel %vm691, %v2635, %v2631
      %v2640 = vmul.f32 %v1049, %v2636
      %v2641 = vmul.f32 %v1053, %v2638
      %v2642 = vmul.f32 %v1049, %v2637
      %v2643 = vmul.f32 %v1053, %v2639
      %v2644 = vadd.f32 %v2624, %v2640
      %v2645 = vadd.f32 %v2625, %v2641
      %v2646 = vadd.f32 %v2626, %v2642
      %v2647 = vadd.f32 %v2627, %v2643
      %v2649 = vlaneseq
      %v2650 = vshrl.u32 %v2649, 7
      %v2651 = vsub.s32 0, %v2650
      %v2652 = vrot.slane %v2603, %v2651
      %v2653 = vlaneseq
      %v2654 = vshrl.u32 %v2653, 7
      %v2655 = vsub.s32 1, %v2654
      %v2656 = vrot.slane %v2603, %v2655
      %v2659 = vmul.f32 %v2644, %v2652
      %v2660 = vmul.f32 %v2645, %v2656
      %v2661 = vmul.f32 %v2646, %v2652
      %v2662 = vmul.f32 %v2647, %v2656
      %v2664 = vsel %vm1118, %v2602, 0
      %2666 = vmatprep.subr.mxu0 0.0
      %2667 = vmatpush1.msra.mxu0 0.0
      %2668 = vmatprep.subr.mxu0 0.0
      %2669 = vmatpush1.msra.mxu0 0.0
      %2670 = vmatprep.subr.mxu0 0.0
      %2671 = vmatpush1.msra.mxu0 0.0
      %2672 = vmatprep.subr.mxu0 0.0
      %2673 = vmatpush1.msra.mxu0 0.0
      %2674 = vmatprep.subr.mxu0 0.0
      %2675 = vmatpush1.msra.mxu0 0.0
      %2676 = vmatprep.subr.mxu0 0.0
      %2677 = vmatpush1.msra.mxu0 0.0
      %2678 = vmatprep.subr.mxu0 0.0
      %2679 = vmatpush1.msra.mxu0 0.0
      %2680 = vmatprep.subr.mxu0 0.0
      %2681 = vmatpush1.msra.mxu0 0.0
      %2682 = vmatprep.subr.mxu0 0.0
      %2683 = vmatpush1.msra.mxu0 0.0
      %2684 = vmatprep.subr.mxu0 0.0
      %2685 = vmatpush1.msra.mxu0 0.0
      %2686 = vmatprep.subr.mxu0 0.0
      %2687 = vmatpush1.msra.mxu0 0.0
      %2688 = vmatprep.subr.mxu0 0.0
      %2689 = vmatpush1.msra.mxu0 0.0
      %2690 = vmatprep.subr.mxu0 0.0
      %2691 = vmatpush1.msra.mxu0 0.0
      %2692 = vmatprep.subr.mxu0 0.0
      %2693 = vmatpush1.msra.mxu0 0.0
      %2694 = vmatprep.subr.mxu0 %v2662
      %2695 = vmatpush1.msra.mxu0 %v2661
      %2696 = vmatprep.subr.mxu0 %v2660
      %2697 = vmatpush1.msra.mxu0 %v2659
      %2698 = vmatprep.subr.mxu0 0.0
      %2699 = vmatpush2.msra.mxu0 0.0
      %2700 = vmatprep.subr.mxu0 0.0
      %2701 = vmatpush2.msra.mxu0 0.0
      %2702 = vmatprep.subr.mxu0 0.0
      %2703 = vmatpush2.msra.mxu0 0.0
      %2704 = vmatprep.subr.mxu0 0.0
      %2705 = vmatpush2.msra.mxu0 0.0
      %2706 = vmatprep.subr.mxu0 0.0
      %2707 = vmatpush2.msra.mxu0 0.0
      %2708 = vmatprep.subr.mxu0 0.0
      %2709 = vmatpush2.msra.mxu0 0.0
      %2710 = vmatprep.subr.mxu0 0.0
      %2711 = vmatpush2.msra.mxu0 0.0
      %2712 = vmatprep.subr.mxu0 0.0
      %2713 = vmatpush2.msra.mxu0 0.0
      %2714 = vmatprep.subr.mxu0 0.0
      %2715 = vmatpush2.msra.mxu0 0.0
      %2716 = vmatprep.subr.mxu0 0.0
      %2717 = vmatpush2.msra.mxu0 0.0
      %2718 = vmatprep.subr.mxu0 0.0
      %2719 = vmatpush2.msra.mxu0 0.0
      %2720 = vmatprep.subr.mxu0 0.0
      %2721 = vmatpush2.msra.mxu0 0.0
      %2722 = vmatprep.subr.mxu0 0.0
      %2723 = vmatpush2.msra.mxu0 0.0
      %2724 = vmatprep.subr.mxu0 0.0
      %2725 = vmatpush2.msra.mxu0 0.0
      %2726 = vmatprep.subr.mxu0 0.0
      %2727 = vmatpush2.msra.mxu0 0.0
      %2728 = vmatprep.subr.mxu0 0.0
      %2729 = vmatpush2.msra.mxu0 0.0
      %2730 = vmatprep.mubr.f32.mxu0 0.0
      %2731 = vmatmul.mubr.f32.gmra.mxu0 %v2664
      %v2732 = vpop.f32.mrf.mxu0
      %v2733 = vadd.f32 0.0, %v2732
      %v2734 = vpop.f32.mrf.mxu0
      %v2735 = vadd.f32 0.0, %v2734
      %2736 = vdwg.mxu0
      %2737 = vst [vmem:[%s368] sm:$0xff] %v2733
      %2738 = vst [vmem:[%s368 + $0x8] sm:$0xff] %v2735
      %v2739 = vadd.f32 %v1218, %v1274
      %v2740 = vadd.f32 %v1219, %v1275
      %v2741 = vadd.f32 %v1220, %v1276
      %v2742 = vadd.f32 %v1221, %v1277
      %2743 = vrot.lane.b32.xlu0 %v2739, 16
      %v2744 = vpop.permute.xlu0 %2743
      %2745 = vrot.lane.b32.xlu0 %v2741, 16
      %v2746 = vpop.permute.xlu0 %2745
      %2747 = vrot.lane.b32.xlu0 %v2740, 16
      %v2748 = vpop.permute.xlu0 %2747
      %2749 = vrot.lane.b32.xlu0 %v2742, 16
      %v2750 = vpop.permute.xlu0 %2749
      %v2751 = vsel %vm598, %v2744, %v2748
      %v2752 = vsel %vm598, %v2746, %v2750
      %v2753 = vsel %vm598, %v2748, %v2744
      %v2754 = vsel %vm598, %v2750, %v2746
      %v2755 = vmul.f32 %v965, %v2753
      %v2756 = vmul.f32 %v969, %v2751
      %v2757 = vmul.f32 %v965, %v2754
      %v2758 = vmul.f32 %v969, %v2752
      %v2759 = vadd.f32 %v2739, %v2755
      %v2760 = vadd.f32 %v2740, %v2756
      %v2761 = vadd.f32 %v2741, %v2757
      %v2762 = vadd.f32 %v2742, %v2758
      %2763 = vrot.lane.b32.xlu0 %v2739, 112
      %v2764 = vpop.permute.xlu0 %2763
      %2765 = vrot.lane.b32.xlu0 %v2741, 112
      %v2766 = vpop.permute.xlu0 %2765
      %2767 = vrot.lane.b32.xlu0 %v2740, 112
      %v2768 = vpop.permute.xlu0 %2767
      %2769 = vrot.lane.b32.xlu0 %v2742, 112
      %v2770 = vpop.permute.xlu0 %2769
      %v2771 = vsel %vm691, %v2764, %v2768
      %v2772 = vsel %vm691, %v2766, %v2770
      %v2773 = vsel %vm691, %v2768, %v2764
      %v2774 = vsel %vm691, %v2770, %v2766
      %v2775 = vmul.f32 %v1049, %v2771
      %v2776 = vmul.f32 %v1053, %v2773
      %v2777 = vmul.f32 %v1049, %v2772
      %v2778 = vmul.f32 %v1053, %v2774
      %v2779 = vadd.f32 %v2759, %v2775
      %v2780 = vadd.f32 %v2760, %v2776
      %v2781 = vadd.f32 %v2761, %v2777
      %v2782 = vadd.f32 %v2762, %v2778
      %v2783 = vmul.f32 %v2779, %v2652
      %v2784 = vmul.f32 %v2780, %v2656
      %v2785 = vmul.f32 %v2781, %v2652
      %v2786 = vmul.f32 %v2782, %v2656
      %2787 = vmatprep.subr.mxu0 0.0
      %2788 = vmatpush1.msra.mxu0 0.0
      %2789 = vmatprep.subr.mxu0 0.0
      %2790 = vmatpush1.msra.mxu0 0.0
      %2791 = vmatprep.subr.mxu0 0.0
      %2792 = vmatpush1.msra.mxu0 0.0
      %2793 = vmatprep.subr.mxu0 0.0
      %2794 = vmatpush1.msra.mxu0 0.0
      %2795 = vmatprep.subr.mxu0 0.0
      %2796 = vmatpush1.msra.mxu0 0.0
      %2797 = vmatprep.subr.mxu0 0.0
      %2798 = vmatpush1.msra.mxu0 0.0
      %2799 = vmatprep.subr.mxu0 0.0
      %2800 = vmatpush1.msra.mxu0 0.0
      %2801 = vmatprep.subr.mxu0 0.0
      %2802 = vmatpush1.msra.mxu0 0.0
      %2803 = vmatprep.subr.mxu0 0.0
      %2804 = vmatpush1.msra.mxu0 0.0
      %2805 = vmatprep.subr.mxu0 0.0
      %2806 = vmatpush1.msra.mxu0 0.0
      %2807 = vmatprep.subr.mxu0 0.0
      %2808 = vmatpush1.msra.mxu0 0.0
      %2809 = vmatprep.subr.mxu0 0.0
      %2810 = vmatpush1.msra.mxu0 0.0
      %2811 = vmatprep.subr.mxu0 0.0
      %2812 = vmatpush1.msra.mxu0 0.0
      %2813 = vmatprep.subr.mxu0 0.0
      %2814 = vmatpush1.msra.mxu0 0.0
      %2815 = vmatprep.subr.mxu0 %v2786
      %2816 = vmatpush1.msra.mxu0 %v2785
      %2817 = vmatprep.subr.mxu0 %v2784
      %2818 = vmatpush1.msra.mxu0 %v2783
      %2819 = vmatprep.subr.mxu0 0.0
      %2820 = vmatpush2.msra.mxu0 0.0
      %2821 = vmatprep.subr.mxu0 0.0
      %2822 = vmatpush2.msra.mxu0 0.0
      %2823 = vmatprep.subr.mxu0 0.0
      %2824 = vmatpush2.msra.mxu0 0.0
      %2825 = vmatprep.subr.mxu0 0.0
      %2826 = vmatpush2.msra.mxu0 0.0
      %2827 = vmatprep.subr.mxu0 0.0
      %2828 = vmatpush2.msra.mxu0 0.0
      %2829 = vmatprep.subr.mxu0 0.0
      %2830 = vmatpush2.msra.mxu0 0.0
      %2831 = vmatprep.subr.mxu0 0.0
      %2832 = vmatpush2.msra.mxu0 0.0
      %2833 = vmatprep.subr.mxu0 0.0
      %2834 = vmatpush2.msra.mxu0 0.0
      %2835 = vmatprep.subr.mxu0 0.0
      %2836 = vmatpush2.msra.mxu0 0.0
      %2837 = vmatprep.subr.mxu0 0.0
      %2838 = vmatpush2.msra.mxu0 0.0
      %2839 = vmatprep.subr.mxu0 0.0
      %2840 = vmatpush2.msra.mxu0 0.0
      %2841 = vmatprep.subr.mxu0 0.0
      %2842 = vmatpush2.msra.mxu0 0.0
      %2843 = vmatprep.subr.mxu0 0.0
      %2844 = vmatpush2.msra.mxu0 0.0
      %2845 = vmatprep.subr.mxu0 0.0
      %2846 = vmatpush2.msra.mxu0 0.0
      %2847 = vmatprep.subr.mxu0 0.0
      %2848 = vmatpush2.msra.mxu0 0.0
      %2849 = vmatprep.subr.mxu0 0.0
      %2850 = vmatpush2.msra.mxu0 0.0
      %2851 = vmatprep.mubr.f32.mxu0 0.0
      %2852 = vmatmul.mubr.f32.gmra.mxu0 %v2664
      %v2853 = vpop.f32.mrf.mxu0
      %v2854 = vadd.f32 0.0, %v2853
      %v2855 = vpop.f32.mrf.mxu0
      %v2856 = vadd.f32 0.0, %v2855
      %2857 = vdwg.mxu0
      %2858 = vst [vmem:[%s373] sm:$0xff] %v2854
      %2859 = vst [vmem:[%s373 + $0x8] sm:$0xff] %v2856
      %p2860 = scmp.lt.s32.totalorder %s21, 1
      %s2861 = scalar_select %p2860, %s21, 1
      %s2862 = scalar_lea.vmem %s7, %s2861
      %p2863 = scmp.lt.s32.totalorder %s21, 1
      %s2864 = scalar_select %p2863, %s21, 1
      %s2865 = smul.addr %s2864, 2
      %s2866 = smul.addr %s2865, 8
      %s2867 = scalar_lea.vmem %s8, %s2866
      %p2868 = scmp.lt.s32.totalorder %s21, 1
      %s2869 = scalar_select %p2868, %s21, 1
      %s2870 = smul.addr %s2869, 2
      %s2871 = smul.addr %s2870, 8
      %s2872 = scalar_lea.vmem %s9, %s2871
      // Predicated region
      $region49: #{multi_resolution_ncc.3} parent=47 // pred_check
        %p2873 = pneg %p196
      $region50: #{multi_resolution_ncc.3} parent=47 // pred_check_branch
        %2875 = sbr.rel (%p2873) target = $region52
      $region51: #{multi_resolution_ncc.3} parent=47 // pred_region
        _
      $region52: #{multi_resolution_ncc.3} parent=47 // pred_fallthru
        _
      // Predicated region
      $region53: #{multi_resolution_ncc.3} parent=47 // pred_check
        %p2876 = pneg %p222
      $region54: #{multi_resolution_ncc.3} parent=47 // pred_check_branch
        %2878 = sbr.rel (%p2876) target = $region56
      $region55: #{multi_resolution_ncc.3} parent=47 // pred_region
        _
      $region56: #{multi_resolution_ncc.3} parent=47 // pred_fallthru
        _
      // Predicated region
      $region57: #{multi_resolution_ncc.3} parent=47 // pred_check
        %p2879 = pneg %p248
      $region58: #{multi_resolution_ncc.3} parent=47 // pred_check_branch
        %2881 = sbr.rel (%p2879) target = $region60
      $region59: #{multi_resolution_ncc.3} parent=47 // pred_region
        _
      $region60: #{multi_resolution_ncc.3} parent=47 // pred_fallthru
        _
    $region48: #{multi_resolution_ncc.3} parent=5 // pred_fallthru
      _
    %p2882 = scmp.le.s32.totalorder 2, %s16
    // Predicated region
    $region61: #{multi_resolution_ncc.3} parent=5 // pred_check
      %p2883 = pneg %p2882
    $region62: #{multi_resolution_ncc.3} parent=5 // pred_check_branch
      %2885 = sbr.rel (%p2883) target = $region64
    $region63: #{multi_resolution_ncc.3} parent=5 // pred_region
      %s2886 = ssub.s32 %s16, 2
      // Predicated region
      $region65: #{multi_resolution_ncc.3} parent=63 // pred_check
        %p2887 = pneg %p202
      $region66: #{multi_resolution_ncc.3} parent=63 // pred_check_branch
        %2889 = sbr.rel (%p2887) target = $region68
      $region67: #{multi_resolution_ncc.3} parent=63 // pred_region
        %p2890 = scmp.lt.s32.totalorder %s22, 1
        %s2891 = scalar_select %p2890, %s22, 1
        %s2892 = scalar_lea.vmem %s7, %s2891
      $region68: #{multi_resolution_ncc.3} parent=63 // pred_fallthru
        _
      // Predicated region
      $region69: #{multi_resolution_ncc.3} parent=63 // pred_check
        %p2893 = pneg %p228
      $region70: #{multi_resolution_ncc.3} parent=63 // pred_check_branch
        %2895 = sbr.rel (%p2893) target = $region72
      $region71: #{multi_resolution_ncc.3} parent=63 // pred_region
        %p2896 = scmp.lt.s32.totalorder %s22, 1
        %s2897 = scalar_select %p2896, %s22, 1
        %s2898 = smul.addr %s2897, 2
        %s2899 = smul.addr %s2898, 8
        %s2900 = scalar_lea.vmem %s8, %s2899
      $region72: #{multi_resolution_ncc.3} parent=63 // pred_fallthru
        _
      // Predicated region
      $region73: #{multi_resolution_ncc.3} parent=63 // pred_check
        %p2901 = pneg %p254
      $region74: #{multi_resolution_ncc.3} parent=63 // pred_check_branch
        %2903 = sbr.rel (%p2901) target = $region76
      $region75: #{multi_resolution_ncc.3} parent=63 // pred_region
        %p2904 = scmp.lt.s32.totalorder %s22, 1
        %s2905 = scalar_select %p2904, %s22, 1
        %s2906 = smul.addr %s2905, 2
        %s2907 = smul.addr %s2906, 8
        %s2908 = scalar_lea.vmem %s9, %s2907
      $region76: #{multi_resolution_ncc.3} parent=63 // pred_fallthru
        _
    $region64: #{multi_resolution_ncc.3} parent=5 // pred_fallthru
      _
  $region6: #{multi_resolution_ncc.3} parent=0 // loop_footer
    %s20 = sadd.s32 1, %s16
  $region7: #{multi_resolution_ncc.3} parent=0 // loop_footer_branch
    %15 = sbr.rel target = $region3
  $region8: #{multi_resolution_ncc.3} parent=0 // loop_exit
    _

</llo_original>
